<compile_context>
chip_gen: v6e
topology: v6e:2x2x1
jax: 0.10.0
libtpu: 0.0.40
codegen_flags: <defaults>
</compile_context>

<pallas_src>
import jax
import jax.numpy as jnp
from jax import lax
from jax.experimental import pallas as pl
from jax.experimental.pallas import tpu as pltpu


# Module-default hyperparameters of ConfigurableRecommendationNet.
CFG = dict(
    user_dim=16, movie_dim=24, dense_hidden=128,
    fm_latent_dim=16, fm_hidden_dim=32,
    d_model=128, nhead=4, dim_feedforward=256, layers=2,
)


def _round_up(x, m):
    return ((x + m - 1) // m) * m


# ----------------------------- parameters ---------------------------------- #
def init_params(key, cfg):
    Du, Dm = cfg["user_dim"], cfg["movie_dim"]
    H, L, FH = cfg["dense_hidden"], cfg["fm_latent_dim"], cfg["fm_hidden_dim"]
    D, F = cfg["d_model"], cfg["dim_feedforward"]
    C = H + FH + D  # combined_dim
    keys = iter(jax.random.split(key, 256))

    def rnd(shape, scale=0.05):
        return (scale * jax.random.normal(next(keys), shape)).astype(jnp.float32)

    p = {}
    p["W_ud"], p["b_ud"] = rnd((Du, H)), rnd((1, H))
    p["W_md"], p["b_md"] = rnd((Dm, H)), rnd((1, H))
    p["fm_v"] = rnd((Du + Dm, L))
    p["W_fp"], p["b_fp"] = rnd((L, FH)), rnd((1, FH))
    p["W_utp"], p["b_utp"] = rnd((H, D)), rnd((1, D))
    p["W_mtp"], p["b_mtp"] = rnd((H, D)), rnd((1, D))
    for l in range(cfg["layers"]):
        p[f"Wq{l}"], p[f"bq{l}"] = rnd((D, D)), rnd((1, D))
        p[f"Wk{l}"], p[f"bk{l}"] = rnd((D, D)), rnd((1, D))
        p[f"Wv{l}"], p[f"bv{l}"] = rnd((D, D)), rnd((1, D))
        p[f"Wo{l}"], p[f"bo{l}"] = rnd((D, D)), rnd((1, D))
        p[f"W1_{l}"], p[f"b1_{l}"] = rnd((D, F)), rnd((1, F))
        p[f"W2_{l}"], p[f"b2_{l}"] = rnd((F, D)), rnd((1, D))
        p[f"g1_{l}"], p[f"be1_{l}"] = jnp.ones((1, D), jnp.float32), jnp.zeros((1, D), jnp.float32)
        p[f"g2_{l}"], p[f"be2_{l}"] = jnp.ones((1, D), jnp.float32), jnp.zeros((1, D), jnp.float32)
    p["W_ap"], p["b_ap"] = rnd((D, 1)), rnd((1, 1))
    p["W_fc1"], p["b_fc1"] = rnd((C, H)), rnd((1, H))
    p["W_fc2"], p["b_fc2"] = rnd((H, 1)), rnd((1, 1))
    return p


# --------------------- pure-JAX reference (original structure) -------------- #
def _relu(z):
    return jnp.maximum(z, 0.0)


def _dot(a, b):
    return jnp.dot(a, b, preferred_element_type=jnp.float32)


def _layer_norm(z, g, b, eps=1e-5):
    mu = jnp.mean(z, axis=-1, keepdims=True)
    var = jnp.mean((z - mu) ** 2, axis=-1, keepdims=True)
    return (z - mu) * lax.rsqrt(var + eps) * g + b


def forward_math(u, m, P, cfg):
    """Straightforward f32 (per-token, softmax) reference of the module forward."""
    D, nhead = cfg["d_model"], cfg["nhead"]
    hd = D // nhead

    ue = _relu(_dot(u, P["W_ud"]) + P["b_ud"])
    me = _relu(_dot(m, P["W_md"]) + P["b_md"])
    combined = ue + me

    x = jnp.concatenate([u, m], axis=1)
    xv = _dot(x, P["fm_v"])
    sos = _dot(x * x, P["fm_v"] * P["fm_v"])
    inter = 0.5 * (xv * xv - sos)
    fm_out = _relu(_dot(inter, P["W_fp"]) + P["b_fp"])

    t0 = _dot(ue, P["W_utp"]) + P["b_utp"]
    t1 = _dot(me, P["W_mtp"]) + P["b_mtp"]

    d_i = lax.broadcasted_iota(jnp.int32, (D, nhead), 0)
    h_i = lax.broadcasted_iota(jnp.int32, (D, nhead), 1)
    M = (d_i // hd == h_i).astype(jnp.float32)
    Mt = M.T
    scale = 1.0 / (hd ** 0.5)

    for l in range(cfg["layers"]):
        q0 = _dot(t0, P[f"Wq{l}"]) + P[f"bq{l}"]
        q1 = _dot(t1, P[f"Wq{l}"]) + P[f"bq{l}"]
        k0 = _dot(t0, P[f"Wk{l}"]) + P[f"bk{l}"]
        k1 = _dot(t1, P[f"Wk{l}"]) + P[f"bk{l}"]
        v0 = _dot(t0, P[f"Wv{l}"]) + P[f"bv{l}"]
        v1 = _dot(t1, P[f"Wv{l}"]) + P[f"bv{l}"]
        s00 = _dot(q0 * k0, M) * scale
        s01 = _dot(q0 * k1, M) * scale
        s10 = _dot(q1 * k0, M) * scale
        s11 = _dot(q1 * k1, M) * scale
        mx0 = jnp.maximum(s00, s01)
        e00, e01 = jnp.exp(s00 - mx0), jnp.exp(s01 - mx0)
        w00, w01 = e00 / (e00 + e01), e01 / (e00 + e01)
        mx1 = jnp.maximum(s10, s11)
        e10, e11 = jnp.exp(s10 - mx1), jnp.exp(s11 - mx1)
        w10, w11 = e10 / (e10 + e11), e11 / (e10 + e11)
        o0 = _dot(w00, Mt) * v0 + _dot(w01, Mt) * v1
        o1 = _dot(w10, Mt) * v0 + _dot(w11, Mt) * v1
        a0 = _dot(o0, P[f"Wo{l}"]) + P[f"bo{l}"]
        a1 = _dot(o1, P[f"Wo{l}"]) + P[f"bo{l}"]
        t0 = _layer_norm(t0 + a0, P[f"g1_{l}"], P[f"be1_{l}"])
        t1 = _layer_norm(t1 + a1, P[f"g1_{l}"], P[f"be1_{l}"])
        f0 = _dot(_relu(_dot(t0, P[f"W1_{l}"]) + P[f"b1_{l}"]), P[f"W2_{l}"]) + P[f"b2_{l}"]
        f1 = _dot(_relu(_dot(t1, P[f"W1_{l}"]) + P[f"b1_{l}"]), P[f"W2_{l}"]) + P[f"b2_{l}"]
        t0 = _layer_norm(t0 + f0, P[f"g2_{l}"], P[f"be2_{l}"])
        t1 = _layer_norm(t1 + f1, P[f"g2_{l}"], P[f"be2_{l}"])

    s0 = _dot(t0, P["W_ap"]) + P["b_ap"]
    s1 = _dot(t1, P["W_ap"]) + P["b_ap"]
    mx = jnp.maximum(s0, s1)
    e0, e1 = jnp.exp(s0 - mx), jnp.exp(s1 - mx)
    w0, w1 = e0 / (e0 + e1), e1 / (e0 + e1)
    attended = w0 * t0 + w1 * t1

    comb = jnp.concatenate([combined, fm_out, attended], axis=1)
    hid = _relu(_dot(comb, P["W_fc1"]) + P["b_fc1"])
    return _dot(hid, P["W_fc2"]) + P["b_fc2"]
    # TODO(synk): multitask genre head omitted (module default multitask=False).


# ----------------------- host-side parameter packing ------------------------ #
def pack_params(P, cfg):
    Du, Dm = cfg["user_dim"], cfg["movie_dim"]
    H, L, FH = cfg["dense_hidden"], cfg["fm_latent_dim"], cfg["fm_hidden_dim"]
    D, F, nh = cfg["d_model"], cfg["dim_feedforward"], cfg["nhead"]
    Lyr = cfg["layers"]
    Din = Du + Dm
    hd = D // nh
    scale = 1.0 / (hd ** 0.5)

    def z(*s):
        return jnp.zeros(s, jnp.float32)

    def pad_lanes(v, width):
        return jnp.concatenate([v, z(v.shape[0], width - v.shape[1])], axis=1)

    fm_v_u, fm_v_m = P["fm_v"][:Du], P["fm_v"][Du:]

    # Block-diagonal fused input weight: columns = [W_ud | W_md | fm_v(pad D) | fm_v^2(pad D)]
    W_lin = jnp.concatenate([
        jnp.concatenate([P["W_ud"], z(Du, H), pad_lanes(fm_v_u, D), z(Du, D)], axis=1),
        jnp.concatenate([z(Dm, H), P["W_md"], pad_lanes(fm_v_m, D), z(Dm, D)], axis=1),
    ], axis=0)                                                   # [Din, 2H+2D]
    W_sq = jnp.concatenate([
        jnp.concatenate([z(Du, 2 * H + D), pad_lanes(fm_v_u ** 2, D)], axis=1),
        jnp.concatenate([z(Dm, 2 * H + D), pad_lanes(fm_v_m ** 2, D)], axis=1),
    ], axis=0)                                                   # [Din, 2H+2D]
    w_in = jnp.concatenate([W_lin, W_sq], axis=0)                # [2*Din, 512], applied to [x | x^2]
    b_in = jnp.concatenate([P["b_ud"], P["b_md"], z(1, 2 * D)], axis=1)

    w_fp = jnp.concatenate([P["W_fp"], z(D - L, FH)], axis=0)    # [D, FH], rows >= L are zero
    b_fp = P["b_fp"]

    w_tp = jnp.concatenate([P["W_utp"], P["W_mtp"]], axis=0)     # [2H, D]
    b_tp = jnp.concatenate([P["b_utp"], P["b_mtp"]], axis=0)     # [2, D]

    # Attention scale folded into Wq / bq (no '* scale' in the kernel).
    w_qkv = jnp.stack([jnp.concatenate([P[f"Wq{l}"] * scale, P[f"Wk{l}"], P[f"Wv{l}"]], axis=1)
                       for l in range(Lyr)])                     # [Lyr, D, 3D]
    b_qkv = jnp.stack([jnp.concatenate([P[f"bq{l}"] * scale, P[f"bk{l}"], P[f"bv{l}"]], axis=1)
                       for l in range(Lyr)])                     # [Lyr, 1, 3D]
    w_ao = jnp.stack([P[f"Wo{l}"] for l in range(Lyr)])          # [Lyr, D, D]
    b_ao = jnp.stack([P[f"bo{l}"] for l in range(Lyr)])          # [Lyr, 1, D]
    w_ff1 = jnp.stack([P[f"W1_{l}"] for l in range(Lyr)])        # [Lyr, D, F]
    b_ff1 = jnp.stack([P[f"b1_{l}"] for l in range(Lyr)])        # [Lyr, 1, F]
    w_ff2 = jnp.stack([P[f"W2_{l}"] for l in range(Lyr)])        # [Lyr, F, D]
    b_ff2 = jnp.stack([P[f"b2_{l}"] for l in range(Lyr)])        # [Lyr, 1, D]
    ln = jnp.stack([jnp.concatenate([P[f"g1_{l}"], P[f"be1_{l}"],
                                     P[f"g2_{l}"], P[f"be2_{l}"]], axis=0)
                    for l in range(Lyr)])                        # [Lyr, 4, D]

    # Head-pooling matrices (hoisted out of the kernel). Binary -> exact in bf16.
    d_i = lax.broadcasted_iota(jnp.int32, (D, nh), 0)
    h_i = lax.broadcasted_iota(jnp.int32, (D, nh), 1)
    m_head = (d_i // hd == h_i).astype(jnp.float32)              # [D, nh]
    mt_head = m_head.T                                           # [nh, D]

    # Lane-dense final projection: replicate the scalar rating across 128 lanes.
    w_fc2w = jnp.tile(P["W_fc2"], (1, 128))                      # [H, 128]
    b_fc2w = jnp.tile(P["b_fc2"], (1, 128))                      # [1, 128]

    def bf(a):  # matmul operands go through the MXU in bf16
        return a.astype(jnp.bfloat16)

    # Biases and LayerNorm params stay f32 (added / applied after f32 accumulation).
    return [bf(w_in), b_in, bf(w_fp), b_fp, bf(w_tp), b_tp,
            bf(w_qkv), b_qkv, bf(w_ao), b_ao, bf(w_ff1), b_ff1, bf(w_ff2), b_ff2, ln,
            bf(m_head), bf(mt_head), bf(P["W_ap"]), P["b_ap"],
            bf(P["W_fc1"]), P["b_fc1"], bf(w_fc2w), b_fc2w]


# ------------------------------ Pallas kernel ------------------------------- #
def make_kernel(cfg, bb):
    Du, Dm = cfg["user_dim"], cfg["movie_dim"]
    Din = Du + Dm
    H, FH = cfg["dense_hidden"], cfg["fm_hidden_dim"]
    D, nh, Lyr = cfg["d_model"], cfg["nhead"], cfg["layers"]

    def _bdot(a, b):
        # bf16 MXU path (bf16-native on v5e/v6e/v7x), f32 accumulation.
        return jnp.dot(a.astype(jnp.bfloat16), b, preferred_element_type=jnp.float32)

    def _sig(z):
        # 2-logit softmax == sigmoid of the logit difference; exp + approx recip on EUP.
        return pl.reciprocal(1.0 + jnp.exp(-z), approx=True)

    def kernel(x2_ref,
               w_in_ref, b_in_ref, w_fp_ref, b_fp_ref, w_tp_ref, b_tp_ref,
               w_qkv_ref, b_qkv_ref, w_ao_ref, b_ao_ref,
               w_ff1_ref, b_ff1_ref, w_ff2_ref, b_ff2_ref, ln_ref,
               mh_ref, mth_ref, w_ap_ref, b_ap_ref,
               w_fc1_ref, b_fc1_ref, w_fc2_ref, b_fc2_ref,
               out_ref):
        x2 = x2_ref[...]                                      # [bb, 2*Din] = [u | m | u^2 | m^2]
        # Fused dense towers + FM first stage: single K=2*Din matmul.
        zfused = _bdot(x2, w_in_ref[...]) + b_in_ref[...]
        ue = _relu(zfused[:, :H])
        me = _relu(zfused[:, H:2 * H])
        combined = ue + me
        xv = zfused[:, 2 * H:2 * H + D]                       # fm latent (zero-padded lanes)
        sos = zfused[:, 2 * H + D:]
        inter = 0.5 * (xv * xv - sos)
        fm_out = _relu(_bdot(inter, w_fp_ref[...]) + b_fp_ref[...])   # [bb, FH]

        # Token projections; stack the 2-token sequence along rows: [2*bb, D].
        W_tp = w_tp_ref[...]
        b_tp = b_tp_ref[...]
        t0 = _bdot(ue, W_tp[:H]) + b_tp[0:1]
        t1 = _bdot(me, W_tp[H:]) + b_tp[1:2]
        T = jnp.concatenate([t0, t1], axis=0)                 # rows [0,bb)=user, [bb,2bb)=movie

        Mh = mh_ref[...]                                      # [D, nh]   (bf16, binary)
        Mth = mth_ref[...]                                    # [nh, D]

        for l in range(Lyr):
            QKV = _bdot(T, w_qkv_ref[l]) + b_qkv_ref[l]       # [2bb, 3D] f32
            Q = QKV[:, :D]
            K = QKV[:, D:2 * D]
            V = QKV[:, 2 * D:]
            # Other-token keys/values via an XLU sublane rotation (no extra copies).
            K_sw = pltpu.roll(K, shift=bb, axis=0)
            V_sw = pltpu.roll(V, shift=bb, axis=0)
            # Per-head logit difference in ONE matmul (1/sqrt(hd) folded into Wq/bq).
            s_diff = _bdot(Q * (K - K_sw), Mh)                # [2bb, nh]
            p_same = _sig(s_diff)                             # softmax weight on own token
            mix = _bdot(p_same, Mth)                          # broadcast heads -> lanes
            attn = V_sw + mix * (V - V_sw)                    # == p*V + (1-p)*V_sw
            A = _bdot(attn, w_ao_ref[l]) + b_ao_ref[l]
            lnp = ln_ref[l]                                   # [4, D] f32
            T = _layer_norm(T + A, lnp[0:1], lnp[1:2])
            Hff = _relu(_bdot(T, w_ff1_ref[l]) + b_ff1_ref[l])
            Ff = _bdot(Hff, w_ff2_ref[l]) + b_ff2_ref[l]
            T = _layer_norm(T + Ff, lnp[2:3], lnp[3:4])

        # Attention pooling over the 2 tokens: sigmoid of the score difference.
        s = _bdot(T, w_ap_ref[...]) + b_ap_ref[...]           # [2bb, 1]
        w0 = _sig(s[:bb] - s[bb:])                            # weight of the user token
        attended = T[bb:] + w0 * (T[:bb] - T[bb:])            # [bb, D]

        # Final head: concat replaced by split-weight accumulation.
        W_fc1 = w_fc1_ref[...]
        hid = _relu(_bdot(combined, W_fc1[:H])
                    + _bdot(fm_out, W_fc1[H:H + FH])
                    + _bdot(attended, W_fc1[H + FH:])
                    + b_fc1_ref[...])
        # Lane-dense output: every lane carries the rating; wrapper reads lane 0.
        out_ref[...] = _bdot(hid, w_fc2_ref[...]) + b_fc2_ref[...]

    return kernel


# --------------------------------- wrapper ----------------------------------- #
def recommendation_net_pallas(user, movie, params, cfg, block_batch=512):
    B = user.shape[0]
    Du, Dm = cfg["user_dim"], cfg["movie_dim"]
    H, L, FH = cfg["dense_hidden"], cfg["fm_latent_dim"], cfg["fm_hidden_dim"]
    D, F, nh, Lyr = cfg["d_model"], cfg["dim_feedforward"], cfg["nhead"], cfg["layers"]
    Din = Du + Dm

    # Batch tile: multiple of 16 (bf16 sublane packing), capped at 512 rows so the
    # fused activation working set stays well inside v7x's 64 MiB VMEM.  Aim for a
    # grid of >= 2 steps so both v7x TensorCores get work; this is harmless on
    # single-core v5e/v6e because the weight operands have constant index maps and
    # are only DMA'd once.
    bb_cap = max(16, min(int(block_batch), 512))
    g_target = max(2, -(-B // bb_cap))
    bb = _round_up(-(-B // g_target), 16)
    bb = max(16, min(bb, _round_up(B, 16), bb_cap))
    B_pad = _round_up(B, bb)
    G = B_pad // bb

    x = jnp.concatenate([user, movie], axis=1).astype(jnp.float32)
    x2 = jnp.concatenate([x, x * x], axis=1)                      # [B, 2*Din]
    if B_pad != B:
        x2 = jnp.concatenate([x2, jnp.zeros((B_pad - B, 2 * Din), jnp.float32)], axis=0)

    flat = pack_params(params, cfg)

    # NOTE: weight operands have constant index maps so they are fetched only once;
    # pl.Buffered(1) single-buffering was considered but left off to keep the
    # lowering path conservative.
    def full_spec(a):
        return pl.BlockSpec(a.shape, lambda i, _nd=a.ndim: (0,) * _nd)

    in_specs = [pl.BlockSpec((bb, 2 * Din), lambda i: (i, 0))] + [full_spec(a) for a in flat]
    out_specs = pl.BlockSpec((bb, 128), lambda i: (i, 0))

    # Advisory cost estimate for XLA scheduling.
    macs_per_row = (2 * Din * (2 * H + 2 * D) + D * FH + 2 * H * D
                    + Lyr * 2 * (D * 3 * D + D * nh + nh * D + D * D + 2 * D * F)
                    + 2 * D + (H + FH + D) * H + H * 128)
    param_bytes = sum(int(a.size) * a.dtype.itemsize for a in flat)
    cost = pl.CostEstimate(
        flops=int(2 * macs_per_row * B_pad),
        transcendentals=int(B_pad * (Lyr * (2 * nh + 4) + 1)),
        # Parameters are grid-invariant and fetched once (NOT once per grid step).
        bytes_accessed=int(x2.size * x2.dtype.itemsize + B_pad * 128 * 4 + param_bytes),
    )

    out = pl.pallas_call(
        make_kernel(cfg, bb),
        out_shape=jax.ShapeDtypeStruct((B_pad, 128), jnp.float32),
        grid_spec=pltpu.PrefetchScalarGridSpec(
            num_scalar_prefetch=0,
            grid=(G,),
            in_specs=in_specs,
            out_specs=out_specs,
        ),
        compiler_params=pltpu.CompilerParams(
            dimension_semantics=("parallel",),
            vmem_limit_bytes=32 * 1024 * 1024,
        ),
        cost_estimate=cost,
    )(x2, *flat)

    return out[:B, 0:1]


# ----------------------------------- main ------------------------------------ #
if __name__ == "__main__":
    cfg = CFG
    key = jax.random.PRNGKey(0)
    kp, ku, km = jax.random.split(key, 3)

    B = 100  # not a multiple of the tile: exercises padding + a 2-step grid
    user = jax.random.normal(ku, (B, cfg["user_dim"]), dtype=jnp.float32)
    movie = jax.random.normal(km, (B, cfg["movie_dim"]), dtype=jnp.float32)
    params = init_params(kp, cfg)

    rating = recommendation_net_pallas(user, movie, params, cfg)
    rating = jax.block_until_ready(rating)

    # Independent pure-JAX f32 reference (original per-token softmax structure).
    ref = forward_math(user, movie, params, cfg)
    assert rating.shape == (B, 1)
    assert bool(jnp.all(jnp.isfinite(rating)))
    max_err = float(jnp.max(jnp.abs(rating - ref)))
    # Tolerance re-validated for the bf16 MXU path (f32 accumulation throughout).
    assert max_err < 8e-2, f"mismatch vs reference: {max_err}"

    print("KERNEL_OK")
</pallas_src>

<mosaic_0001>
module attributes {stable_mosaic.version = 11 : i64} {
  func.func @kernel(%arg0: i32, %arg1: memref<64x80xf32, #tpu.memory_space<vmem>>, %arg2: memref<80x512xbf16, #tpu.memory_space<vmem>>, %arg3: memref<1x512xf32, #tpu.memory_space<vmem>>, %arg4: memref<128x32xbf16, #tpu.memory_space<vmem>>, %arg5: memref<1x32xf32, #tpu.memory_space<vmem>>, %arg6: memref<256x128xbf16, #tpu.memory_space<vmem>>, %arg7: memref<2x128xf32, #tpu.memory_space<vmem>>, %arg8: memref<2x128x384xbf16, #tpu.memory_space<vmem>>, %arg9: memref<2x1x384xf32, #tpu.memory_space<vmem>>, %arg10: memref<2x128x128xbf16, #tpu.memory_space<vmem>>, %arg11: memref<2x1x128xf32, #tpu.memory_space<vmem>>, %arg12: memref<2x128x256xbf16, #tpu.memory_space<vmem>>, %arg13: memref<2x1x256xf32, #tpu.memory_space<vmem>>, %arg14: memref<2x256x128xbf16, #tpu.memory_space<vmem>>, %arg15: memref<2x1x128xf32, #tpu.memory_space<vmem>>, %arg16: memref<2x4x128xf32, #tpu.memory_space<vmem>>, %arg17: memref<128x4xbf16, #tpu.memory_space<vmem>>, %arg18: memref<4x128xbf16, #tpu.memory_space<vmem>>, %arg19: memref<128x1xbf16, #tpu.memory_space<vmem>>, %arg20: memref<1x1xf32, #tpu.memory_space<vmem>>, %arg21: memref<288x128xbf16, #tpu.memory_space<vmem>>, %arg22: memref<1x128xf32, #tpu.memory_space<vmem>>, %arg23: memref<128x128xbf16, #tpu.memory_space<vmem>>, %arg24: memref<1x128xf32, #tpu.memory_space<vmem>>, %arg25: memref<64x128xf32, #tpu.memory_space<vmem>>) attributes {dimension_semantics = [#tpu.dimension_semantics<parallel>], iteration_bounds = array<i64: 2>, scalar_prefetch = 0 : i64, scratch_operands = 0 : i64, tpu.core_type = #tpu.core_type<tc>, window_params = [{transform_indices = @transform_0, window_bounds = array<i64: 64, 80>}, {pipeline_mode = #tpu.pipeline_mode<synchronous>, transform_indices = @transform_1, window_bounds = array<i64: 80, 512>}, {pipeline_mode = #tpu.pipeline_mode<synchronous>, transform_indices = @transform_2, window_bounds = array<i64: 1, 512>}, {pipeline_mode = #tpu.pipeline_mode<synchronous>, transform_indices = @transform_3, window_bounds = array<i64: 128, 32>}, {pipeline_mode = #tpu.pipeline_mode<synchronous>, transform_indices = @transform_4, window_bounds = array<i64: 1, 32>}, {pipeline_mode = #tpu.pipeline_mode<synchronous>, transform_indices = @transform_5, window_bounds = array<i64: 256, 128>}, {pipeline_mode = #tpu.pipeline_mode<synchronous>, transform_indices = @transform_6, window_bounds = array<i64: 2, 128>}, {pipeline_mode = #tpu.pipeline_mode<synchronous>, transform_indices = @transform_7, window_bounds = array<i64: 2, 128, 384>}, {pipeline_mode = #tpu.pipeline_mode<synchronous>, transform_indices = @transform_8, window_bounds = array<i64: 2, 1, 384>}, {pipeline_mode = #tpu.pipeline_mode<synchronous>, transform_indices = @transform_9, window_bounds = array<i64: 2, 128, 128>}, {pipeline_mode = #tpu.pipeline_mode<synchronous>, transform_indices = @transform_10, window_bounds = array<i64: 2, 1, 128>}, {pipeline_mode = #tpu.pipeline_mode<synchronous>, transform_indices = @transform_11, window_bounds = array<i64: 2, 128, 256>}, {pipeline_mode = #tpu.pipeline_mode<synchronous>, transform_indices = @transform_12, window_bounds = array<i64: 2, 1, 256>}, {pipeline_mode = #tpu.pipeline_mode<synchronous>, transform_indices = @transform_13, window_bounds = array<i64: 2, 256, 128>}, {pipeline_mode = #tpu.pipeline_mode<synchronous>, transform_indices = @transform_14, window_bounds = array<i64: 2, 1, 128>}, {pipeline_mode = #tpu.pipeline_mode<synchronous>, transform_indices = @transform_15, window_bounds = array<i64: 2, 4, 128>}, {pipeline_mode = #tpu.pipeline_mode<synchronous>, transform_indices = @transform_16, window_bounds = array<i64: 128, 4>}, {pipeline_mode = #tpu.pipeline_mode<synchronous>, transform_indices = @transform_17, window_bounds = array<i64: 4, 128>}, {pipeline_mode = #tpu.pipeline_mode<synchronous>, transform_indices = @transform_18, window_bounds = array<i64: 128, 1>}, {pipeline_mode = #tpu.pipeline_mode<synchronous>, transform_indices = @transform_19, window_bounds = array<i64: 1, 1>}, {pipeline_mode = #tpu.pipeline_mode<synchronous>, transform_indices = @transform_20, window_bounds = array<i64: 288, 128>}, {pipeline_mode = #tpu.pipeline_mode<synchronous>, transform_indices = @transform_21, window_bounds = array<i64: 1, 128>}, {pipeline_mode = #tpu.pipeline_mode<synchronous>, transform_indices = @transform_22, window_bounds = array<i64: 128, 128>}, {pipeline_mode = #tpu.pipeline_mode<synchronous>, transform_indices = @transform_23, window_bounds = array<i64: 1, 128>}, {transform_indices = @transform_24, window_bounds = array<i64: 64, 128>}]} {
    %c0 = arith.constant 0 : index
    %c0_0 = arith.constant 0 : index
    %0 = vector.load %arg1[%c0, %c0_0] : memref<64x80xf32, #tpu.memory_space<vmem>>, vector<64x80xf32>
    %c0_1 = arith.constant 0 : index
    %c0_2 = arith.constant 0 : index
    %1 = vector.load %arg2[%c0_1, %c0_2] : memref<80x512xbf16, #tpu.memory_space<vmem>>, vector<80x512xbf16>
    %2 = arith.truncf %0 : vector<64x80xf32> to vector<64x80xbf16>
    %cst = arith.constant dense<0.000000e+00> : vector<64x512xf32>
    %3 = tpu.matmul %2, %1, %cst {dimension_numbers = #tpu.dot_dimension_numbers<[1], [0], [0], [1], [0, 0, 1, 1], [], []>} : vector<64x80xbf16>, vector<80x512xbf16>, vector<64x512xf32> -> vector<64x512xf32>
    %c0_3 = arith.constant 0 : index
    %c0_4 = arith.constant 0 : index
    %4 = vector.load %arg3[%c0_3, %c0_4] : memref<1x512xf32, #tpu.memory_space<vmem>>, vector<1x512xf32>
    %5 = vector.broadcast %4 : vector<1x512xf32> to vector<64x512xf32>
    %6 = arith.addf %3, %5 : vector<64x512xf32>
    %7 = vector.extract_strided_slice %6 {offsets = [0, 0], sizes = [64, 128], strides = [1, 1]} : vector<64x512xf32> to vector<64x128xf32>
    %cst_5 = arith.constant 0.000000e+00 : f32
    %8 = vector.broadcast %cst_5 : f32 to vector<64x128xf32>
    %9 = arith.maximumf %7, %8 : vector<64x128xf32>
    %10 = vector.extract_strided_slice %6 {offsets = [0, 128], sizes = [64, 128], strides = [1, 1]} : vector<64x512xf32> to vector<64x128xf32>
    %cst_6 = arith.constant 0.000000e+00 : f32
    %11 = vector.broadcast %cst_6 : f32 to vector<64x128xf32>
    %12 = arith.maximumf %10, %11 : vector<64x128xf32>
    %13 = arith.addf %9, %12 : vector<64x128xf32>
    %14 = vector.extract_strided_slice %6 {offsets = [0, 256], sizes = [64, 128], strides = [1, 1]} : vector<64x512xf32> to vector<64x128xf32>
    %15 = vector.extract_strided_slice %6 {offsets = [0, 384], sizes = [64, 128], strides = [1, 1]} : vector<64x512xf32> to vector<64x128xf32>
    %16 = arith.mulf %14, %14 : vector<64x128xf32>
    %17 = arith.subf %16, %15 : vector<64x128xf32>
    %cst_7 = arith.constant 5.000000e-01 : f32
    %18 = vector.broadcast %cst_7 : f32 to vector<64x128xf32>
    %19 = arith.mulf %18, %17 : vector<64x128xf32>
    %c0_8 = arith.constant 0 : index
    %c0_9 = arith.constant 0 : index
    %20 = vector.load %arg4[%c0_8, %c0_9] : memref<128x32xbf16, #tpu.memory_space<vmem>>, vector<128x32xbf16>
    %21 = arith.truncf %19 : vector<64x128xf32> to vector<64x128xbf16>
    %cst_10 = arith.constant dense<0.000000e+00> : vector<64x32xf32>
    %22 = tpu.matmul %21, %20, %cst_10 {dimension_numbers = #tpu.dot_dimension_numbers<[1], [0], [0], [1], [0, 0, 1, 1], [], []>} : vector<64x128xbf16>, vector<128x32xbf16>, vector<64x32xf32> -> vector<64x32xf32>
    %c0_11 = arith.constant 0 : index
    %c0_12 = arith.constant 0 : index
    %23 = vector.load %arg5[%c0_11, %c0_12] : memref<1x32xf32, #tpu.memory_space<vmem>>, vector<1x32xf32>
    %24 = vector.broadcast %23 : vector<1x32xf32> to vector<64x32xf32>
    %25 = arith.addf %22, %24 : vector<64x32xf32>
    %cst_13 = arith.constant 0.000000e+00 : f32
    %26 = vector.broadcast %cst_13 : f32 to vector<64x32xf32>
    %27 = arith.maximumf %25, %26 : vector<64x32xf32>
    %c0_14 = arith.constant 0 : index
    %c0_15 = arith.constant 0 : index
    %28 = vector.load %arg6[%c0_14, %c0_15] : memref<256x128xbf16, #tpu.memory_space<vmem>>, vector<256x128xbf16>
    %c0_16 = arith.constant 0 : index
    %c0_17 = arith.constant 0 : index
    %29 = vector.load %arg7[%c0_16, %c0_17] : memref<2x128xf32, #tpu.memory_space<vmem>>, vector<2x128xf32>
    %30 = vector.extract_strided_slice %28 {offsets = [0, 0], sizes = [128, 128], strides = [1, 1]} : vector<256x128xbf16> to vector<128x128xbf16>
    %31 = arith.truncf %9 : vector<64x128xf32> to vector<64x128xbf16>
    %cst_18 = arith.constant dense<0.000000e+00> : vector<64x128xf32>
    %32 = tpu.matmul %31, %30, %cst_18 {dimension_numbers = #tpu.dot_dimension_numbers<[1], [0], [0], [1], [0, 0, 1, 1], [], []>} : vector<64x128xbf16>, vector<128x128xbf16>, vector<64x128xf32> -> vector<64x128xf32>
    %33 = vector.extract_strided_slice %29 {offsets = [0, 0], sizes = [1, 128], strides = [1, 1]} : vector<2x128xf32> to vector<1x128xf32>
    %34 = vector.broadcast %33 : vector<1x128xf32> to vector<64x128xf32>
    %35 = arith.addf %32, %34 : vector<64x128xf32>
    %36 = vector.extract_strided_slice %28 {offsets = [128, 0], sizes = [128, 128], strides = [1, 1]} : vector<256x128xbf16> to vector<128x128xbf16>
    %37 = arith.truncf %12 : vector<64x128xf32> to vector<64x128xbf16>
    %cst_19 = arith.constant dense<0.000000e+00> : vector<64x128xf32>
    %38 = tpu.matmul %37, %36, %cst_19 {dimension_numbers = #tpu.dot_dimension_numbers<[1], [0], [0], [1], [0, 0, 1, 1], [], []>} : vector<64x128xbf16>, vector<128x128xbf16>, vector<64x128xf32> -> vector<64x128xf32>
    %39 = vector.extract_strided_slice %29 {offsets = [1, 0], sizes = [1, 128], strides = [1, 1]} : vector<2x128xf32> to vector<1x128xf32>
    %40 = vector.broadcast %39 : vector<1x128xf32> to vector<64x128xf32>
    %41 = arith.addf %38, %40 : vector<64x128xf32>
    %42 = tpu.concatenate %35, %41 in 0 : vector<64x128xf32>, vector<64x128xf32> -> vector<128x128xf32>
    %c0_20 = arith.constant 0 : index
    %c0_21 = arith.constant 0 : index
    %43 = vector.load %arg17[%c0_20, %c0_21] : memref<128x4xbf16, #tpu.memory_space<vmem>>, vector<128x4xbf16>
    %c0_22 = arith.constant 0 : index
    %c0_23 = arith.constant 0 : index
    %44 = vector.load %arg18[%c0_22, %c0_23] : memref<4x128xbf16, #tpu.memory_space<vmem>>, vector<4x128xbf16>
    %c0_24 = arith.constant 0 : index
    %c0_25 = arith.constant 0 : index
    %c0_26 = arith.constant 0 : index
    %45 = vector.load %arg8[%c0_24, %c0_25, %c0_26] : memref<2x128x384xbf16, #tpu.memory_space<vmem>>, vector<1x128x384xbf16>
    %46 = vector.shape_cast %45 : vector<1x128x384xbf16> to vector<128x384xbf16>
    %47 = arith.truncf %42 : vector<128x128xf32> to vector<128x128xbf16>
    %cst_27 = arith.constant dense<0.000000e+00> : vector<128x384xf32>
    %48 = tpu.matmul %47, %46, %cst_27 {dimension_numbers = #tpu.dot_dimension_numbers<[1], [0], [0], [1], [0, 0, 1, 1], [], []>} : vector<128x128xbf16>, vector<128x384xbf16>, vector<128x384xf32> -> vector<128x384xf32>
    %c0_28 = arith.constant 0 : index
    %c0_29 = arith.constant 0 : index
    %c0_30 = arith.constant 0 : index
    %49 = vector.load %arg9[%c0_28, %c0_29, %c0_30] : memref<2x1x384xf32, #tpu.memory_space<vmem>>, vector<1x1x384xf32>
    %50 = vector.shape_cast %49 : vector<1x1x384xf32> to vector<1x384xf32>
    %51 = vector.broadcast %50 : vector<1x384xf32> to vector<128x384xf32>
    %52 = arith.addf %48, %51 : vector<128x384xf32>
    %53 = vector.extract_strided_slice %52 {offsets = [0, 0], sizes = [128, 128], strides = [1, 1]} : vector<128x384xf32> to vector<128x128xf32>
    %54 = vector.extract_strided_slice %52 {offsets = [0, 128], sizes = [128, 128], strides = [1, 1]} : vector<128x384xf32> to vector<128x128xf32>
    %55 = vector.extract_strided_slice %52 {offsets = [0, 256], sizes = [128, 128], strides = [1, 1]} : vector<128x384xf32> to vector<128x128xf32>
    %c64_i32 = arith.constant 64 : i32
    %56 = tpu.dynamic_rotate %54 by %c64_i32 dim 0 : vector<128x128xf32>, i32 -> vector<128x128xf32>
    %c64_i32_31 = arith.constant 64 : i32
    %57 = tpu.dynamic_rotate %55 by %c64_i32_31 dim 0 : vector<128x128xf32>, i32 -> vector<128x128xf32>
    %58 = arith.subf %54, %56 : vector<128x128xf32>
    %59 = arith.mulf %53, %58 : vector<128x128xf32>
    %60 = arith.truncf %59 : vector<128x128xf32> to vector<128x128xbf16>
    %cst_32 = arith.constant dense<0.000000e+00> : vector<128x4xf32>
    %61 = tpu.matmul %60, %43, %cst_32 {dimension_numbers = #tpu.dot_dimension_numbers<[1], [0], [0], [1], [0, 0, 1, 1], [], []>} : vector<128x128xbf16>, vector<128x4xbf16>, vector<128x4xf32> -> vector<128x4xf32>
    %cst_33 = arith.constant 0.000000e+00 : f32
    %62 = vector.broadcast %cst_33 : f32 to vector<128x4xf32>
    %63 = arith.subf %62, %61 : vector<128x4xf32>
    %64 = math.exp %63 : vector<128x4xf32>
    %cst_34 = arith.constant 1.000000e+00 : f32
    %65 = vector.broadcast %cst_34 : f32 to vector<128x4xf32>
    %66 = arith.addf %65, %64 : vector<128x4xf32>
    %67 = tpu.reciprocal %66 {approx = true} : vector<128x4xf32> -> vector<128x4xf32>
    %68 = arith.truncf %67 : vector<128x4xf32> to vector<128x4xbf16>
    %cst_35 = arith.constant dense<0.000000e+00> : vector<128x128xf32>
    %69 = tpu.matmul %68, %44, %cst_35 {dimension_numbers = #tpu.dot_dimension_numbers<[1], [0], [0], [1], [0, 0, 1, 1], [], []>} : vector<128x4xbf16>, vector<4x128xbf16>, vector<128x128xf32> -> vector<128x128xf32>
    %70 = arith.subf %55, %57 : vector<128x128xf32>
    %71 = arith.mulf %69, %70 : vector<128x128xf32>
    %72 = arith.addf %57, %71 : vector<128x128xf32>
    %c0_36 = arith.constant 0 : index
    %c0_37 = arith.constant 0 : index
    %c0_38 = arith.constant 0 : index
    %73 = vector.load %arg10[%c0_36, %c0_37, %c0_38] : memref<2x128x128xbf16, #tpu.memory_space<vmem>>, vector<1x128x128xbf16>
    %74 = vector.shape_cast %73 : vector<1x128x128xbf16> to vector<128x128xbf16>
    %75 = arith.truncf %72 : vector<128x128xf32> to vector<128x128xbf16>
    %cst_39 = arith.constant dense<0.000000e+00> : vector<128x128xf32>
    %76 = tpu.matmul %75, %74, %cst_39 {dimension_numbers = #tpu.dot_dimension_numbers<[1], [0], [0], [1], [0, 0, 1, 1], [], []>} : vector<128x128xbf16>, vector<128x128xbf16>, vector<128x128xf32> -> vector<128x128xf32>
    %c0_40 = arith.constant 0 : index
    %c0_41 = arith.constant 0 : index
    %c0_42 = arith.constant 0 : index
    %77 = vector.load %arg11[%c0_40, %c0_41, %c0_42] : memref<2x1x128xf32, #tpu.memory_space<vmem>>, vector<1x1x128xf32>
    %78 = vector.shape_cast %77 : vector<1x1x128xf32> to vector<1x128xf32>
    %79 = vector.broadcast %78 : vector<1x128xf32> to vector<128x128xf32>
    %80 = arith.addf %76, %79 : vector<128x128xf32>
    %c0_43 = arith.constant 0 : index
    %c0_44 = arith.constant 0 : index
    %c0_45 = arith.constant 0 : index
    %81 = vector.load %arg16[%c0_43, %c0_44, %c0_45] : memref<2x4x128xf32, #tpu.memory_space<vmem>>, vector<1x4x128xf32>
    %82 = vector.shape_cast %81 : vector<1x4x128xf32> to vector<4x128xf32>
    %83 = arith.addf %42, %80 : vector<128x128xf32>
    %84 = vector.extract_strided_slice %82 {offsets = [0, 0], sizes = [1, 128], strides = [1, 1]} : vector<4x128xf32> to vector<1x128xf32>
    %85 = vector.extract_strided_slice %82 {offsets = [1, 0], sizes = [1, 128], strides = [1, 1]} : vector<4x128xf32> to vector<1x128xf32>
    %cst_46 = arith.constant dense<0.000000e+00> : vector<128xf32>
    %86 = vector.multi_reduction <add>, %83, %cst_46 [1] : vector<128x128xf32> to vector<128xf32>
    %87 = vector.shape_cast %86 : vector<128xf32> to vector<128x1xf32>
    %cst_47 = arith.constant 1.280000e+02 : f32
    %88 = vector.broadcast %cst_47 : f32 to vector<128x1xf32>
    %89 = arith.divf %87, %88 : vector<128x1xf32>
    %90 = vector.broadcast %89 : vector<128x1xf32> to vector<128x128xf32>
    %91 = arith.subf %83, %90 : vector<128x128xf32>
    %92 = arith.mulf %91, %91 : vector<128x128xf32>
    %cst_48 = arith.constant dense<0.000000e+00> : vector<128xf32>
    %93 = vector.multi_reduction <add>, %92, %cst_48 [1] : vector<128x128xf32> to vector<128xf32>
    %94 = vector.shape_cast %93 : vector<128xf32> to vector<128x1xf32>
    %cst_49 = arith.constant 1.280000e+02 : f32
    %95 = vector.broadcast %cst_49 : f32 to vector<128x1xf32>
    %96 = arith.divf %94, %95 : vector<128x1xf32>
    %97 = vector.broadcast %89 : vector<128x1xf32> to vector<128x128xf32>
    %98 = arith.subf %83, %97 : vector<128x128xf32>
    %cst_50 = arith.constant 9.99999974E-6 : f32
    %99 = vector.broadcast %cst_50 : f32 to vector<128x1xf32>
    %100 = arith.addf %96, %99 : vector<128x1xf32>
    %101 = math.rsqrt %100 : vector<128x1xf32>
    %102 = vector.broadcast %101 : vector<128x1xf32> to vector<128x128xf32>
    %103 = arith.mulf %98, %102 : vector<128x128xf32>
    %104 = vector.broadcast %84 : vector<1x128xf32> to vector<128x128xf32>
    %105 = arith.mulf %103, %104 : vector<128x128xf32>
    %106 = vector.broadcast %85 : vector<1x128xf32> to vector<128x128xf32>
    %107 = arith.addf %105, %106 : vector<128x128xf32>
    %c0_51 = arith.constant 0 : index
    %c0_52 = arith.constant 0 : index
    %c0_53 = arith.constant 0 : index
    %108 = vector.load %arg12[%c0_51, %c0_52, %c0_53] : memref<2x128x256xbf16, #tpu.memory_space<vmem>>, vector<1x128x256xbf16>
    %109 = vector.shape_cast %108 : vector<1x128x256xbf16> to vector<128x256xbf16>
    %110 = arith.truncf %107 : vector<128x128xf32> to vector<128x128xbf16>
    %cst_54 = arith.constant dense<0.000000e+00> : vector<128x256xf32>
    %111 = tpu.matmul %110, %109, %cst_54 {dimension_numbers = #tpu.dot_dimension_numbers<[1], [0], [0], [1], [0, 0, 1, 1], [], []>} : vector<128x128xbf16>, vector<128x256xbf16>, vector<128x256xf32> -> vector<128x256xf32>
    %c0_55 = arith.constant 0 : index
    %c0_56 = arith.constant 0 : index
    %c0_57 = arith.constant 0 : index
    %112 = vector.load %arg13[%c0_55, %c0_56, %c0_57] : memref<2x1x256xf32, #tpu.memory_space<vmem>>, vector<1x1x256xf32>
    %113 = vector.shape_cast %112 : vector<1x1x256xf32> to vector<1x256xf32>
    %114 = vector.broadcast %113 : vector<1x256xf32> to vector<128x256xf32>
    %115 = arith.addf %111, %114 : vector<128x256xf32>
    %cst_58 = arith.constant 0.000000e+00 : f32
    %116 = vector.broadcast %cst_58 : f32 to vector<128x256xf32>
    %117 = arith.maximumf %115, %116 : vector<128x256xf32>
    %c0_59 = arith.constant 0 : index
    %c0_60 = arith.constant 0 : index
    %c0_61 = arith.constant 0 : index
    %118 = vector.load %arg14[%c0_59, %c0_60, %c0_61] : memref<2x256x128xbf16, #tpu.memory_space<vmem>>, vector<1x256x128xbf16>
    %119 = vector.shape_cast %118 : vector<1x256x128xbf16> to vector<256x128xbf16>
    %120 = arith.truncf %117 : vector<128x256xf32> to vector<128x256xbf16>
    %cst_62 = arith.constant dense<0.000000e+00> : vector<128x128xf32>
    %121 = tpu.matmul %120, %119, %cst_62 {dimension_numbers = #tpu.dot_dimension_numbers<[1], [0], [0], [1], [0, 0, 1, 1], [], []>} : vector<128x256xbf16>, vector<256x128xbf16>, vector<128x128xf32> -> vector<128x128xf32>
    %c0_63 = arith.constant 0 : index
    %c0_64 = arith.constant 0 : index
    %c0_65 = arith.constant 0 : index
    %122 = vector.load %arg15[%c0_63, %c0_64, %c0_65] : memref<2x1x128xf32, #tpu.memory_space<vmem>>, vector<1x1x128xf32>
    %123 = vector.shape_cast %122 : vector<1x1x128xf32> to vector<1x128xf32>
    %124 = vector.broadcast %123 : vector<1x128xf32> to vector<128x128xf32>
    %125 = arith.addf %121, %124 : vector<128x128xf32>
    %126 = arith.addf %107, %125 : vector<128x128xf32>
    %127 = vector.extract_strided_slice %82 {offsets = [2, 0], sizes = [1, 128], strides = [1, 1]} : vector<4x128xf32> to vector<1x128xf32>
    %128 = vector.extract_strided_slice %82 {offsets = [3, 0], sizes = [1, 128], strides = [1, 1]} : vector<4x128xf32> to vector<1x128xf32>
    %cst_66 = arith.constant dense<0.000000e+00> : vector<128xf32>
    %129 = vector.multi_reduction <add>, %126, %cst_66 [1] : vector<128x128xf32> to vector<128xf32>
    %130 = vector.shape_cast %129 : vector<128xf32> to vector<128x1xf32>
    %cst_67 = arith.constant 1.280000e+02 : f32
    %131 = vector.broadcast %cst_67 : f32 to vector<128x1xf32>
    %132 = arith.divf %130, %131 : vector<128x1xf32>
    %133 = vector.broadcast %132 : vector<128x1xf32> to vector<128x128xf32>
    %134 = arith.subf %126, %133 : vector<128x128xf32>
    %135 = arith.mulf %134, %134 : vector<128x128xf32>
    %cst_68 = arith.constant dense<0.000000e+00> : vector<128xf32>
    %136 = vector.multi_reduction <add>, %135, %cst_68 [1] : vector<128x128xf32> to vector<128xf32>
    %137 = vector.shape_cast %136 : vector<128xf32> to vector<128x1xf32>
    %cst_69 = arith.constant 1.280000e+02 : f32
    %138 = vector.broadcast %cst_69 : f32 to vector<128x1xf32>
    %139 = arith.divf %137, %138 : vector<128x1xf32>
    %140 = vector.broadcast %132 : vector<128x1xf32> to vector<128x128xf32>
    %141 = arith.subf %126, %140 : vector<128x128xf32>
    %cst_70 = arith.constant 9.99999974E-6 : f32
    %142 = vector.broadcast %cst_70 : f32 to vector<128x1xf32>
    %143 = arith.addf %139, %142 : vector<128x1xf32>
    %144 = math.rsqrt %143 : vector<128x1xf32>
    %145 = vector.broadcast %144 : vector<128x1xf32> to vector<128x128xf32>
    %146 = arith.mulf %141, %145 : vector<128x128xf32>
    %147 = vector.broadcast %127 : vector<1x128xf32> to vector<128x128xf32>
    %148 = arith.mulf %146, %147 : vector<128x128xf32>
    %149 = vector.broadcast %128 : vector<1x128xf32> to vector<128x128xf32>
    %150 = arith.addf %148, %149 : vector<128x128xf32>
    %c1 = arith.constant 1 : index
    %c0_71 = arith.constant 0 : index
    %c0_72 = arith.constant 0 : index
    %151 = vector.load %arg8[%c1, %c0_71, %c0_72] : memref<2x128x384xbf16, #tpu.memory_space<vmem>>, vector<1x128x384xbf16>
    %152 = vector.shape_cast %151 : vector<1x128x384xbf16> to vector<128x384xbf16>
    %153 = arith.truncf %150 : vector<128x128xf32> to vector<128x128xbf16>
    %cst_73 = arith.constant dense<0.000000e+00> : vector<128x384xf32>
    %154 = tpu.matmul %153, %152, %cst_73 {dimension_numbers = #tpu.dot_dimension_numbers<[1], [0], [0], [1], [0, 0, 1, 1], [], []>} : vector<128x128xbf16>, vector<128x384xbf16>, vector<128x384xf32> -> vector<128x384xf32>
    %c1_74 = arith.constant 1 : index
    %c0_75 = arith.constant 0 : index
    %c0_76 = arith.constant 0 : index
    %155 = vector.load %arg9[%c1_74, %c0_75, %c0_76] : memref<2x1x384xf32, #tpu.memory_space<vmem>>, vector<1x1x384xf32>
    %156 = vector.shape_cast %155 : vector<1x1x384xf32> to vector<1x384xf32>
    %157 = vector.broadcast %156 : vector<1x384xf32> to vector<128x384xf32>
    %158 = arith.addf %154, %157 : vector<128x384xf32>
    %159 = vector.extract_strided_slice %158 {offsets = [0, 0], sizes = [128, 128], strides = [1, 1]} : vector<128x384xf32> to vector<128x128xf32>
    %160 = vector.extract_strided_slice %158 {offsets = [0, 128], sizes = [128, 128], strides = [1, 1]} : vector<128x384xf32> to vector<128x128xf32>
    %161 = vector.extract_strided_slice %158 {offsets = [0, 256], sizes = [128, 128], strides = [1, 1]} : vector<128x384xf32> to vector<128x128xf32>
    %c64_i32_77 = arith.constant 64 : i32
    %162 = tpu.dynamic_rotate %160 by %c64_i32_77 dim 0 : vector<128x128xf32>, i32 -> vector<128x128xf32>
    %c64_i32_78 = arith.constant 64 : i32
    %163 = tpu.dynamic_rotate %161 by %c64_i32_78 dim 0 : vector<128x128xf32>, i32 -> vector<128x128xf32>
    %164 = arith.subf %160, %162 : vector<128x128xf32>
    %165 = arith.mulf %159, %164 : vector<128x128xf32>
    %166 = arith.truncf %165 : vector<128x128xf32> to vector<128x128xbf16>
    %cst_79 = arith.constant dense<0.000000e+00> : vector<128x4xf32>
    %167 = tpu.matmul %166, %43, %cst_79 {dimension_numbers = #tpu.dot_dimension_numbers<[1], [0], [0], [1], [0, 0, 1, 1], [], []>} : vector<128x128xbf16>, vector<128x4xbf16>, vector<128x4xf32> -> vector<128x4xf32>
    %cst_80 = arith.constant 0.000000e+00 : f32
    %168 = vector.broadcast %cst_80 : f32 to vector<128x4xf32>
    %169 = arith.subf %168, %167 : vector<128x4xf32>
    %170 = math.exp %169 : vector<128x4xf32>
    %cst_81 = arith.constant 1.000000e+00 : f32
    %171 = vector.broadcast %cst_81 : f32 to vector<128x4xf32>
    %172 = arith.addf %171, %170 : vector<128x4xf32>
    %173 = tpu.reciprocal %172 {approx = true} : vector<128x4xf32> -> vector<128x4xf32>
    %174 = arith.truncf %173 : vector<128x4xf32> to vector<128x4xbf16>
    %cst_82 = arith.constant dense<0.000000e+00> : vector<128x128xf32>
    %175 = tpu.matmul %174, %44, %cst_82 {dimension_numbers = #tpu.dot_dimension_numbers<[1], [0], [0], [1], [0, 0, 1, 1], [], []>} : vector<128x4xbf16>, vector<4x128xbf16>, vector<128x128xf32> -> vector<128x128xf32>
    %176 = arith.subf %161, %163 : vector<128x128xf32>
    %177 = arith.mulf %175, %176 : vector<128x128xf32>
    %178 = arith.addf %163, %177 : vector<128x128xf32>
    %c1_83 = arith.constant 1 : index
    %c0_84 = arith.constant 0 : index
    %c0_85 = arith.constant 0 : index
    %179 = vector.load %arg10[%c1_83, %c0_84, %c0_85] : memref<2x128x128xbf16, #tpu.memory_space<vmem>>, vector<1x128x128xbf16>
    %180 = vector.shape_cast %179 : vector<1x128x128xbf16> to vector<128x128xbf16>
    %181 = arith.truncf %178 : vector<128x128xf32> to vector<128x128xbf16>
    %cst_86 = arith.constant dense<0.000000e+00> : vector<128x128xf32>
    %182 = tpu.matmul %181, %180, %cst_86 {dimension_numbers = #tpu.dot_dimension_numbers<[1], [0], [0], [1], [0, 0, 1, 1], [], []>} : vector<128x128xbf16>, vector<128x128xbf16>, vector<128x128xf32> -> vector<128x128xf32>
    %c1_87 = arith.constant 1 : index
    %c0_88 = arith.constant 0 : index
    %c0_89 = arith.constant 0 : index
    %183 = vector.load %arg11[%c1_87, %c0_88, %c0_89] : memref<2x1x128xf32, #tpu.memory_space<vmem>>, vector<1x1x128xf32>
    %184 = vector.shape_cast %183 : vector<1x1x128xf32> to vector<1x128xf32>
    %185 = vector.broadcast %184 : vector<1x128xf32> to vector<128x128xf32>
    %186 = arith.addf %182, %185 : vector<128x128xf32>
    %c1_90 = arith.constant 1 : index
    %c0_91 = arith.constant 0 : index
    %c0_92 = arith.constant 0 : index
    %187 = vector.load %arg16[%c1_90, %c0_91, %c0_92] : memref<2x4x128xf32, #tpu.memory_space<vmem>>, vector<1x4x128xf32>
    %188 = vector.shape_cast %187 : vector<1x4x128xf32> to vector<4x128xf32>
    %189 = arith.addf %150, %186 : vector<128x128xf32>
    %190 = vector.extract_strided_slice %188 {offsets = [0, 0], sizes = [1, 128], strides = [1, 1]} : vector<4x128xf32> to vector<1x128xf32>
    %191 = vector.extract_strided_slice %188 {offsets = [1, 0], sizes = [1, 128], strides = [1, 1]} : vector<4x128xf32> to vector<1x128xf32>
    %cst_93 = arith.constant dense<0.000000e+00> : vector<128xf32>
    %192 = vector.multi_reduction <add>, %189, %cst_93 [1] : vector<128x128xf32> to vector<128xf32>
    %193 = vector.shape_cast %192 : vector<128xf32> to vector<128x1xf32>
    %cst_94 = arith.constant 1.280000e+02 : f32
    %194 = vector.broadcast %cst_94 : f32 to vector<128x1xf32>
    %195 = arith.divf %193, %194 : vector<128x1xf32>
    %196 = vector.broadcast %195 : vector<128x1xf32> to vector<128x128xf32>
    %197 = arith.subf %189, %196 : vector<128x128xf32>
    %198 = arith.mulf %197, %197 : vector<128x128xf32>
    %cst_95 = arith.constant dense<0.000000e+00> : vector<128xf32>
    %199 = vector.multi_reduction <add>, %198, %cst_95 [1] : vector<128x128xf32> to vector<128xf32>
    %200 = vector.shape_cast %199 : vector<128xf32> to vector<128x1xf32>
    %cst_96 = arith.constant 1.280000e+02 : f32
    %201 = vector.broadcast %cst_96 : f32 to vector<128x1xf32>
    %202 = arith.divf %200, %201 : vector<128x1xf32>
    %203 = vector.broadcast %195 : vector<128x1xf32> to vector<128x128xf32>
    %204 = arith.subf %189, %203 : vector<128x128xf32>
    %cst_97 = arith.constant 9.99999974E-6 : f32
    %205 = vector.broadcast %cst_97 : f32 to vector<128x1xf32>
    %206 = arith.addf %202, %205 : vector<128x1xf32>
    %207 = math.rsqrt %206 : vector<128x1xf32>
    %208 = vector.broadcast %207 : vector<128x1xf32> to vector<128x128xf32>
    %209 = arith.mulf %204, %208 : vector<128x128xf32>
    %210 = vector.broadcast %190 : vector<1x128xf32> to vector<128x128xf32>
    %211 = arith.mulf %209, %210 : vector<128x128xf32>
    %212 = vector.broadcast %191 : vector<1x128xf32> to vector<128x128xf32>
    %213 = arith.addf %211, %212 : vector<128x128xf32>
    %c1_98 = arith.constant 1 : index
    %c0_99 = arith.constant 0 : index
    %c0_100 = arith.constant 0 : index
    %214 = vector.load %arg12[%c1_98, %c0_99, %c0_100] : memref<2x128x256xbf16, #tpu.memory_space<vmem>>, vector<1x128x256xbf16>
    %215 = vector.shape_cast %214 : vector<1x128x256xbf16> to vector<128x256xbf16>
    %216 = arith.truncf %213 : vector<128x128xf32> to vector<128x128xbf16>
    %cst_101 = arith.constant dense<0.000000e+00> : vector<128x256xf32>
    %217 = tpu.matmul %216, %215, %cst_101 {dimension_numbers = #tpu.dot_dimension_numbers<[1], [0], [0], [1], [0, 0, 1, 1], [], []>} : vector<128x128xbf16>, vector<128x256xbf16>, vector<128x256xf32> -> vector<128x256xf32>
    %c1_102 = arith.constant 1 : index
    %c0_103 = arith.constant 0 : index
    %c0_104 = arith.constant 0 : index
    %218 = vector.load %arg13[%c1_102, %c0_103, %c0_104] : memref<2x1x256xf32, #tpu.memory_space<vmem>>, vector<1x1x256xf32>
    %219 = vector.shape_cast %218 : vector<1x1x256xf32> to vector<1x256xf32>
    %220 = vector.broadcast %219 : vector<1x256xf32> to vector<128x256xf32>
    %221 = arith.addf %217, %220 : vector<128x256xf32>
    %cst_105 = arith.constant 0.000000e+00 : f32
    %222 = vector.broadcast %cst_105 : f32 to vector<128x256xf32>
    %223 = arith.maximumf %221, %222 : vector<128x256xf32>
    %c1_106 = arith.constant 1 : index
    %c0_107 = arith.constant 0 : index
    %c0_108 = arith.constant 0 : index
    %224 = vector.load %arg14[%c1_106, %c0_107, %c0_108] : memref<2x256x128xbf16, #tpu.memory_space<vmem>>, vector<1x256x128xbf16>
    %225 = vector.shape_cast %224 : vector<1x256x128xbf16> to vector<256x128xbf16>
    %226 = arith.truncf %223 : vector<128x256xf32> to vector<128x256xbf16>
    %cst_109 = arith.constant dense<0.000000e+00> : vector<128x128xf32>
    %227 = tpu.matmul %226, %225, %cst_109 {dimension_numbers = #tpu.dot_dimension_numbers<[1], [0], [0], [1], [0, 0, 1, 1], [], []>} : vector<128x256xbf16>, vector<256x128xbf16>, vector<128x128xf32> -> vector<128x128xf32>
    %c1_110 = arith.constant 1 : index
    %c0_111 = arith.constant 0 : index
    %c0_112 = arith.constant 0 : index
    %228 = vector.load %arg15[%c1_110, %c0_111, %c0_112] : memref<2x1x128xf32, #tpu.memory_space<vmem>>, vector<1x1x128xf32>
    %229 = vector.shape_cast %228 : vector<1x1x128xf32> to vector<1x128xf32>
    %230 = vector.broadcast %229 : vector<1x128xf32> to vector<128x128xf32>
    %231 = arith.addf %227, %230 : vector<128x128xf32>
    %232 = arith.addf %213, %231 : vector<128x128xf32>
    %233 = vector.extract_strided_slice %188 {offsets = [2, 0], sizes = [1, 128], strides = [1, 1]} : vector<4x128xf32> to vector<1x128xf32>
    %234 = vector.extract_strided_slice %188 {offsets = [3, 0], sizes = [1, 128], strides = [1, 1]} : vector<4x128xf32> to vector<1x128xf32>
    %cst_113 = arith.constant dense<0.000000e+00> : vector<128xf32>
    %235 = vector.multi_reduction <add>, %232, %cst_113 [1] : vector<128x128xf32> to vector<128xf32>
    %236 = vector.shape_cast %235 : vector<128xf32> to vector<128x1xf32>
    %cst_114 = arith.constant 1.280000e+02 : f32
    %237 = vector.broadcast %cst_114 : f32 to vector<128x1xf32>
    %238 = arith.divf %236, %237 : vector<128x1xf32>
    %239 = vector.broadcast %238 : vector<128x1xf32> to vector<128x128xf32>
    %240 = arith.subf %232, %239 : vector<128x128xf32>
    %241 = arith.mulf %240, %240 : vector<128x128xf32>
    %cst_115 = arith.constant dense<0.000000e+00> : vector<128xf32>
    %242 = vector.multi_reduction <add>, %241, %cst_115 [1] : vector<128x128xf32> to vector<128xf32>
    %243 = vector.shape_cast %242 : vector<128xf32> to vector<128x1xf32>
    %cst_116 = arith.constant 1.280000e+02 : f32
    %244 = vector.broadcast %cst_116 : f32 to vector<128x1xf32>
    %245 = arith.divf %243, %244 : vector<128x1xf32>
    %246 = vector.broadcast %238 : vector<128x1xf32> to vector<128x128xf32>
    %247 = arith.subf %232, %246 : vector<128x128xf32>
    %cst_117 = arith.constant 9.99999974E-6 : f32
    %248 = vector.broadcast %cst_117 : f32 to vector<128x1xf32>
    %249 = arith.addf %245, %248 : vector<128x1xf32>
    %250 = math.rsqrt %249 : vector<128x1xf32>
    %251 = vector.broadcast %250 : vector<128x1xf32> to vector<128x128xf32>
    %252 = arith.mulf %247, %251 : vector<128x128xf32>
    %253 = vector.broadcast %233 : vector<1x128xf32> to vector<128x128xf32>
    %254 = arith.mulf %252, %253 : vector<128x128xf32>
    %255 = vector.broadcast %234 : vector<1x128xf32> to vector<128x128xf32>
    %256 = arith.addf %254, %255 : vector<128x128xf32>
    %c0_118 = arith.constant 0 : index
    %c0_119 = arith.constant 0 : index
    %257 = vector.load %arg19[%c0_118, %c0_119] : memref<128x1xbf16, #tpu.memory_space<vmem>>, vector<128x1xbf16>
    %258 = arith.truncf %256 : vector<128x128xf32> to vector<128x128xbf16>
    %cst_120 = arith.constant dense<0.000000e+00> : vector<128x1xf32>
    %259 = tpu.matmul %258, %257, %cst_120 {dimension_numbers = #tpu.dot_dimension_numbers<[1], [0], [0], [1], [0, 0, 1, 1], [], []>} : vector<128x128xbf16>, vector<128x1xbf16>, vector<128x1xf32> -> vector<128x1xf32>
    %c0_121 = arith.constant 0 : index
    %c0_122 = arith.constant 0 : index
    %260 = vector.load %arg20[%c0_121, %c0_122] : memref<1x1xf32, #tpu.memory_space<vmem>>, vector<1x1xf32>
    %261 = vector.broadcast %260 : vector<1x1xf32> to vector<128x1xf32>
    %262 = arith.addf %259, %261 : vector<128x1xf32>
    %263 = vector.extract_strided_slice %262 {offsets = [0, 0], sizes = [64, 1], strides = [1, 1]} : vector<128x1xf32> to vector<64x1xf32>
    %264 = vector.extract_strided_slice %262 {offsets = [64, 0], sizes = [64, 1], strides = [1, 1]} : vector<128x1xf32> to vector<64x1xf32>
    %265 = arith.subf %263, %264 : vector<64x1xf32>
    %cst_123 = arith.constant 0.000000e+00 : f32
    %266 = vector.broadcast %cst_123 : f32 to vector<64x1xf32>
    %267 = arith.subf %266, %265 : vector<64x1xf32>
    %268 = math.exp %267 : vector<64x1xf32>
    %cst_124 = arith.constant 1.000000e+00 : f32
    %269 = vector.broadcast %cst_124 : f32 to vector<64x1xf32>
    %270 = arith.addf %269, %268 : vector<64x1xf32>
    %271 = tpu.reciprocal %270 {approx = true} : vector<64x1xf32> -> vector<64x1xf32>
    %272 = vector.extract_strided_slice %256 {offsets = [64, 0], sizes = [64, 128], strides = [1, 1]} : vector<128x128xf32> to vector<64x128xf32>
    %273 = vector.extract_strided_slice %256 {offsets = [0, 0], sizes = [64, 128], strides = [1, 1]} : vector<128x128xf32> to vector<64x128xf32>
    %274 = vector.extract_strided_slice %256 {offsets = [64, 0], sizes = [64, 128], strides = [1, 1]} : vector<128x128xf32> to vector<64x128xf32>
    %275 = arith.subf %273, %274 : vector<64x128xf32>
    %276 = vector.broadcast %271 : vector<64x1xf32> to vector<64x128xf32>
    %277 = arith.mulf %276, %275 : vector<64x128xf32>
    %278 = arith.addf %272, %277 : vector<64x128xf32>
    %c0_125 = arith.constant 0 : index
    %c0_126 = arith.constant 0 : index
    %279 = vector.load %arg21[%c0_125, %c0_126] : memref<288x128xbf16, #tpu.memory_space<vmem>>, vector<288x128xbf16>
    %280 = vector.extract_strided_slice %279 {offsets = [0, 0], sizes = [128, 128], strides = [1, 1]} : vector<288x128xbf16> to vector<128x128xbf16>
    %281 = arith.truncf %13 : vector<64x128xf32> to vector<64x128xbf16>
    %cst_127 = arith.constant dense<0.000000e+00> : vector<64x128xf32>
    %282 = tpu.matmul %281, %280, %cst_127 {dimension_numbers = #tpu.dot_dimension_numbers<[1], [0], [0], [1], [0, 0, 1, 1], [], []>} : vector<64x128xbf16>, vector<128x128xbf16>, vector<64x128xf32> -> vector<64x128xf32>
    %283 = vector.extract_strided_slice %279 {offsets = [128, 0], sizes = [32, 128], strides = [1, 1]} : vector<288x128xbf16> to vector<32x128xbf16>
    %284 = arith.truncf %27 : vector<64x32xf32> to vector<64x32xbf16>
    %cst_128 = arith.constant dense<0.000000e+00> : vector<64x128xf32>
    %285 = tpu.matmul %284, %283, %cst_128 {dimension_numbers = #tpu.dot_dimension_numbers<[1], [0], [0], [1], [0, 0, 1, 1], [], []>} : vector<64x32xbf16>, vector<32x128xbf16>, vector<64x128xf32> -> vector<64x128xf32>
    %286 = arith.addf %282, %285 : vector<64x128xf32>
    %287 = vector.extract_strided_slice %279 {offsets = [160, 0], sizes = [128, 128], strides = [1, 1]} : vector<288x128xbf16> to vector<128x128xbf16>
    %288 = arith.truncf %278 : vector<64x128xf32> to vector<64x128xbf16>
    %cst_129 = arith.constant dense<0.000000e+00> : vector<64x128xf32>
    %289 = tpu.matmul %288, %287, %cst_129 {dimension_numbers = #tpu.dot_dimension_numbers<[1], [0], [0], [1], [0, 0, 1, 1], [], []>} : vector<64x128xbf16>, vector<128x128xbf16>, vector<64x128xf32> -> vector<64x128xf32>
    %290 = arith.addf %286, %289 : vector<64x128xf32>
    %c0_130 = arith.constant 0 : index
    %c0_131 = arith.constant 0 : index
    %291 = vector.load %arg22[%c0_130, %c0_131] : memref<1x128xf32, #tpu.memory_space<vmem>>, vector<1x128xf32>
    %292 = vector.broadcast %291 : vector<1x128xf32> to vector<64x128xf32>
    %293 = arith.addf %290, %292 : vector<64x128xf32>
    %cst_132 = arith.constant 0.000000e+00 : f32
    %294 = vector.broadcast %cst_132 : f32 to vector<64x128xf32>
    %295 = arith.maximumf %293, %294 : vector<64x128xf32>
    %c0_133 = arith.constant 0 : index
    %c0_134 = arith.constant 0 : index
    %296 = vector.load %arg23[%c0_133, %c0_134] : memref<128x128xbf16, #tpu.memory_space<vmem>>, vector<128x128xbf16>
    %297 = arith.truncf %295 : vector<64x128xf32> to vector<64x128xbf16>
    %cst_135 = arith.constant dense<0.000000e+00> : vector<64x128xf32>
    %298 = tpu.matmul %297, %296, %cst_135 {dimension_numbers = #tpu.dot_dimension_numbers<[1], [0], [0], [1], [0, 0, 1, 1], [], []>} : vector<64x128xbf16>, vector<128x128xbf16>, vector<64x128xf32> -> vector<64x128xf32>
    %c0_136 = arith.constant 0 : index
    %c0_137 = arith.constant 0 : index
    %299 = vector.load %arg24[%c0_136, %c0_137] : memref<1x128xf32, #tpu.memory_space<vmem>>, vector<1x128xf32>
    %300 = vector.broadcast %299 : vector<1x128xf32> to vector<64x128xf32>
    %301 = arith.addf %298, %300 : vector<64x128xf32>
    %c0_138 = arith.constant 0 : index
    %c0_139 = arith.constant 0 : index
    %302 = vector.load %arg25[%c0_138, %c0_139] : memref<64x128xf32, #tpu.memory_space<vmem>>, vector<64x128xf32>
    tpu.vector_store %arg25[%c0_138, %c0_139], %301 {strides = array<i32>} : memref<64x128xf32, #tpu.memory_space<vmem>>, vector<64x128xf32>,
    return
  }
  func.func @transform_0(%arg0: i32) -> (i32, i32) {
    %c0_i32 = arith.constant 0 : i32
    %c0_i32_0 = arith.constant 0 : i32
    return %arg0, %c0_i32 : i32, i32
  }
  func.func @transform_1(%arg0: i32) -> (i32, i32) {
    %c0_i32 = arith.constant 0 : i32
    %c0_i32_0 = arith.constant 0 : i32
    %c0_i32_1 = arith.constant 0 : i32
    return %c0_i32, %c0_i32_0 : i32, i32
  }
  func.func @transform_2(%arg0: i32) -> (i32, i32) {
    %c0_i32 = arith.constant 0 : i32
    %c0_i32_0 = arith.constant 0 : i32
    %c0_i32_1 = arith.constant 0 : i32
    return %c0_i32, %c0_i32_0 : i32, i32
  }
  func.func @transform_3(%arg0: i32) -> (i32, i32) {
    %c0_i32 = arith.constant 0 : i32
    %c0_i32_0 = arith.constant 0 : i32
    %c0_i32_1 = arith.constant 0 : i32
    return %c0_i32, %c0_i32_0 : i32, i32
  }
  func.func @transform_4(%arg0: i32) -> (i32, i32) {
    %c0_i32 = arith.constant 0 : i32
    %c0_i32_0 = arith.constant 0 : i32
    %c0_i32_1 = arith.constant 0 : i32
    return %c0_i32, %c0_i32_0 : i32, i32
  }
  func.func @transform_5(%arg0: i32) -> (i32, i32) {
    %c0_i32 = arith.constant 0 : i32
    %c0_i32_0 = arith.constant 0 : i32
    %c0_i32_1 = arith.constant 0 : i32
    return %c0_i32, %c0_i32_0 : i32, i32
  }
  func.func @transform_6(%arg0: i32) -> (i32, i32) {
    %c0_i32 = arith.constant 0 : i32
    %c0_i32_0 = arith.constant 0 : i32
    %c0_i32_1 = arith.constant 0 : i32
    return %c0_i32, %c0_i32_0 : i32, i32
  }
  func.func @transform_7(%arg0: i32) -> (i32, i32, i32) {
    %c0_i32 = arith.constant 0 : i32
    %c0_i32_0 = arith.constant 0 : i32
    %c0_i32_1 = arith.constant 0 : i32
    %c0_i32_2 = arith.constant 0 : i32
    return %c0_i32, %c0_i32_0, %c0_i32_1 : i32, i32, i32
  }
  func.func @transform_8(%arg0: i32) -> (i32, i32, i32) {
    %c0_i32 = arith.constant 0 : i32
    %c0_i32_0 = arith.constant 0 : i32
    %c0_i32_1 = arith.constant 0 : i32
    %c0_i32_2 = arith.constant 0 : i32
    return %c0_i32, %c0_i32_0, %c0_i32_1 : i32, i32, i32
  }
  func.func @transform_9(%arg0: i32) -> (i32, i32, i32) {
    %c0_i32 = arith.constant 0 : i32
    %c0_i32_0 = arith.constant 0 : i32
    %c0_i32_1 = arith.constant 0 : i32
    %c0_i32_2 = arith.constant 0 : i32
    return %c0_i32, %c0_i32_0, %c0_i32_1 : i32, i32, i32
  }
  func.func @transform_10(%arg0: i32) -> (i32, i32, i32) {
    %c0_i32 = arith.constant 0 : i32
    %c0_i32_0 = arith.constant 0 : i32
    %c0_i32_1 = arith.constant 0 : i32
    %c0_i32_2 = arith.constant 0 : i32
    return %c0_i32, %c0_i32_0, %c0_i32_1 : i32, i32, i32
  }
  func.func @transform_11(%arg0: i32) -> (i32, i32, i32) {
    %c0_i32 = arith.constant 0 : i32
    %c0_i32_0 = arith.constant 0 : i32
    %c0_i32_1 = arith.constant 0 : i32
    %c0_i32_2 = arith.constant 0 : i32
    return %c0_i32, %c0_i32_0, %c0_i32_1 : i32, i32, i32
  }
  func.func @transform_12(%arg0: i32) -> (i32, i32, i32) {
    %c0_i32 = arith.constant 0 : i32
    %c0_i32_0 = arith.constant 0 : i32
    %c0_i32_1 = arith.constant 0 : i32
    %c0_i32_2 = arith.constant 0 : i32
    return %c0_i32, %c0_i32_0, %c0_i32_1 : i32, i32, i32
  }
  func.func @transform_13(%arg0: i32) -> (i32, i32, i32) {
    %c0_i32 = arith.constant 0 : i32
    %c0_i32_0 = arith.constant 0 : i32
    %c0_i32_1 = arith.constant 0 : i32
    %c0_i32_2 = arith.constant 0 : i32
    return %c0_i32, %c0_i32_0, %c0_i32_1 : i32, i32, i32
  }
  func.func @transform_14(%arg0: i32) -> (i32, i32, i32) {
    %c0_i32 = arith.constant 0 : i32
    %c0_i32_0 = arith.constant 0 : i32
    %c0_i32_1 = arith.constant 0 : i32
    %c0_i32_2 = arith.constant 0 : i32
    return %c0_i32, %c0_i32_0, %c0_i32_1 : i32, i32, i32
  }
  func.func @transform_15(%arg0: i32) -> (i32, i32, i32) {
    %c0_i32 = arith.constant 0 : i32
    %c0_i32_0 = arith.constant 0 : i32
    %c0_i32_1 = arith.constant 0 : i32
    %c0_i32_2 = arith.constant 0 : i32
    return %c0_i32, %c0_i32_0, %c0_i32_1 : i32, i32, i32
  }
  func.func @transform_16(%arg0: i32) -> (i32, i32) {
    %c0_i32 = arith.constant 0 : i32
    %c0_i32_0 = arith.constant 0 : i32
    %c0_i32_1 = arith.constant 0 : i32
    return %c0_i32, %c0_i32_0 : i32, i32
  }
  func.func @transform_17(%arg0: i32) -> (i32, i32) {
    %c0_i32 = arith.constant 0 : i32
    %c0_i32_0 = arith.constant 0 : i32
    %c0_i32_1 = arith.constant 0 : i32
    return %c0_i32, %c0_i32_0 : i32, i32
  }
  func.func @transform_18(%arg0: i32) -> (i32, i32) {
    %c0_i32 = arith.constant 0 : i32
    %c0_i32_0 = arith.constant 0 : i32
    %c0_i32_1 = arith.constant 0 : i32
    return %c0_i32, %c0_i32_0 : i32, i32
  }
  func.func @transform_19(%arg0: i32) -> (i32, i32) {
    %c0_i32 = arith.constant 0 : i32
    %c0_i32_0 = arith.constant 0 : i32
    %c0_i32_1 = arith.constant 0 : i32
    return %c0_i32, %c0_i32_0 : i32, i32
  }
  func.func @transform_20(%arg0: i32) -> (i32, i32) {
    %c0_i32 = arith.constant 0 : i32
    %c0_i32_0 = arith.constant 0 : i32
    %c0_i32_1 = arith.constant 0 : i32
    return %c0_i32, %c0_i32_0 : i32, i32
  }
  func.func @transform_21(%arg0: i32) -> (i32, i32) {
    %c0_i32 = arith.constant 0 : i32
    %c0_i32_0 = arith.constant 0 : i32
    %c0_i32_1 = arith.constant 0 : i32
    return %c0_i32, %c0_i32_0 : i32, i32
  }
  func.func @transform_22(%arg0: i32) -> (i32, i32) {
    %c0_i32 = arith.constant 0 : i32
    %c0_i32_0 = arith.constant 0 : i32
    %c0_i32_1 = arith.constant 0 : i32
    return %c0_i32, %c0_i32_0 : i32, i32
  }
  func.func @transform_23(%arg0: i32) -> (i32, i32) {
    %c0_i32 = arith.constant 0 : i32
    %c0_i32_0 = arith.constant 0 : i32
    %c0_i32_1 = arith.constant 0 : i32
    return %c0_i32, %c0_i32_0 : i32, i32
  }
  func.func @transform_24(%arg0: i32) -> (i32, i32) {
    %c0_i32 = arith.constant 0 : i32
    %c0_i32_0 = arith.constant 0 : i32
    return %arg0, %c0_i32 : i32, i32
  }
}

</mosaic_0001>

<llo_original>
// kernel: tpu_custom_call.1
$region0: #{tpu_custom_call.1}
  #allocation0 [shape = 'u32[]', space=smem, size = 0x4, offset = 0x4, fixed_abs, tag = 'smem constant byte address 0x4 - core index']
  #allocation1 [shape = 'u32[144,128]{1,0:T(1,128)}', space=vmem, size = 0x12000, scoped, tag = 'internal scratch']
  #allocation2 [shape = 'f32[1,1]{1,0:T(1,128)S(1)}', space=vmem, size = 0x200, scoped, tag = 'scoped memory for tpu_custom_call.1']
  %s0 = inlined_call_operand.vmem [shape: f32[128,80], index: 0, kind: input, shape index: {}]
  %s1 = inlined_call_operand.hbm [shape: bf16[80,512], index: 1, kind: input, shape index: {}]
  %s2 = inlined_call_operand.vmem [shape: f32[1,512], index: 2, kind: input, shape index: {}]
  %s3 = inlined_call_operand.vmem [shape: bf16[128,32], index: 3, kind: input, shape index: {}]
  %s4 = inlined_call_operand.hbm [shape: f32[1,32], index: 4, kind: input, shape index: {}]
  %s5 = inlined_call_operand.hbm [shape: bf16[256,128], index: 5, kind: input, shape index: {}]
  %s6 = inlined_call_operand.hbm [shape: f32[2,128], index: 6, kind: input, shape index: {}]
  %s7 = inlined_call_operand.vmem [shape: bf16[2,128,384], index: 7, kind: input, shape index: {}]
  %s8 = inlined_call_operand.hbm [shape: f32[2,1,384], index: 8, kind: input, shape index: {}]
  %s9 = inlined_call_operand.hbm [shape: bf16[2,128,128], index: 9, kind: input, shape index: {}]
  %s10 = inlined_call_operand.hbm [shape: f32[2,1,128], index: 10, kind: input, shape index: {}]
  %s11 = inlined_call_operand.hbm [shape: bf16[2,128,256], index: 11, kind: input, shape index: {}]
  %s12 = inlined_call_operand.hbm [shape: f32[2,1,256], index: 12, kind: input, shape index: {}]
  %s13 = inlined_call_operand.hbm [shape: bf16[2,256,128], index: 13, kind: input, shape index: {}]
  %s14 = inlined_call_operand.hbm [shape: f32[2,1,128], index: 14, kind: input, shape index: {}]
  %s15 = inlined_call_operand.hbm [shape: f32[2,4,128], index: 15, kind: input, shape index: {}]
  %s16 = inlined_call_operand.vmem [shape: bf16[128,4], index: 16, kind: input, shape index: {}]
  %s17 = inlined_call_operand.hbm [shape: bf16[4,128], index: 17, kind: input, shape index: {}]
  %s18 = inlined_call_operand.vmem [shape: bf16[128,1], index: 18, kind: input, shape index: {}]
  %s19 = inlined_call_operand.<no memory space> [shape: f32[1,1], index: 19, kind: input, shape index: {}]
  %s20 = inlined_call_operand.hbm [shape: bf16[288,128], index: 20, kind: input, shape index: {}]
  %s21 = inlined_call_operand.vmem [shape: f32[1,128], index: 21, kind: input, shape index: {}]
  %s22 = inlined_call_operand.vmem [shape: bf16[128,128], index: 22, kind: input, shape index: {}]
  %s23 = inlined_call_operand.vmem [shape: f32[1,128], index: 23, kind: input, shape index: {}]
  %s24 = inlined_call_operand.hbm [shape: f32[128,128], index: 24, kind: output, shape index: {}]
  %s25 = sld [smem:[#allocation0]]
  $region185: #{tpu_custom_call.1} parent=0
    _
  %s27 = ssub.s32 1, %s25
  %s28 = scalar_select 0, %s27, %s25
  %v29 = vstv %s19
  %30 = vst [vmem:[#allocation2] sm:$0x1] %v29
  $region1: #{tpu_custom_call.1} parent=0
    #allocation3 [shape = 'u8[81920]{0}', space=vmem, size = 0x14000, scoped, tag = 'input window, operand 1, single buffered']
    #allocation4 [shape = 's32[2]{0}', space=sflag, size = 0x8, scoped, tag = 'scoped memory for tpu_custom_call.1']
    #allocation5 [shape = 's32[2]{0}', space=sflag, size = 0x8, scoped, tag = 'scoped memory for tpu_custom_call.1']
    #allocation6 [shape = 'u8[512]{0}', space=vmem, size = 0x400, scoped, tag = 'input window, operand 4, single buffered']
    #allocation7 [shape = 's32[1]{0}', space=sflag, size = 0x4, scoped, tag = 'scoped memory for tpu_custom_call.1']
    #allocation8 [shape = 'u8[65536]{0}', space=vmem, size = 0x10000, scoped, tag = 'input window, operand 5, single buffered']
    #allocation9 [shape = 'u8[1024]{0}', space=vmem, size = 0x400, scoped, tag = 'input window, operand 6, single buffered']
    #allocation10 [shape = 's32[1]{0}', space=sflag, size = 0x4, scoped, tag = 'scoped memory for tpu_custom_call.1']
    #allocation11 [shape = 'u8[3072]{0}', space=vmem, size = 0xc00, scoped, tag = 'input window, operand 8, single buffered']
    #allocation12 [shape = 'u8[65536]{0}', space=vmem, size = 0x10000, scoped, tag = 'input window, operand 9, single buffered']
    #allocation13 [shape = 's32[1]{0}', space=sflag, size = 0x4, scoped, tag = 'scoped memory for tpu_custom_call.1']
    #allocation14 [shape = 'u8[1024]{0}', space=vmem, size = 0x400, scoped, tag = 'input window, operand 10, single buffered']
    #allocation15 [shape = 'u8[131072]{0}', space=vmem, size = 0x20000, scoped, tag = 'input window, operand 11, single buffered']
    #allocation16 [shape = 's32[1]{0}', space=sflag, size = 0x4, scoped, tag = 'scoped memory for tpu_custom_call.1']
    #allocation17 [shape = 'u8[2048]{0}', space=vmem, size = 0x800, scoped, tag = 'input window, operand 12, single buffered']
    #allocation18 [shape = 'u8[131072]{0}', space=vmem, size = 0x20000, scoped, tag = 'input window, operand 13, single buffered']
    #allocation19 [shape = 's32[1]{0}', space=sflag, size = 0x4, scoped, tag = 'scoped memory for tpu_custom_call.1']
    #allocation20 [shape = 'u8[1024]{0}', space=vmem, size = 0x400, scoped, tag = 'input window, operand 14, single buffered']
    #allocation21 [shape = 'u8[4096]{0}', space=vmem, size = 0x1000, scoped, tag = 'input window, operand 15, single buffered']
    #allocation22 [shape = 's32[1]{0}', space=sflag, size = 0x4, scoped, tag = 'scoped memory for tpu_custom_call.1']
    #allocation23 [shape = 'u8[1024]{0}', space=vmem, size = 0x400, scoped, tag = 'input window, operand 17, single buffered']
    #allocation24 [shape = 'u8[73728]{0}', space=vmem, size = 0x12000, scoped, tag = 'input window, operand 20, single buffered']
    #allocation25 [shape = 's32[1]{0}', space=sflag, size = 0x4, scoped, tag = 'scoped memory for tpu_custom_call.1']
    #allocation26 [shape = 'u8[65536]{0}', space=vmem, size = 0x10000, scoped, tag = 'output window, operand 0']
    %31 = vsyncpa [#allocation4], 0
    %32 = vsyncpa [#allocation7], 0
    %33 = vsyncpa [#allocation10], 0
    %34 = vsyncpa [#allocation13], 0
    %35 = vsyncpa [#allocation16], 0
    %36 = vsyncpa [#allocation19], 0
    %37 = vsyncpa [#allocation22], 0
    %38 = vsyncpa [#allocation25], 0
    %39 = vsyncpa [#allocation5], 0
    %s40 = scalar_lea.sflag [#allocation5], 1
    %41 = vsyncpa %s40, 0
    loop: start=0, step=1, limit=4
    $region2: #{tpu_custom_call.1} parent=1 // loop_pre_header
      _
    $region3: #{tpu_custom_call.1} parent=1 // loop_header
      %s43 = sphi 0, %s47
      %p44 = scmp.ge.s32.totalorder %s43, 4
      %s53 = sphi 0, %s55
      %s56 = sphi 0, %s53
      %s57 = sphi 0, %s56
      %s73 = sphi 0, %s57
      %s77 = sphi 0, %s77
      %s79 = sphi 0, %s77
      %s80 = sphi 0, %s79
      %s94 = sphi 0, %s80
      %s98 = sphi 0, %s98
      %s100 = sphi 0, %s98
      %s101 = sphi 0, %s100
      %s115 = sphi 0, %s101
      %s119 = sphi 0, %s119
      %s121 = sphi 0, %s119
      %s122 = sphi 0, %s121
      %s136 = sphi 0, %s122
      %s140 = sphi 0, %s140
      %s142 = sphi 0, %s140
      %s143 = sphi 0, %s142
      %s157 = sphi 0, %s143
      %s161 = sphi 0, %s161
      %s163 = sphi 0, %s161
      %s164 = sphi 0, %s163
      %s178 = sphi 0, %s164
      %s182 = sphi 0, %s182
      %s184 = sphi 0, %s182
      %s185 = sphi 0, %s184
      %s199 = sphi 0, %s185
      %s203 = sphi 0, %s203
      %s205 = sphi 0, %s203
      %s206 = sphi 0, %s205
      %s220 = sphi 0, %s206
      %s224 = sphi 0, %s224
      %s226 = sphi 0, %s224
      %s227 = sphi 0, %s226
      %s241 = sphi 0, %s227
      %s245 = sphi 0, %s245
      %s247 = sphi 0, %s245
      %s248 = sphi 0, %s247
      %s262 = sphi 0, %s248
      %s266 = sphi 0, %s266
      %s268 = sphi 0, %s266
      %s269 = sphi 0, %s268
      %s283 = sphi 0, %s269
      %s287 = sphi 0, %s287
      %s289 = sphi 0, %s287
      %s290 = sphi 0, %s289
      %s304 = sphi 0, %s290
      %s308 = sphi 0, %s308
      %s310 = sphi 0, %s308
      %s311 = sphi 0, %s310
      %s325 = sphi 0, %s311
      %s329 = sphi 0, %s329
      %s331 = sphi 0, %s329
      %s332 = sphi 0, %s331
      %s346 = sphi 0, %s332
      %s350 = sphi 0, %s350
      %s352 = sphi 0, %s350
      %s353 = sphi 0, %s352
      %s367 = sphi 0, %s353
      %s371 = sphi 0, %s371
      %s373 = sphi 0, %s371
      %s374 = sphi 0, %s373
      %s388 = sphi 0, %s374
      %s392 = sphi 0, %s392
      %s394 = sphi 0, %s392
      %s395 = sphi 0, %s394
      %s409 = sphi 0, %s395
      %s413 = sphi 0, %s413
      %s415 = sphi 0, %s413
      %s416 = sphi 0, %s415
      %s430 = sphi 0, %s416
      %s434 = sphi 0, %s434
      %s436 = sphi 0, %s434
      %s437 = sphi 0, %s436
      %s451 = sphi 0, %s437
      %s455 = sphi 0, %s455
      %s457 = sphi 0, %s455
      %s458 = sphi 0, %s457
      %s472 = sphi 0, %s458
      %s476 = sphi 0, %s476
      %s478 = sphi 0, %s476
      %s479 = sphi 0, %s478
      %s493 = sphi 0, %s479
      %s497 = sphi 0, %s497
      %s499 = sphi 0, %s497
      %s500 = sphi 0, %s499
      %s514 = sphi 0, %s500
      %s518 = sphi 0, %s518
      %s520 = sphi 0, %s518
      %s521 = sphi 0, %s520
      %s535 = sphi 0, %s521
      %s539 = sphi 0, %s539
      %s541 = sphi 0, %s539
      %s542 = sphi 0, %s541
      %s556 = sphi 0, %s542
      %s562 = sphi 0, %s564
      %s565 = sphi 0, %s562
      %s566 = sphi 0, %s565
      %s582 = sphi 0, %s566
    $region4: #{tpu_custom_call.1} parent=1 // loop_header_branch
      %46 = sbr.rel (%p44) target = $region8
    $region5: #{tpu_custom_call.1} parent=1 // loop_body
      %s48 = ssub.s32 %s43, 1
      %s49 = ssub.s32 %s43, 2
      %s50 = sadd.s32 %s43, 1
      %s51 = ssub.s32 %s43, %s50
      %p52 = scmp.eq.s32.totalorder %s51, 0
      %s54 = sadd.s32 %s53, 1
      %s55 = scalar_select %p52, %s53, %s54
      %p58 = pneg %p52
      %p59 = scmp.eq.s32.totalorder %s43, 1
      %p60 = por %p58, %p59
      %p61 = scmp.ne.s32.totalorder %s53, %s56
      %p62 = scmp.eq.s32.totalorder %s43, 0
      %p63 = por %p61, %p62
      %p64 = scmp.ne.s32.totalorder %s53, %s56
      %p65 = scmp.eq.s32.totalorder %s48, 1
      %p66 = por %p64, %p65
      %p67 = scmp.ne.s32.totalorder %s56, %s57
      %p68 = scmp.eq.s32.totalorder %s48, 0
      %p69 = por %p67, %p68
      %p70 = scmp.ne.s32.totalorder %s56, %s57
      %p71 = scmp.eq.s32.totalorder %s49, 1
      %p72 = por %p70, %p71
      %p74 = scmp.ne.s32.totalorder %s57, %s73
      %p75 = scmp.eq.s32.totalorder %s49, 0
      %p76 = por %p74, %p75
      %s78 = sadd.s32 %s77, 1
      %p81 = scmp.eq.s32.totalorder %s43, 1
      %p82 = scmp.ne.s32.totalorder %s77, %s79
      %p83 = scmp.eq.s32.totalorder %s43, 0
      %p84 = por %p82, %p83
      %p85 = scmp.ne.s32.totalorder %s77, %s79
      %p86 = scmp.eq.s32.totalorder %s48, 1
      %p87 = por %p85, %p86
      %p88 = scmp.ne.s32.totalorder %s79, %s80
      %p89 = scmp.eq.s32.totalorder %s48, 0
      %p90 = por %p88, %p89
      %p91 = scmp.ne.s32.totalorder %s79, %s80
      %p92 = scmp.eq.s32.totalorder %s49, 1
      %p93 = por %p91, %p92
      %p95 = scmp.ne.s32.totalorder %s80, %s94
      %p96 = scmp.eq.s32.totalorder %s49, 0
      %p97 = por %p95, %p96
      %s99 = sadd.s32 %s98, 1
      %p102 = scmp.eq.s32.totalorder %s43, 1
      %p103 = scmp.ne.s32.totalorder %s98, %s100
      %p104 = scmp.eq.s32.totalorder %s43, 0
      %p105 = por %p103, %p104
      %p106 = scmp.ne.s32.totalorder %s98, %s100
      %p107 = scmp.eq.s32.totalorder %s48, 1
      %p108 = por %p106, %p107
      %p109 = scmp.ne.s32.totalorder %s100, %s101
      %p110 = scmp.eq.s32.totalorder %s48, 0
      %p111 = por %p109, %p110
      %p112 = scmp.ne.s32.totalorder %s100, %s101
      %p113 = scmp.eq.s32.totalorder %s49, 1
      %p114 = por %p112, %p113
      %p116 = scmp.ne.s32.totalorder %s101, %s115
      %p117 = scmp.eq.s32.totalorder %s49, 0
      %p118 = por %p116, %p117
      %s120 = sadd.s32 %s119, 1
      %p123 = scmp.eq.s32.totalorder %s43, 1
      %p124 = scmp.ne.s32.totalorder %s119, %s121
      %p125 = scmp.eq.s32.totalorder %s43, 0
      %p126 = por %p124, %p125
      %p127 = scmp.ne.s32.totalorder %s119, %s121
      %p128 = scmp.eq.s32.totalorder %s48, 1
      %p129 = por %p127, %p128
      %p130 = scmp.ne.s32.totalorder %s121, %s122
      %p131 = scmp.eq.s32.totalorder %s48, 0
      %p132 = por %p130, %p131
      %p133 = scmp.ne.s32.totalorder %s121, %s122
      %p134 = scmp.eq.s32.totalorder %s49, 1
      %p135 = por %p133, %p134
      %p137 = scmp.ne.s32.totalorder %s122, %s136
      %p138 = scmp.eq.s32.totalorder %s49, 0
      %p139 = por %p137, %p138
      %s141 = sadd.s32 %s140, 1
      %p144 = scmp.eq.s32.totalorder %s43, 1
      %p145 = scmp.ne.s32.totalorder %s140, %s142
      %p146 = scmp.eq.s32.totalorder %s43, 0
      %p147 = por %p145, %p146
      %p148 = scmp.ne.s32.totalorder %s140, %s142
      %p149 = scmp.eq.s32.totalorder %s48, 1
      %p150 = por %p148, %p149
      %p151 = scmp.ne.s32.totalorder %s142, %s143
      %p152 = scmp.eq.s32.totalorder %s48, 0
      %p153 = por %p151, %p152
      %p154 = scmp.ne.s32.totalorder %s142, %s143
      %p155 = scmp.eq.s32.totalorder %s49, 1
      %p156 = por %p154, %p155
      %p158 = scmp.ne.s32.totalorder %s143, %s157
      %p159 = scmp.eq.s32.totalorder %s49, 0
      %p160 = por %p158, %p159
      %s162 = sadd.s32 %s161, 1
      %p165 = scmp.eq.s32.totalorder %s43, 1
      %p166 = scmp.ne.s32.totalorder %s161, %s163
      %p167 = scmp.eq.s32.totalorder %s43, 0
      %p168 = por %p166, %p167
      %p169 = scmp.ne.s32.totalorder %s161, %s163
      %p170 = scmp.eq.s32.totalorder %s48, 1
      %p171 = por %p169, %p170
      %p172 = scmp.ne.s32.totalorder %s163, %s164
      %p173 = scmp.eq.s32.totalorder %s48, 0
      %p174 = por %p172, %p173
      %p175 = scmp.ne.s32.totalorder %s163, %s164
      %p176 = scmp.eq.s32.totalorder %s49, 1
      %p177 = por %p175, %p176
      %p179 = scmp.ne.s32.totalorder %s164, %s178
      %p180 = scmp.eq.s32.totalorder %s49, 0
      %p181 = por %p179, %p180
      %s183 = sadd.s32 %s182, 1
      %p186 = scmp.eq.s32.totalorder %s43, 1
      %p187 = scmp.ne.s32.totalorder %s182, %s184
      %p188 = scmp.eq.s32.totalorder %s43, 0
      %p189 = por %p187, %p188
      %p190 = scmp.ne.s32.totalorder %s182, %s184
      %p191 = scmp.eq.s32.totalorder %s48, 1
      %p192 = por %p190, %p191
      %p193 = scmp.ne.s32.totalorder %s184, %s185
      %p194 = scmp.eq.s32.totalorder %s48, 0
      %p195 = por %p193, %p194
      %p196 = scmp.ne.s32.totalorder %s184, %s185
      %p197 = scmp.eq.s32.totalorder %s49, 1
      %p198 = por %p196, %p197
      %p200 = scmp.ne.s32.totalorder %s185, %s199
      %p201 = scmp.eq.s32.totalorder %s49, 0
      %p202 = por %p200, %p201
      %s204 = sadd.s32 %s203, 1
      %p207 = scmp.eq.s32.totalorder %s43, 1
      %p208 = scmp.ne.s32.totalorder %s203, %s205
      %p209 = scmp.eq.s32.totalorder %s43, 0
      %p210 = por %p208, %p209
      %p211 = scmp.ne.s32.totalorder %s203, %s205
      %p212 = scmp.eq.s32.totalorder %s48, 1
      %p213 = por %p211, %p212
      %p214 = scmp.ne.s32.totalorder %s205, %s206
      %p215 = scmp.eq.s32.totalorder %s48, 0
      %p216 = por %p214, %p215
      %p217 = scmp.ne.s32.totalorder %s205, %s206
      %p218 = scmp.eq.s32.totalorder %s49, 1
      %p219 = por %p217, %p218
      %p221 = scmp.ne.s32.totalorder %s206, %s220
      %p222 = scmp.eq.s32.totalorder %s49, 0
      %p223 = por %p221, %p222
      %s225 = sadd.s32 %s224, 1
      %p228 = scmp.eq.s32.totalorder %s43, 1
      %p229 = scmp.ne.s32.totalorder %s224, %s226
      %p230 = scmp.eq.s32.totalorder %s43, 0
      %p231 = por %p229, %p230
      %p232 = scmp.ne.s32.totalorder %s224, %s226
      %p233 = scmp.eq.s32.totalorder %s48, 1
      %p234 = por %p232, %p233
      %p235 = scmp.ne.s32.totalorder %s226, %s227
      %p236 = scmp.eq.s32.totalorder %s48, 0
      %p237 = por %p235, %p236
      %p238 = scmp.ne.s32.totalorder %s226, %s227
      %p239 = scmp.eq.s32.totalorder %s49, 1
      %p240 = por %p238, %p239
      %p242 = scmp.ne.s32.totalorder %s227, %s241
      %p243 = scmp.eq.s32.totalorder %s49, 0
      %p244 = por %p242, %p243
      %s246 = sadd.s32 %s245, 1
      %p249 = scmp.eq.s32.totalorder %s43, 1
      %p250 = scmp.ne.s32.totalorder %s245, %s247
      %p251 = scmp.eq.s32.totalorder %s43, 0
      %p252 = por %p250, %p251
      %p253 = scmp.ne.s32.totalorder %s245, %s247
      %p254 = scmp.eq.s32.totalorder %s48, 1
      %p255 = por %p253, %p254
      %p256 = scmp.ne.s32.totalorder %s247, %s248
      %p257 = scmp.eq.s32.totalorder %s48, 0
      %p258 = por %p256, %p257
      %p259 = scmp.ne.s32.totalorder %s247, %s248
      %p260 = scmp.eq.s32.totalorder %s49, 1
      %p261 = por %p259, %p260
      %p263 = scmp.ne.s32.totalorder %s248, %s262
      %p264 = scmp.eq.s32.totalorder %s49, 0
      %p265 = por %p263, %p264
      %s267 = sadd.s32 %s266, 1
      %p270 = scmp.eq.s32.totalorder %s43, 1
      %p271 = scmp.ne.s32.totalorder %s266, %s268
      %p272 = scmp.eq.s32.totalorder %s43, 0
      %p273 = por %p271, %p272
      %p274 = scmp.ne.s32.totalorder %s266, %s268
      %p275 = scmp.eq.s32.totalorder %s48, 1
      %p276 = por %p274, %p275
      %p277 = scmp.ne.s32.totalorder %s268, %s269
      %p278 = scmp.eq.s32.totalorder %s48, 0
      %p279 = por %p277, %p278
      %p280 = scmp.ne.s32.totalorder %s268, %s269
      %p281 = scmp.eq.s32.totalorder %s49, 1
      %p282 = por %p280, %p281
      %p284 = scmp.ne.s32.totalorder %s269, %s283
      %p285 = scmp.eq.s32.totalorder %s49, 0
      %p286 = por %p284, %p285
      %s288 = sadd.s32 %s287, 1
      %p291 = scmp.eq.s32.totalorder %s43, 1
      %p292 = scmp.ne.s32.totalorder %s287, %s289
      %p293 = scmp.eq.s32.totalorder %s43, 0
      %p294 = por %p292, %p293
      %p295 = scmp.ne.s32.totalorder %s287, %s289
      %p296 = scmp.eq.s32.totalorder %s48, 1
      %p297 = por %p295, %p296
      %p298 = scmp.ne.s32.totalorder %s289, %s290
      %p299 = scmp.eq.s32.totalorder %s48, 0
      %p300 = por %p298, %p299
      %p301 = scmp.ne.s32.totalorder %s289, %s290
      %p302 = scmp.eq.s32.totalorder %s49, 1
      %p303 = por %p301, %p302
      %p305 = scmp.ne.s32.totalorder %s290, %s304
      %p306 = scmp.eq.s32.totalorder %s49, 0
      %p307 = por %p305, %p306
      %s309 = sadd.s32 %s308, 1
      %p312 = scmp.eq.s32.totalorder %s43, 1
      %p313 = scmp.ne.s32.totalorder %s308, %s310
      %p314 = scmp.eq.s32.totalorder %s43, 0
      %p315 = por %p313, %p314
      %p316 = scmp.ne.s32.totalorder %s308, %s310
      %p317 = scmp.eq.s32.totalorder %s48, 1
      %p318 = por %p316, %p317
      %p319 = scmp.ne.s32.totalorder %s310, %s311
      %p320 = scmp.eq.s32.totalorder %s48, 0
      %p321 = por %p319, %p320
      %p322 = scmp.ne.s32.totalorder %s310, %s311
      %p323 = scmp.eq.s32.totalorder %s49, 1
      %p324 = por %p322, %p323
      %p326 = scmp.ne.s32.totalorder %s311, %s325
      %p327 = scmp.eq.s32.totalorder %s49, 0
      %p328 = por %p326, %p327
      %s330 = sadd.s32 %s329, 1
      %p333 = scmp.eq.s32.totalorder %s43, 1
      %p334 = scmp.ne.s32.totalorder %s329, %s331
      %p335 = scmp.eq.s32.totalorder %s43, 0
      %p336 = por %p334, %p335
      %p337 = scmp.ne.s32.totalorder %s329, %s331
      %p338 = scmp.eq.s32.totalorder %s48, 1
      %p339 = por %p337, %p338
      %p340 = scmp.ne.s32.totalorder %s331, %s332
      %p341 = scmp.eq.s32.totalorder %s48, 0
      %p342 = por %p340, %p341
      %p343 = scmp.ne.s32.totalorder %s331, %s332
      %p344 = scmp.eq.s32.totalorder %s49, 1
      %p345 = por %p343, %p344
      %p347 = scmp.ne.s32.totalorder %s332, %s346
      %p348 = scmp.eq.s32.totalorder %s49, 0
      %p349 = por %p347, %p348
      %s351 = sadd.s32 %s350, 1
      %p354 = scmp.eq.s32.totalorder %s43, 1
      %p355 = scmp.ne.s32.totalorder %s350, %s352
      %p356 = scmp.eq.s32.totalorder %s43, 0
      %p357 = por %p355, %p356
      %p358 = scmp.ne.s32.totalorder %s350, %s352
      %p359 = scmp.eq.s32.totalorder %s48, 1
      %p360 = por %p358, %p359
      %p361 = scmp.ne.s32.totalorder %s352, %s353
      %p362 = scmp.eq.s32.totalorder %s48, 0
      %p363 = por %p361, %p362
      %p364 = scmp.ne.s32.totalorder %s352, %s353
      %p365 = scmp.eq.s32.totalorder %s49, 1
      %p366 = por %p364, %p365
      %p368 = scmp.ne.s32.totalorder %s353, %s367
      %p369 = scmp.eq.s32.totalorder %s49, 0
      %p370 = por %p368, %p369
      %s372 = sadd.s32 %s371, 1
      %p375 = scmp.eq.s32.totalorder %s43, 1
      %p376 = scmp.ne.s32.totalorder %s371, %s373
      %p377 = scmp.eq.s32.totalorder %s43, 0
      %p378 = por %p376, %p377
      %p379 = scmp.ne.s32.totalorder %s371, %s373
      %p380 = scmp.eq.s32.totalorder %s48, 1
      %p381 = por %p379, %p380
      %p382 = scmp.ne.s32.totalorder %s373, %s374
      %p383 = scmp.eq.s32.totalorder %s48, 0
      %p384 = por %p382, %p383
      %p385 = scmp.ne.s32.totalorder %s373, %s374
      %p386 = scmp.eq.s32.totalorder %s49, 1
      %p387 = por %p385, %p386
      %p389 = scmp.ne.s32.totalorder %s374, %s388
      %p390 = scmp.eq.s32.totalorder %s49, 0
      %p391 = por %p389, %p390
      %s393 = sadd.s32 %s392, 1
      %p396 = scmp.eq.s32.totalorder %s43, 1
      %p397 = scmp.ne.s32.totalorder %s392, %s394
      %p398 = scmp.eq.s32.totalorder %s43, 0
      %p399 = por %p397, %p398
      %p400 = scmp.ne.s32.totalorder %s392, %s394
      %p401 = scmp.eq.s32.totalorder %s48, 1
      %p402 = por %p400, %p401
      %p403 = scmp.ne.s32.totalorder %s394, %s395
      %p404 = scmp.eq.s32.totalorder %s48, 0
      %p405 = por %p403, %p404
      %p406 = scmp.ne.s32.totalorder %s394, %s395
      %p407 = scmp.eq.s32.totalorder %s49, 1
      %p408 = por %p406, %p407
      %p410 = scmp.ne.s32.totalorder %s395, %s409
      %p411 = scmp.eq.s32.totalorder %s49, 0
      %p412 = por %p410, %p411
      %s414 = sadd.s32 %s413, 1
      %p417 = scmp.eq.s32.totalorder %s43, 1
      %p418 = scmp.ne.s32.totalorder %s413, %s415
      %p419 = scmp.eq.s32.totalorder %s43, 0
      %p420 = por %p418, %p419
      %p421 = scmp.ne.s32.totalorder %s413, %s415
      %p422 = scmp.eq.s32.totalorder %s48, 1
      %p423 = por %p421, %p422
      %p424 = scmp.ne.s32.totalorder %s415, %s416
      %p425 = scmp.eq.s32.totalorder %s48, 0
      %p426 = por %p424, %p425
      %p427 = scmp.ne.s32.totalorder %s415, %s416
      %p428 = scmp.eq.s32.totalorder %s49, 1
      %p429 = por %p427, %p428
      %p431 = scmp.ne.s32.totalorder %s416, %s430
      %p432 = scmp.eq.s32.totalorder %s49, 0
      %p433 = por %p431, %p432
      %s435 = sadd.s32 %s434, 1
      %p438 = scmp.eq.s32.totalorder %s43, 1
      %p439 = scmp.ne.s32.totalorder %s434, %s436
      %p440 = scmp.eq.s32.totalorder %s43, 0
      %p441 = por %p439, %p440
      %p442 = scmp.ne.s32.totalorder %s434, %s436
      %p443 = scmp.eq.s32.totalorder %s48, 1
      %p444 = por %p442, %p443
      %p445 = scmp.ne.s32.totalorder %s436, %s437
      %p446 = scmp.eq.s32.totalorder %s48, 0
      %p447 = por %p445, %p446
      %p448 = scmp.ne.s32.totalorder %s436, %s437
      %p449 = scmp.eq.s32.totalorder %s49, 1
      %p450 = por %p448, %p449
      %p452 = scmp.ne.s32.totalorder %s437, %s451
      %p453 = scmp.eq.s32.totalorder %s49, 0
      %p454 = por %p452, %p453
      %s456 = sadd.s32 %s455, 1
      %p459 = scmp.eq.s32.totalorder %s43, 1
      %p460 = scmp.ne.s32.totalorder %s455, %s457
      %p461 = scmp.eq.s32.totalorder %s43, 0
      %p462 = por %p460, %p461
      %p463 = scmp.ne.s32.totalorder %s455, %s457
      %p464 = scmp.eq.s32.totalorder %s48, 1
      %p465 = por %p463, %p464
      %p466 = scmp.ne.s32.totalorder %s457, %s458
      %p467 = scmp.eq.s32.totalorder %s48, 0
      %p468 = por %p466, %p467
      %p469 = scmp.ne.s32.totalorder %s457, %s458
      %p470 = scmp.eq.s32.totalorder %s49, 1
      %p471 = por %p469, %p470
      %p473 = scmp.ne.s32.totalorder %s458, %s472
      %p474 = scmp.eq.s32.totalorder %s49, 0
      %p475 = por %p473, %p474
      %s477 = sadd.s32 %s476, 1
      %p480 = scmp.eq.s32.totalorder %s43, 1
      %p481 = scmp.ne.s32.totalorder %s476, %s478
      %p482 = scmp.eq.s32.totalorder %s43, 0
      %p483 = por %p481, %p482
      %p484 = scmp.ne.s32.totalorder %s476, %s478
      %p485 = scmp.eq.s32.totalorder %s48, 1
      %p486 = por %p484, %p485
      %p487 = scmp.ne.s32.totalorder %s478, %s479
      %p488 = scmp.eq.s32.totalorder %s48, 0
      %p489 = por %p487, %p488
      %p490 = scmp.ne.s32.totalorder %s478, %s479
      %p491 = scmp.eq.s32.totalorder %s49, 1
      %p492 = por %p490, %p491
      %p494 = scmp.ne.s32.totalorder %s479, %s493
      %p495 = scmp.eq.s32.totalorder %s49, 0
      %p496 = por %p494, %p495
      %s498 = sadd.s32 %s497, 1
      %p501 = scmp.eq.s32.totalorder %s43, 1
      %p502 = scmp.ne.s32.totalorder %s497, %s499
      %p503 = scmp.eq.s32.totalorder %s43, 0
      %p504 = por %p502, %p503
      %p505 = scmp.ne.s32.totalorder %s497, %s499
      %p506 = scmp.eq.s32.totalorder %s48, 1
      %p507 = por %p505, %p506
      %p508 = scmp.ne.s32.totalorder %s499, %s500
      %p509 = scmp.eq.s32.totalorder %s48, 0
      %p510 = por %p508, %p509
      %p511 = scmp.ne.s32.totalorder %s499, %s500
      %p512 = scmp.eq.s32.totalorder %s49, 1
      %p513 = por %p511, %p512
      %p515 = scmp.ne.s32.totalorder %s500, %s514
      %p516 = scmp.eq.s32.totalorder %s49, 0
      %p517 = por %p515, %p516
      %s519 = sadd.s32 %s518, 1
      %p522 = scmp.eq.s32.totalorder %s43, 1
      %p523 = scmp.ne.s32.totalorder %s518, %s520
      %p524 = scmp.eq.s32.totalorder %s43, 0
      %p525 = por %p523, %p524
      %p526 = scmp.ne.s32.totalorder %s518, %s520
      %p527 = scmp.eq.s32.totalorder %s48, 1
      %p528 = por %p526, %p527
      %p529 = scmp.ne.s32.totalorder %s520, %s521
      %p530 = scmp.eq.s32.totalorder %s48, 0
      %p531 = por %p529, %p530
      %p532 = scmp.ne.s32.totalorder %s520, %s521
      %p533 = scmp.eq.s32.totalorder %s49, 1
      %p534 = por %p532, %p533
      %p536 = scmp.ne.s32.totalorder %s521, %s535
      %p537 = scmp.eq.s32.totalorder %s49, 0
      %p538 = por %p536, %p537
      %s540 = sadd.s32 %s539, 1
      %p543 = scmp.eq.s32.totalorder %s43, 1
      %p544 = scmp.ne.s32.totalorder %s539, %s541
      %p545 = scmp.eq.s32.totalorder %s43, 0
      %p546 = por %p544, %p545
      %p547 = scmp.ne.s32.totalorder %s539, %s541
      %p548 = scmp.eq.s32.totalorder %s48, 1
      %p549 = por %p547, %p548
      %p550 = scmp.ne.s32.totalorder %s541, %s542
      %p551 = scmp.eq.s32.totalorder %s48, 0
      %p552 = por %p550, %p551
      %p553 = scmp.ne.s32.totalorder %s541, %s542
      %p554 = scmp.eq.s32.totalorder %s49, 1
      %p555 = por %p553, %p554
      %p557 = scmp.ne.s32.totalorder %s542, %s556
      %p558 = scmp.eq.s32.totalorder %s49, 0
      %p559 = por %p557, %p558
      %s560 = ssub.s32 %s43, %s50
      %p561 = scmp.eq.s32.totalorder %s560, 0
      %s563 = sadd.s32 %s562, 1
      %s564 = scalar_select %p561, %s562, %s563
      %p567 = pneg %p561
      %p568 = scmp.eq.s32.totalorder %s43, 1
      %p569 = por %p567, %p568
      %p570 = scmp.ne.s32.totalorder %s562, %s565
      %p571 = scmp.eq.s32.totalorder %s43, 0
      %p572 = por %p570, %p571
      %p573 = scmp.ne.s32.totalorder %s562, %s565
      %p574 = scmp.eq.s32.totalorder %s48, 1
      %p575 = por %p573, %p574
      %p576 = scmp.ne.s32.totalorder %s565, %s566
      %p577 = scmp.eq.s32.totalorder %s48, 0
      %p578 = por %p576, %p577
      %p579 = scmp.ne.s32.totalorder %s565, %s566
      %p580 = scmp.eq.s32.totalorder %s49, 1
      %p581 = por %p579, %p580
      %p583 = scmp.ne.s32.totalorder %s566, %s582
      %p584 = scmp.eq.s32.totalorder %s49, 0
      %p585 = por %p583, %p584
      %p586 = scmp.le.s32.totalorder 1, %s43
      %p587 = scmp.lt.s32.totalorder %s43, 3
      %p588 = pnand %p586, %p587
      %p589 = pneg %p588
      // Predicated region
      $region9: #{tpu_custom_call.1} parent=5 // pred_check
        _
      $region10: #{tpu_custom_call.1} parent=5 // pred_check_branch
        %591 = sbr.rel (%p588) target = $region12
      $region11: #{tpu_custom_call.1} parent=5 // pred_region
        %s592 = ssub.s32 %s43, 1
        // Predicated region
        $region13: #{tpu_custom_call.1} parent=11 // pred_check
          %p593 = pneg %p90
        $region14: #{tpu_custom_call.1} parent=11 // pred_check_branch
          %595 = sbr.rel (%p593) target = $region16
        $region15: #{tpu_custom_call.1} parent=11 // pred_region
          %s597 = ssub.s32 2560, 2560
          %598 = vsyncadd [#allocation4], %s597
          %s599 = sshll.u32 [#allocation3], 4
          %s600 = int_to_ptr.vmem [resolvable:$true] %s599
          %605 = dma.hbm_to_vmem [thread:$0]  %s1, 2560, %s600, [#allocation4], 256, 256, 16
        $region16: #{tpu_custom_call.1} parent=11 // pred_fallthru
          _
        // Predicated region
        $region17: #{tpu_custom_call.1} parent=11 // pred_check
          %p606 = pneg %p111
        $region18: #{tpu_custom_call.1} parent=11 // pred_check_branch
          %608 = sbr.rel (%p606) target = $region20
        $region19: #{tpu_custom_call.1} parent=11 // pred_region
          _
        $region20: #{tpu_custom_call.1} parent=11 // pred_fallthru
          _
        // Predicated region
        $region21: #{tpu_custom_call.1} parent=11 // pred_check
          %p609 = pneg %p132
        $region22: #{tpu_custom_call.1} parent=11 // pred_check_branch
          %611 = sbr.rel (%p609) target = $region24
        $region23: #{tpu_custom_call.1} parent=11 // pred_region
          _
        $region24: #{tpu_custom_call.1} parent=11 // pred_fallthru
          _
        // Predicated region
        $region25: #{tpu_custom_call.1} parent=11 // pred_check
          %p612 = pneg %p153
        $region26: #{tpu_custom_call.1} parent=11 // pred_check_branch
          %614 = sbr.rel (%p612) target = $region28
        $region27: #{tpu_custom_call.1} parent=11 // pred_region
          %s616 = ssub.s32 16, 16
          %617 = vsyncadd [#allocation7], %s616
          %s619 = sshll.u32 [#allocation6], 4
          %s620 = int_to_ptr.vmem [resolvable:$true] %s619
          %622 = dma.hbm_to_vmem [thread:$0]  %s4, 16, %s620, [#allocation7]
        $region28: #{tpu_custom_call.1} parent=11 // pred_fallthru
          _
        // Predicated region
        $region29: #{tpu_custom_call.1} parent=11 // pred_check
          %p623 = pneg %p174
        $region30: #{tpu_custom_call.1} parent=11 // pred_check_branch
          %625 = sbr.rel (%p623) target = $region32
        $region31: #{tpu_custom_call.1} parent=11 // pred_region
          %s627 = ssub.s32 2048, 2048
          %628 = vsyncadd [#allocation7], %s627
          %s629 = sshll.u32 [#allocation8], 4
          %s630 = int_to_ptr.vmem [resolvable:$true] %s629
          %635 = dma.hbm_to_vmem [thread:$0]  %s5, 2048, %s630, [#allocation7], 64, 64, 4
        $region32: #{tpu_custom_call.1} parent=11 // pred_fallthru
          _
        // Predicated region
        $region33: #{tpu_custom_call.1} parent=11 // pred_check
          %p636 = pneg %p195
        $region34: #{tpu_custom_call.1} parent=11 // pred_check_branch
          %638 = sbr.rel (%p636) target = $region36
        $region35: #{tpu_custom_call.1} parent=11 // pred_region
          %s640 = ssub.s32 32, 32
          %641 = vsyncadd [#allocation10], %s640
          %s643 = sshll.u32 [#allocation9], 4
          %s644 = int_to_ptr.vmem [resolvable:$true] %s643
          %646 = dma.hbm_to_vmem [thread:$0]  %s6, 32, %s644, [#allocation10]
        $region36: #{tpu_custom_call.1} parent=11 // pred_fallthru
          _
        // Predicated region
        $region37: #{tpu_custom_call.1} parent=11 // pred_check
          %p647 = pneg %p216
        $region38: #{tpu_custom_call.1} parent=11 // pred_check_branch
          %649 = sbr.rel (%p647) target = $region40
        $region39: #{tpu_custom_call.1} parent=11 // pred_region
          _
        $region40: #{tpu_custom_call.1} parent=11 // pred_fallthru
          _
        // Predicated region
        $region41: #{tpu_custom_call.1} parent=11 // pred_check
          %p650 = pneg %p237
        $region42: #{tpu_custom_call.1} parent=11 // pred_check_branch
          %652 = sbr.rel (%p650) target = $region44
        $region43: #{tpu_custom_call.1} parent=11 // pred_region
          %s654 = ssub.s32 96, 96
          %655 = vsyncadd [#allocation10], %s654
          %s656 = sshll.u32 [#allocation11], 4
          %s657 = int_to_ptr.vmem [resolvable:$true] %s656
          %662 = dma.hbm_to_vmem [thread:$0]  %s8, 96, %s657, [#allocation10], 48, 48, 3
        $region44: #{tpu_custom_call.1} parent=11 // pred_fallthru
          _
        // Predicated region
        $region45: #{tpu_custom_call.1} parent=11 // pred_check
          %p663 = pneg %p258
        $region46: #{tpu_custom_call.1} parent=11 // pred_check_branch
          %665 = sbr.rel (%p663) target = $region48
        $region47: #{tpu_custom_call.1} parent=11 // pred_region
          %s667 = ssub.s32 2048, 2048
          %668 = vsyncadd [#allocation13], %s667
          %s669 = sshll.u32 [#allocation12], 4
          %s670 = int_to_ptr.vmem [resolvable:$true] %s669
          %675 = dma.hbm_to_vmem [thread:$0]  %s9, 2048, %s670, [#allocation13], 64, 64, 4
        $region48: #{tpu_custom_call.1} parent=11 // pred_fallthru
          _
        // Predicated region
        $region49: #{tpu_custom_call.1} parent=11 // pred_check
          %p676 = pneg %p279
        $region50: #{tpu_custom_call.1} parent=11 // pred_check_branch
          %678 = sbr.rel (%p676) target = $region52
        $region51: #{tpu_custom_call.1} parent=11 // pred_region
          %s680 = ssub.s32 32, 32
          %681 = vsyncadd [#allocation13], %s680
          %s682 = sshll.u32 [#allocation14], 4
          %s683 = int_to_ptr.vmem [resolvable:$true] %s682
          %688 = dma.hbm_to_vmem [thread:$0]  %s10, 32, %s683, [#allocation13], 16, 16, 1
        $region52: #{tpu_custom_call.1} parent=11 // pred_fallthru
          _
        // Predicated region
        $region53: #{tpu_custom_call.1} parent=11 // pred_check
          %p689 = pneg %p300
        $region54: #{tpu_custom_call.1} parent=11 // pred_check_branch
          %691 = sbr.rel (%p689) target = $region56
        $region55: #{tpu_custom_call.1} parent=11 // pred_region
          %s693 = ssub.s32 4096, 4096
          %694 = vsyncadd [#allocation16], %s693
          %s695 = sshll.u32 [#allocation15], 4
          %s696 = int_to_ptr.vmem [resolvable:$true] %s695
          %701 = dma.hbm_to_vmem [thread:$0]  %s11, 4096, %s696, [#allocation16], 128, 128, 8
        $region56: #{tpu_custom_call.1} parent=11 // pred_fallthru
          _
        // Predicated region
        $region57: #{tpu_custom_call.1} parent=11 // pred_check
          %p702 = pneg %p321
        $region58: #{tpu_custom_call.1} parent=11 // pred_check_branch
          %704 = sbr.rel (%p702) target = $region60
        $region59: #{tpu_custom_call.1} parent=11 // pred_region
          %s706 = ssub.s32 64, 64
          %707 = vsyncadd [#allocation16], %s706
          %s708 = sshll.u32 [#allocation17], 4
          %s709 = int_to_ptr.vmem [resolvable:$true] %s708
          %714 = dma.hbm_to_vmem [thread:$0]  %s12, 64, %s709, [#allocation16], 32, 32, 2
        $region60: #{tpu_custom_call.1} parent=11 // pred_fallthru
          _
        // Predicated region
        $region61: #{tpu_custom_call.1} parent=11 // pred_check
          %p715 = pneg %p342
        $region62: #{tpu_custom_call.1} parent=11 // pred_check_branch
          %717 = sbr.rel (%p715) target = $region64
        $region63: #{tpu_custom_call.1} parent=11 // pred_region
          %s719 = ssub.s32 4096, 4096
          %720 = vsyncadd [#allocation19], %s719
          %s721 = sshll.u32 [#allocation18], 4
          %s722 = int_to_ptr.vmem [resolvable:$true] %s721
          %727 = dma.hbm_to_vmem [thread:$0]  %s13, 4096, %s722, [#allocation19], 64, 64, 4
        $region64: #{tpu_custom_call.1} parent=11 // pred_fallthru
          _
        // Predicated region
        $region65: #{tpu_custom_call.1} parent=11 // pred_check
          %p728 = pneg %p363
        $region66: #{tpu_custom_call.1} parent=11 // pred_check_branch
          %730 = sbr.rel (%p728) target = $region68
        $region67: #{tpu_custom_call.1} parent=11 // pred_region
          %s732 = ssub.s32 32, 32
          %733 = vsyncadd [#allocation19], %s732
          %s734 = sshll.u32 [#allocation20], 4
          %s735 = int_to_ptr.vmem [resolvable:$true] %s734
          %740 = dma.hbm_to_vmem [thread:$0]  %s14, 32, %s735, [#allocation19], 16, 16, 1
        $region68: #{tpu_custom_call.1} parent=11 // pred_fallthru
          _
        // Predicated region
        $region69: #{tpu_custom_call.1} parent=11 // pred_check
          %p741 = pneg %p384
        $region70: #{tpu_custom_call.1} parent=11 // pred_check_branch
          %743 = sbr.rel (%p741) target = $region72
        $region71: #{tpu_custom_call.1} parent=11 // pred_region
          %s745 = ssub.s32 128, 128
          %746 = vsyncadd [#allocation22], %s745
          %s747 = sshll.u32 [#allocation21], 4
          %s748 = int_to_ptr.vmem [resolvable:$true] %s747
          %753 = dma.hbm_to_vmem [thread:$0]  %s15, 128, %s748, [#allocation22], 64, 64, 4
        $region72: #{tpu_custom_call.1} parent=11 // pred_fallthru
          _
        // Predicated region
        $region73: #{tpu_custom_call.1} parent=11 // pred_check
          %p754 = pneg %p405
        $region74: #{tpu_custom_call.1} parent=11 // pred_check_branch
          %756 = sbr.rel (%p754) target = $region76
        $region75: #{tpu_custom_call.1} parent=11 // pred_region
          _
        $region76: #{tpu_custom_call.1} parent=11 // pred_fallthru
          _
        // Predicated region
        $region77: #{tpu_custom_call.1} parent=11 // pred_check
          %p757 = pneg %p426
        $region78: #{tpu_custom_call.1} parent=11 // pred_check_branch
          %759 = sbr.rel (%p757) target = $region80
        $region79: #{tpu_custom_call.1} parent=11 // pred_region
          %s761 = ssub.s32 32, 32
          %762 = vsyncadd [#allocation22], %s761
          %s764 = sshll.u32 [#allocation23], 4
          %s765 = int_to_ptr.vmem [resolvable:$true] %s764
          %767 = dma.hbm_to_vmem [thread:$0]  %s17, 32, %s765, [#allocation22]
        $region80: #{tpu_custom_call.1} parent=11 // pred_fallthru
          _
        // Predicated region
        $region81: #{tpu_custom_call.1} parent=11 // pred_check
          %p768 = pneg %p447
        $region82: #{tpu_custom_call.1} parent=11 // pred_check_branch
          %770 = sbr.rel (%p768) target = $region84
        $region83: #{tpu_custom_call.1} parent=11 // pred_region
          _
        $region84: #{tpu_custom_call.1} parent=11 // pred_fallthru
          _
        // Predicated region
        $region85: #{tpu_custom_call.1} parent=11 // pred_check
          %p771 = pneg %p468
        $region86: #{tpu_custom_call.1} parent=11 // pred_check_branch
          %773 = sbr.rel (%p771) target = $region88
        $region87: #{tpu_custom_call.1} parent=11 // pred_region
          _
        $region88: #{tpu_custom_call.1} parent=11 // pred_fallthru
          _
        // Predicated region
        $region89: #{tpu_custom_call.1} parent=11 // pred_check
          %p774 = pneg %p489
        $region90: #{tpu_custom_call.1} parent=11 // pred_check_branch
          %776 = sbr.rel (%p774) target = $region92
        $region91: #{tpu_custom_call.1} parent=11 // pred_region
          %s778 = ssub.s32 2304, 2304
          %779 = vsyncadd [#allocation25], %s778
          %s780 = sshll.u32 [#allocation24], 4
          %s781 = int_to_ptr.vmem [resolvable:$true] %s780
          %786 = dma.hbm_to_vmem [thread:$0]  %s20, 2304, %s781, [#allocation25], 64, 64, 4
        $region92: #{tpu_custom_call.1} parent=11 // pred_fallthru
          _
        // Predicated region
        $region93: #{tpu_custom_call.1} parent=11 // pred_check
          %p787 = pneg %p510
        $region94: #{tpu_custom_call.1} parent=11 // pred_check_branch
          %789 = sbr.rel (%p787) target = $region96
        $region95: #{tpu_custom_call.1} parent=11 // pred_region
          _
        $region96: #{tpu_custom_call.1} parent=11 // pred_fallthru
          _
        // Predicated region
        $region97: #{tpu_custom_call.1} parent=11 // pred_check
          %p790 = pneg %p531
        $region98: #{tpu_custom_call.1} parent=11 // pred_check_branch
          %792 = sbr.rel (%p790) target = $region100
        $region99: #{tpu_custom_call.1} parent=11 // pred_region
          _
        $region100: #{tpu_custom_call.1} parent=11 // pred_fallthru
          _
        // Predicated region
        $region101: #{tpu_custom_call.1} parent=11 // pred_check
          %p793 = pneg %p552
        $region102: #{tpu_custom_call.1} parent=11 // pred_check_branch
          %795 = sbr.rel (%p793) target = $region104
        $region103: #{tpu_custom_call.1} parent=11 // pred_region
          _
        $region104: #{tpu_custom_call.1} parent=11 // pred_fallthru
          _
      $region12: #{tpu_custom_call.1} parent=5 // pred_fallthru
        _
      %p796 = scmp.lt.s32.totalorder %s43, 2
      // Predicated region
      $region105: #{tpu_custom_call.1} parent=5 // pred_check
        %p797 = pneg %p796
      $region106: #{tpu_custom_call.1} parent=5 // pred_check_branch
        %799 = sbr.rel (%p797) target = $region108
      $region107: #{tpu_custom_call.1} parent=5 // pred_region
        // Predicated region
        $region109: #{tpu_custom_call.1} parent=107 // pred_check
          %p800 = pneg %p63
        $region110: #{tpu_custom_call.1} parent=107 // pred_check_branch
          %802 = sbr.rel (%p800) target = $region112
        $region111: #{tpu_custom_call.1} parent=107 // pred_region
          %s803 = smul.u32 8, %s43
          %p804 = scmp.lt.s32.totalorder %s803, 15
          %s805 = scalar_select %p804, %s803, 15
          %s806 = smul.addr %s805, 8
          %s807 = scalar_lea.vmem %s0, %s806
          %s808 = smul.u32 8, %s43
        $region112: #{tpu_custom_call.1} parent=107 // pred_fallthru
          _
      $region108: #{tpu_custom_call.1} parent=5 // pred_fallthru
        _
      %p809 = scmp.le.s32.totalorder 1, %s43
      %p810 = scmp.lt.s32.totalorder %s43, 3
      %p811 = pnand %p809, %p810
      %p812 = pneg %p811
      // Predicated region
      $region113: #{tpu_custom_call.1} parent=5 // pred_check
        _
      $region114: #{tpu_custom_call.1} parent=5 // pred_check_branch
        %814 = sbr.rel (%p811) target = $region116
      $region115: #{tpu_custom_call.1} parent=5 // pred_region
        %s815 = ssub.s32 %s43, 1
        // Predicated region
        $region117: #{tpu_custom_call.1} parent=115 // pred_check
          %p816 = pneg %p90
        $region118: #{tpu_custom_call.1} parent=115 // pred_check_branch
          %818 = sbr.rel (%p816) target = $region120
        $region119: #{tpu_custom_call.1} parent=115 // pred_region
          %819 = dma.done [#allocation4], 2560
        $region120: #{tpu_custom_call.1} parent=115 // pred_fallthru
          _
        // Predicated region
        $region121: #{tpu_custom_call.1} parent=115 // pred_check
          %p820 = pneg %p153
        $region122: #{tpu_custom_call.1} parent=115 // pred_check_branch
          %822 = sbr.rel (%p820) target = $region124
        $region123: #{tpu_custom_call.1} parent=115 // pred_region
          %823 = dma.done [#allocation7], 16
        $region124: #{tpu_custom_call.1} parent=115 // pred_fallthru
          _
        // Predicated region
        $region125: #{tpu_custom_call.1} parent=115 // pred_check
          %p824 = pneg %p174
        $region126: #{tpu_custom_call.1} parent=115 // pred_check_branch
          %826 = sbr.rel (%p824) target = $region128
        $region127: #{tpu_custom_call.1} parent=115 // pred_region
          %827 = dma.done [#allocation7], 2048
        $region128: #{tpu_custom_call.1} parent=115 // pred_fallthru
          _
        // Predicated region
        $region129: #{tpu_custom_call.1} parent=115 // pred_check
          %p828 = pneg %p195
        $region130: #{tpu_custom_call.1} parent=115 // pred_check_branch
          %830 = sbr.rel (%p828) target = $region132
        $region131: #{tpu_custom_call.1} parent=115 // pred_region
          %831 = dma.done [#allocation10], 32
        $region132: #{tpu_custom_call.1} parent=115 // pred_fallthru
          _
        // Predicated region
        $region133: #{tpu_custom_call.1} parent=115 // pred_check
          %p832 = pneg %p237
        $region134: #{tpu_custom_call.1} parent=115 // pred_check_branch
          %834 = sbr.rel (%p832) target = $region136
        $region135: #{tpu_custom_call.1} parent=115 // pred_region
          %835 = dma.done [#allocation10], 96
        $region136: #{tpu_custom_call.1} parent=115 // pred_fallthru
          _
        // Predicated region
        $region137: #{tpu_custom_call.1} parent=115 // pred_check
          %p836 = pneg %p258
        $region138: #{tpu_custom_call.1} parent=115 // pred_check_branch
          %838 = sbr.rel (%p836) target = $region140
        $region139: #{tpu_custom_call.1} parent=115 // pred_region
          %839 = dma.done [#allocation13], 2048
        $region140: #{tpu_custom_call.1} parent=115 // pred_fallthru
          _
        // Predicated region
        $region141: #{tpu_custom_call.1} parent=115 // pred_check
          %p840 = pneg %p279
        $region142: #{tpu_custom_call.1} parent=115 // pred_check_branch
          %842 = sbr.rel (%p840) target = $region144
        $region143: #{tpu_custom_call.1} parent=115 // pred_region
          %843 = dma.done [#allocation13], 32
        $region144: #{tpu_custom_call.1} parent=115 // pred_fallthru
          _
        // Predicated region
        $region145: #{tpu_custom_call.1} parent=115 // pred_check
          %p844 = pneg %p300
        $region146: #{tpu_custom_call.1} parent=115 // pred_check_branch
          %846 = sbr.rel (%p844) target = $region148
        $region147: #{tpu_custom_call.1} parent=115 // pred_region
          %847 = dma.done [#allocation16], 4096
        $region148: #{tpu_custom_call.1} parent=115 // pred_fallthru
          _
        // Predicated region
        $region149: #{tpu_custom_call.1} parent=115 // pred_check
          %p848 = pneg %p321
        $region150: #{tpu_custom_call.1} parent=115 // pred_check_branch
          %850 = sbr.rel (%p848) target = $region152
        $region151: #{tpu_custom_call.1} parent=115 // pred_region
          %851 = dma.done [#allocation16], 64
        $region152: #{tpu_custom_call.1} parent=115 // pred_fallthru
          _
        // Predicated region
        $region153: #{tpu_custom_call.1} parent=115 // pred_check
          %p852 = pneg %p342
        $region154: #{tpu_custom_call.1} parent=115 // pred_check_branch
          %854 = sbr.rel (%p852) target = $region156
        $region155: #{tpu_custom_call.1} parent=115 // pred_region
          %855 = dma.done [#allocation19], 4096
        $region156: #{tpu_custom_call.1} parent=115 // pred_fallthru
          _
        // Predicated region
        $region157: #{tpu_custom_call.1} parent=115 // pred_check
          %p856 = pneg %p363
        $region158: #{tpu_custom_call.1} parent=115 // pred_check_branch
          %858 = sbr.rel (%p856) target = $region160
        $region159: #{tpu_custom_call.1} parent=115 // pred_region
          %859 = dma.done [#allocation19], 32
        $region160: #{tpu_custom_call.1} parent=115 // pred_fallthru
          _
        // Predicated region
        $region161: #{tpu_custom_call.1} parent=115 // pred_check
          %p860 = pneg %p384
        $region162: #{tpu_custom_call.1} parent=115 // pred_check_branch
          %862 = sbr.rel (%p860) target = $region164
        $region163: #{tpu_custom_call.1} parent=115 // pred_region
          %863 = dma.done [#allocation22], 128
        $region164: #{tpu_custom_call.1} parent=115 // pred_fallthru
          _
        // Predicated region
        $region165: #{tpu_custom_call.1} parent=115 // pred_check
          %p864 = pneg %p426
        $region166: #{tpu_custom_call.1} parent=115 // pred_check_branch
          %866 = sbr.rel (%p864) target = $region168
        $region167: #{tpu_custom_call.1} parent=115 // pred_region
          %867 = dma.done [#allocation22], 32
        $region168: #{tpu_custom_call.1} parent=115 // pred_fallthru
          _
        // Predicated region
        $region169: #{tpu_custom_call.1} parent=115 // pred_check
          %p868 = pneg %p489
        $region170: #{tpu_custom_call.1} parent=115 // pred_check_branch
          %870 = sbr.rel (%p868) target = $region172
        $region171: #{tpu_custom_call.1} parent=115 // pred_region
          %871 = dma.done [#allocation25], 2304
        $region172: #{tpu_custom_call.1} parent=115 // pred_fallthru
          _
        %s872 = smul.u32 8, %s48
        %p873 = scmp.lt.s32.totalorder %s872, 15
        %s874 = scalar_select %p873, %s872, 15
        %s875 = smul.addr %s874, 8
        %s876 = scalar_lea.vmem %s0, %s875
        %p877 = pneg %p69
        %p878 = pneg %p66
        %p879 = pneg %p90
        %p880 = pneg %p87
        %p881 = pneg %p111
        %p882 = pneg %p108
        %p883 = pneg %p132
        %p884 = pneg %p129
        %p885 = pneg %p153
        %p886 = pneg %p150
        %p887 = pneg %p174
        %p888 = pneg %p171
        %p889 = pneg %p195
        %p890 = pneg %p192
        %p891 = pneg %p216
        %p892 = pneg %p213
        %p893 = pneg %p237
        %p894 = pneg %p234
        %p895 = pneg %p258
        %p896 = pneg %p255
        %p897 = pneg %p279
        %p898 = pneg %p276
        %p899 = pneg %p300
        %p900 = pneg %p297
        %p901 = pneg %p321
        %p902 = pneg %p318
        %p903 = pneg %p342
        %p904 = pneg %p339
        %p905 = pneg %p363
        %p906 = pneg %p360
        %p907 = pneg %p384
        %p908 = pneg %p381
        %p909 = pneg %p405
        %p910 = pneg %p402
        %p911 = pneg %p426
        %p912 = pneg %p423
        %p913 = pneg %p447
        %p914 = pneg %p444
        %p915 = pneg %p468
        %p916 = pneg %p465
        %p917 = pneg %p489
        %p918 = pneg %p486
        %p919 = pneg %p510
        %p920 = pneg %p507
        %p921 = pneg %p531
        %p922 = pneg %p528
        %p923 = pneg %p552
        %p924 = pneg %p549
        %p925 = pneg %p578
        %p926 = pneg %p575
        %s927 = sand.u32 %s565, 1
        %s928 = scalar_lea.sflag [#allocation5], %s927
        %s929 = sand.u32 %s565, 1
        %s930 = smul.addr %s929, 64
        %s931 = scalar_lea.vmem [#allocation26], %s930
        %s932 = smul.u32 8, %s48
        %p933 = scmp.lt.s32.totalorder %s932, 15
        %s934 = scalar_select %p933, %s932, 15
        %s935 = smul.addr %s934, 8
        %s936 = scalar_lea.vmem %s0, %s935
        %s937 = smul.u32 8, %s48
        %s938 = smul.u32 8, %s48
        %v940 = vld [vmem:[%s936] sm:$0xff]
        %v941 = vld [vmem:[%s936 + $0x8] sm:$0xff]
        %v942 = vld [vmem:[%s936 + $0x10] sm:$0xff]
        %v943 = vld [vmem:[%s936 + $0x18] sm:$0xff]
        %v944 = vld [vmem:[%s936 + $0x20] sm:$0xff]
        %v945 = vld [vmem:[%s936 + $0x28] sm:$0xff]
        %v946 = vld [vmem:[%s936 + $0x30] sm:$0xff]
        %v947 = vld [vmem:[%s936 + $0x38] sm:$0xff]
        %v948 = vld [vmem:[#allocation3] sm:$0xff]
        %v949 = vld [vmem:[#allocation3 + $0x8] sm:$0xff]
        %v950 = vld [vmem:[#allocation3 + $0x10] sm:$0xff]
        %v951 = vld [vmem:[#allocation3 + $0x18] sm:$0xff]
        %v952 = vld [vmem:[#allocation3 + $0x20] sm:$0xff]
        %v953 = vld [vmem:[#allocation3 + $0x28] sm:$0xff]
        %v954 = vld [vmem:[#allocation3 + $0x30] sm:$0xff]
        %v955 = vld [vmem:[#allocation3 + $0x38] sm:$0xff]
        %v956 = vld [vmem:[#allocation3 + $0x40] sm:$0xff]
        %v957 = vld [vmem:[#allocation3 + $0x48] sm:$0xff]
        %v958 = vld [vmem:[#allocation3 + $0x50] sm:$0xff]
        %v959 = vld [vmem:[#allocation3 + $0x58] sm:$0xff]
        %v960 = vld [vmem:[#allocation3 + $0x60] sm:$0xff]
        %v961 = vld [vmem:[#allocation3 + $0x68] sm:$0xff]
        %v962 = vld [vmem:[#allocation3 + $0x70] sm:$0xff]
        %v963 = vld [vmem:[#allocation3 + $0x78] sm:$0xff]
        %v964 = vld [vmem:[#allocation3 + $0x80] sm:$0xff]
        %v965 = vld [vmem:[#allocation3 + $0x88] sm:$0xff]
        %v966 = vld [vmem:[#allocation3 + $0x90] sm:$0xff]
        %v967 = vld [vmem:[#allocation3 + $0x98] sm:$0xff]
        %v968 = vpack.c.bf16 %v941, %v940
        %v969 = vpack.c.bf16 %v943, %v942
        %v970 = vpack.c.bf16 %v945, %v944
        %v971 = vpack.c.bf16 %v947, %v946
        %v972 = vld [vmem:[%s2] sm:$0xf]
        %v974 = vlaneseq
        %v975 = vshrl.u32 %v974, 7
        %v976 = vsub.s32 0, %v975
        %v977 = vrot.slane %v972, %v976
        %v978 = vlaneseq
        %v979 = vshrl.u32 %v978, 7
        %v980 = vsub.s32 1, %v979
        %v981 = vrot.slane %v972, %v980
        %v982 = vlaneseq
        %v983 = vshrl.u32 %v982, 7
        %v984 = vsub.s32 2, %v983
        %v985 = vrot.slane %v972, %v984
        %v986 = vlaneseq
        %v987 = vshrl.u32 %v986, 7
        %v988 = vsub.s32 3, %v987
        %v989 = vrot.slane %v972, %v988
        %v1014 = vunpack.c.l.b16 %v948
        %v1015 = vunpack.c.h.b16 %v948
        %v1016 = vunpack.c.l.b16 %v949
        %v1017 = vunpack.c.h.b16 %v949
        %v1018 = vunpack.c.l.b16 %v950
        %v1019 = vunpack.c.h.b16 %v950
        %v1020 = vunpack.c.l.b16 %v951
        %v1021 = vunpack.c.h.b16 %v951
        %v1022 = vunpack.c.l.b16 %v952
        %v1023 = vunpack.c.h.b16 %v952
        %v1024 = vunpack.c.l.b16 %v953
        %v1025 = vunpack.c.h.b16 %v953
        %v1026 = vunpack.c.l.b16 %v954
        %v1027 = vunpack.c.h.b16 %v954
        %v1028 = vunpack.c.l.b16 %v955
        %v1029 = vunpack.c.h.b16 %v955
        %v1030 = vunpack.c.l.b16 %v956
        %v1031 = vunpack.c.h.b16 %v956
        %v1032 = vunpack.c.l.b16 %v957
        %v1033 = vunpack.c.h.b16 %v957
        %v1034 = vunpack.c.l.b16 %v958
        %v1035 = vunpack.c.h.b16 %v958
        %v1036 = vunpack.c.l.b16 %v959
        %v1037 = vunpack.c.h.b16 %v959
        %v1038 = vunpack.c.l.b16 %v960
        %v1039 = vunpack.c.h.b16 %v960
        %v1040 = vunpack.c.l.b16 %v961
        %v1041 = vunpack.c.h.b16 %v961
        %v1042 = vunpack.c.l.b16 %v962
        %v1043 = vunpack.c.h.b16 %v962
        %v1044 = vunpack.c.l.b16 %v963
        %v1045 = vunpack.c.h.b16 %v963
        %v1046 = vunpack.c.l.b16 %v964
        %v1047 = vunpack.c.h.b16 %v964
        %v1048 = vunpack.c.l.b16 %v965
        %v1049 = vunpack.c.h.b16 %v965
        %v1050 = vunpack.c.l.b16 %v966
        %v1051 = vunpack.c.h.b16 %v966
        %v1052 = vunpack.c.l.b16 %v967
        %v1053 = vunpack.c.h.b16 %v967
        %v1054 = vpack.c.b16 %v1018, %v1014
        %v1055 = vpack.c.b16 %v1019, %v1015
        %v1056 = vpack.c.b16 %v1020, %v1016
        %v1057 = vpack.c.b16 %v1021, %v1017
        %v1058 = vpack.c.b16 %v1026, %v1022
        %v1059 = vpack.c.b16 %v1027, %v1023
        %v1060 = vpack.c.b16 %v1028, %v1024
        %v1061 = vpack.c.b16 %v1029, %v1025
        %v1062 = vpack.c.b16 %v1034, %v1030
        %v1063 = vpack.c.b16 %v1035, %v1031
        %v1064 = vpack.c.b16 %v1036, %v1032
        %v1065 = vpack.c.b16 %v1037, %v1033
        %v1066 = vpack.c.b16 %v1042, %v1038
        %v1067 = vpack.c.b16 %v1043, %v1039
        %v1068 = vpack.c.b16 %v1044, %v1040
        %v1069 = vpack.c.b16 %v1045, %v1041
        %v1070 = vpack.c.b16 %v1050, %v1046
        %v1071 = vpack.c.b16 %v1051, %v1047
        %v1072 = vpack.c.b16 %v1052, %v1048
        %v1073 = vpack.c.b16 %v1053, %v1049
        %vm1094 = vcmask 654336
        %v1096 = vsel %vm1094, %v968, 0
        %v1099 = vsel %vm1094, %v969, 0
        %v1102 = vsel %vm1094, %v970, 0
        %v1105 = vsel %vm1094, %v971, 0
        %1107 = vmatprep.subr.bf16.mxu0 0
        %1108 = vmatpush1.bf16.msra.mxu0 0
        %1109 = vmatprep.subr.bf16.mxu0 0
        %1110 = vmatpush1.bf16.msra.mxu0 0
        %1111 = vmatprep.subr.bf16.mxu0 0
        %1112 = vmatpush1.bf16.msra.mxu0 0
        %1113 = vmatprep.subr.bf16.mxu0 %v1071
        %1114 = vmatpush1.bf16.msra.mxu0 %v1070
        %1115 = vmatprep.subr.bf16.mxu0 %v1067
        %1116 = vmatpush1.bf16.msra.mxu0 %v1066
        %1117 = vmatprep.subr.bf16.mxu0 %v1063
        %1118 = vmatpush1.bf16.msra.mxu0 %v1062
        %1119 = vmatprep.subr.bf16.mxu0 %v1059
        %1120 = vmatpush1.bf16.msra.mxu0 %v1058
        %1121 = vmatprep.subr.bf16.mxu0 %v1055
        %1122 = vmatpush1.bf16.msra.mxu0 %v1054
        %1123 = vmatprep.subr.bf16.mxu0 0
        %1124 = vmatpush2.bf16.msra.mxu0 0
        %1125 = vmatprep.subr.bf16.mxu0 0
        %1126 = vmatpush2.bf16.msra.mxu0 0
        %1127 = vmatprep.subr.bf16.mxu0 0
        %1128 = vmatpush2.bf16.msra.mxu0 0
        %1129 = vmatprep.subr.bf16.mxu0 0
        %1130 = vmatpush2.bf16.msra.mxu0 0
        %1131 = vmatprep.subr.bf16.mxu0 0
        %1132 = vmatpush2.bf16.msra.mxu0 0
        %1133 = vmatprep.subr.bf16.mxu0 0
        %1134 = vmatpush2.bf16.msra.mxu0 0
        %1135 = vmatprep.subr.bf16.mxu0 0
        %1136 = vmatpush2.bf16.msra.mxu0 0
        %1137 = vmatprep.subr.bf16.mxu0 0
        %1138 = vmatpush2.bf16.msra.mxu0 0
        %1139 = vmatprep.mubr.bf16.mxu0 0
        %1140 = vmatmul.mubr.bf16.gmra.mxu0 %v1096
        %v1141 = vpop.f32.mrf.mxu0
        %v1142 = vadd.f32 %v977, %v1141
        %v1143 = vpop.f32.mrf.mxu0
        %v1144 = vadd.f32 %v981, %v1143
        %v1145 = vpop.f32.mrf.mxu0
        %v1146 = vadd.f32 %v977, %v1145
        %v1147 = vpop.f32.mrf.mxu0
        %v1148 = vadd.f32 %v981, %v1147
        %1149 = vmatprep.mubr.bf16.mxu0 0
        %1150 = vmatmul.mubr.bf16.gmra.mxu0 %v1099
        %v1151 = vpop.f32.mrf.mxu0
        %v1152 = vadd.f32 %v977, %v1151
        %v1153 = vpop.f32.mrf.mxu0
        %v1154 = vadd.f32 %v981, %v1153
        %v1155 = vpop.f32.mrf.mxu0
        %v1156 = vadd.f32 %v977, %v1155
        %v1157 = vpop.f32.mrf.mxu0
        %v1158 = vadd.f32 %v981, %v1157
        %1159 = vmatprep.mubr.bf16.mxu0 0
        %1160 = vmatmul.mubr.bf16.gmra.mxu0 %v1102
        %v1161 = vpop.f32.mrf.mxu0
        %v1162 = vadd.f32 %v977, %v1161
        %v1163 = vpop.f32.mrf.mxu0
        %v1164 = vadd.f32 %v981, %v1163
        %v1165 = vpop.f32.mrf.mxu0
        %v1166 = vadd.f32 %v977, %v1165
        %v1167 = vpop.f32.mrf.mxu0
        %v1168 = vadd.f32 %v981, %v1167
        %1169 = vmatprep.mubr.bf16.mxu0 0
        %1170 = vmatmul.mubr.bf16.gmra.mxu0 %v1105
        %v1171 = vpop.f32.mrf.mxu0
        %v1172 = vadd.f32 %v977, %v1171
        %v1173 = vpop.f32.mrf.mxu0
        %v1174 = vadd.f32 %v981, %v1173
        %v1175 = vpop.f32.mrf.mxu0
        %v1176 = vadd.f32 %v977, %v1175
        %v1177 = vpop.f32.mrf.mxu0
        %v1178 = vadd.f32 %v981, %v1177
        %1179 = vdwg.mxu0
        %1180 = vmatprep.subr.bf16.mxu0 0
        %1181 = vmatpush1.bf16.msra.mxu0 0
        %1182 = vmatprep.subr.bf16.mxu0 0
        %1183 = vmatpush1.bf16.msra.mxu0 0
        %1184 = vmatprep.subr.bf16.mxu0 0
        %1185 = vmatpush1.bf16.msra.mxu0 0
        %1186 = vmatprep.subr.bf16.mxu0 %v1073
        %1187 = vmatpush1.bf16.msra.mxu0 %v1072
        %1188 = vmatprep.subr.bf16.mxu0 %v1069
        %1189 = vmatpush1.bf16.msra.mxu0 %v1068
        %1190 = vmatprep.subr.bf16.mxu0 %v1065
        %1191 = vmatpush1.bf16.msra.mxu0 %v1064
        %1192 = vmatprep.subr.bf16.mxu0 %v1061
        %1193 = vmatpush1.bf16.msra.mxu0 %v1060
        %1194 = vmatprep.subr.bf16.mxu0 %v1057
        %1195 = vmatpush1.bf16.msra.mxu0 %v1056
        %1196 = vmatprep.subr.bf16.mxu0 0
        %1197 = vmatpush2.bf16.msra.mxu0 0
        %1198 = vmatprep.subr.bf16.mxu0 0
        %1199 = vmatpush2.bf16.msra.mxu0 0
        %1200 = vmatprep.subr.bf16.mxu0 0
        %1201 = vmatpush2.bf16.msra.mxu0 0
        %1202 = vmatprep.subr.bf16.mxu0 0
        %1203 = vmatpush2.bf16.msra.mxu0 0
        %1204 = vmatprep.subr.bf16.mxu0 0
        %1205 = vmatpush2.bf16.msra.mxu0 0
        %1206 = vmatprep.subr.bf16.mxu0 0
        %1207 = vmatpush2.bf16.msra.mxu0 0
        %1208 = vmatprep.subr.bf16.mxu0 0
        %1209 = vmatpush2.bf16.msra.mxu0 0
        %1210 = vmatprep.subr.bf16.mxu0 0
        %1211 = vmatpush2.bf16.msra.mxu0 0
        %1212 = vmatprep.mubr.bf16.mxu0 0
        %1213 = vmatmul.mubr.bf16.gmra.mxu0 %v1096
        %v1214 = vpop.f32.mrf.mxu0
        %v1215 = vadd.f32 %v985, %v1214
        %v1216 = vpop.f32.mrf.mxu0
        %v1217 = vadd.f32 %v989, %v1216
        %v1218 = vpop.f32.mrf.mxu0
        %v1219 = vadd.f32 %v985, %v1218
        %v1220 = vpop.f32.mrf.mxu0
        %v1221 = vadd.f32 %v989, %v1220
        %1222 = vmatprep.mubr.bf16.mxu0 0
        %1223 = vmatmul.mubr.bf16.gmra.mxu0 %v1099
        %v1224 = vpop.f32.mrf.mxu0
        %v1225 = vadd.f32 %v985, %v1224
        %v1226 = vpop.f32.mrf.mxu0
        %v1227 = vadd.f32 %v989, %v1226
        %v1228 = vpop.f32.mrf.mxu0
        %v1229 = vadd.f32 %v985, %v1228
        %v1230 = vpop.f32.mrf.mxu0
        %v1231 = vadd.f32 %v989, %v1230
        %1232 = vmatprep.mubr.bf16.mxu0 0
        %1233 = vmatmul.mubr.bf16.gmra.mxu0 %v1102
        %v1234 = vpop.f32.mrf.mxu0
        %v1235 = vadd.f32 %v985, %v1234
        %v1236 = vpop.f32.mrf.mxu0
        %v1237 = vadd.f32 %v989, %v1236
        %v1238 = vpop.f32.mrf.mxu0
        %v1239 = vadd.f32 %v985, %v1238
        %v1240 = vpop.f32.mrf.mxu0
        %v1241 = vadd.f32 %v989, %v1240
        %1242 = vmatprep.mubr.bf16.mxu0 0
        %1243 = vmatmul.mubr.bf16.gmra.mxu0 %v1105
        %v1244 = vpop.f32.mrf.mxu0
        %v1245 = vadd.f32 %v985, %v1244
        %v1246 = vpop.f32.mrf.mxu0
        %v1247 = vadd.f32 %v989, %v1246
        %v1248 = vpop.f32.mrf.mxu0
        %v1249 = vadd.f32 %v985, %v1248
        %v1250 = vpop.f32.mrf.mxu0
        %v1251 = vadd.f32 %v989, %v1250
        %1252 = vdwg.mxu0
        %v1253 = vmax.f32 %v1142, 0.0
        %v1254 = vmax.f32 %v1146, 0.0
        %v1255 = vmax.f32 %v1152, 0.0
        %v1256 = vmax.f32 %v1156, 0.0
        %v1257 = vmax.f32 %v1162, 0.0
        %v1258 = vmax.f32 %v1166, 0.0
        %v1259 = vmax.f32 %v1172, 0.0
        %v1260 = vmax.f32 %v1176, 0.0
        %v1261 = vmax.f32 %v1144, 0.0
        %v1262 = vmax.f32 %v1148, 0.0
        %v1263 = vmax.f32 %v1154, 0.0
        %v1264 = vmax.f32 %v1158, 0.0
        %v1265 = vmax.f32 %v1164, 0.0
        %v1266 = vmax.f32 %v1168, 0.0
        %v1267 = vmax.f32 %v1174, 0.0
        %v1268 = vmax.f32 %v1178, 0.0
        %v1269 = vadd.f32 %v1253, %v1261
        %v1270 = vadd.f32 %v1254, %v1262
        %v1271 = vadd.f32 %v1255, %v1263
        %v1272 = vadd.f32 %v1256, %v1264
        %v1273 = vadd.f32 %v1257, %v1265
        %v1274 = vadd.f32 %v1258, %v1266
        %v1275 = vadd.f32 %v1259, %v1267
        %v1276 = vadd.f32 %v1260, %v1268
        %v1277 = vmul.f32 %v1215, %v1215
        %v1278 = vmul.f32 %v1219, %v1219
        %v1279 = vmul.f32 %v1225, %v1225
        %v1280 = vmul.f32 %v1229, %v1229
        %v1281 = vmul.f32 %v1235, %v1235
        %v1282 = vmul.f32 %v1239, %v1239
        %v1283 = vmul.f32 %v1245, %v1245
        %v1284 = vmul.f32 %v1249, %v1249
        %v1285 = vsub.f32 %v1277, %v1217
        %v1286 = vsub.f32 %v1278, %v1221
        %v1287 = vsub.f32 %v1279, %v1227
        %v1288 = vsub.f32 %v1280, %v1231
        %v1289 = vsub.f32 %v1281, %v1237
        %v1290 = vsub.f32 %v1282, %v1241
        %v1291 = vsub.f32 %v1283, %v1247
        %v1292 = vsub.f32 %v1284, %v1251
        %v1293 = vmul.f32 %v1285, 0.5
        %v1294 = vmul.f32 %v1286, 0.5
        %v1295 = vmul.f32 %v1287, 0.5
        %v1296 = vmul.f32 %v1288, 0.5
        %v1297 = vmul.f32 %v1289, 0.5
        %v1298 = vmul.f32 %v1290, 0.5
        %v1299 = vmul.f32 %v1291, 0.5
        %v1300 = vmul.f32 %v1292, 0.5
        %v1301 = vld [vmem:[%s3] sm:$0xf]
        %v1302 = vld [vmem:[%s3 + $0x4] sm:$0xf]
        %v1303 = vld [vmem:[%s3 + $0x8] sm:$0xf]
        %v1304 = vld [vmem:[%s3 + $0xc] sm:$0xf]
        %v1305 = vld [vmem:[%s3 + $0x10] sm:$0xf]
        %v1306 = vld [vmem:[%s3 + $0x14] sm:$0xf]
        %v1307 = vld [vmem:[%s3 + $0x18] sm:$0xf]
        %v1308 = vld [vmem:[%s3 + $0x1c] sm:$0xf]
        %v1309 = vld [vmem:[%s3 + $0x20] sm:$0xf]
        %v1310 = vld [vmem:[%s3 + $0x24] sm:$0xf]
        %v1311 = vld [vmem:[%s3 + $0x28] sm:$0xf]
        %v1312 = vld [vmem:[%s3 + $0x2c] sm:$0xf]
        %v1313 = vld [vmem:[%s3 + $0x30] sm:$0xf]
        %v1314 = vld [vmem:[%s3 + $0x34] sm:$0xf]
        %v1315 = vld [vmem:[%s3 + $0x38] sm:$0xf]
        %v1316 = vld [vmem:[%s3 + $0x3c] sm:$0xf]
        %v1317 = vpack.c.bf16 %v1294, %v1293
        %v1318 = vpack.c.bf16 %v1296, %v1295
        %v1319 = vpack.c.bf16 %v1298, %v1297
        %v1320 = vpack.c.bf16 %v1300, %v1299
        %v1321 = vld [vmem:[#allocation6] sm:$0x1]
        %v1323 = vlaneseq
        %v1324 = vshrl.u32 %v1323, 7
        %v1325 = vsub.s32 0, %v1324
        %v1326 = vrot.slane %v1321, %v1325
        %v1344 = vunpack.c.l.b16 %v1301
        %v1345 = vunpack.c.l.b16 %v1302
        %v1346 = vunpack.c.l.b16 %v1303
        %v1347 = vunpack.c.l.b16 %v1304
        %v1348 = vunpack.c.l.b16 %v1305
        %v1349 = vunpack.c.l.b16 %v1306
        %v1350 = vunpack.c.l.b16 %v1307
        %v1351 = vunpack.c.l.b16 %v1308
        %v1352 = vunpack.c.l.b16 %v1309
        %v1353 = vunpack.c.l.b16 %v1310
        %v1354 = vunpack.c.l.b16 %v1311
        %v1355 = vunpack.c.l.b16 %v1312
        %v1356 = vunpack.c.l.b16 %v1313
        %v1357 = vunpack.c.l.b16 %v1314
        %v1358 = vunpack.c.l.b16 %v1315
        %v1359 = vunpack.c.l.b16 %v1316
        %v1360 = vpack.c.b16 %v1345, %v1344
        %v1361 = vpack.c.b16 %v1347, %v1346
        %v1362 = vpack.c.b16 %v1349, %v1348
        %v1363 = vpack.c.b16 %v1351, %v1350
        %v1364 = vpack.c.b16 %v1353, %v1352
        %v1365 = vpack.c.b16 %v1355, %v1354
        %v1366 = vpack.c.b16 %v1357, %v1356
        %v1367 = vpack.c.b16 %v1359, %v1358
        %1376 = vmatprep.subr.bf16.mxu0 0
        %1377 = vmatpush1.bf16.msra.mxu0 %v1367
        %1378 = vmatprep.subr.bf16.mxu0 0
        %1379 = vmatpush1.bf16.msra.mxu0 %v1366
        %1380 = vmatprep.subr.bf16.mxu0 0
        %1381 = vmatpush1.bf16.msra.mxu0 %v1365
        %1382 = vmatprep.subr.bf16.mxu0 0
        %1383 = vmatpush1.bf16.msra.mxu0 %v1364
        %1384 = vmatprep.subr.bf16.mxu0 0
        %1385 = vmatpush1.bf16.msra.mxu0 %v1363
        %1386 = vmatprep.subr.bf16.mxu0 0
        %1387 = vmatpush1.bf16.msra.mxu0 %v1362
        %1388 = vmatprep.subr.bf16.mxu0 0
        %1389 = vmatpush1.bf16.msra.mxu0 %v1361
        %1390 = vmatprep.subr.bf16.mxu0 0
        %1391 = vmatpush1.bf16.msra.mxu0 %v1360
        %1392 = vmatprep.subr.bf16.mxu0 0
        %1393 = vmatpush2.bf16.msra.mxu0 0
        %1394 = vmatprep.subr.bf16.mxu0 0
        %1395 = vmatpush2.bf16.msra.mxu0 0
        %1396 = vmatprep.subr.bf16.mxu0 0
        %1397 = vmatpush2.bf16.msra.mxu0 0
        %1398 = vmatprep.subr.bf16.mxu0 0
        %1399 = vmatpush2.bf16.msra.mxu0 0
        %1400 = vmatprep.subr.bf16.mxu0 0
        %1401 = vmatpush2.bf16.msra.mxu0 0
        %1402 = vmatprep.subr.bf16.mxu0 0
        %1403 = vmatpush2.bf16.msra.mxu0 0
        %1404 = vmatprep.subr.bf16.mxu0 0
        %1405 = vmatpush2.bf16.msra.mxu0 0
        %1406 = vmatprep.subr.bf16.mxu0 0
        %1407 = vmatpush2.bf16.msra.mxu0 0
        %1408 = vmatprep.mubr.bf16.mxu0 0
        %1409 = vmatmul.mubr.bf16.gmra.mxu0 %v1317
        %v1410 = vpop.f32.mrf.mxu0
        %v1411 = vadd.f32 %v1326, %v1410
        %v1412 = vpop.f32.mrf.mxu0
        %v1413 = vpop.f32.mrf.mxu0
        %v1414 = vadd.f32 %v1326, %v1413
        %v1415 = vpop.f32.mrf.mxu0
        %1416 = vmatprep.mubr.bf16.mxu0 0
        %1417 = vmatmul.mubr.bf16.gmra.mxu0 %v1318
        %v1418 = vpop.f32.mrf.mxu0
        %v1419 = vadd.f32 %v1326, %v1418
        %v1420 = vpop.f32.mrf.mxu0
        %v1421 = vpop.f32.mrf.mxu0
        %v1422 = vadd.f32 %v1326, %v1421
        %v1423 = vpop.f32.mrf.mxu0
        %1424 = vmatprep.mubr.bf16.mxu0 0
        %1425 = vmatmul.mubr.bf16.gmra.mxu0 %v1319
        %v1426 = vpop.f32.mrf.mxu0
        %v1427 = vadd.f32 %v1326, %v1426
        %v1428 = vpop.f32.mrf.mxu0
        %v1429 = vpop.f32.mrf.mxu0
        %v1430 = vadd.f32 %v1326, %v1429
        %v1431 = vpop.f32.mrf.mxu0
        %1432 = vmatprep.mubr.bf16.mxu0 0
        %1433 = vmatmul.mubr.bf16.gmra.mxu0 %v1320
        %v1434 = vpop.f32.mrf.mxu0
        %v1435 = vadd.f32 %v1326, %v1434
        %v1436 = vpop.f32.mrf.mxu0
        %v1437 = vpop.f32.mrf.mxu0
        %v1438 = vadd.f32 %v1326, %v1437
        %v1439 = vpop.f32.mrf.mxu0
        %1440 = vdwg.mxu0
        %v1441 = vmax.f32 %v1411, 0.0
        %v1442 = vmax.f32 %v1414, 0.0
        %v1443 = vmax.f32 %v1419, 0.0
        %v1444 = vmax.f32 %v1422, 0.0
        %v1445 = vmax.f32 %v1427, 0.0
        %v1446 = vmax.f32 %v1430, 0.0
        %v1447 = vmax.f32 %v1435, 0.0
        %v1448 = vmax.f32 %v1438, 0.0
        %v1449 = vld [vmem:[#allocation8] sm:$0xf]
        %v1450 = vld [vmem:[#allocation8 + $0x4] sm:$0xf]
        %v1451 = vld [vmem:[#allocation8 + $0x8] sm:$0xf]
        %v1452 = vld [vmem:[#allocation8 + $0xc] sm:$0xf]
        %v1453 = vld [vmem:[#allocation8 + $0x10] sm:$0xf]
        %v1454 = vld [vmem:[#allocation8 + $0x14] sm:$0xf]
        %v1455 = vld [vmem:[#allocation8 + $0x18] sm:$0xf]
        %v1456 = vld [vmem:[#allocation8 + $0x1c] sm:$0xf]
        %v1457 = vld [vmem:[#allocation8 + $0x20] sm:$0xf]
        %v1458 = vld [vmem:[#allocation8 + $0x24] sm:$0xf]
        %v1459 = vld [vmem:[#allocation8 + $0x28] sm:$0xf]
        %v1460 = vld [vmem:[#allocation8 + $0x2c] sm:$0xf]
        %v1461 = vld [vmem:[#allocation8 + $0x30] sm:$0xf]
        %v1462 = vld [vmem:[#allocation8 + $0x34] sm:$0xf]
        %v1463 = vld [vmem:[#allocation8 + $0x38] sm:$0xf]
        %v1464 = vld [vmem:[#allocation8 + $0x3c] sm:$0xf]
        %v1465 = vld [vmem:[#allocation8 + $0x40] sm:$0xf]
        %v1466 = vld [vmem:[#allocation8 + $0x44] sm:$0xf]
        %v1467 = vld [vmem:[#allocation8 + $0x48] sm:$0xf]
        %v1468 = vld [vmem:[#allocation8 + $0x4c] sm:$0xf]
        %v1469 = vld [vmem:[#allocation8 + $0x50] sm:$0xf]
        %v1470 = vld [vmem:[#allocation8 + $0x54] sm:$0xf]
        %v1471 = vld [vmem:[#allocation8 + $0x58] sm:$0xf]
        %v1472 = vld [vmem:[#allocation8 + $0x5c] sm:$0xf]
        %v1473 = vld [vmem:[#allocation8 + $0x60] sm:$0xf]
        %v1474 = vld [vmem:[#allocation8 + $0x64] sm:$0xf]
        %v1475 = vld [vmem:[#allocation8 + $0x68] sm:$0xf]
        %v1476 = vld [vmem:[#allocation8 + $0x6c] sm:$0xf]
        %v1477 = vld [vmem:[#allocation8 + $0x70] sm:$0xf]
        %v1478 = vld [vmem:[#allocation8 + $0x74] sm:$0xf]
        %v1479 = vld [vmem:[#allocation8 + $0x78] sm:$0xf]
        %v1480 = vld [vmem:[#allocation8 + $0x7c] sm:$0xf]
        %v1481 = vld [vmem:[#allocation9] sm:$0x3]
        %v1482 = vpack.c.bf16 %v1254, %v1253
        %v1483 = vpack.c.bf16 %v1256, %v1255
        %v1484 = vpack.c.bf16 %v1258, %v1257
        %v1485 = vpack.c.bf16 %v1260, %v1259
        %v1486 = vlaneseq
        %v1487 = vshrl.u32 %v1486, 7
        %v1488 = vsub.s32 0, %v1487
        %v1489 = vrot.slane %v1481, %v1488
        %v1506 = vunpack.c.l.b16 %v1449
        %v1507 = vunpack.c.l.b16 %v1450
        %v1508 = vunpack.c.l.b16 %v1451
        %v1509 = vunpack.c.l.b16 %v1452
        %v1510 = vunpack.c.l.b16 %v1453
        %v1511 = vunpack.c.l.b16 %v1454
        %v1512 = vunpack.c.l.b16 %v1455
        %v1513 = vunpack.c.l.b16 %v1456
        %v1514 = vunpack.c.l.b16 %v1457
        %v1515 = vunpack.c.l.b16 %v1458
        %v1516 = vunpack.c.l.b16 %v1459
        %v1517 = vunpack.c.l.b16 %v1460
        %v1518 = vunpack.c.l.b16 %v1461
        %v1519 = vunpack.c.l.b16 %v1462
        %v1520 = vunpack.c.l.b16 %v1463
        %v1521 = vunpack.c.l.b16 %v1464
        %v1522 = vpack.c.b16 %v1507, %v1506
        %v1523 = vpack.c.b16 %v1509, %v1508
        %v1524 = vpack.c.b16 %v1511, %v1510
        %v1525 = vpack.c.b16 %v1513, %v1512
        %v1526 = vpack.c.b16 %v1515, %v1514
        %v1527 = vpack.c.b16 %v1517, %v1516
        %v1528 = vpack.c.b16 %v1519, %v1518
        %v1529 = vpack.c.b16 %v1521, %v1520
        %1538 = vmatprep.subr.bf16.mxu0 0
        %1539 = vmatpush1.bf16.msra.mxu0 %v1529
        %1540 = vmatprep.subr.bf16.mxu0 0
        %1541 = vmatpush1.bf16.msra.mxu0 %v1528
        %1542 = vmatprep.subr.bf16.mxu0 0
        %1543 = vmatpush1.bf16.msra.mxu0 %v1527
        %1544 = vmatprep.subr.bf16.mxu0 0
        %1545 = vmatpush1.bf16.msra.mxu0 %v1526
        %1546 = vmatprep.subr.bf16.mxu0 0
        %1547 = vmatpush1.bf16.msra.mxu0 %v1525
        %1548 = vmatprep.subr.bf16.mxu0 0
        %1549 = vmatpush1.bf16.msra.mxu0 %v1524
        %1550 = vmatprep.subr.bf16.mxu0 0
        %1551 = vmatpush1.bf16.msra.mxu0 %v1523
        %1552 = vmatprep.subr.bf16.mxu0 0
        %1553 = vmatpush1.bf16.msra.mxu0 %v1522
        %1554 = vmatprep.subr.bf16.mxu0 0
        %1555 = vmatpush2.bf16.msra.mxu0 0
        %1556 = vmatprep.subr.bf16.mxu0 0
        %1557 = vmatpush2.bf16.msra.mxu0 0
        %1558 = vmatprep.subr.bf16.mxu0 0
        %1559 = vmatpush2.bf16.msra.mxu0 0
        %1560 = vmatprep.subr.bf16.mxu0 0
        %1561 = vmatpush2.bf16.msra.mxu0 0
        %1562 = vmatprep.subr.bf16.mxu0 0
        %1563 = vmatpush2.bf16.msra.mxu0 0
        %1564 = vmatprep.subr.bf16.mxu0 0
        %1565 = vmatpush2.bf16.msra.mxu0 0
        %1566 = vmatprep.subr.bf16.mxu0 0
        %1567 = vmatpush2.bf16.msra.mxu0 0
        %1568 = vmatprep.subr.bf16.mxu0 0
        %1569 = vmatpush2.bf16.msra.mxu0 0
        %1570 = vmatprep.mubr.bf16.mxu0 0
        %1571 = vmatmul.mubr.bf16.gmra.mxu0 %v1482
        %v1572 = vpop.f32.mrf.mxu0
        %v1573 = vadd.f32 %v1489, %v1572
        %v1574 = vpop.f32.mrf.mxu0
        %v1575 = vpop.f32.mrf.mxu0
        %v1576 = vadd.f32 %v1489, %v1575
        %v1577 = vpop.f32.mrf.mxu0
        %1578 = vmatprep.mubr.bf16.mxu0 0
        %1579 = vmatmul.mubr.bf16.gmra.mxu0 %v1483
        %v1580 = vpop.f32.mrf.mxu0
        %v1581 = vadd.f32 %v1489, %v1580
        %v1582 = vpop.f32.mrf.mxu0
        %v1583 = vpop.f32.mrf.mxu0
        %v1584 = vadd.f32 %v1489, %v1583
        %v1585 = vpop.f32.mrf.mxu0
        %1586 = vmatprep.mubr.bf16.mxu0 0
        %1587 = vmatmul.mubr.bf16.gmra.mxu0 %v1484
        %v1588 = vpop.f32.mrf.mxu0
        %v1589 = vadd.f32 %v1489, %v1588
        %v1590 = vpop.f32.mrf.mxu0
        %v1591 = vpop.f32.mrf.mxu0
        %v1592 = vadd.f32 %v1489, %v1591
        %v1593 = vpop.f32.mrf.mxu0
        %1594 = vmatprep.mubr.bf16.mxu0 0
        %1595 = vmatmul.mubr.bf16.gmra.mxu0 %v1485
        %v1596 = vpop.f32.mrf.mxu0
        %v1597 = vadd.f32 %v1489, %v1596
        %v1598 = vpop.f32.mrf.mxu0
        %v1599 = vpop.f32.mrf.mxu0
        %v1600 = vadd.f32 %v1489, %v1599
        %v1601 = vpop.f32.mrf.mxu0
        %1602 = vdwg.mxu0
        %v1603 = vpack.c.bf16 %v1262, %v1261
        %v1604 = vpack.c.bf16 %v1264, %v1263
        %v1605 = vpack.c.bf16 %v1266, %v1265
        %v1606 = vpack.c.bf16 %v1268, %v1267
        %v1607 = vlaneseq
        %v1608 = vshrl.u32 %v1607, 7
        %v1609 = vsub.s32 1, %v1608
        %v1610 = vrot.slane %v1481, %v1609
        %v1627 = vunpack.c.l.b16 %v1465
        %v1628 = vunpack.c.l.b16 %v1466
        %v1629 = vunpack.c.l.b16 %v1467
        %v1630 = vunpack.c.l.b16 %v1468
        %v1631 = vunpack.c.l.b16 %v1469
        %v1632 = vunpack.c.l.b16 %v1470
        %v1633 = vunpack.c.l.b16 %v1471
        %v1634 = vunpack.c.l.b16 %v1472
        %v1635 = vunpack.c.l.b16 %v1473
        %v1636 = vunpack.c.l.b16 %v1474
        %v1637 = vunpack.c.l.b16 %v1475
        %v1638 = vunpack.c.l.b16 %v1476
        %v1639 = vunpack.c.l.b16 %v1477
        %v1640 = vunpack.c.l.b16 %v1478
        %v1641 = vunpack.c.l.b16 %v1479
        %v1642 = vunpack.c.l.b16 %v1480
        %v1643 = vpack.c.b16 %v1628, %v1627
        %v1644 = vpack.c.b16 %v1630, %v1629
        %v1645 = vpack.c.b16 %v1632, %v1631
        %v1646 = vpack.c.b16 %v1634, %v1633
        %v1647 = vpack.c.b16 %v1636, %v1635
        %v1648 = vpack.c.b16 %v1638, %v1637
        %v1649 = vpack.c.b16 %v1640, %v1639
        %v1650 = vpack.c.b16 %v1642, %v1641
        %1659 = vmatprep.subr.bf16.mxu0 0
        %1660 = vmatpush1.bf16.msra.mxu0 %v1650
        %1661 = vmatprep.subr.bf16.mxu0 0
        %1662 = vmatpush1.bf16.msra.mxu0 %v1649
        %1663 = vmatprep.subr.bf16.mxu0 0
        %1664 = vmatpush1.bf16.msra.mxu0 %v1648
        %1665 = vmatprep.subr.bf16.mxu0 0
        %1666 = vmatpush1.bf16.msra.mxu0 %v1647
        %1667 = vmatprep.subr.bf16.mxu0 0
        %1668 = vmatpush1.bf16.msra.mxu0 %v1646
        %1669 = vmatprep.subr.bf16.mxu0 0
        %1670 = vmatpush1.bf16.msra.mxu0 %v1645
        %1671 = vmatprep.subr.bf16.mxu0 0
        %1672 = vmatpush1.bf16.msra.mxu0 %v1644
        %1673 = vmatprep.subr.bf16.mxu0 0
        %1674 = vmatpush1.bf16.msra.mxu0 %v1643
        %1675 = vmatprep.subr.bf16.mxu0 0
        %1676 = vmatpush2.bf16.msra.mxu0 0
        %1677 = vmatprep.subr.bf16.mxu0 0
        %1678 = vmatpush2.bf16.msra.mxu0 0
        %1679 = vmatprep.subr.bf16.mxu0 0
        %1680 = vmatpush2.bf16.msra.mxu0 0
        %1681 = vmatprep.subr.bf16.mxu0 0
        %1682 = vmatpush2.bf16.msra.mxu0 0
        %1683 = vmatprep.subr.bf16.mxu0 0
        %1684 = vmatpush2.bf16.msra.mxu0 0
        %1685 = vmatprep.subr.bf16.mxu0 0
        %1686 = vmatpush2.bf16.msra.mxu0 0
        %1687 = vmatprep.subr.bf16.mxu0 0
        %1688 = vmatpush2.bf16.msra.mxu0 0
        %1689 = vmatprep.subr.bf16.mxu0 0
        %1690 = vmatpush2.bf16.msra.mxu0 0
        %1691 = vmatprep.mubr.bf16.mxu0 0
        %1692 = vmatmul.mubr.bf16.gmra.mxu0 %v1603
        %v1693 = vpop.f32.mrf.mxu0
        %v1694 = vadd.f32 %v1610, %v1693
        %v1695 = vpop.f32.mrf.mxu0
        %v1696 = vpop.f32.mrf.mxu0
        %v1697 = vadd.f32 %v1610, %v1696
        %v1698 = vpop.f32.mrf.mxu0
        %1699 = vmatprep.mubr.bf16.mxu0 0
        %1700 = vmatmul.mubr.bf16.gmra.mxu0 %v1604
        %v1701 = vpop.f32.mrf.mxu0
        %v1702 = vadd.f32 %v1610, %v1701
        %v1703 = vpop.f32.mrf.mxu0
        %v1704 = vpop.f32.mrf.mxu0
        %v1705 = vadd.f32 %v1610, %v1704
        %v1706 = vpop.f32.mrf.mxu0
        %1707 = vmatprep.mubr.bf16.mxu0 0
        %1708 = vmatmul.mubr.bf16.gmra.mxu0 %v1605
        %v1709 = vpop.f32.mrf.mxu0
        %v1710 = vadd.f32 %v1610, %v1709
        %v1711 = vpop.f32.mrf.mxu0
        %v1712 = vpop.f32.mrf.mxu0
        %v1713 = vadd.f32 %v1610, %v1712
        %v1714 = vpop.f32.mrf.mxu0
        %1715 = vmatprep.mubr.bf16.mxu0 0
        %1716 = vmatmul.mubr.bf16.gmra.mxu0 %v1606
        %v1717 = vpop.f32.mrf.mxu0
        %v1718 = vadd.f32 %v1610, %v1717
        %v1719 = vpop.f32.mrf.mxu0
        %v1720 = vpop.f32.mrf.mxu0
        %v1721 = vadd.f32 %v1610, %v1720
        %v1722 = vpop.f32.mrf.mxu0
        %1723 = vdwg.mxu0
        %v1724 = vld [vmem:[%s16] sm:$0xf]
        %v1725 = vld [vmem:[%s16 + $0x4] sm:$0xf]
        %v1726 = vld [vmem:[%s16 + $0x8] sm:$0xf]
        %v1727 = vld [vmem:[%s16 + $0xc] sm:$0xf]
        %v1728 = vld [vmem:[%s16 + $0x10] sm:$0xf]
        %v1729 = vld [vmem:[%s16 + $0x14] sm:$0xf]
        %v1730 = vld [vmem:[%s16 + $0x18] sm:$0xf]
        %v1731 = vld [vmem:[%s16 + $0x1c] sm:$0xf]
        %v1732 = vld [vmem:[%s16 + $0x20] sm:$0xf]
        %v1733 = vld [vmem:[%s16 + $0x24] sm:$0xf]
        %v1734 = vld [vmem:[%s16 + $0x28] sm:$0xf]
        %v1735 = vld [vmem:[%s16 + $0x2c] sm:$0xf]
        %v1736 = vld [vmem:[%s16 + $0x30] sm:$0xf]
        %v1737 = vld [vmem:[%s16 + $0x34] sm:$0xf]
        %v1738 = vld [vmem:[%s16 + $0x38] sm:$0xf]
        %v1739 = vld [vmem:[%s16 + $0x3c] sm:$0xf]
        %v1740 = vld [vmem:[#allocation23] sm:$0x3]
        %v1741 = vld [vmem:[%s7] sm:$0xff]
        %v1742 = vld [vmem:[%s7 + $0x8] sm:$0xf]
        %v1743 = vld [vmem:[%s7 + $0xc] sm:$0xff]
        %v1744 = vld [vmem:[%s7 + $0x14] sm:$0xf]
        %v1745 = vld [vmem:[%s7 + $0x18] sm:$0xff]
        %v1746 = vld [vmem:[%s7 + $0x20] sm:$0xf]
        %v1747 = vld [vmem:[%s7 + $0x24] sm:$0xff]
        %v1748 = vld [vmem:[%s7 + $0x2c] sm:$0xf]
        %v1749 = vld [vmem:[%s7 + $0x30] sm:$0xff]
        %v1750 = vld [vmem:[%s7 + $0x38] sm:$0xf]
        %v1751 = vld [vmem:[%s7 + $0x3c] sm:$0xff]
        %v1752 = vld [vmem:[%s7 + $0x44] sm:$0xf]
        %v1753 = vld [vmem:[%s7 + $0x48] sm:$0xff]
        %v1754 = vld [vmem:[%s7 + $0x50] sm:$0xf]
        %v1755 = vld [vmem:[%s7 + $0x54] sm:$0xff]
        %v1756 = vld [vmem:[%s7 + $0x5c] sm:$0xf]
        %v1757 = vld [vmem:[%s7 + $0x60] sm:$0xff]
        %v1758 = vld [vmem:[%s7 + $0x68] sm:$0xf]
        %v1759 = vld [vmem:[%s7 + $0x6c] sm:$0xff]
        %v1760 = vld [vmem:[%s7 + $0x74] sm:$0xf]
        %v1761 = vld [vmem:[%s7 + $0x78] sm:$0xff]
        %v1762 = vld [vmem:[%s7 + $0x80] sm:$0xf]
        %v1763 = vld [vmem:[%s7 + $0x84] sm:$0xff]
        %v1764 = vld [vmem:[%s7 + $0x8c] sm:$0xf]
        %v1765 = vld [vmem:[%s7 + $0x90] sm:$0xff]
        %v1766 = vld [vmem:[%s7 + $0x98] sm:$0xf]
        %v1767 = vld [vmem:[%s7 + $0x9c] sm:$0xff]
        %v1768 = vld [vmem:[%s7 + $0xa4] sm:$0xf]
        %v1769 = vld [vmem:[%s7 + $0xa8] sm:$0xff]
        %v1770 = vld [vmem:[%s7 + $0xb0] sm:$0xf]
        %v1771 = vld [vmem:[%s7 + $0xb4] sm:$0xff]
        %v1772 = vld [vmem:[%s7 + $0xbc] sm:$0xf]
        %v1773 = vpack.c.bf16 %v1576, %v1573
        %v1774 = vpack.c.bf16 %v1584, %v1581
        %v1775 = vpack.c.bf16 %v1592, %v1589
        %v1776 = vpack.c.bf16 %v1600, %v1597
        %v1777 = vpack.c.bf16 %v1697, %v1694
        %v1778 = vpack.c.bf16 %v1705, %v1702
        %v1779 = vpack.c.bf16 %v1713, %v1710
        %v1780 = vpack.c.bf16 %v1721, %v1718
        %v1781 = vld [vmem:[#allocation11] sm:$0x7]
        %v1783 = vlaneseq
        %v1784 = vshrl.u32 %v1783, 7
        %v1785 = vsub.s32 0, %v1784
        %v1786 = vrot.slane %v1781, %v1785
        %v1787 = vlaneseq
        %v1788 = vshrl.u32 %v1787, 7
        %v1789 = vsub.s32 1, %v1788
        %v1790 = vrot.slane %v1781, %v1789
        %v1791 = vlaneseq
        %v1792 = vshrl.u32 %v1791, 7
        %v1793 = vsub.s32 2, %v1792
        %v1794 = vrot.slane %v1781, %v1793
        %v1830 = vunpack.c.l.b16 %v1741
        %v1831 = vunpack.c.h.b16 %v1741
        %v1832 = vunpack.c.l.b16 %v1742
        %v1833 = vunpack.c.l.b16 %v1743
        %v1834 = vunpack.c.h.b16 %v1743
        %v1835 = vunpack.c.l.b16 %v1744
        %v1836 = vunpack.c.l.b16 %v1745
        %v1837 = vunpack.c.h.b16 %v1745
        %v1838 = vunpack.c.l.b16 %v1746
        %v1839 = vunpack.c.l.b16 %v1747
        %v1840 = vunpack.c.h.b16 %v1747
        %v1841 = vunpack.c.l.b16 %v1748
        %v1842 = vunpack.c.l.b16 %v1749
        %v1843 = vunpack.c.h.b16 %v1749
        %v1844 = vunpack.c.l.b16 %v1750
        %v1845 = vunpack.c.l.b16 %v1751
        %v1846 = vunpack.c.h.b16 %v1751
        %v1847 = vunpack.c.l.b16 %v1752
        %v1848 = vunpack.c.l.b16 %v1753
        %v1849 = vunpack.c.h.b16 %v1753
        %v1850 = vunpack.c.l.b16 %v1754
        %v1851 = vunpack.c.l.b16 %v1755
        %v1852 = vunpack.c.h.b16 %v1755
        %v1853 = vunpack.c.l.b16 %v1756
        %v1854 = vunpack.c.l.b16 %v1757
        %v1855 = vunpack.c.h.b16 %v1757
        %v1856 = vunpack.c.l.b16 %v1758
        %v1857 = vunpack.c.l.b16 %v1759
        %v1858 = vunpack.c.h.b16 %v1759
        %v1859 = vunpack.c.l.b16 %v1760
        %v1860 = vunpack.c.l.b16 %v1761
        %v1861 = vunpack.c.h.b16 %v1761
        %v1862 = vunpack.c.l.b16 %v1762
        %v1863 = vunpack.c.l.b16 %v1763
        %v1864 = vunpack.c.h.b16 %v1763
        %v1865 = vunpack.c.l.b16 %v1764
        %v1866 = vunpack.c.l.b16 %v1765
        %v1867 = vunpack.c.h.b16 %v1765
        %v1868 = vunpack.c.l.b16 %v1766
        %v1869 = vunpack.c.l.b16 %v1767
        %v1870 = vunpack.c.h.b16 %v1767
        %v1871 = vunpack.c.l.b16 %v1768
        %v1872 = vunpack.c.l.b16 %v1769
        %v1873 = vunpack.c.h.b16 %v1769
        %v1874 = vunpack.c.l.b16 %v1770
        %v1875 = vunpack.c.l.b16 %v1771
        %v1876 = vunpack.c.h.b16 %v1771
        %v1877 = vunpack.c.l.b16 %v1772
        %v1878 = vpack.c.b16 %v1833, %v1830
        %v1879 = vpack.c.b16 %v1834, %v1831
        %v1880 = vpack.c.b16 %v1835, %v1832
        %v1881 = vpack.c.b16 %v1839, %v1836
        %v1882 = vpack.c.b16 %v1840, %v1837
        %v1883 = vpack.c.b16 %v1841, %v1838
        %v1884 = vpack.c.b16 %v1845, %v1842
        %v1885 = vpack.c.b16 %v1846, %v1843
        %v1886 = vpack.c.b16 %v1847, %v1844
        %v1887 = vpack.c.b16 %v1851, %v1848
        %v1888 = vpack.c.b16 %v1852, %v1849
        %v1889 = vpack.c.b16 %v1853, %v1850
        %v1890 = vpack.c.b16 %v1857, %v1854
        %v1891 = vpack.c.b16 %v1858, %v1855
        %v1892 = vpack.c.b16 %v1859, %v1856
        %v1893 = vpack.c.b16 %v1863, %v1860
        %v1894 = vpack.c.b16 %v1864, %v1861
        %v1895 = vpack.c.b16 %v1865, %v1862
        %v1896 = vpack.c.b16 %v1869, %v1866
        %v1897 = vpack.c.b16 %v1870, %v1867
        %v1898 = vpack.c.b16 %v1871, %v1868
        %v1899 = vpack.c.b16 %v1875, %v1872
        %v1900 = vpack.c.b16 %v1876, %v1873
        %v1901 = vpack.c.b16 %v1877, %v1874
        %1926 = vmatprep.subr.bf16.mxu0 %v1900
        %1927 = vmatpush1.bf16.msra.mxu0 %v1899
        %1928 = vmatprep.subr.bf16.mxu0 %v1897
        %1929 = vmatpush1.bf16.msra.mxu0 %v1896
        %1930 = vmatprep.subr.bf16.mxu0 %v1894
        %1931 = vmatpush1.bf16.msra.mxu0 %v1893
        %1932 = vmatprep.subr.bf16.mxu0 %v1891
        %1933 = vmatpush1.bf16.msra.mxu0 %v1890
        %1934 = vmatprep.subr.bf16.mxu0 %v1888
        %1935 = vmatpush1.bf16.msra.mxu0 %v1887
        %1936 = vmatprep.subr.bf16.mxu0 %v1885
        %1937 = vmatpush1.bf16.msra.mxu0 %v1884
        %1938 = vmatprep.subr.bf16.mxu0 %v1882
        %1939 = vmatpush1.bf16.msra.mxu0 %v1881
        %1940 = vmatprep.subr.bf16.mxu0 %v1879
        %1941 = vmatpush1.bf16.msra.mxu0 %v1878
        %1942 = vmatprep.subr.bf16.mxu0 0
        %1943 = vmatpush2.bf16.msra.mxu0 0
        %1944 = vmatprep.subr.bf16.mxu0 0
        %1945 = vmatpush2.bf16.msra.mxu0 0
        %1946 = vmatprep.subr.bf16.mxu0 0
        %1947 = vmatpush2.bf16.msra.mxu0 0
        %1948 = vmatprep.subr.bf16.mxu0 0
        %1949 = vmatpush2.bf16.msra.mxu0 0
        %1950 = vmatprep.subr.bf16.mxu0 0
        %1951 = vmatpush2.bf16.msra.mxu0 0
        %1952 = vmatprep.subr.bf16.mxu0 0
        %1953 = vmatpush2.bf16.msra.mxu0 0
        %1954 = vmatprep.subr.bf16.mxu0 0
        %1955 = vmatpush2.bf16.msra.mxu0 0
        %1956 = vmatprep.subr.bf16.mxu0 0
        %1957 = vmatpush2.bf16.msra.mxu0 0
        %1958 = vmatprep.mubr.bf16.mxu0 0
        %1959 = vmatmul.mubr.bf16.gmra.mxu0 %v1773
        %v1960 = vpop.f32.mrf.mxu0
        %v1961 = vadd.f32 %v1786, %v1960
        %v1962 = vpop.f32.mrf.mxu0
        %v1963 = vadd.f32 %v1790, %v1962
        %v1964 = vpop.f32.mrf.mxu0
        %v1965 = vadd.f32 %v1786, %v1964
        %v1966 = vpop.f32.mrf.mxu0
        %v1967 = vadd.f32 %v1790, %v1966
        %1968 = vmatprep.mubr.bf16.mxu0 0
        %1969 = vmatmul.mubr.bf16.gmra.mxu0 %v1774
        %v1970 = vpop.f32.mrf.mxu0
        %v1971 = vadd.f32 %v1786, %v1970
        %v1972 = vpop.f32.mrf.mxu0
        %v1973 = vadd.f32 %v1790, %v1972
        %v1974 = vpop.f32.mrf.mxu0
        %v1975 = vadd.f32 %v1786, %v1974
        %v1976 = vpop.f32.mrf.mxu0
        %v1977 = vadd.f32 %v1790, %v1976
        %1978 = vmatprep.mubr.bf16.mxu0 0
        %1979 = vmatmul.mubr.bf16.gmra.mxu0 %v1775
        %v1980 = vpop.f32.mrf.mxu0
        %v1981 = vadd.f32 %v1786, %v1980
        %v1982 = vpop.f32.mrf.mxu0
        %v1983 = vadd.f32 %v1790, %v1982
        %v1984 = vpop.f32.mrf.mxu0
        %v1985 = vadd.f32 %v1786, %v1984
        %v1986 = vpop.f32.mrf.mxu0
        %v1987 = vadd.f32 %v1790, %v1986
        %1988 = vmatprep.mubr.bf16.mxu0 0
        %1989 = vmatmul.mubr.bf16.gmra.mxu0 %v1776
        %v1990 = vpop.f32.mrf.mxu0
        %v1991 = vadd.f32 %v1786, %v1990
        %v1992 = vpop.f32.mrf.mxu0
        %v1993 = vadd.f32 %v1790, %v1992
        %v1994 = vpop.f32.mrf.mxu0
        %v1995 = vadd.f32 %v1786, %v1994
        %v1996 = vpop.f32.mrf.mxu0
        %v1997 = vadd.f32 %v1790, %v1996
        %1998 = vmatprep.mubr.bf16.mxu0 0
        %1999 = vmatmul.mubr.bf16.gmra.mxu0 %v1777
        %v2000 = vpop.f32.mrf.mxu0
        %v2001 = vadd.f32 %v1786, %v2000
        %v2002 = vpop.f32.mrf.mxu0
        %v2003 = vadd.f32 %v1790, %v2002
        %v2004 = vpop.f32.mrf.mxu0
        %v2005 = vadd.f32 %v1786, %v2004
        %v2006 = vpop.f32.mrf.mxu0
        %v2007 = vadd.f32 %v1790, %v2006
        %2008 = vmatprep.mubr.bf16.mxu0 0
        %2009 = vmatmul.mubr.bf16.gmra.mxu0 %v1778
        %v2010 = vpop.f32.mrf.mxu0
        %v2011 = vadd.f32 %v1786, %v2010
        %v2012 = vpop.f32.mrf.mxu0
        %v2013 = vadd.f32 %v1790, %v2012
        %v2014 = vpop.f32.mrf.mxu0
        %v2015 = vadd.f32 %v1786, %v2014
        %v2016 = vpop.f32.mrf.mxu0
        %v2017 = vadd.f32 %v1790, %v2016
        %2018 = vmatprep.mubr.bf16.mxu0 0
        %2019 = vmatmul.mubr.bf16.gmra.mxu0 %v1779
        %v2020 = vpop.f32.mrf.mxu0
        %v2021 = vadd.f32 %v1786, %v2020
        %v2022 = vpop.f32.mrf.mxu0
        %v2023 = vadd.f32 %v1790, %v2022
        %v2024 = vpop.f32.mrf.mxu0
        %v2025 = vadd.f32 %v1786, %v2024
        %v2026 = vpop.f32.mrf.mxu0
        %v2027 = vadd.f32 %v1790, %v2026
        %2028 = vmatprep.mubr.bf16.mxu0 0
        %2029 = vmatmul.mubr.bf16.gmra.mxu0 %v1780
        %v2030 = vpop.f32.mrf.mxu0
        %v2031 = vadd.f32 %v1786, %v2030
        %v2032 = vpop.f32.mrf.mxu0
        %v2033 = vadd.f32 %v1790, %v2032
        %v2034 = vpop.f32.mrf.mxu0
        %v2035 = vadd.f32 %v1786, %v2034
        %v2036 = vpop.f32.mrf.mxu0
        %v2037 = vadd.f32 %v1790, %v2036
        %2038 = vdwg.mxu0
        %2039 = vmatprep.subr.bf16.mxu0 0
        %2040 = vmatpush1.bf16.msra.mxu0 %v1901
        %2041 = vmatprep.subr.bf16.mxu0 0
        %2042 = vmatpush1.bf16.msra.mxu0 %v1898
        %2043 = vmatprep.subr.bf16.mxu0 0
        %2044 = vmatpush1.bf16.msra.mxu0 %v1895
        %2045 = vmatprep.subr.bf16.mxu0 0
        %2046 = vmatpush1.bf16.msra.mxu0 %v1892
        %2047 = vmatprep.subr.bf16.mxu0 0
        %2048 = vmatpush1.bf16.msra.mxu0 %v1889
        %2049 = vmatprep.subr.bf16.mxu0 0
        %2050 = vmatpush1.bf16.msra.mxu0 %v1886
        %2051 = vmatprep.subr.bf16.mxu0 0
        %2052 = vmatpush1.bf16.msra.mxu0 %v1883
        %2053 = vmatprep.subr.bf16.mxu0 0
        %2054 = vmatpush1.bf16.msra.mxu0 %v1880
        %2055 = vmatprep.subr.bf16.mxu0 0
        %2056 = vmatpush2.bf16.msra.mxu0 0
        %2057 = vmatprep.subr.bf16.mxu0 0
        %2058 = vmatpush2.bf16.msra.mxu0 0
        %2059 = vmatprep.subr.bf16.mxu0 0
        %2060 = vmatpush2.bf16.msra.mxu0 0
        %2061 = vmatprep.subr.bf16.mxu0 0
        %2062 = vmatpush2.bf16.msra.mxu0 0
        %2063 = vmatprep.subr.bf16.mxu0 0
        %2064 = vmatpush2.bf16.msra.mxu0 0
        %2065 = vmatprep.subr.bf16.mxu0 0
        %2066 = vmatpush2.bf16.msra.mxu0 0
        %2067 = vmatprep.subr.bf16.mxu0 0
        %2068 = vmatpush2.bf16.msra.mxu0 0
        %2069 = vmatprep.subr.bf16.mxu0 0
        %2070 = vmatpush2.bf16.msra.mxu0 0
        %2071 = vmatprep.mubr.bf16.mxu0 0
        %2072 = vmatmul.mubr.bf16.gmra.mxu0 %v1773
        %v2073 = vpop.f32.mrf.mxu0
        %v2074 = vadd.f32 %v1794, %v2073
        %v2075 = vpop.f32.mrf.mxu0
        %v2076 = vpop.f32.mrf.mxu0
        %v2077 = vadd.f32 %v1794, %v2076
        %v2078 = vpop.f32.mrf.mxu0
        %2079 = vmatprep.mubr.bf16.mxu0 0
        %2080 = vmatmul.mubr.bf16.gmra.mxu0 %v1774
        %v2081 = vpop.f32.mrf.mxu0
        %v2082 = vadd.f32 %v1794, %v2081
        %v2083 = vpop.f32.mrf.mxu0
        %v2084 = vpop.f32.mrf.mxu0
        %v2085 = vadd.f32 %v1794, %v2084
        %v2086 = vpop.f32.mrf.mxu0
        %2087 = vmatprep.mubr.bf16.mxu0 0
        %2088 = vmatmul.mubr.bf16.gmra.mxu0 %v1775
        %v2089 = vpop.f32.mrf.mxu0
        %v2090 = vadd.f32 %v1794, %v2089
        %v2091 = vpop.f32.mrf.mxu0
        %v2092 = vpop.f32.mrf.mxu0
        %v2093 = vadd.f32 %v1794, %v2092
        %v2094 = vpop.f32.mrf.mxu0
        %2095 = vmatprep.mubr.bf16.mxu0 0
        %2096 = vmatmul.mubr.bf16.gmra.mxu0 %v1776
        %v2097 = vpop.f32.mrf.mxu0
        %v2098 = vadd.f32 %v1794, %v2097
        %v2099 = vpop.f32.mrf.mxu0
        %v2100 = vpop.f32.mrf.mxu0
        %v2101 = vadd.f32 %v1794, %v2100
        %v2102 = vpop.f32.mrf.mxu0
        %2103 = vmatprep.mubr.bf16.mxu0 0
        %2104 = vmatmul.mubr.bf16.gmra.mxu0 %v1777
        %v2105 = vpop.f32.mrf.mxu0
        %v2106 = vadd.f32 %v1794, %v2105
        %v2107 = vpop.f32.mrf.mxu0
        %v2108 = vpop.f32.mrf.mxu0
        %v2109 = vadd.f32 %v1794, %v2108
        %v2110 = vpop.f32.mrf.mxu0
        %2111 = vmatprep.mubr.bf16.mxu0 0
        %2112 = vmatmul.mubr.bf16.gmra.mxu0 %v1778
        %v2113 = vpop.f32.mrf.mxu0
        %v2114 = vadd.f32 %v1794, %v2113
        %v2115 = vpop.f32.mrf.mxu0
        %v2116 = vpop.f32.mrf.mxu0
        %v2117 = vadd.f32 %v1794, %v2116
        %v2118 = vpop.f32.mrf.mxu0
        %2119 = vmatprep.mubr.bf16.mxu0 0
        %2120 = vmatmul.mubr.bf16.gmra.mxu0 %v1779
        %v2121 = vpop.f32.mrf.mxu0
        %v2122 = vadd.f32 %v1794, %v2121
        %v2123 = vpop.f32.mrf.mxu0
        %v2124 = vpop.f32.mrf.mxu0
        %v2125 = vadd.f32 %v1794, %v2124
        %v2126 = vpop.f32.mrf.mxu0
        %2127 = vmatprep.mubr.bf16.mxu0 0
        %2128 = vmatmul.mubr.bf16.gmra.mxu0 %v1780
        %v2129 = vpop.f32.mrf.mxu0
        %v2130 = vadd.f32 %v1794, %v2129
        %v2131 = vpop.f32.mrf.mxu0
        %v2132 = vpop.f32.mrf.mxu0
        %v2133 = vadd.f32 %v1794, %v2132
        %v2134 = vpop.f32.mrf.mxu0
        %2135 = vdwg.mxu0
        %v2136 = vsub.f32 %v1963, %v2003
        %v2137 = vsub.f32 %v1967, %v2007
        %v2138 = vsub.f32 %v1973, %v2013
        %v2139 = vsub.f32 %v1977, %v2017
        %v2140 = vsub.f32 %v1983, %v2023
        %v2141 = vsub.f32 %v1987, %v2027
        %v2142 = vsub.f32 %v1993, %v2033
        %v2143 = vsub.f32 %v1997, %v2037
        %v2144 = vsub.f32 %v2003, %v1963
        %v2145 = vsub.f32 %v2007, %v1967
        %v2146 = vsub.f32 %v2013, %v1973
        %v2147 = vsub.f32 %v2017, %v1977
        %v2148 = vsub.f32 %v2023, %v1983
        %v2149 = vsub.f32 %v2027, %v1987
        %v2150 = vsub.f32 %v2033, %v1993
        %v2151 = vsub.f32 %v2037, %v1997
        %v2152 = vmul.f32 %v1961, %v2136
        %v2153 = vmul.f32 %v1965, %v2137
        %v2154 = vmul.f32 %v1971, %v2138
        %v2155 = vmul.f32 %v1975, %v2139
        %v2156 = vmul.f32 %v1981, %v2140
        %v2157 = vmul.f32 %v1985, %v2141
        %v2158 = vmul.f32 %v1991, %v2142
        %v2159 = vmul.f32 %v1995, %v2143
        %v2160 = vmul.f32 %v2001, %v2144
        %v2161 = vmul.f32 %v2005, %v2145
        %v2162 = vmul.f32 %v2011, %v2146
        %v2163 = vmul.f32 %v2015, %v2147
        %v2164 = vmul.f32 %v2021, %v2148
        %v2165 = vmul.f32 %v2025, %v2149
        %v2166 = vmul.f32 %v2031, %v2150
        %v2167 = vmul.f32 %v2035, %v2151
        %v2168 = vpack.c.bf16 %v2153, %v2152
        %v2169 = vpack.c.bf16 %v2155, %v2154
        %v2170 = vpack.c.bf16 %v2157, %v2156
        %v2171 = vpack.c.bf16 %v2159, %v2158
        %v2172 = vpack.c.bf16 %v2161, %v2160
        %v2173 = vpack.c.bf16 %v2163, %v2162
        %v2174 = vpack.c.bf16 %v2165, %v2164
        %v2175 = vpack.c.bf16 %v2167, %v2166
        %v2192 = vunpack.c.l.b16 %v1724
        %v2193 = vunpack.c.l.b16 %v1725
        %v2194 = vunpack.c.l.b16 %v1726
        %v2195 = vunpack.c.l.b16 %v1727
        %v2196 = vunpack.c.l.b16 %v1728
        %v2197 = vunpack.c.l.b16 %v1729
        %v2198 = vunpack.c.l.b16 %v1730
        %v2199 = vunpack.c.l.b16 %v1731
        %v2200 = vunpack.c.l.b16 %v1732
        %v2201 = vunpack.c.l.b16 %v1733
        %v2202 = vunpack.c.l.b16 %v1734
        %v2203 = vunpack.c.l.b16 %v1735
        %v2204 = vunpack.c.l.b16 %v1736
        %v2205 = vunpack.c.l.b16 %v1737
        %v2206 = vunpack.c.l.b16 %v1738
        %v2207 = vunpack.c.l.b16 %v1739
        %v2208 = vpack.c.b16 %v2193, %v2192
        %v2209 = vpack.c.b16 %v2195, %v2194
        %v2210 = vpack.c.b16 %v2197, %v2196
        %v2211 = vpack.c.b16 %v2199, %v2198
        %v2212 = vpack.c.b16 %v2201, %v2200
        %v2213 = vpack.c.b16 %v2203, %v2202
        %v2214 = vpack.c.b16 %v2205, %v2204
        %v2215 = vpack.c.b16 %v2207, %v2206
        %2224 = vmatprep.subr.bf16.mxu0 0
        %2225 = vmatpush1.bf16.msra.mxu0 %v2215
        %2226 = vmatprep.subr.bf16.mxu0 0
        %2227 = vmatpush1.bf16.msra.mxu0 %v2214
        %2228 = vmatprep.subr.bf16.mxu0 0
        %2229 = vmatpush1.bf16.msra.mxu0 %v2213
        %2230 = vmatprep.subr.bf16.mxu0 0
        %2231 = vmatpush1.bf16.msra.mxu0 %v2212
        %2232 = vmatprep.subr.bf16.mxu0 0
        %2233 = vmatpush1.bf16.msra.mxu0 %v2211
        %2234 = vmatprep.subr.bf16.mxu0 0
        %2235 = vmatpush1.bf16.msra.mxu0 %v2210
        %2236 = vmatprep.subr.bf16.mxu0 0
        %2237 = vmatpush1.bf16.msra.mxu0 %v2209
        %2238 = vmatprep.subr.bf16.mxu0 0
        %2239 = vmatpush1.bf16.msra.mxu0 %v2208
        %2240 = vmatprep.subr.bf16.mxu0 0
        %2241 = vmatpush2.bf16.msra.mxu0 0
        %2242 = vmatprep.subr.bf16.mxu0 0
        %2243 = vmatpush2.bf16.msra.mxu0 0
        %2244 = vmatprep.subr.bf16.mxu0 0
        %2245 = vmatpush2.bf16.msra.mxu0 0
        %2246 = vmatprep.subr.bf16.mxu0 0
        %2247 = vmatpush2.bf16.msra.mxu0 0
        %2248 = vmatprep.subr.bf16.mxu0 0
        %2249 = vmatpush2.bf16.msra.mxu0 0
        %2250 = vmatprep.subr.bf16.mxu0 0
        %2251 = vmatpush2.bf16.msra.mxu0 0
        %2252 = vmatprep.subr.bf16.mxu0 0
        %2253 = vmatpush2.bf16.msra.mxu0 0
        %2254 = vmatprep.subr.bf16.mxu0 0
        %2255 = vmatpush2.bf16.msra.mxu0 0
        %2256 = vmatprep.mubr.bf16.mxu0 0
        %2257 = vmatmul.mubr.bf16.gmra.mxu0 %v2168
        %v2258 = vpop.f32.mrf.mxu0
        %v2259 = vadd.f32 0.0, %v2258
        %v2260 = vpop.f32.mrf.mxu0
        %v2261 = vpop.f32.mrf.mxu0
        %v2262 = vadd.f32 0.0, %v2261
        %v2263 = vpop.f32.mrf.mxu0
        %2264 = vmatprep.mubr.bf16.mxu0 0
        %2265 = vmatmul.mubr.bf16.gmra.mxu0 %v2169
        %v2266 = vpop.f32.mrf.mxu0
        %v2267 = vadd.f32 0.0, %v2266
        %v2268 = vpop.f32.mrf.mxu0
        %v2269 = vpop.f32.mrf.mxu0
        %v2270 = vadd.f32 0.0, %v2269
        %v2271 = vpop.f32.mrf.mxu0
        %2272 = vmatprep.mubr.bf16.mxu0 0
        %2273 = vmatmul.mubr.bf16.gmra.mxu0 %v2170
        %v2274 = vpop.f32.mrf.mxu0
        %v2275 = vadd.f32 0.0, %v2274
        %v2276 = vpop.f32.mrf.mxu0
        %v2277 = vpop.f32.mrf.mxu0
        %v2278 = vadd.f32 0.0, %v2277
        %v2279 = vpop.f32.mrf.mxu0
        %2280 = vmatprep.mubr.bf16.mxu0 0
        %2281 = vmatmul.mubr.bf16.gmra.mxu0 %v2171
        %v2282 = vpop.f32.mrf.mxu0
        %v2283 = vadd.f32 0.0, %v2282
        %v2284 = vpop.f32.mrf.mxu0
        %v2285 = vpop.f32.mrf.mxu0
        %v2286 = vadd.f32 0.0, %v2285
        %v2287 = vpop.f32.mrf.mxu0
        %2288 = vmatprep.mubr.bf16.mxu0 0
        %2289 = vmatmul.mubr.bf16.gmra.mxu0 %v2172
        %v2290 = vpop.f32.mrf.mxu0
        %v2291 = vadd.f32 0.0, %v2290
        %v2292 = vpop.f32.mrf.mxu0
        %v2293 = vpop.f32.mrf.mxu0
        %v2294 = vadd.f32 0.0, %v2293
        %v2295 = vpop.f32.mrf.mxu0
        %2296 = vmatprep.mubr.bf16.mxu0 0
        %2297 = vmatmul.mubr.bf16.gmra.mxu0 %v2173
        %v2298 = vpop.f32.mrf.mxu0
        %v2299 = vadd.f32 0.0, %v2298
        %v2300 = vpop.f32.mrf.mxu0
        %v2301 = vpop.f32.mrf.mxu0
        %v2302 = vadd.f32 0.0, %v2301
        %v2303 = vpop.f32.mrf.mxu0
        %2304 = vmatprep.mubr.bf16.mxu0 0
        %2305 = vmatmul.mubr.bf16.gmra.mxu0 %v2174
        %v2306 = vpop.f32.mrf.mxu0
        %v2307 = vadd.f32 0.0, %v2306
        %v2308 = vpop.f32.mrf.mxu0
        %v2309 = vpop.f32.mrf.mxu0
        %v2310 = vadd.f32 0.0, %v2309
        %v2311 = vpop.f32.mrf.mxu0
        %2312 = vmatprep.mubr.bf16.mxu0 0
        %2313 = vmatmul.mubr.bf16.gmra.mxu0 %v2175
        %v2314 = vpop.f32.mrf.mxu0
        %v2315 = vadd.f32 0.0, %v2314
        %v2316 = vpop.f32.mrf.mxu0
        %v2317 = vpop.f32.mrf.mxu0
        %v2318 = vadd.f32 0.0, %v2317
        %v2319 = vpop.f32.mrf.mxu0
        %2320 = vdwg.mxu0
        %v2321 = vsub.f32 0.0, %v2259
        %v2322 = vsub.f32 0.0, %v2262
        %v2323 = vsub.f32 0.0, %v2267
        %v2324 = vsub.f32 0.0, %v2270
        %v2325 = vsub.f32 0.0, %v2275
        %v2326 = vsub.f32 0.0, %v2278
        %v2327 = vsub.f32 0.0, %v2283
        %v2328 = vsub.f32 0.0, %v2286
        %v2329 = vsub.f32 0.0, %v2291
        %v2330 = vsub.f32 0.0, %v2294
        %v2331 = vsub.f32 0.0, %v2299
        %v2332 = vsub.f32 0.0, %v2302
        %v2333 = vsub.f32 0.0, %v2307
        %v2334 = vsub.f32 0.0, %v2310
        %v2335 = vsub.f32 0.0, %v2315
        %v2336 = vsub.f32 0.0, %v2318
        %v2337 = vmul.f32 %v2321, 1.442695
        %v2338 = vpow.pop %v2337
        %v2339 = vmul.f32 %v2322, 1.442695
        %v2340 = vpow.pop %v2339
        %v2341 = vmul.f32 %v2323, 1.442695
        %v2342 = vpow.pop %v2341
        %v2343 = vmul.f32 %v2324, 1.442695
        %v2344 = vpow.pop %v2343
        %v2345 = vmul.f32 %v2325, 1.442695
        %v2346 = vpow.pop %v2345
        %v2347 = vmul.f32 %v2326, 1.442695
        %v2348 = vpow.pop %v2347
        %v2349 = vmul.f32 %v2327, 1.442695
        %v2350 = vpow.pop %v2349
        %v2351 = vmul.f32 %v2328, 1.442695
        %v2352 = vpow.pop %v2351
        %v2353 = vmul.f32 %v2329, 1.442695
        %v2354 = vpow.pop %v2353
        %v2355 = vmul.f32 %v2330, 1.442695
        %v2356 = vpow.pop %v2355
        %v2357 = vmul.f32 %v2331, 1.442695
        %v2358 = vpow.pop %v2357
        %v2359 = vmul.f32 %v2332, 1.442695
        %v2360 = vpow.pop %v2359
        %v2361 = vmul.f32 %v2333, 1.442695
        %v2362 = vpow.pop %v2361
        %v2363 = vmul.f32 %v2334, 1.442695
        %v2364 = vpow.pop %v2363
        %v2365 = vmul.f32 %v2335, 1.442695
        %v2366 = vpow.pop %v2365
        %v2367 = vmul.f32 %v2336, 1.442695
        %v2368 = vpow.pop %v2367
        %v2369 = vadd.f32 %v2338, 1.0
        %v2370 = vadd.f32 %v2340, 1.0
        %v2371 = vadd.f32 %v2342, 1.0
        %v2372 = vadd.f32 %v2344, 1.0
        %v2373 = vadd.f32 %v2346, 1.0
        %v2374 = vadd.f32 %v2348, 1.0
        %v2375 = vadd.f32 %v2350, 1.0
        %v2376 = vadd.f32 %v2352, 1.0
        %v2377 = vadd.f32 %v2354, 1.0
        %v2378 = vadd.f32 %v2356, 1.0
        %v2379 = vadd.f32 %v2358, 1.0
        %v2380 = vadd.f32 %v2360, 1.0
        %v2381 = vadd.f32 %v2362, 1.0
        %v2382 = vadd.f32 %v2364, 1.0
        %v2383 = vadd.f32 %v2366, 1.0
        %v2384 = vadd.f32 %v2368, 1.0
        %v2385 = vrcp.pop %v2369
        %v2386 = vrcp.pop %v2370
        %v2387 = vrcp.pop %v2371
        %v2388 = vrcp.pop %v2372
        %v2389 = vrcp.pop %v2373
        %v2390 = vrcp.pop %v2374
        %v2391 = vrcp.pop %v2375
        %v2392 = vrcp.pop %v2376
        %v2393 = vrcp.pop %v2377
        %v2394 = vrcp.pop %v2378
        %v2395 = vrcp.pop %v2379
        %v2396 = vrcp.pop %v2380
        %v2397 = vrcp.pop %v2381
        %v2398 = vrcp.pop %v2382
        %v2399 = vrcp.pop %v2383
        %v2400 = vrcp.pop %v2384
        %v2401 = vpack.c.bf16 %v2386, %v2385
        %v2402 = vpack.c.bf16 %v2388, %v2387
        %v2403 = vpack.c.bf16 %v2390, %v2389
        %v2404 = vpack.c.bf16 %v2392, %v2391
        %v2405 = vpack.c.bf16 %v2394, %v2393
        %v2406 = vpack.c.bf16 %v2396, %v2395
        %v2407 = vpack.c.bf16 %v2398, %v2397
        %v2408 = vpack.c.bf16 %v2400, %v2399
        %vm2409 = vcmask 31744
        %v2411 = vsel %vm2409, %v2401, 0
        %v2414 = vsel %vm2409, %v2402, 0
        %v2417 = vsel %vm2409, %v2403, 0
        %v2420 = vsel %vm2409, %v2404, 0
        %v2423 = vsel %vm2409, %v2405, 0
        %v2426 = vsel %vm2409, %v2406, 0
        %v2429 = vsel %vm2409, %v2407, 0
        %v2432 = vsel %vm2409, %v2408, 0
        %vm2434 = vcmask 1041408
        %v2436 = vsel %vm2434, %v1740, 0
        %2438 = vmatprep.subr.bf16.mxu0 0
        %2439 = vmatpush1.bf16.msra.mxu0 0
        %2440 = vmatprep.subr.bf16.mxu0 0
        %2441 = vmatpush1.bf16.msra.mxu0 0
        %2442 = vmatprep.subr.bf16.mxu0 0
        %2443 = vmatpush1.bf16.msra.mxu0 0
        %2444 = vmatprep.subr.bf16.mxu0 0
        %2445 = vmatpush1.bf16.msra.mxu0 0
        %2446 = vmatprep.subr.bf16.mxu0 0
        %2447 = vmatpush1.bf16.msra.mxu0 0
        %2448 = vmatprep.subr.bf16.mxu0 0
        %2449 = vmatpush1.bf16.msra.mxu0 0
        %2450 = vmatprep.subr.bf16.mxu0 0
        %2451 = vmatpush1.bf16.msra.mxu0 0
        %2452 = vmatprep.subr.bf16.mxu0 0
        %2453 = vmatpush1.bf16.msra.mxu0 %v2436
        %2454 = vmatprep.subr.bf16.mxu0 0
        %2455 = vmatpush2.bf16.msra.mxu0 0
        %2456 = vmatprep.subr.bf16.mxu0 0
        %2457 = vmatpush2.bf16.msra.mxu0 0
        %2458 = vmatprep.subr.bf16.mxu0 0
        %2459 = vmatpush2.bf16.msra.mxu0 0
        %2460 = vmatprep.subr.bf16.mxu0 0
        %2461 = vmatpush2.bf16.msra.mxu0 0
        %2462 = vmatprep.subr.bf16.mxu0 0
        %2463 = vmatpush2.bf16.msra.mxu0 0
        %2464 = vmatprep.subr.bf16.mxu0 0
        %2465 = vmatpush2.bf16.msra.mxu0 0
        %2466 = vmatprep.subr.bf16.mxu0 0
        %2467 = vmatpush2.bf16.msra.mxu0 0
        %2468 = vmatprep.subr.bf16.mxu0 0
        %2469 = vmatpush2.bf16.msra.mxu0 0
        %2470 = vmatprep.mubr.bf16.mxu0 0
        %2471 = vmatmul.mubr.bf16.gmra.mxu0 %v2411
        %v2472 = vpop.f32.mrf.mxu0
        %v2473 = vadd.f32 0.0, %v2472
        %v2474 = vpop.f32.mrf.mxu0
        %v2475 = vpop.f32.mrf.mxu0
        %v2476 = vadd.f32 0.0, %v2475
        %v2477 = vpop.f32.mrf.mxu0
        %2478 = vmatprep.mubr.bf16.mxu0 0
        %2479 = vmatmul.mubr.bf16.gmra.mxu0 %v2414
        %v2480 = vpop.f32.mrf.mxu0
        %v2481 = vadd.f32 0.0, %v2480
        %v2482 = vpop.f32.mrf.mxu0
        %v2483 = vpop.f32.mrf.mxu0
        %v2484 = vadd.f32 0.0, %v2483
        %v2485 = vpop.f32.mrf.mxu0
        %2486 = vmatprep.mubr.bf16.mxu0 0
        %2487 = vmatmul.mubr.bf16.gmra.mxu0 %v2417
        %v2488 = vpop.f32.mrf.mxu0
        %v2489 = vadd.f32 0.0, %v2488
        %v2490 = vpop.f32.mrf.mxu0
        %v2491 = vpop.f32.mrf.mxu0
        %v2492 = vadd.f32 0.0, %v2491
        %v2493 = vpop.f32.mrf.mxu0
        %2494 = vmatprep.mubr.bf16.mxu0 0
        %2495 = vmatmul.mubr.bf16.gmra.mxu0 %v2420
        %v2496 = vpop.f32.mrf.mxu0
        %v2497 = vadd.f32 0.0, %v2496
        %v2498 = vpop.f32.mrf.mxu0
        %v2499 = vpop.f32.mrf.mxu0
        %v2500 = vadd.f32 0.0, %v2499
        %v2501 = vpop.f32.mrf.mxu0
        %2502 = vmatprep.mubr.bf16.mxu0 0
        %2503 = vmatmul.mubr.bf16.gmra.mxu0 %v2423
        %v2504 = vpop.f32.mrf.mxu0
        %v2505 = vadd.f32 0.0, %v2504
        %v2506 = vpop.f32.mrf.mxu0
        %v2507 = vpop.f32.mrf.mxu0
        %v2508 = vadd.f32 0.0, %v2507
        %v2509 = vpop.f32.mrf.mxu0
        %2510 = vmatprep.mubr.bf16.mxu0 0
        %2511 = vmatmul.mubr.bf16.gmra.mxu0 %v2426
        %v2512 = vpop.f32.mrf.mxu0
        %v2513 = vadd.f32 0.0, %v2512
        %v2514 = vpop.f32.mrf.mxu0
        %v2515 = vpop.f32.mrf.mxu0
        %v2516 = vadd.f32 0.0, %v2515
        %v2517 = vpop.f32.mrf.mxu0
        %2518 = vmatprep.mubr.bf16.mxu0 0
        %2519 = vmatmul.mubr.bf16.gmra.mxu0 %v2429
        %v2520 = vpop.f32.mrf.mxu0
        %v2521 = vadd.f32 0.0, %v2520
        %v2522 = vpop.f32.mrf.mxu0
        %v2523 = vpop.f32.mrf.mxu0
        %v2524 = vadd.f32 0.0, %v2523
        %v2525 = vpop.f32.mrf.mxu0
        %2526 = vmatprep.mubr.bf16.mxu0 0
        %2527 = vmatmul.mubr.bf16.gmra.mxu0 %v2432
        %v2528 = vpop.f32.mrf.mxu0
        %v2529 = vadd.f32 0.0, %v2528
        %v2530 = vpop.f32.mrf.mxu0
        %v2531 = vpop.f32.mrf.mxu0
        %v2532 = vadd.f32 0.0, %v2531
        %v2533 = vpop.f32.mrf.mxu0
        %2534 = vdwg.mxu0
        %v2535 = vsub.f32 %v2074, %v2106
        %v2536 = vsub.f32 %v2077, %v2109
        %v2537 = vsub.f32 %v2082, %v2114
        %v2538 = vsub.f32 %v2085, %v2117
        %v2539 = vsub.f32 %v2090, %v2122
        %v2540 = vsub.f32 %v2093, %v2125
        %v2541 = vsub.f32 %v2098, %v2130
        %v2542 = vsub.f32 %v2101, %v2133
        %v2543 = vsub.f32 %v2106, %v2074
        %v2544 = vsub.f32 %v2109, %v2077
        %v2545 = vsub.f32 %v2114, %v2082
        %v2546 = vsub.f32 %v2117, %v2085
        %v2547 = vsub.f32 %v2122, %v2090
        %v2548 = vsub.f32 %v2125, %v2093
        %v2549 = vsub.f32 %v2130, %v2098
        %v2550 = vsub.f32 %v2133, %v2101
        %v2551 = vmul.f32 %v2473, %v2535
        %v2552 = vmul.f32 %v2476, %v2536
        %v2553 = vmul.f32 %v2481, %v2537
        %v2554 = vmul.f32 %v2484, %v2538
        %v2555 = vmul.f32 %v2489, %v2539
        %v2556 = vmul.f32 %v2492, %v2540
        %v2557 = vmul.f32 %v2497, %v2541
        %v2558 = vmul.f32 %v2500, %v2542
        %v2559 = vmul.f32 %v2505, %v2543
        %v2560 = vmul.f32 %v2508, %v2544
        %v2561 = vmul.f32 %v2513, %v2545
        %v2562 = vmul.f32 %v2516, %v2546
        %v2563 = vmul.f32 %v2521, %v2547
        %v2564 = vmul.f32 %v2524, %v2548
        %v2565 = vmul.f32 %v2529, %v2549
        %v2566 = vmul.f32 %v2532, %v2550
        %v2567 = vadd.f32 %v2106, %v2551
        %v2568 = vadd.f32 %v2109, %v2552
        %v2569 = vadd.f32 %v2114, %v2553
        %v2570 = vadd.f32 %v2117, %v2554
        %v2571 = vadd.f32 %v2122, %v2555
        %v2572 = vadd.f32 %v2125, %v2556
        %v2573 = vadd.f32 %v2130, %v2557
        %v2574 = vadd.f32 %v2133, %v2558
        %v2575 = vadd.f32 %v2074, %v2559
        %v2576 = vadd.f32 %v2077, %v2560
        %v2577 = vadd.f32 %v2082, %v2561
        %v2578 = vadd.f32 %v2085, %v2562
        %v2579 = vadd.f32 %v2090, %v2563
        %v2580 = vadd.f32 %v2093, %v2564
        %v2581 = vadd.f32 %v2098, %v2565
        %v2582 = vadd.f32 %v2101, %v2566
        %v2583 = vld [vmem:[#allocation12] sm:$0xf]
        %v2584 = vld [vmem:[#allocation12 + $0x4] sm:$0xf]
        %v2585 = vld [vmem:[#allocation12 + $0x8] sm:$0xf]
        %v2586 = vld [vmem:[#allocation12 + $0xc] sm:$0xf]
        %v2587 = vld [vmem:[#allocation12 + $0x10] sm:$0xf]
        %v2588 = vld [vmem:[#allocation12 + $0x14] sm:$0xf]
        %v2589 = vld [vmem:[#allocation12 + $0x18] sm:$0xf]
        %v2590 = vld [vmem:[#allocation12 + $0x1c] sm:$0xf]
        %v2591 = vld [vmem:[#allocation12 + $0x20] sm:$0xf]
        %v2592 = vld [vmem:[#allocation12 + $0x24] sm:$0xf]
        %v2593 = vld [vmem:[#allocation12 + $0x28] sm:$0xf]
        %v2594 = vld [vmem:[#allocation12 + $0x2c] sm:$0xf]
        %v2595 = vld [vmem:[#allocation12 + $0x30] sm:$0xf]
        %v2596 = vld [vmem:[#allocation12 + $0x34] sm:$0xf]
        %v2597 = vld [vmem:[#allocation12 + $0x38] sm:$0xf]
        %v2598 = vld [vmem:[#allocation12 + $0x3c] sm:$0xf]
        %v2599 = vpack.c.bf16 %v2568, %v2567
        %v2600 = vpack.c.bf16 %v2570, %v2569
        %v2601 = vpack.c.bf16 %v2572, %v2571
        %v2602 = vpack.c.bf16 %v2574, %v2573
        %v2603 = vpack.c.bf16 %v2576, %v2575
        %v2604 = vpack.c.bf16 %v2578, %v2577
        %v2605 = vpack.c.bf16 %v2580, %v2579
        %v2606 = vpack.c.bf16 %v2582, %v2581
        %v2607 = vld [vmem:[#allocation14] sm:$0x1]
        %v2609 = vlaneseq
        %v2610 = vshrl.u32 %v2609, 7
        %v2611 = vsub.s32 0, %v2610
        %v2612 = vrot.slane %v2607, %v2611
        %v2630 = vunpack.c.l.b16 %v2583
        %v2631 = vunpack.c.l.b16 %v2584
        %v2632 = vunpack.c.l.b16 %v2585
        %v2633 = vunpack.c.l.b16 %v2586
        %v2634 = vunpack.c.l.b16 %v2587
        %v2635 = vunpack.c.l.b16 %v2588
        %v2636 = vunpack.c.l.b16 %v2589
        %v2637 = vunpack.c.l.b16 %v2590
        %v2638 = vunpack.c.l.b16 %v2591
        %v2639 = vunpack.c.l.b16 %v2592
        %v2640 = vunpack.c.l.b16 %v2593
        %v2641 = vunpack.c.l.b16 %v2594
        %v2642 = vunpack.c.l.b16 %v2595
        %v2643 = vunpack.c.l.b16 %v2596
        %v2644 = vunpack.c.l.b16 %v2597
        %v2645 = vunpack.c.l.b16 %v2598
        %v2646 = vpack.c.b16 %v2631, %v2630
        %v2647 = vpack.c.b16 %v2633, %v2632
        %v2648 = vpack.c.b16 %v2635, %v2634
        %v2649 = vpack.c.b16 %v2637, %v2636
        %v2650 = vpack.c.b16 %v2639, %v2638
        %v2651 = vpack.c.b16 %v2641, %v2640
        %v2652 = vpack.c.b16 %v2643, %v2642
        %v2653 = vpack.c.b16 %v2645, %v2644
        %2662 = vmatprep.subr.bf16.mxu0 0
        %2663 = vmatpush1.bf16.msra.mxu0 %v2653
        %2664 = vmatprep.subr.bf16.mxu0 0
        %2665 = vmatpush1.bf16.msra.mxu0 %v2652
        %2666 = vmatprep.subr.bf16.mxu0 0
        %2667 = vmatpush1.bf16.msra.mxu0 %v2651
        %2668 = vmatprep.subr.bf16.mxu0 0
        %2669 = vmatpush1.bf16.msra.mxu0 %v2650
        %2670 = vmatprep.subr.bf16.mxu0 0
        %2671 = vmatpush1.bf16.msra.mxu0 %v2649
        %2672 = vmatprep.subr.bf16.mxu0 0
        %2673 = vmatpush1.bf16.msra.mxu0 %v2648
        %2674 = vmatprep.subr.bf16.mxu0 0
        %2675 = vmatpush1.bf16.msra.mxu0 %v2647
        %2676 = vmatprep.subr.bf16.mxu0 0
        %2677 = vmatpush1.bf16.msra.mxu0 %v2646
        %2678 = vmatprep.subr.bf16.mxu0 0
        %2679 = vmatpush2.bf16.msra.mxu0 0
        %2680 = vmatprep.subr.bf16.mxu0 0
        %2681 = vmatpush2.bf16.msra.mxu0 0
        %2682 = vmatprep.subr.bf16.mxu0 0
        %2683 = vmatpush2.bf16.msra.mxu0 0
        %2684 = vmatprep.subr.bf16.mxu0 0
        %2685 = vmatpush2.bf16.msra.mxu0 0
        %2686 = vmatprep.subr.bf16.mxu0 0
        %2687 = vmatpush2.bf16.msra.mxu0 0
        %2688 = vmatprep.subr.bf16.mxu0 0
        %2689 = vmatpush2.bf16.msra.mxu0 0
        %2690 = vmatprep.subr.bf16.mxu0 0
        %2691 = vmatpush2.bf16.msra.mxu0 0
        %2692 = vmatprep.subr.bf16.mxu0 0
        %2693 = vmatpush2.bf16.msra.mxu0 0
        %2694 = vmatprep.mubr.bf16.mxu0 0
        %2695 = vmatmul.mubr.bf16.gmra.mxu0 %v2599
        %v2696 = vpop.f32.mrf.mxu0
        %v2697 = vadd.f32 %v2612, %v2696
        %v2698 = vpop.f32.mrf.mxu0
        %v2699 = vpop.f32.mrf.mxu0
        %v2700 = vadd.f32 %v2612, %v2699
        %v2701 = vpop.f32.mrf.mxu0
        %2702 = vmatprep.mubr.bf16.mxu0 0
        %2703 = vmatmul.mubr.bf16.gmra.mxu0 %v2600
        %v2704 = vpop.f32.mrf.mxu0
        %v2705 = vadd.f32 %v2612, %v2704
        %v2706 = vpop.f32.mrf.mxu0
        %v2707 = vpop.f32.mrf.mxu0
        %v2708 = vadd.f32 %v2612, %v2707
        %v2709 = vpop.f32.mrf.mxu0
        %2710 = vmatprep.mubr.bf16.mxu0 0
        %2711 = vmatmul.mubr.bf16.gmra.mxu0 %v2601
        %v2712 = vpop.f32.mrf.mxu0
        %v2713 = vadd.f32 %v2612, %v2712
        %v2714 = vpop.f32.mrf.mxu0
        %v2715 = vpop.f32.mrf.mxu0
        %v2716 = vadd.f32 %v2612, %v2715
        %v2717 = vpop.f32.mrf.mxu0
        %2718 = vmatprep.mubr.bf16.mxu0 0
        %2719 = vmatmul.mubr.bf16.gmra.mxu0 %v2602
        %v2720 = vpop.f32.mrf.mxu0
        %v2721 = vadd.f32 %v2612, %v2720
        %v2722 = vpop.f32.mrf.mxu0
        %v2723 = vpop.f32.mrf.mxu0
        %v2724 = vadd.f32 %v2612, %v2723
        %v2725 = vpop.f32.mrf.mxu0
        %2726 = vmatprep.mubr.bf16.mxu0 0
        %2727 = vmatmul.mubr.bf16.gmra.mxu0 %v2603
        %v2728 = vpop.f32.mrf.mxu0
        %v2729 = vadd.f32 %v2612, %v2728
        %v2730 = vpop.f32.mrf.mxu0
        %v2731 = vpop.f32.mrf.mxu0
        %v2732 = vadd.f32 %v2612, %v2731
        %v2733 = vpop.f32.mrf.mxu0
        %2734 = vmatprep.mubr.bf16.mxu0 0
        %2735 = vmatmul.mubr.bf16.gmra.mxu0 %v2604
        %v2736 = vpop.f32.mrf.mxu0
        %v2737 = vadd.f32 %v2612, %v2736
        %v2738 = vpop.f32.mrf.mxu0
        %v2739 = vpop.f32.mrf.mxu0
        %v2740 = vadd.f32 %v2612, %v2739
        %v2741 = vpop.f32.mrf.mxu0
        %2742 = vmatprep.mubr.bf16.mxu0 0
        %2743 = vmatmul.mubr.bf16.gmra.mxu0 %v2605
        %v2744 = vpop.f32.mrf.mxu0
        %v2745 = vadd.f32 %v2612, %v2744
        %v2746 = vpop.f32.mrf.mxu0
        %v2747 = vpop.f32.mrf.mxu0
        %v2748 = vadd.f32 %v2612, %v2747
        %v2749 = vpop.f32.mrf.mxu0
        %2750 = vmatprep.mubr.bf16.mxu0 0
        %2751 = vmatmul.mubr.bf16.gmra.mxu0 %v2606
        %v2752 = vpop.f32.mrf.mxu0
        %v2753 = vadd.f32 %v2612, %v2752
        %v2754 = vpop.f32.mrf.mxu0
        %v2755 = vpop.f32.mrf.mxu0
        %v2756 = vadd.f32 %v2612, %v2755
        %v2757 = vpop.f32.mrf.mxu0
        %2758 = vdwg.mxu0
        %v2759 = vld [vmem:[#allocation21] sm:$0xf]
        %v2760 = vadd.f32 %v1573, %v2697
        %v2761 = vadd.f32 %v1576, %v2700
        %v2762 = vadd.f32 %v1581, %v2705
        %v2763 = vadd.f32 %v1584, %v2708
        %v2764 = vadd.f32 %v1589, %v2713
        %v2765 = vadd.f32 %v1592, %v2716
        %v2766 = vadd.f32 %v1597, %v2721
        %v2767 = vadd.f32 %v1600, %v2724
        %v2768 = vadd.f32 %v1694, %v2729
        %v2769 = vadd.f32 %v1697, %v2732
        %v2770 = vadd.f32 %v1702, %v2737
        %v2771 = vadd.f32 %v1705, %v2740
        %v2772 = vadd.f32 %v1710, %v2745
        %v2773 = vadd.f32 %v1713, %v2748
        %v2774 = vadd.f32 %v1718, %v2753
        %v2775 = vadd.f32 %v1721, %v2756
        %2776 = vadd.xlane.f32.xlu0 %v2760
        %v2777 = vpop.xlane.xlu0 %2776
        %2778 = vadd.xlane.f32.xlu0 %v2761
        %v2779 = vpop.xlane.xlu0 %2778
        %2780 = vadd.xlane.f32.xlu0 %v2762
        %v2781 = vpop.xlane.xlu0 %2780
        %2782 = vadd.xlane.f32.xlu0 %v2763
        %v2783 = vpop.xlane.xlu0 %2782
        %2784 = vadd.xlane.f32.xlu0 %v2764
        %v2785 = vpop.xlane.xlu0 %2784
        %2786 = vadd.xlane.f32.xlu0 %v2765
        %v2787 = vpop.xlane.xlu0 %2786
        %2788 = vadd.xlane.f32.xlu0 %v2766
        %v2789 = vpop.xlane.xlu0 %2788
        %2790 = vadd.xlane.f32.xlu0 %v2767
        %v2791 = vpop.xlane.xlu0 %2790
        %2792 = vadd.xlane.f32.xlu0 %v2768
        %v2793 = vpop.xlane.xlu0 %2792
        %2794 = vadd.xlane.f32.xlu0 %v2769
        %v2795 = vpop.xlane.xlu0 %2794
        %2796 = vadd.xlane.f32.xlu0 %v2770
        %v2797 = vpop.xlane.xlu0 %2796
        %2798 = vadd.xlane.f32.xlu0 %v2771
        %v2799 = vpop.xlane.xlu0 %2798
        %2800 = vadd.xlane.f32.xlu0 %v2772
        %v2801 = vpop.xlane.xlu0 %2800
        %2802 = vadd.xlane.f32.xlu0 %v2773
        %v2803 = vpop.xlane.xlu0 %2802
        %2804 = vadd.xlane.f32.xlu0 %v2774
        %v2805 = vpop.xlane.xlu0 %2804
        %2806 = vadd.xlane.f32.xlu0 %v2775
        %v2807 = vpop.xlane.xlu0 %2806
        %v2808 = vrcp.pop 128.0
        %v2809 = vmul.f32 %v2777, %v2808
        %v2810 = vmul.f32 %v2779, %v2808
        %v2811 = vmul.f32 %v2781, %v2808
        %v2812 = vmul.f32 %v2783, %v2808
        %v2813 = vmul.f32 %v2785, %v2808
        %v2814 = vmul.f32 %v2787, %v2808
        %v2815 = vmul.f32 %v2789, %v2808
        %v2816 = vmul.f32 %v2791, %v2808
        %v2817 = vmul.f32 %v2793, %v2808
        %v2818 = vmul.f32 %v2795, %v2808
        %v2819 = vmul.f32 %v2797, %v2808
        %v2820 = vmul.f32 %v2799, %v2808
        %v2821 = vmul.f32 %v2801, %v2808
        %v2822 = vmul.f32 %v2803, %v2808
        %v2823 = vmul.f32 %v2805, %v2808
        %v2824 = vmul.f32 %v2807, %v2808
        %v2825 = vsub.f32 %v2760, %v2809
        %v2826 = vsub.f32 %v2761, %v2810
        %v2827 = vsub.f32 %v2762, %v2811
        %v2828 = vsub.f32 %v2763, %v2812
        %v2829 = vsub.f32 %v2764, %v2813
        %v2830 = vsub.f32 %v2765, %v2814
        %v2831 = vsub.f32 %v2766, %v2815
        %v2832 = vsub.f32 %v2767, %v2816
        %v2833 = vsub.f32 %v2768, %v2817
        %v2834 = vsub.f32 %v2769, %v2818
        %v2835 = vsub.f32 %v2770, %v2819
        %v2836 = vsub.f32 %v2771, %v2820
        %v2837 = vsub.f32 %v2772, %v2821
        %v2838 = vsub.f32 %v2773, %v2822
        %v2839 = vsub.f32 %v2774, %v2823
        %v2840 = vsub.f32 %v2775, %v2824
        %v2841 = vmul.f32 %v2825, %v2825
        %v2842 = vmul.f32 %v2826, %v2826
        %v2843 = vmul.f32 %v2827, %v2827
        %v2844 = vmul.f32 %v2828, %v2828
        %v2845 = vmul.f32 %v2829, %v2829
        %v2846 = vmul.f32 %v2830, %v2830
        %v2847 = vmul.f32 %v2831, %v2831
        %v2848 = vmul.f32 %v2832, %v2832
        %v2849 = vmul.f32 %v2833, %v2833
        %v2850 = vmul.f32 %v2834, %v2834
        %v2851 = vmul.f32 %v2835, %v2835
        %v2852 = vmul.f32 %v2836, %v2836
        %v2853 = vmul.f32 %v2837, %v2837
        %v2854 = vmul.f32 %v2838, %v2838
        %v2855 = vmul.f32 %v2839, %v2839
        %v2856 = vmul.f32 %v2840, %v2840
        %2857 = vadd.xlane.f32.xlu0 %v2841
        %v2858 = vpop.xlane.xlu0 %2857
        %2859 = vadd.xlane.f32.xlu0 %v2842
        %v2860 = vpop.xlane.xlu0 %2859
        %2861 = vadd.xlane.f32.xlu0 %v2843
        %v2862 = vpop.xlane.xlu0 %2861
        %2863 = vadd.xlane.f32.xlu0 %v2844
        %v2864 = vpop.xlane.xlu0 %2863
        %2865 = vadd.xlane.f32.xlu0 %v2845
        %v2866 = vpop.xlane.xlu0 %2865
        %2867 = vadd.xlane.f32.xlu0 %v2846
        %v2868 = vpop.xlane.xlu0 %2867
        %2869 = vadd.xlane.f32.xlu0 %v2847
        %v2870 = vpop.xlane.xlu0 %2869
        %2871 = vadd.xlane.f32.xlu0 %v2848
        %v2872 = vpop.xlane.xlu0 %2871
        %2873 = vadd.xlane.f32.xlu0 %v2849
        %v2874 = vpop.xlane.xlu0 %2873
        %2875 = vadd.xlane.f32.xlu0 %v2850
        %v2876 = vpop.xlane.xlu0 %2875
        %2877 = vadd.xlane.f32.xlu0 %v2851
        %v2878 = vpop.xlane.xlu0 %2877
        %2879 = vadd.xlane.f32.xlu0 %v2852
        %v2880 = vpop.xlane.xlu0 %2879
        %2881 = vadd.xlane.f32.xlu0 %v2853
        %v2882 = vpop.xlane.xlu0 %2881
        %2883 = vadd.xlane.f32.xlu0 %v2854
        %v2884 = vpop.xlane.xlu0 %2883
        %2885 = vadd.xlane.f32.xlu0 %v2855
        %v2886 = vpop.xlane.xlu0 %2885
        %2887 = vadd.xlane.f32.xlu0 %v2856
        %v2888 = vpop.xlane.xlu0 %2887
        %v2889 = vmul.f32 %v2858, %v2808
        %v2890 = vmul.f32 %v2860, %v2808
        %v2891 = vmul.f32 %v2862, %v2808
        %v2892 = vmul.f32 %v2864, %v2808
        %v2893 = vmul.f32 %v2866, %v2808
        %v2894 = vmul.f32 %v2868, %v2808
        %v2895 = vmul.f32 %v2870, %v2808
        %v2896 = vmul.f32 %v2872, %v2808
        %v2897 = vmul.f32 %v2874, %v2808
        %v2898 = vmul.f32 %v2876, %v2808
        %v2899 = vmul.f32 %v2878, %v2808
        %v2900 = vmul.f32 %v2880, %v2808
        %v2901 = vmul.f32 %v2882, %v2808
        %v2902 = vmul.f32 %v2884, %v2808
        %v2903 = vmul.f32 %v2886, %v2808
        %v2904 = vmul.f32 %v2888, %v2808
        %v2905 = vadd.f32 %v2889, 1e-05
        %v2906 = vadd.f32 %v2890, 1e-05
        %v2907 = vadd.f32 %v2891, 1e-05
        %v2908 = vadd.f32 %v2892, 1e-05
        %v2909 = vadd.f32 %v2893, 1e-05
        %v2910 = vadd.f32 %v2894, 1e-05
        %v2911 = vadd.f32 %v2895, 1e-05
        %v2912 = vadd.f32 %v2896, 1e-05
        %v2913 = vadd.f32 %v2897, 1e-05
        %v2914 = vadd.f32 %v2898, 1e-05
        %v2915 = vadd.f32 %v2899, 1e-05
        %v2916 = vadd.f32 %v2900, 1e-05
        %v2917 = vadd.f32 %v2901, 1e-05
        %v2918 = vadd.f32 %v2902, 1e-05
        %v2919 = vadd.f32 %v2903, 1e-05
        %v2920 = vadd.f32 %v2904, 1e-05
        %v2921 = vrsqrt.pop %v2905
        %v2922 = vrsqrt.pop %v2906
        %v2923 = vrsqrt.pop %v2907
        %v2924 = vrsqrt.pop %v2908
        %v2925 = vrsqrt.pop %v2909
        %v2926 = vrsqrt.pop %v2910
        %v2927 = vrsqrt.pop %v2911
        %v2928 = vrsqrt.pop %v2912
        %v2929 = vrsqrt.pop %v2913
        %v2930 = vrsqrt.pop %v2914
        %v2931 = vrsqrt.pop %v2915
        %v2932 = vrsqrt.pop %v2916
        %v2933 = vrsqrt.pop %v2917
        %v2934 = vrsqrt.pop %v2918
        %v2935 = vrsqrt.pop %v2919
        %v2936 = vrsqrt.pop %v2920
        %v2937 = vmul.f32 %v2825, %v2921
        %v2938 = vmul.f32 %v2826, %v2922
        %v2939 = vmul.f32 %v2827, %v2923
        %v2940 = vmul.f32 %v2828, %v2924
        %v2941 = vmul.f32 %v2829, %v2925
        %v2942 = vmul.f32 %v2830, %v2926
        %v2943 = vmul.f32 %v2831, %v2927
        %v2944 = vmul.f32 %v2832, %v2928
        %v2945 = vmul.f32 %v2833, %v2929
        %v2946 = vmul.f32 %v2834, %v2930
        %v2947 = vmul.f32 %v2835, %v2931
        %v2948 = vmul.f32 %v2836, %v2932
        %v2949 = vmul.f32 %v2837, %v2933
        %v2950 = vmul.f32 %v2838, %v2934
        %v2951 = vmul.f32 %v2839, %v2935
        %v2952 = vmul.f32 %v2840, %v2936
        %v2953 = vlaneseq
        %v2954 = vshrl.u32 %v2953, 7
        %v2955 = vsub.s32 0, %v2954
        %v2956 = vrot.slane %v2759, %v2955
        %v2957 = vmul.f32 %v2937, %v2956
        %v2958 = vmul.f32 %v2938, %v2956
        %v2959 = vmul.f32 %v2939, %v2956
        %v2960 = vmul.f32 %v2940, %v2956
        %v2961 = vmul.f32 %v2941, %v2956
        %v2962 = vmul.f32 %v2942, %v2956
        %v2963 = vmul.f32 %v2943, %v2956
        %v2964 = vmul.f32 %v2944, %v2956
        %v2965 = vmul.f32 %v2945, %v2956
        %v2966 = vmul.f32 %v2946, %v2956
        %v2967 = vmul.f32 %v2947, %v2956
        %v2968 = vmul.f32 %v2948, %v2956
        %v2969 = vmul.f32 %v2949, %v2956
        %v2970 = vmul.f32 %v2950, %v2956
        %v2971 = vmul.f32 %v2951, %v2956
        %v2972 = vmul.f32 %v2952, %v2956
        %v2973 = vlaneseq
        %v2974 = vshrl.u32 %v2973, 7
        %v2975 = vsub.s32 1, %v2974
        %v2976 = vrot.slane %v2759, %v2975
        %v2977 = vadd.f32 %v2957, %v2976
        %v2978 = vadd.f32 %v2958, %v2976
        %v2979 = vadd.f32 %v2959, %v2976
        %v2980 = vadd.f32 %v2960, %v2976
        %v2981 = vadd.f32 %v2961, %v2976
        %v2982 = vadd.f32 %v2962, %v2976
        %v2983 = vadd.f32 %v2963, %v2976
        %v2984 = vadd.f32 %v2964, %v2976
        %v2985 = vadd.f32 %v2965, %v2976
        %v2986 = vadd.f32 %v2966, %v2976
        %v2987 = vadd.f32 %v2967, %v2976
        %v2988 = vadd.f32 %v2968, %v2976
        %v2989 = vadd.f32 %v2969, %v2976
        %v2990 = vadd.f32 %v2970, %v2976
        %v2991 = vadd.f32 %v2971, %v2976
        %v2992 = vadd.f32 %v2972, %v2976
        %v2993 = vld [vmem:[#allocation15] sm:$0xff]
        %v2994 = vld [vmem:[#allocation15 + $0x8] sm:$0xff]
        %v2995 = vld [vmem:[#allocation15 + $0x10] sm:$0xff]
        %v2996 = vld [vmem:[#allocation15 + $0x18] sm:$0xff]
        %v2997 = vld [vmem:[#allocation15 + $0x20] sm:$0xff]
        %v2998 = vld [vmem:[#allocation15 + $0x28] sm:$0xff]
        %v2999 = vld [vmem:[#allocation15 + $0x30] sm:$0xff]
        %v3000 = vld [vmem:[#allocation15 + $0x38] sm:$0xff]
        %v3001 = vld [vmem:[#allocation15 + $0x40] sm:$0xff]
        %v3002 = vld [vmem:[#allocation15 + $0x48] sm:$0xff]
        %v3003 = vld [vmem:[#allocation15 + $0x50] sm:$0xff]
        %v3004 = vld [vmem:[#allocation15 + $0x58] sm:$0xff]
        %v3005 = vld [vmem:[#allocation15 + $0x60] sm:$0xff]
        %v3006 = vld [vmem:[#allocation15 + $0x68] sm:$0xff]
        %v3007 = vld [vmem:[#allocation15 + $0x70] sm:$0xff]
        %v3008 = vld [vmem:[#allocation15 + $0x78] sm:$0xff]
        %v3009 = vpack.c.bf16 %v2978, %v2977
        %v3010 = vpack.c.bf16 %v2980, %v2979
        %v3011 = vpack.c.bf16 %v2982, %v2981
        %v3012 = vpack.c.bf16 %v2984, %v2983
        %v3013 = vpack.c.bf16 %v2986, %v2985
        %v3014 = vpack.c.bf16 %v2988, %v2987
        %v3015 = vpack.c.bf16 %v2990, %v2989
        %v3016 = vpack.c.bf16 %v2992, %v2991
        %v3017 = vld [vmem:[#allocation17] sm:$0x3]
        %v3019 = vlaneseq
        %v3020 = vshrl.u32 %v3019, 7
        %v3021 = vsub.s32 0, %v3020
        %v3022 = vrot.slane %v3017, %v3021
        %v3023 = vlaneseq
        %v3024 = vshrl.u32 %v3023, 7
        %v3025 = vsub.s32 1, %v3024
        %v3026 = vrot.slane %v3017, %v3025
        %v3045 = vunpack.c.l.b16 %v2993
        %v3046 = vunpack.c.h.b16 %v2993
        %v3047 = vunpack.c.l.b16 %v2994
        %v3048 = vunpack.c.h.b16 %v2994
        %v3049 = vunpack.c.l.b16 %v2995
        %v3050 = vunpack.c.h.b16 %v2995
        %v3051 = vunpack.c.l.b16 %v2996
        %v3052 = vunpack.c.h.b16 %v2996
        %v3053 = vunpack.c.l.b16 %v2997
        %v3054 = vunpack.c.h.b16 %v2997
        %v3055 = vunpack.c.l.b16 %v2998
        %v3056 = vunpack.c.h.b16 %v2998
        %v3057 = vunpack.c.l.b16 %v2999
        %v3058 = vunpack.c.h.b16 %v2999
        %v3059 = vunpack.c.l.b16 %v3000
        %v3060 = vunpack.c.h.b16 %v3000
        %v3061 = vunpack.c.l.b16 %v3001
        %v3062 = vunpack.c.h.b16 %v3001
        %v3063 = vunpack.c.l.b16 %v3002
        %v3064 = vunpack.c.h.b16 %v3002
        %v3065 = vunpack.c.l.b16 %v3003
        %v3066 = vunpack.c.h.b16 %v3003
        %v3067 = vunpack.c.l.b16 %v3004
        %v3068 = vunpack.c.h.b16 %v3004
        %v3069 = vunpack.c.l.b16 %v3005
        %v3070 = vunpack.c.h.b16 %v3005
        %v3071 = vunpack.c.l.b16 %v3006
        %v3072 = vunpack.c.h.b16 %v3006
        %v3073 = vunpack.c.l.b16 %v3007
        %v3074 = vunpack.c.h.b16 %v3007
        %v3075 = vunpack.c.l.b16 %v3008
        %v3076 = vunpack.c.h.b16 %v3008
        %v3077 = vpack.c.b16 %v3047, %v3045
        %v3078 = vpack.c.b16 %v3048, %v3046
        %v3079 = vpack.c.b16 %v3051, %v3049
        %v3080 = vpack.c.b16 %v3052, %v3050
        %v3081 = vpack.c.b16 %v3055, %v3053
        %v3082 = vpack.c.b16 %v3056, %v3054
        %v3083 = vpack.c.b16 %v3059, %v3057
        %v3084 = vpack.c.b16 %v3060, %v3058
        %v3085 = vpack.c.b16 %v3063, %v3061
        %v3086 = vpack.c.b16 %v3064, %v3062
        %v3087 = vpack.c.b16 %v3067, %v3065
        %v3088 = vpack.c.b16 %v3068, %v3066
        %v3089 = vpack.c.b16 %v3071, %v3069
        %v3090 = vpack.c.b16 %v3072, %v3070
        %v3091 = vpack.c.b16 %v3075, %v3073
        %v3092 = vpack.c.b16 %v3076, %v3074
        %3109 = vmatprep.subr.bf16.mxu0 %v3092
        %3110 = vmatpush1.bf16.msra.mxu0 %v3091
        %3111 = vmatprep.subr.bf16.mxu0 %v3090
        %3112 = vmatpush1.bf16.msra.mxu0 %v3089
        %3113 = vmatprep.subr.bf16.mxu0 %v3088
        %3114 = vmatpush1.bf16.msra.mxu0 %v3087
        %3115 = vmatprep.subr.bf16.mxu0 %v3086
        %3116 = vmatpush1.bf16.msra.mxu0 %v3085
        %3117 = vmatprep.subr.bf16.mxu0 %v3084
        %3118 = vmatpush1.bf16.msra.mxu0 %v3083
        %3119 = vmatprep.subr.bf16.mxu0 %v3082
        %3120 = vmatpush1.bf16.msra.mxu0 %v3081
        %3121 = vmatprep.subr.bf16.mxu0 %v3080
        %3122 = vmatpush1.bf16.msra.mxu0 %v3079
        %3123 = vmatprep.subr.bf16.mxu0 %v3078
        %3124 = vmatpush1.bf16.msra.mxu0 %v3077
        %3125 = vmatprep.subr.bf16.mxu0 0
        %3126 = vmatpush2.bf16.msra.mxu0 0
        %3127 = vmatprep.subr.bf16.mxu0 0
        %3128 = vmatpush2.bf16.msra.mxu0 0
        %3129 = vmatprep.subr.bf16.mxu0 0
        %3130 = vmatpush2.bf16.msra.mxu0 0
        %3131 = vmatprep.subr.bf16.mxu0 0
        %3132 = vmatpush2.bf16.msra.mxu0 0
        %3133 = vmatprep.subr.bf16.mxu0 0
        %3134 = vmatpush2.bf16.msra.mxu0 0
        %3135 = vmatprep.subr.bf16.mxu0 0
        %3136 = vmatpush2.bf16.msra.mxu0 0
        %3137 = vmatprep.subr.bf16.mxu0 0
        %3138 = vmatpush2.bf16.msra.mxu0 0
        %3139 = vmatprep.subr.bf16.mxu0 0
        %3140 = vmatpush2.bf16.msra.mxu0 0
        %3141 = vmatprep.mubr.bf16.mxu0 0
        %3142 = vmatmul.mubr.bf16.gmra.mxu0 %v3009
        %v3143 = vpop.f32.mrf.mxu0
        %v3144 = vadd.f32 %v3022, %v3143
        %v3145 = vpop.f32.mrf.mxu0
        %v3146 = vadd.f32 %v3026, %v3145
        %v3147 = vpop.f32.mrf.mxu0
        %v3148 = vadd.f32 %v3022, %v3147
        %v3149 = vpop.f32.mrf.mxu0
        %v3150 = vadd.f32 %v3026, %v3149
        %3151 = vmatprep.mubr.bf16.mxu0 0
        %3152 = vmatmul.mubr.bf16.gmra.mxu0 %v3010
        %v3153 = vpop.f32.mrf.mxu0
        %v3154 = vadd.f32 %v3022, %v3153
        %v3155 = vpop.f32.mrf.mxu0
        %v3156 = vadd.f32 %v3026, %v3155
        %v3157 = vpop.f32.mrf.mxu0
        %v3158 = vadd.f32 %v3022, %v3157
        %v3159 = vpop.f32.mrf.mxu0
        %v3160 = vadd.f32 %v3026, %v3159
        %3161 = vmatprep.mubr.bf16.mxu0 0
        %3162 = vmatmul.mubr.bf16.gmra.mxu0 %v3011
        %v3163 = vpop.f32.mrf.mxu0
        %v3164 = vadd.f32 %v3022, %v3163
        %v3165 = vpop.f32.mrf.mxu0
        %v3166 = vadd.f32 %v3026, %v3165
        %v3167 = vpop.f32.mrf.mxu0
        %v3168 = vadd.f32 %v3022, %v3167
        %v3169 = vpop.f32.mrf.mxu0
        %v3170 = vadd.f32 %v3026, %v3169
        %3171 = vmatprep.mubr.bf16.mxu0 0
        %3172 = vmatmul.mubr.bf16.gmra.mxu0 %v3012
        %v3173 = vpop.f32.mrf.mxu0
        %v3174 = vadd.f32 %v3022, %v3173
        %v3175 = vpop.f32.mrf.mxu0
        %v3176 = vadd.f32 %v3026, %v3175
        %v3177 = vpop.f32.mrf.mxu0
        %v3178 = vadd.f32 %v3022, %v3177
        %v3179 = vpop.f32.mrf.mxu0
        %v3180 = vadd.f32 %v3026, %v3179
        %3181 = vmatprep.mubr.bf16.mxu0 0
        %3182 = vmatmul.mubr.bf16.gmra.mxu0 %v3013
        %v3183 = vpop.f32.mrf.mxu0
        %v3184 = vadd.f32 %v3022, %v3183
        %v3185 = vpop.f32.mrf.mxu0
        %v3186 = vadd.f32 %v3026, %v3185
        %v3187 = vpop.f32.mrf.mxu0
        %v3188 = vadd.f32 %v3022, %v3187
        %v3189 = vpop.f32.mrf.mxu0
        %v3190 = vadd.f32 %v3026, %v3189
        %3191 = vmatprep.mubr.bf16.mxu0 0
        %3192 = vmatmul.mubr.bf16.gmra.mxu0 %v3014
        %v3193 = vpop.f32.mrf.mxu0
        %v3194 = vadd.f32 %v3022, %v3193
        %v3195 = vpop.f32.mrf.mxu0
        %v3196 = vadd.f32 %v3026, %v3195
        %v3197 = vpop.f32.mrf.mxu0
        %v3198 = vadd.f32 %v3022, %v3197
        %v3199 = vpop.f32.mrf.mxu0
        %v3200 = vadd.f32 %v3026, %v3199
        %3201 = vmatprep.mubr.bf16.mxu0 0
        %3202 = vmatmul.mubr.bf16.gmra.mxu0 %v3015
        %v3203 = vpop.f32.mrf.mxu0
        %v3204 = vadd.f32 %v3022, %v3203
        %v3205 = vpop.f32.mrf.mxu0
        %v3206 = vadd.f32 %v3026, %v3205
        %v3207 = vpop.f32.mrf.mxu0
        %v3208 = vadd.f32 %v3022, %v3207
        %v3209 = vpop.f32.mrf.mxu0
        %v3210 = vadd.f32 %v3026, %v3209
        %3211 = vmatprep.mubr.bf16.mxu0 0
        %3212 = vmatmul.mubr.bf16.gmra.mxu0 %v3016
        %v3213 = vpop.f32.mrf.mxu0
        %v3214 = vadd.f32 %v3022, %v3213
        %v3215 = vpop.f32.mrf.mxu0
        %v3216 = vadd.f32 %v3026, %v3215
        %v3217 = vpop.f32.mrf.mxu0
        %v3218 = vadd.f32 %v3022, %v3217
        %v3219 = vpop.f32.mrf.mxu0
        %v3220 = vadd.f32 %v3026, %v3219
        %3221 = vdwg.mxu0
        %v3222 = vmax.f32 %v3144, 0.0
        %v3223 = vmax.f32 %v3146, 0.0
        %v3224 = vmax.f32 %v3148, 0.0
        %v3225 = vmax.f32 %v3150, 0.0
        %v3226 = vmax.f32 %v3154, 0.0
        %v3227 = vmax.f32 %v3156, 0.0
        %v3228 = vmax.f32 %v3158, 0.0
        %v3229 = vmax.f32 %v3160, 0.0
        %v3230 = vmax.f32 %v3164, 0.0
        %v3231 = vmax.f32 %v3166, 0.0
        %v3232 = vmax.f32 %v3168, 0.0
        %v3233 = vmax.f32 %v3170, 0.0
        %v3234 = vmax.f32 %v3174, 0.0
        %v3235 = vmax.f32 %v3176, 0.0
        %v3236 = vmax.f32 %v3178, 0.0
        %v3237 = vmax.f32 %v3180, 0.0
        %v3238 = vmax.f32 %v3184, 0.0
        %v3239 = vmax.f32 %v3186, 0.0
        %v3240 = vmax.f32 %v3188, 0.0
        %v3241 = vmax.f32 %v3190, 0.0
        %v3242 = vmax.f32 %v3194, 0.0
        %v3243 = vmax.f32 %v3196, 0.0
        %v3244 = vmax.f32 %v3198, 0.0
        %v3245 = vmax.f32 %v3200, 0.0
        %v3246 = vmax.f32 %v3204, 0.0
        %v3247 = vmax.f32 %v3206, 0.0
        %v3248 = vmax.f32 %v3208, 0.0
        %v3249 = vmax.f32 %v3210, 0.0
        %v3250 = vmax.f32 %v3214, 0.0
        %v3251 = vmax.f32 %v3216, 0.0
        %v3252 = vmax.f32 %v3218, 0.0
        %v3253 = vmax.f32 %v3220, 0.0
        %v3254 = vld [vmem:[#allocation18] sm:$0xf]
        %v3255 = vld [vmem:[#allocation18 + $0x4] sm:$0xf]
        %v3256 = vld [vmem:[#allocation18 + $0x8] sm:$0xf]
        %v3257 = vld [vmem:[#allocation18 + $0xc] sm:$0xf]
        %v3258 = vld [vmem:[#allocation18 + $0x10] sm:$0xf]
        %v3259 = vld [vmem:[#allocation18 + $0x14] sm:$0xf]
        %v3260 = vld [vmem:[#allocation18 + $0x18] sm:$0xf]
        %v3261 = vld [vmem:[#allocation18 + $0x1c] sm:$0xf]
        %v3262 = vld [vmem:[#allocation18 + $0x20] sm:$0xf]
        %v3263 = vld [vmem:[#allocation18 + $0x24] sm:$0xf]
        %v3264 = vld [vmem:[#allocation18 + $0x28] sm:$0xf]
        %v3265 = vld [vmem:[#allocation18 + $0x2c] sm:$0xf]
        %v3266 = vld [vmem:[#allocation18 + $0x30] sm:$0xf]
        %v3267 = vld [vmem:[#allocation18 + $0x34] sm:$0xf]
        %v3268 = vld [vmem:[#allocation18 + $0x38] sm:$0xf]
        %v3269 = vld [vmem:[#allocation18 + $0x3c] sm:$0xf]
        %v3270 = vld [vmem:[#allocation18 + $0x40] sm:$0xf]
        %v3271 = vld [vmem:[#allocation18 + $0x44] sm:$0xf]
        %v3272 = vld [vmem:[#allocation18 + $0x48] sm:$0xf]
        %v3273 = vld [vmem:[#allocation18 + $0x4c] sm:$0xf]
        %v3274 = vld [vmem:[#allocation18 + $0x50] sm:$0xf]
        %v3275 = vld [vmem:[#allocation18 + $0x54] sm:$0xf]
        %v3276 = vld [vmem:[#allocation18 + $0x58] sm:$0xf]
        %v3277 = vld [vmem:[#allocation18 + $0x5c] sm:$0xf]
        %v3278 = vld [vmem:[#allocation18 + $0x60] sm:$0xf]
        %v3279 = vld [vmem:[#allocation18 + $0x64] sm:$0xf]
        %v3280 = vld [vmem:[#allocation18 + $0x68] sm:$0xf]
        %v3281 = vld [vmem:[#allocation18 + $0x6c] sm:$0xf]
        %v3282 = vld [vmem:[#allocation18 + $0x70] sm:$0xf]
        %v3283 = vld [vmem:[#allocation18 + $0x74] sm:$0xf]
        %v3284 = vld [vmem:[#allocation18 + $0x78] sm:$0xf]
        %v3285 = vld [vmem:[#allocation18 + $0x7c] sm:$0xf]
        %v3286 = vpack.c.bf16 %v3224, %v3222
        %v3287 = vpack.c.bf16 %v3225, %v3223
        %v3288 = vpack.c.bf16 %v3228, %v3226
        %v3289 = vpack.c.bf16 %v3229, %v3227
        %v3290 = vpack.c.bf16 %v3232, %v3230
        %v3291 = vpack.c.bf16 %v3233, %v3231
        %v3292 = vpack.c.bf16 %v3236, %v3234
        %v3293 = vpack.c.bf16 %v3237, %v3235
        %v3294 = vpack.c.bf16 %v3240, %v3238
        %v3295 = vpack.c.bf16 %v3241, %v3239
        %v3296 = vpack.c.bf16 %v3244, %v3242
        %v3297 = vpack.c.bf16 %v3245, %v3243
        %v3298 = vpack.c.bf16 %v3248, %v3246
        %v3299 = vpack.c.bf16 %v3249, %v3247
        %v3300 = vpack.c.bf16 %v3252, %v3250
        %v3301 = vpack.c.bf16 %v3253, %v3251
        %v3302 = vld [vmem:[#allocation20] sm:$0x1]
        %v3304 = vlaneseq
        %v3305 = vshrl.u32 %v3304, 7
        %v3306 = vsub.s32 0, %v3305
        %v3307 = vrot.slane %v3302, %v3306
        %v3341 = vunpack.c.l.b16 %v3254
        %v3342 = vunpack.c.l.b16 %v3255
        %v3343 = vunpack.c.l.b16 %v3256
        %v3344 = vunpack.c.l.b16 %v3257
        %v3345 = vunpack.c.l.b16 %v3258
        %v3346 = vunpack.c.l.b16 %v3259
        %v3347 = vunpack.c.l.b16 %v3260
        %v3348 = vunpack.c.l.b16 %v3261
        %v3349 = vunpack.c.l.b16 %v3262
        %v3350 = vunpack.c.l.b16 %v3263
        %v3351 = vunpack.c.l.b16 %v3264
        %v3352 = vunpack.c.l.b16 %v3265
        %v3353 = vunpack.c.l.b16 %v3266
        %v3354 = vunpack.c.l.b16 %v3267
        %v3355 = vunpack.c.l.b16 %v3268
        %v3356 = vunpack.c.l.b16 %v3269
        %v3357 = vunpack.c.l.b16 %v3270
        %v3358 = vunpack.c.l.b16 %v3271
        %v3359 = vunpack.c.l.b16 %v3272
        %v3360 = vunpack.c.l.b16 %v3273
        %v3361 = vunpack.c.l.b16 %v3274
        %v3362 = vunpack.c.l.b16 %v3275
        %v3363 = vunpack.c.l.b16 %v3276
        %v3364 = vunpack.c.l.b16 %v3277
        %v3365 = vunpack.c.l.b16 %v3278
        %v3366 = vunpack.c.l.b16 %v3279
        %v3367 = vunpack.c.l.b16 %v3280
        %v3368 = vunpack.c.l.b16 %v3281
        %v3369 = vunpack.c.l.b16 %v3282
        %v3370 = vunpack.c.l.b16 %v3283
        %v3371 = vunpack.c.l.b16 %v3284
        %v3372 = vunpack.c.l.b16 %v3285
        %v3373 = vpack.c.b16 %v3342, %v3341
        %v3374 = vpack.c.b16 %v3344, %v3343
        %v3375 = vpack.c.b16 %v3346, %v3345
        %v3376 = vpack.c.b16 %v3348, %v3347
        %v3377 = vpack.c.b16 %v3350, %v3349
        %v3378 = vpack.c.b16 %v3352, %v3351
        %v3379 = vpack.c.b16 %v3354, %v3353
        %v3380 = vpack.c.b16 %v3356, %v3355
        %v3381 = vpack.c.b16 %v3358, %v3357
        %v3382 = vpack.c.b16 %v3360, %v3359
        %v3383 = vpack.c.b16 %v3362, %v3361
        %v3384 = vpack.c.b16 %v3364, %v3363
        %v3385 = vpack.c.b16 %v3366, %v3365
        %v3386 = vpack.c.b16 %v3368, %v3367
        %v3387 = vpack.c.b16 %v3370, %v3369
        %v3388 = vpack.c.b16 %v3372, %v3371
        %3405 = vmatprep.subr.bf16.mxu0 0
        %3406 = vmatpush1.bf16.msra.mxu0 %v3380
        %3407 = vmatprep.subr.bf16.mxu0 0
        %3408 = vmatpush1.bf16.msra.mxu0 %v3379
        %3409 = vmatprep.subr.bf16.mxu0 0
        %3410 = vmatpush1.bf16.msra.mxu0 %v3378
        %3411 = vmatprep.subr.bf16.mxu0 0
        %3412 = vmatpush1.bf16.msra.mxu0 %v3377
        %3413 = vmatprep.subr.bf16.mxu0 0
        %3414 = vmatpush1.bf16.msra.mxu0 %v3376
        %3415 = vmatprep.subr.bf16.mxu0 0
        %3416 = vmatpush1.bf16.msra.mxu0 %v3375
        %3417 = vmatprep.subr.bf16.mxu0 0
        %3418 = vmatpush1.bf16.msra.mxu0 %v3374
        %3419 = vmatprep.subr.bf16.mxu0 0
        %3420 = vmatpush1.bf16.msra.mxu0 %v3373
        %3421 = vmatprep.subr.bf16.mxu0 0
        %3422 = vmatpush2.bf16.msra.mxu0 %v3388
        %3423 = vmatprep.subr.bf16.mxu0 0
        %3424 = vmatpush2.bf16.msra.mxu0 %v3387
        %3425 = vmatprep.subr.bf16.mxu0 0
        %3426 = vmatpush2.bf16.msra.mxu0 %v3386
        %3427 = vmatprep.subr.bf16.mxu0 0
        %3428 = vmatpush2.bf16.msra.mxu0 %v3385
        %3429 = vmatprep.subr.bf16.mxu0 0
        %3430 = vmatpush2.bf16.msra.mxu0 %v3384
        %3431 = vmatprep.subr.bf16.mxu0 0
        %3432 = vmatpush2.bf16.msra.mxu0 %v3383
        %3433 = vmatprep.subr.bf16.mxu0 0
        %3434 = vmatpush2.bf16.msra.mxu0 %v3382
        %3435 = vmatprep.subr.bf16.mxu0 0
        %3436 = vmatpush2.bf16.msra.mxu0 %v3381
        %3437 = vmatprep.mubr.bf16.mxu0 %v3287
        %3438 = vmatmul.mubr.bf16.gmra.mxu0 %v3286
        %v3439 = vpop.f32.mrf.mxu0
        %v3440 = vadd.f32 %v3307, %v3439
        %v3441 = vpop.f32.mrf.mxu0
        %v3442 = vpop.f32.mrf.mxu0
        %v3443 = vadd.f32 %v3307, %v3442
        %v3444 = vpop.f32.mrf.mxu0
        %3445 = vmatprep.mubr.bf16.mxu0 %v3289
        %3446 = vmatmul.mubr.bf16.gmra.mxu0 %v3288
        %v3447 = vpop.f32.mrf.mxu0
        %v3448 = vadd.f32 %v3307, %v3447
        %v3449 = vpop.f32.mrf.mxu0
        %v3450 = vpop.f32.mrf.mxu0
        %v3451 = vadd.f32 %v3307, %v3450
        %v3452 = vpop.f32.mrf.mxu0
        %3453 = vmatprep.mubr.bf16.mxu0 %v3291
        %3454 = vmatmul.mubr.bf16.gmra.mxu0 %v3290
        %v3455 = vpop.f32.mrf.mxu0
        %v3456 = vadd.f32 %v3307, %v3455
        %v3457 = vpop.f32.mrf.mxu0
        %v3458 = vpop.f32.mrf.mxu0
        %v3459 = vadd.f32 %v3307, %v3458
        %v3460 = vpop.f32.mrf.mxu0
        %3461 = vmatprep.mubr.bf16.mxu0 %v3293
        %3462 = vmatmul.mubr.bf16.gmra.mxu0 %v3292
        %v3463 = vpop.f32.mrf.mxu0
        %v3464 = vadd.f32 %v3307, %v3463
        %v3465 = vpop.f32.mrf.mxu0
        %v3466 = vpop.f32.mrf.mxu0
        %v3467 = vadd.f32 %v3307, %v3466
        %v3468 = vpop.f32.mrf.mxu0
        %3469 = vmatprep.mubr.bf16.mxu0 %v3295
        %3470 = vmatmul.mubr.bf16.gmra.mxu0 %v3294
        %v3471 = vpop.f32.mrf.mxu0
        %v3472 = vadd.f32 %v3307, %v3471
        %v3473 = vpop.f32.mrf.mxu0
        %v3474 = vpop.f32.mrf.mxu0
        %v3475 = vadd.f32 %v3307, %v3474
        %v3476 = vpop.f32.mrf.mxu0
        %3477 = vmatprep.mubr.bf16.mxu0 %v3297
        %3478 = vmatmul.mubr.bf16.gmra.mxu0 %v3296
        %v3479 = vpop.f32.mrf.mxu0
        %v3480 = vadd.f32 %v3307, %v3479
        %v3481 = vpop.f32.mrf.mxu0
        %v3482 = vpop.f32.mrf.mxu0
        %v3483 = vadd.f32 %v3307, %v3482
        %v3484 = vpop.f32.mrf.mxu0
        %3485 = vmatprep.mubr.bf16.mxu0 %v3299
        %3486 = vmatmul.mubr.bf16.gmra.mxu0 %v3298
        %v3487 = vpop.f32.mrf.mxu0
        %v3488 = vadd.f32 %v3307, %v3487
        %v3489 = vpop.f32.mrf.mxu0
        %v3490 = vpop.f32.mrf.mxu0
        %v3491 = vadd.f32 %v3307, %v3490
        %v3492 = vpop.f32.mrf.mxu0
        %3493 = vmatprep.mubr.bf16.mxu0 %v3301
        %3494 = vmatmul.mubr.bf16.gmra.mxu0 %v3300
        %v3495 = vpop.f32.mrf.mxu0
        %v3496 = vadd.f32 %v3307, %v3495
        %v3497 = vpop.f32.mrf.mxu0
        %v3498 = vpop.f32.mrf.mxu0
        %v3499 = vadd.f32 %v3307, %v3498
        %v3500 = vpop.f32.mrf.mxu0
        %3501 = vdwg.mxu0
        %v3502 = vadd.f32 %v2977, %v3440
        %v3503 = vadd.f32 %v2978, %v3443
        %v3504 = vadd.f32 %v2979, %v3448
        %v3505 = vadd.f32 %v2980, %v3451
        %v3506 = vadd.f32 %v2981, %v3456
        %v3507 = vadd.f32 %v2982, %v3459
        %v3508 = vadd.f32 %v2983, %v3464
        %v3509 = vadd.f32 %v2984, %v3467
        %v3510 = vadd.f32 %v2985, %v3472
        %v3511 = vadd.f32 %v2986, %v3475
        %v3512 = vadd.f32 %v2987, %v3480
        %v3513 = vadd.f32 %v2988, %v3483
        %v3514 = vadd.f32 %v2989, %v3488
        %v3515 = vadd.f32 %v2990, %v3491
        %v3516 = vadd.f32 %v2991, %v3496
        %v3517 = vadd.f32 %v2992, %v3499
        %3518 = vadd.xlane.f32.xlu0 %v3502
        %v3519 = vpop.xlane.xlu0 %3518
        %3520 = vadd.xlane.f32.xlu0 %v3503
        %v3521 = vpop.xlane.xlu0 %3520
        %3522 = vadd.xlane.f32.xlu0 %v3504
        %v3523 = vpop.xlane.xlu0 %3522
        %3524 = vadd.xlane.f32.xlu0 %v3505
        %v3525 = vpop.xlane.xlu0 %3524
        %3526 = vadd.xlane.f32.xlu0 %v3506
        %v3527 = vpop.xlane.xlu0 %3526
        %3528 = vadd.xlane.f32.xlu0 %v3507
        %v3529 = vpop.xlane.xlu0 %3528
        %3530 = vadd.xlane.f32.xlu0 %v3508
        %v3531 = vpop.xlane.xlu0 %3530
        %3532 = vadd.xlane.f32.xlu0 %v3509
        %v3533 = vpop.xlane.xlu0 %3532
        %3534 = vadd.xlane.f32.xlu0 %v3510
        %v3535 = vpop.xlane.xlu0 %3534
        %3536 = vadd.xlane.f32.xlu0 %v3511
        %v3537 = vpop.xlane.xlu0 %3536
        %3538 = vadd.xlane.f32.xlu0 %v3512
        %v3539 = vpop.xlane.xlu0 %3538
        %3540 = vadd.xlane.f32.xlu0 %v3513
        %v3541 = vpop.xlane.xlu0 %3540
        %3542 = vadd.xlane.f32.xlu0 %v3514
        %v3543 = vpop.xlane.xlu0 %3542
        %3544 = vadd.xlane.f32.xlu0 %v3515
        %v3545 = vpop.xlane.xlu0 %3544
        %3546 = vadd.xlane.f32.xlu0 %v3516
        %v3547 = vpop.xlane.xlu0 %3546
        %3548 = vadd.xlane.f32.xlu0 %v3517
        %v3549 = vpop.xlane.xlu0 %3548
        %v3550 = vmul.f32 %v3519, %v2808
        %v3551 = vmul.f32 %v3521, %v2808
        %v3552 = vmul.f32 %v3523, %v2808
        %v3553 = vmul.f32 %v3525, %v2808
        %v3554 = vmul.f32 %v3527, %v2808
        %v3555 = vmul.f32 %v3529, %v2808
        %v3556 = vmul.f32 %v3531, %v2808
        %v3557 = vmul.f32 %v3533, %v2808
        %v3558 = vmul.f32 %v3535, %v2808
        %v3559 = vmul.f32 %v3537, %v2808
        %v3560 = vmul.f32 %v3539, %v2808
        %v3561 = vmul.f32 %v3541, %v2808
        %v3562 = vmul.f32 %v3543, %v2808
        %v3563 = vmul.f32 %v3545, %v2808
        %v3564 = vmul.f32 %v3547, %v2808
        %v3565 = vmul.f32 %v3549, %v2808
        %v3566 = vsub.f32 %v3502, %v3550
        %v3567 = vsub.f32 %v3503, %v3551
        %v3568 = vsub.f32 %v3504, %v3552
        %v3569 = vsub.f32 %v3505, %v3553
        %v3570 = vsub.f32 %v3506, %v3554
        %v3571 = vsub.f32 %v3507, %v3555
        %v3572 = vsub.f32 %v3508, %v3556
        %v3573 = vsub.f32 %v3509, %v3557
        %v3574 = vsub.f32 %v3510, %v3558
        %v3575 = vsub.f32 %v3511, %v3559
        %v3576 = vsub.f32 %v3512, %v3560
        %v3577 = vsub.f32 %v3513, %v3561
        %v3578 = vsub.f32 %v3514, %v3562
        %v3579 = vsub.f32 %v3515, %v3563
        %v3580 = vsub.f32 %v3516, %v3564
        %v3581 = vsub.f32 %v3517, %v3565
        %v3582 = vmul.f32 %v3566, %v3566
        %v3583 = vmul.f32 %v3567, %v3567
        %v3584 = vmul.f32 %v3568, %v3568
        %v3585 = vmul.f32 %v3569, %v3569
        %v3586 = vmul.f32 %v3570, %v3570
        %v3587 = vmul.f32 %v3571, %v3571
        %v3588 = vmul.f32 %v3572, %v3572
        %v3589 = vmul.f32 %v3573, %v3573
        %v3590 = vmul.f32 %v3574, %v3574
        %v3591 = vmul.f32 %v3575, %v3575
        %v3592 = vmul.f32 %v3576, %v3576
        %v3593 = vmul.f32 %v3577, %v3577
        %v3594 = vmul.f32 %v3578, %v3578
        %v3595 = vmul.f32 %v3579, %v3579
        %v3596 = vmul.f32 %v3580, %v3580
        %v3597 = vmul.f32 %v3581, %v3581
        %3598 = vadd.xlane.f32.xlu0 %v3582
        %v3599 = vpop.xlane.xlu0 %3598
        %3600 = vadd.xlane.f32.xlu0 %v3583
        %v3601 = vpop.xlane.xlu0 %3600
        %3602 = vadd.xlane.f32.xlu0 %v3584
        %v3603 = vpop.xlane.xlu0 %3602
        %3604 = vadd.xlane.f32.xlu0 %v3585
        %v3605 = vpop.xlane.xlu0 %3604
        %3606 = vadd.xlane.f32.xlu0 %v3586
        %v3607 = vpop.xlane.xlu0 %3606
        %3608 = vadd.xlane.f32.xlu0 %v3587
        %v3609 = vpop.xlane.xlu0 %3608
        %3610 = vadd.xlane.f32.xlu0 %v3588
        %v3611 = vpop.xlane.xlu0 %3610
        %3612 = vadd.xlane.f32.xlu0 %v3589
        %v3613 = vpop.xlane.xlu0 %3612
        %3614 = vadd.xlane.f32.xlu0 %v3590
        %v3615 = vpop.xlane.xlu0 %3614
        %3616 = vadd.xlane.f32.xlu0 %v3591
        %v3617 = vpop.xlane.xlu0 %3616
        %3618 = vadd.xlane.f32.xlu0 %v3592
        %v3619 = vpop.xlane.xlu0 %3618
        %3620 = vadd.xlane.f32.xlu0 %v3593
        %v3621 = vpop.xlane.xlu0 %3620
        %3622 = vadd.xlane.f32.xlu0 %v3594
        %v3623 = vpop.xlane.xlu0 %3622
        %3624 = vadd.xlane.f32.xlu0 %v3595
        %v3625 = vpop.xlane.xlu0 %3624
        %3626 = vadd.xlane.f32.xlu0 %v3596
        %v3627 = vpop.xlane.xlu0 %3626
        %3628 = vadd.xlane.f32.xlu0 %v3597
        %v3629 = vpop.xlane.xlu0 %3628
        %v3630 = vmul.f32 %v3599, %v2808
        %v3631 = vmul.f32 %v3601, %v2808
        %v3632 = vmul.f32 %v3603, %v2808
        %v3633 = vmul.f32 %v3605, %v2808
        %v3634 = vmul.f32 %v3607, %v2808
        %v3635 = vmul.f32 %v3609, %v2808
        %v3636 = vmul.f32 %v3611, %v2808
        %v3637 = vmul.f32 %v3613, %v2808
        %v3638 = vmul.f32 %v3615, %v2808
        %v3639 = vmul.f32 %v3617, %v2808
        %v3640 = vmul.f32 %v3619, %v2808
        %v3641 = vmul.f32 %v3621, %v2808
        %v3642 = vmul.f32 %v3623, %v2808
        %v3643 = vmul.f32 %v3625, %v2808
        %v3644 = vmul.f32 %v3627, %v2808
        %v3645 = vmul.f32 %v3629, %v2808
        %v3646 = vadd.f32 %v3630, 1e-05
        %v3647 = vadd.f32 %v3631, 1e-05
        %v3648 = vadd.f32 %v3632, 1e-05
        %v3649 = vadd.f32 %v3633, 1e-05
        %v3650 = vadd.f32 %v3634, 1e-05
        %v3651 = vadd.f32 %v3635, 1e-05
        %v3652 = vadd.f32 %v3636, 1e-05
        %v3653 = vadd.f32 %v3637, 1e-05
        %v3654 = vadd.f32 %v3638, 1e-05
        %v3655 = vadd.f32 %v3639, 1e-05
        %v3656 = vadd.f32 %v3640, 1e-05
        %v3657 = vadd.f32 %v3641, 1e-05
        %v3658 = vadd.f32 %v3642, 1e-05
        %v3659 = vadd.f32 %v3643, 1e-05
        %v3660 = vadd.f32 %v3644, 1e-05
        %v3661 = vadd.f32 %v3645, 1e-05
        %v3662 = vrsqrt.pop %v3646
        %v3663 = vrsqrt.pop %v3647
        %v3664 = vrsqrt.pop %v3648
        %v3665 = vrsqrt.pop %v3649
        %v3666 = vrsqrt.pop %v3650
        %v3667 = vrsqrt.pop %v3651
        %v3668 = vrsqrt.pop %v3652
        %v3669 = vrsqrt.pop %v3653
        %v3670 = vrsqrt.pop %v3654
        %v3671 = vrsqrt.pop %v3655
        %v3672 = vrsqrt.pop %v3656
        %v3673 = vrsqrt.pop %v3657
        %v3674 = vrsqrt.pop %v3658
        %v3675 = vrsqrt.pop %v3659
        %v3676 = vrsqrt.pop %v3660
        %v3677 = vrsqrt.pop %v3661
        %v3678 = vmul.f32 %v3566, %v3662
        %v3679 = vmul.f32 %v3567, %v3663
        %v3680 = vmul.f32 %v3568, %v3664
        %v3681 = vmul.f32 %v3569, %v3665
        %v3682 = vmul.f32 %v3570, %v3666
        %v3683 = vmul.f32 %v3571, %v3667
        %v3684 = vmul.f32 %v3572, %v3668
        %v3685 = vmul.f32 %v3573, %v3669
        %v3686 = vmul.f32 %v3574, %v3670
        %v3687 = vmul.f32 %v3575, %v3671
        %v3688 = vmul.f32 %v3576, %v3672
        %v3689 = vmul.f32 %v3577, %v3673
        %v3690 = vmul.f32 %v3578, %v3674
        %v3691 = vmul.f32 %v3579, %v3675
        %v3692 = vmul.f32 %v3580, %v3676
        %v3693 = vmul.f32 %v3581, %v3677
        %v3694 = vlaneseq
        %v3695 = vshrl.u32 %v3694, 7
        %v3696 = vsub.s32 2, %v3695
        %v3697 = vrot.slane %v2759, %v3696
        %v3698 = vmul.f32 %v3678, %v3697
        %v3699 = vmul.f32 %v3679, %v3697
        %v3700 = vmul.f32 %v3680, %v3697
        %v3701 = vmul.f32 %v3681, %v3697
        %v3702 = vmul.f32 %v3682, %v3697
        %v3703 = vmul.f32 %v3683, %v3697
        %v3704 = vmul.f32 %v3684, %v3697
        %v3705 = vmul.f32 %v3685, %v3697
        %v3706 = vmul.f32 %v3686, %v3697
        %v3707 = vmul.f32 %v3687, %v3697
        %v3708 = vmul.f32 %v3688, %v3697
        %v3709 = vmul.f32 %v3689, %v3697
        %v3710 = vmul.f32 %v3690, %v3697
        %v3711 = vmul.f32 %v3691, %v3697
        %v3712 = vmul.f32 %v3692, %v3697
        %v3713 = vmul.f32 %v3693, %v3697
        %v3714 = vlaneseq
        %v3715 = vshrl.u32 %v3714, 7
        %v3716 = vsub.s32 3, %v3715
        %v3717 = vrot.slane %v2759, %v3716
        %v3718 = vadd.f32 %v3698, %v3717
        %v3719 = vadd.f32 %v3699, %v3717
        %v3720 = vadd.f32 %v3700, %v3717
        %v3721 = vadd.f32 %v3701, %v3717
        %v3722 = vadd.f32 %v3702, %v3717
        %v3723 = vadd.f32 %v3703, %v3717
        %v3724 = vadd.f32 %v3704, %v3717
        %v3725 = vadd.f32 %v3705, %v3717
        %v3726 = vadd.f32 %v3706, %v3717
        %v3727 = vadd.f32 %v3707, %v3717
        %v3728 = vadd.f32 %v3708, %v3717
        %v3729 = vadd.f32 %v3709, %v3717
        %v3730 = vadd.f32 %v3710, %v3717
        %v3731 = vadd.f32 %v3711, %v3717
        %v3732 = vadd.f32 %v3712, %v3717
        %v3733 = vadd.f32 %v3713, %v3717
        %s3734 = scalar_lea.vmem %s7, 192
        %v3735 = vld [vmem:[%s3734] sm:$0xff]
        %v3736 = vld [vmem:[%s3734 + $0x8] sm:$0xf]
        %v3737 = vld [vmem:[%s3734 + $0xc] sm:$0xff]
        %v3738 = vld [vmem:[%s3734 + $0x14] sm:$0xf]
        %v3739 = vld [vmem:[%s3734 + $0x18] sm:$0xff]
        %v3740 = vld [vmem:[%s3734 + $0x20] sm:$0xf]
        %v3741 = vld [vmem:[%s3734 + $0x24] sm:$0xff]
        %v3742 = vld [vmem:[%s3734 + $0x2c] sm:$0xf]
        %v3743 = vld [vmem:[%s3734 + $0x30] sm:$0xff]
        %v3744 = vld [vmem:[%s3734 + $0x38] sm:$0xf]
        %v3745 = vld [vmem:[%s3734 + $0x3c] sm:$0xff]
        %v3746 = vld [vmem:[%s3734 + $0x44] sm:$0xf]
        %v3747 = vld [vmem:[%s3734 + $0x48] sm:$0xff]
        %v3748 = vld [vmem:[%s3734 + $0x50] sm:$0xf]
        %v3749 = vld [vmem:[%s3734 + $0x54] sm:$0xff]
        %v3750 = vld [vmem:[%s3734 + $0x5c] sm:$0xf]
        %v3751 = vld [vmem:[%s3734 + $0x60] sm:$0xff]
        %v3752 = vld [vmem:[%s3734 + $0x68] sm:$0xf]
        %v3753 = vld [vmem:[%s3734 + $0x6c] sm:$0xff]
        %v3754 = vld [vmem:[%s3734 + $0x74] sm:$0xf]
        %v3755 = vld [vmem:[%s3734 + $0x78] sm:$0xff]
        %v3756 = vld [vmem:[%s3734 + $0x80] sm:$0xf]
        %v3757 = vld [vmem:[%s3734 + $0x84] sm:$0xff]
        %v3758 = vld [vmem:[%s3734 + $0x8c] sm:$0xf]
        %v3759 = vld [vmem:[%s3734 + $0x90] sm:$0xff]
        %v3760 = vld [vmem:[%s3734 + $0x98] sm:$0xf]
        %v3761 = vld [vmem:[%s3734 + $0x9c] sm:$0xff]
        %v3762 = vld [vmem:[%s3734 + $0xa4] sm:$0xf]
        %v3763 = vld [vmem:[%s3734 + $0xa8] sm:$0xff]
        %v3764 = vld [vmem:[%s3734 + $0xb0] sm:$0xf]
        %v3765 = vld [vmem:[%s3734 + $0xb4] sm:$0xff]
        %v3766 = vld [vmem:[%s3734 + $0xbc] sm:$0xf]
        %v3767 = vpack.c.bf16 %v3719, %v3718
        %v3768 = vpack.c.bf16 %v3721, %v3720
        %v3769 = vpack.c.bf16 %v3723, %v3722
        %v3770 = vpack.c.bf16 %v3725, %v3724
        %v3771 = vpack.c.bf16 %v3727, %v3726
        %v3772 = vpack.c.bf16 %v3729, %v3728
        %v3773 = vpack.c.bf16 %v3731, %v3730
        %v3774 = vpack.c.bf16 %v3733, %v3732
        %s3775 = scalar_lea.vmem [#allocation11], 3
        %v3776 = vld [vmem:[%s3775] sm:$0x7]
        %v3778 = vlaneseq
        %v3779 = vshrl.u32 %v3778, 7
        %v3780 = vsub.s32 0, %v3779
        %v3781 = vrot.slane %v3776, %v3780
        %v3782 = vlaneseq
        %v3783 = vshrl.u32 %v3782, 7
        %v3784 = vsub.s32 1, %v3783
        %v3785 = vrot.slane %v3776, %v3784
        %v3786 = vlaneseq
        %v3787 = vshrl.u32 %v3786, 7
        %v3788 = vsub.s32 2, %v3787
        %v3789 = vrot.slane %v3776, %v3788
        %v3825 = vunpack.c.l.b16 %v3735
        %v3826 = vunpack.c.h.b16 %v3735
        %v3827 = vunpack.c.l.b16 %v3736
        %v3828 = vunpack.c.l.b16 %v3737
        %v3829 = vunpack.c.h.b16 %v3737
        %v3830 = vunpack.c.l.b16 %v3738
        %v3831 = vunpack.c.l.b16 %v3739
        %v3832 = vunpack.c.h.b16 %v3739
        %v3833 = vunpack.c.l.b16 %v3740
        %v3834 = vunpack.c.l.b16 %v3741
        %v3835 = vunpack.c.h.b16 %v3741
        %v3836 = vunpack.c.l.b16 %v3742
        %v3837 = vunpack.c.l.b16 %v3743
        %v3838 = vunpack.c.h.b16 %v3743
        %v3839 = vunpack.c.l.b16 %v3744
        %v3840 = vunpack.c.l.b16 %v3745
        %v3841 = vunpack.c.h.b16 %v3745
        %v3842 = vunpack.c.l.b16 %v3746
        %v3843 = vunpack.c.l.b16 %v3747
        %v3844 = vunpack.c.h.b16 %v3747
        %v3845 = vunpack.c.l.b16 %v3748
        %v3846 = vunpack.c.l.b16 %v3749
        %v3847 = vunpack.c.h.b16 %v3749
        %v3848 = vunpack.c.l.b16 %v3750
        %v3849 = vunpack.c.l.b16 %v3751
        %v3850 = vunpack.c.h.b16 %v3751
        %v3851 = vunpack.c.l.b16 %v3752
        %v3852 = vunpack.c.l.b16 %v3753
        %v3853 = vunpack.c.h.b16 %v3753
        %v3854 = vunpack.c.l.b16 %v3754
        %v3855 = vunpack.c.l.b16 %v3755
        %v3856 = vunpack.c.h.b16 %v3755
        %v3857 = vunpack.c.l.b16 %v3756
        %v3858 = vunpack.c.l.b16 %v3757
        %v3859 = vunpack.c.h.b16 %v3757
        %v3860 = vunpack.c.l.b16 %v3758
        %v3861 = vunpack.c.l.b16 %v3759
        %v3862 = vunpack.c.h.b16 %v3759
        %v3863 = vunpack.c.l.b16 %v3760
        %v3864 = vunpack.c.l.b16 %v3761
        %v3865 = vunpack.c.h.b16 %v3761
        %v3866 = vunpack.c.l.b16 %v3762
        %v3867 = vunpack.c.l.b16 %v3763
        %v3868 = vunpack.c.h.b16 %v3763
        %v3869 = vunpack.c.l.b16 %v3764
        %v3870 = vunpack.c.l.b16 %v3765
        %v3871 = vunpack.c.h.b16 %v3765
        %v3872 = vunpack.c.l.b16 %v3766
        %v3873 = vpack.c.b16 %v3828, %v3825
        %v3874 = vpack.c.b16 %v3829, %v3826
        %v3875 = vpack.c.b16 %v3830, %v3827
        %v3876 = vpack.c.b16 %v3834, %v3831
        %v3877 = vpack.c.b16 %v3835, %v3832
        %v3878 = vpack.c.b16 %v3836, %v3833
        %v3879 = vpack.c.b16 %v3840, %v3837
        %v3880 = vpack.c.b16 %v3841, %v3838
        %v3881 = vpack.c.b16 %v3842, %v3839
        %v3882 = vpack.c.b16 %v3846, %v3843
        %v3883 = vpack.c.b16 %v3847, %v3844
        %v3884 = vpack.c.b16 %v3848, %v3845
        %v3885 = vpack.c.b16 %v3852, %v3849
        %v3886 = vpack.c.b16 %v3853, %v3850
        %v3887 = vpack.c.b16 %v3854, %v3851
        %v3888 = vpack.c.b16 %v3858, %v3855
        %v3889 = vpack.c.b16 %v3859, %v3856
        %v3890 = vpack.c.b16 %v3860, %v3857
        %v3891 = vpack.c.b16 %v3864, %v3861
        %v3892 = vpack.c.b16 %v3865, %v3862
        %v3893 = vpack.c.b16 %v3866, %v3863
        %v3894 = vpack.c.b16 %v3870, %v3867
        %v3895 = vpack.c.b16 %v3871, %v3868
        %v3896 = vpack.c.b16 %v3872, %v3869
        %3921 = vmatprep.subr.bf16.mxu0 %v3895
        %3922 = vmatpush1.bf16.msra.mxu0 %v3894
        %3923 = vmatprep.subr.bf16.mxu0 %v3892
        %3924 = vmatpush1.bf16.msra.mxu0 %v3891
        %3925 = vmatprep.subr.bf16.mxu0 %v3889
        %3926 = vmatpush1.bf16.msra.mxu0 %v3888
        %3927 = vmatprep.subr.bf16.mxu0 %v3886
        %3928 = vmatpush1.bf16.msra.mxu0 %v3885
        %3929 = vmatprep.subr.bf16.mxu0 %v3883
        %3930 = vmatpush1.bf16.msra.mxu0 %v3882
        %3931 = vmatprep.subr.bf16.mxu0 %v3880
        %3932 = vmatpush1.bf16.msra.mxu0 %v3879
        %3933 = vmatprep.subr.bf16.mxu0 %v3877
        %3934 = vmatpush1.bf16.msra.mxu0 %v3876
        %3935 = vmatprep.subr.bf16.mxu0 %v3874
        %3936 = vmatpush1.bf16.msra.mxu0 %v3873
        %3937 = vmatprep.subr.bf16.mxu0 0
        %3938 = vmatpush2.bf16.msra.mxu0 0
        %3939 = vmatprep.subr.bf16.mxu0 0
        %3940 = vmatpush2.bf16.msra.mxu0 0
        %3941 = vmatprep.subr.bf16.mxu0 0
        %3942 = vmatpush2.bf16.msra.mxu0 0
        %3943 = vmatprep.subr.bf16.mxu0 0
        %3944 = vmatpush2.bf16.msra.mxu0 0
        %3945 = vmatprep.subr.bf16.mxu0 0
        %3946 = vmatpush2.bf16.msra.mxu0 0
        %3947 = vmatprep.subr.bf16.mxu0 0
        %3948 = vmatpush2.bf16.msra.mxu0 0
        %3949 = vmatprep.subr.bf16.mxu0 0
        %3950 = vmatpush2.bf16.msra.mxu0 0
        %3951 = vmatprep.subr.bf16.mxu0 0
        %3952 = vmatpush2.bf16.msra.mxu0 0
        %3953 = vmatprep.mubr.bf16.mxu0 0
        %3954 = vmatmul.mubr.bf16.gmra.mxu0 %v3767
        %v3955 = vpop.f32.mrf.mxu0
        %v3956 = vadd.f32 %v3781, %v3955
        %v3957 = vpop.f32.mrf.mxu0
        %v3958 = vadd.f32 %v3785, %v3957
        %v3959 = vpop.f32.mrf.mxu0
        %v3960 = vadd.f32 %v3781, %v3959
        %v3961 = vpop.f32.mrf.mxu0
        %v3962 = vadd.f32 %v3785, %v3961
        %3963 = vmatprep.mubr.bf16.mxu0 0
        %3964 = vmatmul.mubr.bf16.gmra.mxu0 %v3768
        %v3965 = vpop.f32.mrf.mxu0
        %v3966 = vadd.f32 %v3781, %v3965
        %v3967 = vpop.f32.mrf.mxu0
        %v3968 = vadd.f32 %v3785, %v3967
        %v3969 = vpop.f32.mrf.mxu0
        %v3970 = vadd.f32 %v3781, %v3969
        %v3971 = vpop.f32.mrf.mxu0
        %v3972 = vadd.f32 %v3785, %v3971
        %3973 = vmatprep.mubr.bf16.mxu0 0
        %3974 = vmatmul.mubr.bf16.gmra.mxu0 %v3769
        %v3975 = vpop.f32.mrf.mxu0
        %v3976 = vadd.f32 %v3781, %v3975
        %v3977 = vpop.f32.mrf.mxu0
        %v3978 = vadd.f32 %v3785, %v3977
        %v3979 = vpop.f32.mrf.mxu0
        %v3980 = vadd.f32 %v3781, %v3979
        %v3981 = vpop.f32.mrf.mxu0
        %v3982 = vadd.f32 %v3785, %v3981
        %3983 = vmatprep.mubr.bf16.mxu0 0
        %3984 = vmatmul.mubr.bf16.gmra.mxu0 %v3770
        %v3985 = vpop.f32.mrf.mxu0
        %v3986 = vadd.f32 %v3781, %v3985
        %v3987 = vpop.f32.mrf.mxu0
        %v3988 = vadd.f32 %v3785, %v3987
        %v3989 = vpop.f32.mrf.mxu0
        %v3990 = vadd.f32 %v3781, %v3989
        %v3991 = vpop.f32.mrf.mxu0
        %v3992 = vadd.f32 %v3785, %v3991
        %3993 = vmatprep.mubr.bf16.mxu0 0
        %3994 = vmatmul.mubr.bf16.gmra.mxu0 %v3771
        %v3995 = vpop.f32.mrf.mxu0
        %v3996 = vadd.f32 %v3781, %v3995
        %v3997 = vpop.f32.mrf.mxu0
        %v3998 = vadd.f32 %v3785, %v3997
        %v3999 = vpop.f32.mrf.mxu0
        %v4000 = vadd.f32 %v3781, %v3999
        %v4001 = vpop.f32.mrf.mxu0
        %v4002 = vadd.f32 %v3785, %v4001
        %4003 = vmatprep.mubr.bf16.mxu0 0
        %4004 = vmatmul.mubr.bf16.gmra.mxu0 %v3772
        %v4005 = vpop.f32.mrf.mxu0
        %v4006 = vadd.f32 %v3781, %v4005
        %v4007 = vpop.f32.mrf.mxu0
        %v4008 = vadd.f32 %v3785, %v4007
        %v4009 = vpop.f32.mrf.mxu0
        %v4010 = vadd.f32 %v3781, %v4009
        %v4011 = vpop.f32.mrf.mxu0
        %v4012 = vadd.f32 %v3785, %v4011
        %4013 = vmatprep.mubr.bf16.mxu0 0
        %4014 = vmatmul.mubr.bf16.gmra.mxu0 %v3773
        %v4015 = vpop.f32.mrf.mxu0
        %v4016 = vadd.f32 %v3781, %v4015
        %v4017 = vpop.f32.mrf.mxu0
        %v4018 = vadd.f32 %v3785, %v4017
        %v4019 = vpop.f32.mrf.mxu0
        %v4020 = vadd.f32 %v3781, %v4019
        %v4021 = vpop.f32.mrf.mxu0
        %v4022 = vadd.f32 %v3785, %v4021
        %4023 = vmatprep.mubr.bf16.mxu0 0
        %4024 = vmatmul.mubr.bf16.gmra.mxu0 %v3774
        %v4025 = vpop.f32.mrf.mxu0
        %v4026 = vadd.f32 %v3781, %v4025
        %v4027 = vpop.f32.mrf.mxu0
        %v4028 = vadd.f32 %v3785, %v4027
        %v4029 = vpop.f32.mrf.mxu0
        %v4030 = vadd.f32 %v3781, %v4029
        %v4031 = vpop.f32.mrf.mxu0
        %v4032 = vadd.f32 %v3785, %v4031
        %4033 = vdwg.mxu0
        %4034 = vmatprep.subr.bf16.mxu0 0
        %4035 = vmatpush1.bf16.msra.mxu0 %v3896
        %4036 = vmatprep.subr.bf16.mxu0 0
        %4037 = vmatpush1.bf16.msra.mxu0 %v3893
        %4038 = vmatprep.subr.bf16.mxu0 0
        %4039 = vmatpush1.bf16.msra.mxu0 %v3890
        %4040 = vmatprep.subr.bf16.mxu0 0
        %4041 = vmatpush1.bf16.msra.mxu0 %v3887
        %4042 = vmatprep.subr.bf16.mxu0 0
        %4043 = vmatpush1.bf16.msra.mxu0 %v3884
        %4044 = vmatprep.subr.bf16.mxu0 0
        %4045 = vmatpush1.bf16.msra.mxu0 %v3881
        %4046 = vmatprep.subr.bf16.mxu0 0
        %4047 = vmatpush1.bf16.msra.mxu0 %v3878
        %4048 = vmatprep.subr.bf16.mxu0 0
        %4049 = vmatpush1.bf16.msra.mxu0 %v3875
        %4050 = vmatprep.subr.bf16.mxu0 0
        %4051 = vmatpush2.bf16.msra.mxu0 0
        %4052 = vmatprep.subr.bf16.mxu0 0
        %4053 = vmatpush2.bf16.msra.mxu0 0
        %4054 = vmatprep.subr.bf16.mxu0 0
        %4055 = vmatpush2.bf16.msra.mxu0 0
        %4056 = vmatprep.subr.bf16.mxu0 0
        %4057 = vmatpush2.bf16.msra.mxu0 0
        %4058 = vmatprep.subr.bf16.mxu0 0
        %4059 = vmatpush2.bf16.msra.mxu0 0
        %4060 = vmatprep.subr.bf16.mxu0 0
        %4061 = vmatpush2.bf16.msra.mxu0 0
        %4062 = vmatprep.subr.bf16.mxu0 0
        %4063 = vmatpush2.bf16.msra.mxu0 0
        %4064 = vmatprep.subr.bf16.mxu0 0
        %4065 = vmatpush2.bf16.msra.mxu0 0
        %4066 = vmatprep.mubr.bf16.mxu0 0
        %4067 = vmatmul.mubr.bf16.gmra.mxu0 %v3767
        %v4068 = vpop.f32.mrf.mxu0
        %v4069 = vadd.f32 %v3789, %v4068
        %v4070 = vpop.f32.mrf.mxu0
        %v4071 = vpop.f32.mrf.mxu0
        %v4072 = vadd.f32 %v3789, %v4071
        %v4073 = vpop.f32.mrf.mxu0
        %4074 = vmatprep.mubr.bf16.mxu0 0
        %4075 = vmatmul.mubr.bf16.gmra.mxu0 %v3768
        %v4076 = vpop.f32.mrf.mxu0
        %v4077 = vadd.f32 %v3789, %v4076
        %v4078 = vpop.f32.mrf.mxu0
        %v4079 = vpop.f32.mrf.mxu0
        %v4080 = vadd.f32 %v3789, %v4079
        %v4081 = vpop.f32.mrf.mxu0
        %4082 = vmatprep.mubr.bf16.mxu0 0
        %4083 = vmatmul.mubr.bf16.gmra.mxu0 %v3769
        %v4084 = vpop.f32.mrf.mxu0
        %v4085 = vadd.f32 %v3789, %v4084
        %v4086 = vpop.f32.mrf.mxu0
        %v4087 = vpop.f32.mrf.mxu0
        %v4088 = vadd.f32 %v3789, %v4087
        %v4089 = vpop.f32.mrf.mxu0
        %4090 = vmatprep.mubr.bf16.mxu0 0
        %4091 = vmatmul.mubr.bf16.gmra.mxu0 %v3770
        %v4092 = vpop.f32.mrf.mxu0
        %v4093 = vadd.f32 %v3789, %v4092
        %v4094 = vpop.f32.mrf.mxu0
        %v4095 = vpop.f32.mrf.mxu0
        %v4096 = vadd.f32 %v3789, %v4095
        %v4097 = vpop.f32.mrf.mxu0
        %4098 = vmatprep.mubr.bf16.mxu0 0
        %4099 = vmatmul.mubr.bf16.gmra.mxu0 %v3771
        %v4100 = vpop.f32.mrf.mxu0
        %v4101 = vadd.f32 %v3789, %v4100
        %v4102 = vpop.f32.mrf.mxu0
        %v4103 = vpop.f32.mrf.mxu0
        %v4104 = vadd.f32 %v3789, %v4103
        %v4105 = vpop.f32.mrf.mxu0
        %4106 = vmatprep.mubr.bf16.mxu0 0
        %4107 = vmatmul.mubr.bf16.gmra.mxu0 %v3772
        %v4108 = vpop.f32.mrf.mxu0
        %v4109 = vadd.f32 %v3789, %v4108
        %v4110 = vpop.f32.mrf.mxu0
        %v4111 = vpop.f32.mrf.mxu0
        %v4112 = vadd.f32 %v3789, %v4111
        %v4113 = vpop.f32.mrf.mxu0
        %4114 = vmatprep.mubr.bf16.mxu0 0
        %4115 = vmatmul.mubr.bf16.gmra.mxu0 %v3773
        %v4116 = vpop.f32.mrf.mxu0
        %v4117 = vadd.f32 %v3789, %v4116
        %v4118 = vpop.f32.mrf.mxu0
        %v4119 = vpop.f32.mrf.mxu0
        %v4120 = vadd.f32 %v3789, %v4119
        %v4121 = vpop.f32.mrf.mxu0
        %4122 = vmatprep.mubr.bf16.mxu0 0
        %4123 = vmatmul.mubr.bf16.gmra.mxu0 %v3774
        %v4124 = vpop.f32.mrf.mxu0
        %v4125 = vadd.f32 %v3789, %v4124
        %v4126 = vpop.f32.mrf.mxu0
        %v4127 = vpop.f32.mrf.mxu0
        %v4128 = vadd.f32 %v3789, %v4127
        %v4129 = vpop.f32.mrf.mxu0
        %4130 = vdwg.mxu0
        %v4131 = vsub.f32 %v3958, %v3998
        %v4132 = vsub.f32 %v3962, %v4002
        %v4133 = vsub.f32 %v3968, %v4008
        %v4134 = vsub.f32 %v3972, %v4012
        %v4135 = vsub.f32 %v3978, %v4018
        %v4136 = vsub.f32 %v3982, %v4022
        %v4137 = vsub.f32 %v3988, %v4028
        %v4138 = vsub.f32 %v3992, %v4032
        %v4139 = vsub.f32 %v3998, %v3958
        %v4140 = vsub.f32 %v4002, %v3962
        %v4141 = vsub.f32 %v4008, %v3968
        %v4142 = vsub.f32 %v4012, %v3972
        %v4143 = vsub.f32 %v4018, %v3978
        %v4144 = vsub.f32 %v4022, %v3982
        %v4145 = vsub.f32 %v4028, %v3988
        %v4146 = vsub.f32 %v4032, %v3992
        %v4147 = vmul.f32 %v3956, %v4131
        %v4148 = vmul.f32 %v3960, %v4132
        %v4149 = vmul.f32 %v3966, %v4133
        %v4150 = vmul.f32 %v3970, %v4134
        %v4151 = vmul.f32 %v3976, %v4135
        %v4152 = vmul.f32 %v3980, %v4136
        %v4153 = vmul.f32 %v3986, %v4137
        %v4154 = vmul.f32 %v3990, %v4138
        %v4155 = vmul.f32 %v3996, %v4139
        %v4156 = vmul.f32 %v4000, %v4140
        %v4157 = vmul.f32 %v4006, %v4141
        %v4158 = vmul.f32 %v4010, %v4142
        %v4159 = vmul.f32 %v4016, %v4143
        %v4160 = vmul.f32 %v4020, %v4144
        %v4161 = vmul.f32 %v4026, %v4145
        %v4162 = vmul.f32 %v4030, %v4146
        %v4163 = vpack.c.bf16 %v4148, %v4147
        %v4164 = vpack.c.bf16 %v4150, %v4149
        %v4165 = vpack.c.bf16 %v4152, %v4151
        %v4166 = vpack.c.bf16 %v4154, %v4153
        %v4167 = vpack.c.bf16 %v4156, %v4155
        %v4168 = vpack.c.bf16 %v4158, %v4157
        %v4169 = vpack.c.bf16 %v4160, %v4159
        %v4170 = vpack.c.bf16 %v4162, %v4161
        %4171 = vmatprep.subr.bf16.mxu0 0
        %4172 = vmatpush1.bf16.msra.mxu0 %v2215
        %4173 = vmatprep.subr.bf16.mxu0 0
        %4174 = vmatpush1.bf16.msra.mxu0 %v2214
        %4175 = vmatprep.subr.bf16.mxu0 0
        %4176 = vmatpush1.bf16.msra.mxu0 %v2213
        %4177 = vmatprep.subr.bf16.mxu0 0
        %4178 = vmatpush1.bf16.msra.mxu0 %v2212
        %4179 = vmatprep.subr.bf16.mxu0 0
        %4180 = vmatpush1.bf16.msra.mxu0 %v2211
        %4181 = vmatprep.subr.bf16.mxu0 0
        %4182 = vmatpush1.bf16.msra.mxu0 %v2210
        %4183 = vmatprep.subr.bf16.mxu0 0
        %4184 = vmatpush1.bf16.msra.mxu0 %v2209
        %4185 = vmatprep.subr.bf16.mxu0 0
        %4186 = vmatpush1.bf16.msra.mxu0 %v2208
        %4187 = vmatprep.subr.bf16.mxu0 0
        %4188 = vmatpush2.bf16.msra.mxu0 0
        %4189 = vmatprep.subr.bf16.mxu0 0
        %4190 = vmatpush2.bf16.msra.mxu0 0
        %4191 = vmatprep.subr.bf16.mxu0 0
        %4192 = vmatpush2.bf16.msra.mxu0 0
        %4193 = vmatprep.subr.bf16.mxu0 0
        %4194 = vmatpush2.bf16.msra.mxu0 0
        %4195 = vmatprep.subr.bf16.mxu0 0
        %4196 = vmatpush2.bf16.msra.mxu0 0
        %4197 = vmatprep.subr.bf16.mxu0 0
        %4198 = vmatpush2.bf16.msra.mxu0 0
        %4199 = vmatprep.subr.bf16.mxu0 0
        %4200 = vmatpush2.bf16.msra.mxu0 0
        %4201 = vmatprep.subr.bf16.mxu0 0
        %4202 = vmatpush2.bf16.msra.mxu0 0
        %4203 = vmatprep.mubr.bf16.mxu0 0
        %4204 = vmatmul.mubr.bf16.gmra.mxu0 %v4163
        %v4205 = vpop.f32.mrf.mxu0
        %v4206 = vadd.f32 0.0, %v4205
        %v4207 = vpop.f32.mrf.mxu0
        %v4208 = vpop.f32.mrf.mxu0
        %v4209 = vadd.f32 0.0, %v4208
        %v4210 = vpop.f32.mrf.mxu0
        %4211 = vmatprep.mubr.bf16.mxu0 0
        %4212 = vmatmul.mubr.bf16.gmra.mxu0 %v4164
        %v4213 = vpop.f32.mrf.mxu0
        %v4214 = vadd.f32 0.0, %v4213
        %v4215 = vpop.f32.mrf.mxu0
        %v4216 = vpop.f32.mrf.mxu0
        %v4217 = vadd.f32 0.0, %v4216
        %v4218 = vpop.f32.mrf.mxu0
        %4219 = vmatprep.mubr.bf16.mxu0 0
        %4220 = vmatmul.mubr.bf16.gmra.mxu0 %v4165
        %v4221 = vpop.f32.mrf.mxu0
        %v4222 = vadd.f32 0.0, %v4221
        %v4223 = vpop.f32.mrf.mxu0
        %v4224 = vpop.f32.mrf.mxu0
        %v4225 = vadd.f32 0.0, %v4224
        %v4226 = vpop.f32.mrf.mxu0
        %4227 = vmatprep.mubr.bf16.mxu0 0
        %4228 = vmatmul.mubr.bf16.gmra.mxu0 %v4166
        %v4229 = vpop.f32.mrf.mxu0
        %v4230 = vadd.f32 0.0, %v4229
        %v4231 = vpop.f32.mrf.mxu0
        %v4232 = vpop.f32.mrf.mxu0
        %v4233 = vadd.f32 0.0, %v4232
        %v4234 = vpop.f32.mrf.mxu0
        %4235 = vmatprep.mubr.bf16.mxu0 0
        %4236 = vmatmul.mubr.bf16.gmra.mxu0 %v4167
        %v4237 = vpop.f32.mrf.mxu0
        %v4238 = vadd.f32 0.0, %v4237
        %v4239 = vpop.f32.mrf.mxu0
        %v4240 = vpop.f32.mrf.mxu0
        %v4241 = vadd.f32 0.0, %v4240
        %v4242 = vpop.f32.mrf.mxu0
        %4243 = vmatprep.mubr.bf16.mxu0 0
        %4244 = vmatmul.mubr.bf16.gmra.mxu0 %v4168
        %v4245 = vpop.f32.mrf.mxu0
        %v4246 = vadd.f32 0.0, %v4245
        %v4247 = vpop.f32.mrf.mxu0
        %v4248 = vpop.f32.mrf.mxu0
        %v4249 = vadd.f32 0.0, %v4248
        %v4250 = vpop.f32.mrf.mxu0
        %4251 = vmatprep.mubr.bf16.mxu0 0
        %4252 = vmatmul.mubr.bf16.gmra.mxu0 %v4169
        %v4253 = vpop.f32.mrf.mxu0
        %v4254 = vadd.f32 0.0, %v4253
        %v4255 = vpop.f32.mrf.mxu0
        %v4256 = vpop.f32.mrf.mxu0
        %v4257 = vadd.f32 0.0, %v4256
        %v4258 = vpop.f32.mrf.mxu0
        %4259 = vmatprep.mubr.bf16.mxu0 0
        %4260 = vmatmul.mubr.bf16.gmra.mxu0 %v4170
        %v4261 = vpop.f32.mrf.mxu0
        %v4262 = vadd.f32 0.0, %v4261
        %v4263 = vpop.f32.mrf.mxu0
        %v4264 = vpop.f32.mrf.mxu0
        %v4265 = vadd.f32 0.0, %v4264
        %v4266 = vpop.f32.mrf.mxu0
        %4267 = vdwg.mxu0
        %v4268 = vsub.f32 0.0, %v4206
        %v4269 = vsub.f32 0.0, %v4209
        %v4270 = vsub.f32 0.0, %v4214
        %v4271 = vsub.f32 0.0, %v4217
        %v4272 = vsub.f32 0.0, %v4222
        %v4273 = vsub.f32 0.0, %v4225
        %v4274 = vsub.f32 0.0, %v4230
        %v4275 = vsub.f32 0.0, %v4233
        %v4276 = vsub.f32 0.0, %v4238
        %v4277 = vsub.f32 0.0, %v4241
        %v4278 = vsub.f32 0.0, %v4246
        %v4279 = vsub.f32 0.0, %v4249
        %v4280 = vsub.f32 0.0, %v4254
        %v4281 = vsub.f32 0.0, %v4257
        %v4282 = vsub.f32 0.0, %v4262
        %v4283 = vsub.f32 0.0, %v4265
        %v4284 = vmul.f32 %v4268, 1.442695
        %v4285 = vpow.pop %v4284
        %v4286 = vmul.f32 %v4269, 1.442695
        %v4287 = vpow.pop %v4286
        %v4288 = vmul.f32 %v4270, 1.442695
        %v4289 = vpow.pop %v4288
        %v4290 = vmul.f32 %v4271, 1.442695
        %v4291 = vpow.pop %v4290
        %v4292 = vmul.f32 %v4272, 1.442695
        %v4293 = vpow.pop %v4292
        %v4294 = vmul.f32 %v4273, 1.442695
        %v4295 = vpow.pop %v4294
        %v4296 = vmul.f32 %v4274, 1.442695
        %v4297 = vpow.pop %v4296
        %v4298 = vmul.f32 %v4275, 1.442695
        %v4299 = vpow.pop %v4298
        %v4300 = vmul.f32 %v4276, 1.442695
        %v4301 = vpow.pop %v4300
        %v4302 = vmul.f32 %v4277, 1.442695
        %v4303 = vpow.pop %v4302
        %v4304 = vmul.f32 %v4278, 1.442695
        %v4305 = vpow.pop %v4304
        %v4306 = vmul.f32 %v4279, 1.442695
        %v4307 = vpow.pop %v4306
        %v4308 = vmul.f32 %v4280, 1.442695
        %v4309 = vpow.pop %v4308
        %v4310 = vmul.f32 %v4281, 1.442695
        %v4311 = vpow.pop %v4310
        %v4312 = vmul.f32 %v4282, 1.442695
        %v4313 = vpow.pop %v4312
        %v4314 = vmul.f32 %v4283, 1.442695
        %v4315 = vpow.pop %v4314
        %v4316 = vadd.f32 %v4285, 1.0
        %v4317 = vadd.f32 %v4287, 1.0
        %v4318 = vadd.f32 %v4289, 1.0
        %v4319 = vadd.f32 %v4291, 1.0
        %v4320 = vadd.f32 %v4293, 1.0
        %v4321 = vadd.f32 %v4295, 1.0
        %v4322 = vadd.f32 %v4297, 1.0
        %v4323 = vadd.f32 %v4299, 1.0
        %v4324 = vadd.f32 %v4301, 1.0
        %v4325 = vadd.f32 %v4303, 1.0
        %v4326 = vadd.f32 %v4305, 1.0
        %v4327 = vadd.f32 %v4307, 1.0
        %v4328 = vadd.f32 %v4309, 1.0
        %v4329 = vadd.f32 %v4311, 1.0
        %v4330 = vadd.f32 %v4313, 1.0
        %v4331 = vadd.f32 %v4315, 1.0
        %v4332 = vrcp.pop %v4316
        %v4333 = vrcp.pop %v4317
        %v4334 = vrcp.pop %v4318
        %v4335 = vrcp.pop %v4319
        %v4336 = vrcp.pop %v4320
        %v4337 = vrcp.pop %v4321
        %v4338 = vrcp.pop %v4322
        %v4339 = vrcp.pop %v4323
        %v4340 = vrcp.pop %v4324
        %v4341 = vrcp.pop %v4325
        %v4342 = vrcp.pop %v4326
        %v4343 = vrcp.pop %v4327
        %v4344 = vrcp.pop %v4328
        %v4345 = vrcp.pop %v4329
        %v4346 = vrcp.pop %v4330
        %v4347 = vrcp.pop %v4331
        %v4348 = vpack.c.bf16 %v4333, %v4332
        %v4349 = vpack.c.bf16 %v4335, %v4334
        %v4350 = vpack.c.bf16 %v4337, %v4336
        %v4351 = vpack.c.bf16 %v4339, %v4338
        %v4352 = vpack.c.bf16 %v4341, %v4340
        %v4353 = vpack.c.bf16 %v4343, %v4342
        %v4354 = vpack.c.bf16 %v4345, %v4344
        %v4355 = vpack.c.bf16 %v4347, %v4346
        %v4357 = vsel %vm2409, %v4348, 0
        %v4360 = vsel %vm2409, %v4349, 0
        %v4363 = vsel %vm2409, %v4350, 0
        %v4366 = vsel %vm2409, %v4351, 0
        %v4369 = vsel %vm2409, %v4352, 0
        %v4372 = vsel %vm2409, %v4353, 0
        %v4375 = vsel %vm2409, %v4354, 0
        %v4378 = vsel %vm2409, %v4355, 0
        %4380 = vmatprep.subr.bf16.mxu0 0
        %4381 = vmatpush1.bf16.msra.mxu0 0
        %4382 = vmatprep.subr.bf16.mxu0 0
        %4383 = vmatpush1.bf16.msra.mxu0 0
        %4384 = vmatprep.subr.bf16.mxu0 0
        %4385 = vmatpush1.bf16.msra.mxu0 0
        %4386 = vmatprep.subr.bf16.mxu0 0
        %4387 = vmatpush1.bf16.msra.mxu0 0
        %4388 = vmatprep.subr.bf16.mxu0 0
        %4389 = vmatpush1.bf16.msra.mxu0 0
        %4390 = vmatprep.subr.bf16.mxu0 0
        %4391 = vmatpush1.bf16.msra.mxu0 0
        %4392 = vmatprep.subr.bf16.mxu0 0
        %4393 = vmatpush1.bf16.msra.mxu0 0
        %4394 = vmatprep.subr.bf16.mxu0 0
        %4395 = vmatpush1.bf16.msra.mxu0 %v2436
        %4396 = vmatprep.subr.bf16.mxu0 0
        %4397 = vmatpush2.bf16.msra.mxu0 0
        %4398 = vmatprep.subr.bf16.mxu0 0
        %4399 = vmatpush2.bf16.msra.mxu0 0
        %4400 = vmatprep.subr.bf16.mxu0 0
        %4401 = vmatpush2.bf16.msra.mxu0 0
        %4402 = vmatprep.subr.bf16.mxu0 0
        %4403 = vmatpush2.bf16.msra.mxu0 0
        %4404 = vmatprep.subr.bf16.mxu0 0
        %4405 = vmatpush2.bf16.msra.mxu0 0
        %4406 = vmatprep.subr.bf16.mxu0 0
        %4407 = vmatpush2.bf16.msra.mxu0 0
        %4408 = vmatprep.subr.bf16.mxu0 0
        %4409 = vmatpush2.bf16.msra.mxu0 0
        %4410 = vmatprep.subr.bf16.mxu0 0
        %4411 = vmatpush2.bf16.msra.mxu0 0
        %4412 = vmatprep.mubr.bf16.mxu0 0
        %4413 = vmatmul.mubr.bf16.gmra.mxu0 %v4357
        %v4414 = vpop.f32.mrf.mxu0
        %v4415 = vadd.f32 0.0, %v4414
        %v4416 = vpop.f32.mrf.mxu0
        %v4417 = vpop.f32.mrf.mxu0
        %v4418 = vadd.f32 0.0, %v4417
        %v4419 = vpop.f32.mrf.mxu0
        %4420 = vmatprep.mubr.bf16.mxu0 0
        %4421 = vmatmul.mubr.bf16.gmra.mxu0 %v4360
        %v4422 = vpop.f32.mrf.mxu0
        %v4423 = vadd.f32 0.0, %v4422
        %v4424 = vpop.f32.mrf.mxu0
        %v4425 = vpop.f32.mrf.mxu0
        %v4426 = vadd.f32 0.0, %v4425
        %v4427 = vpop.f32.mrf.mxu0
        %4428 = vmatprep.mubr.bf16.mxu0 0
        %4429 = vmatmul.mubr.bf16.gmra.mxu0 %v4363
        %v4430 = vpop.f32.mrf.mxu0
        %v4431 = vadd.f32 0.0, %v4430
        %v4432 = vpop.f32.mrf.mxu0
        %v4433 = vpop.f32.mrf.mxu0
        %v4434 = vadd.f32 0.0, %v4433
        %v4435 = vpop.f32.mrf.mxu0
        %4436 = vmatprep.mubr.bf16.mxu0 0
        %4437 = vmatmul.mubr.bf16.gmra.mxu0 %v4366
        %v4438 = vpop.f32.mrf.mxu0
        %v4439 = vadd.f32 0.0, %v4438
        %v4440 = vpop.f32.mrf.mxu0
        %v4441 = vpop.f32.mrf.mxu0
        %v4442 = vadd.f32 0.0, %v4441
        %v4443 = vpop.f32.mrf.mxu0
        %4444 = vmatprep.mubr.bf16.mxu0 0
        %4445 = vmatmul.mubr.bf16.gmra.mxu0 %v4369
        %v4446 = vpop.f32.mrf.mxu0
        %v4447 = vadd.f32 0.0, %v4446
        %v4448 = vpop.f32.mrf.mxu0
        %v4449 = vpop.f32.mrf.mxu0
        %v4450 = vadd.f32 0.0, %v4449
        %v4451 = vpop.f32.mrf.mxu0
        %4452 = vmatprep.mubr.bf16.mxu0 0
        %4453 = vmatmul.mubr.bf16.gmra.mxu0 %v4372
        %v4454 = vpop.f32.mrf.mxu0
        %v4455 = vadd.f32 0.0, %v4454
        %v4456 = vpop.f32.mrf.mxu0
        %v4457 = vpop.f32.mrf.mxu0
        %v4458 = vadd.f32 0.0, %v4457
        %v4459 = vpop.f32.mrf.mxu0
        %4460 = vmatprep.mubr.bf16.mxu0 0
        %4461 = vmatmul.mubr.bf16.gmra.mxu0 %v4375
        %v4462 = vpop.f32.mrf.mxu0
        %v4463 = vadd.f32 0.0, %v4462
        %v4464 = vpop.f32.mrf.mxu0
        %v4465 = vpop.f32.mrf.mxu0
        %v4466 = vadd.f32 0.0, %v4465
        %v4467 = vpop.f32.mrf.mxu0
        %4468 = vmatprep.mubr.bf16.mxu0 0
        %4469 = vmatmul.mubr.bf16.gmra.mxu0 %v4378
        %v4470 = vpop.f32.mrf.mxu0
        %v4471 = vadd.f32 0.0, %v4470
        %v4472 = vpop.f32.mrf.mxu0
        %v4473 = vpop.f32.mrf.mxu0
        %v4474 = vadd.f32 0.0, %v4473
        %v4475 = vpop.f32.mrf.mxu0
        %4476 = vdwg.mxu0
        %v4477 = vsub.f32 %v4069, %v4101
        %v4478 = vsub.f32 %v4072, %v4104
        %v4479 = vsub.f32 %v4077, %v4109
        %v4480 = vsub.f32 %v4080, %v4112
        %v4481 = vsub.f32 %v4085, %v4117
        %v4482 = vsub.f32 %v4088, %v4120
        %v4483 = vsub.f32 %v4093, %v4125
        %v4484 = vsub.f32 %v4096, %v4128
        %v4485 = vsub.f32 %v4101, %v4069
        %v4486 = vsub.f32 %v4104, %v4072
        %v4487 = vsub.f32 %v4109, %v4077
        %v4488 = vsub.f32 %v4112, %v4080
        %v4489 = vsub.f32 %v4117, %v4085
        %v4490 = vsub.f32 %v4120, %v4088
        %v4491 = vsub.f32 %v4125, %v4093
        %v4492 = vsub.f32 %v4128, %v4096
        %v4493 = vmul.f32 %v4415, %v4477
        %v4494 = vmul.f32 %v4418, %v4478
        %v4495 = vmul.f32 %v4423, %v4479
        %v4496 = vmul.f32 %v4426, %v4480
        %v4497 = vmul.f32 %v4431, %v4481
        %v4498 = vmul.f32 %v4434, %v4482
        %v4499 = vmul.f32 %v4439, %v4483
        %v4500 = vmul.f32 %v4442, %v4484
        %v4501 = vmul.f32 %v4447, %v4485
        %v4502 = vmul.f32 %v4450, %v4486
        %v4503 = vmul.f32 %v4455, %v4487
        %v4504 = vmul.f32 %v4458, %v4488
        %v4505 = vmul.f32 %v4463, %v4489
        %v4506 = vmul.f32 %v4466, %v4490
        %v4507 = vmul.f32 %v4471, %v4491
        %v4508 = vmul.f32 %v4474, %v4492
        %v4509 = vadd.f32 %v4101, %v4493
        %v4510 = vadd.f32 %v4104, %v4494
        %v4511 = vadd.f32 %v4109, %v4495
        %v4512 = vadd.f32 %v4112, %v4496
        %v4513 = vadd.f32 %v4117, %v4497
        %v4514 = vadd.f32 %v4120, %v4498
        %v4515 = vadd.f32 %v4125, %v4499
        %v4516 = vadd.f32 %v4128, %v4500
        %v4517 = vadd.f32 %v4069, %v4501
        %v4518 = vadd.f32 %v4072, %v4502
        %v4519 = vadd.f32 %v4077, %v4503
        %v4520 = vadd.f32 %v4080, %v4504
        %v4521 = vadd.f32 %v4085, %v4505
        %v4522 = vadd.f32 %v4088, %v4506
        %v4523 = vadd.f32 %v4093, %v4507
        %v4524 = vadd.f32 %v4096, %v4508
        %s4525 = scalar_lea.vmem [#allocation12], 64
        %v4526 = vld [vmem:[%s4525] sm:$0xf]
        %v4527 = vld [vmem:[%s4525 + $0x4] sm:$0xf]
        %v4528 = vld [vmem:[%s4525 + $0x8] sm:$0xf]
        %v4529 = vld [vmem:[%s4525 + $0xc] sm:$0xf]
        %v4530 = vld [vmem:[%s4525 + $0x10] sm:$0xf]
        %v4531 = vld [vmem:[%s4525 + $0x14] sm:$0xf]
        %v4532 = vld [vmem:[%s4525 + $0x18] sm:$0xf]
        %v4533 = vld [vmem:[%s4525 + $0x1c] sm:$0xf]
        %v4534 = vld [vmem:[%s4525 + $0x20] sm:$0xf]
        %v4535 = vld [vmem:[%s4525 + $0x24] sm:$0xf]
        %v4536 = vld [vmem:[%s4525 + $0x28] sm:$0xf]
        %v4537 = vld [vmem:[%s4525 + $0x2c] sm:$0xf]
        %v4538 = vld [vmem:[%s4525 + $0x30] sm:$0xf]
        %v4539 = vld [vmem:[%s4525 + $0x34] sm:$0xf]
        %v4540 = vld [vmem:[%s4525 + $0x38] sm:$0xf]
        %v4541 = vld [vmem:[%s4525 + $0x3c] sm:$0xf]
        %v4542 = vpack.c.bf16 %v4510, %v4509
        %v4543 = vpack.c.bf16 %v4512, %v4511
        %v4544 = vpack.c.bf16 %v4514, %v4513
        %v4545 = vpack.c.bf16 %v4516, %v4515
        %v4546 = vpack.c.bf16 %v4518, %v4517
        %v4547 = vpack.c.bf16 %v4520, %v4519
        %v4548 = vpack.c.bf16 %v4522, %v4521
        %v4549 = vpack.c.bf16 %v4524, %v4523
        %s4550 = scalar_lea.vmem [#allocation14], 1
        %v4551 = vld [vmem:[%s4550] sm:$0x1]
        %v4553 = vlaneseq
        %v4554 = vshrl.u32 %v4553, 7
        %v4555 = vsub.s32 0, %v4554
        %v4556 = vrot.slane %v4551, %v4555
        %v4574 = vunpack.c.l.b16 %v4526
        %v4575 = vunpack.c.l.b16 %v4527
        %v4576 = vunpack.c.l.b16 %v4528
        %v4577 = vunpack.c.l.b16 %v4529
        %v4578 = vunpack.c.l.b16 %v4530
        %v4579 = vunpack.c.l.b16 %v4531
        %v4580 = vunpack.c.l.b16 %v4532
        %v4581 = vunpack.c.l.b16 %v4533
        %v4582 = vunpack.c.l.b16 %v4534
        %v4583 = vunpack.c.l.b16 %v4535
        %v4584 = vunpack.c.l.b16 %v4536
        %v4585 = vunpack.c.l.b16 %v4537
        %v4586 = vunpack.c.l.b16 %v4538
        %v4587 = vunpack.c.l.b16 %v4539
        %v4588 = vunpack.c.l.b16 %v4540
        %v4589 = vunpack.c.l.b16 %v4541
        %v4590 = vpack.c.b16 %v4575, %v4574
        %v4591 = vpack.c.b16 %v4577, %v4576
        %v4592 = vpack.c.b16 %v4579, %v4578
        %v4593 = vpack.c.b16 %v4581, %v4580
        %v4594 = vpack.c.b16 %v4583, %v4582
        %v4595 = vpack.c.b16 %v4585, %v4584
        %v4596 = vpack.c.b16 %v4587, %v4586
        %v4597 = vpack.c.b16 %v4589, %v4588
        %4606 = vmatprep.subr.bf16.mxu0 0
        %4607 = vmatpush1.bf16.msra.mxu0 %v4597
        %4608 = vmatprep.subr.bf16.mxu0 0
        %4609 = vmatpush1.bf16.msra.mxu0 %v4596
        %4610 = vmatprep.subr.bf16.mxu0 0
        %4611 = vmatpush1.bf16.msra.mxu0 %v4595
        %4612 = vmatprep.subr.bf16.mxu0 0
        %4613 = vmatpush1.bf16.msra.mxu0 %v4594
        %4614 = vmatprep.subr.bf16.mxu0 0
        %4615 = vmatpush1.bf16.msra.mxu0 %v4593
        %4616 = vmatprep.subr.bf16.mxu0 0
        %4617 = vmatpush1.bf16.msra.mxu0 %v4592
        %4618 = vmatprep.subr.bf16.mxu0 0
        %4619 = vmatpush1.bf16.msra.mxu0 %v4591
        %4620 = vmatprep.subr.bf16.mxu0 0
        %4621 = vmatpush1.bf16.msra.mxu0 %v4590
        %4622 = vmatprep.subr.bf16.mxu0 0
        %4623 = vmatpush2.bf16.msra.mxu0 0
        %4624 = vmatprep.subr.bf16.mxu0 0
        %4625 = vmatpush2.bf16.msra.mxu0 0
        %4626 = vmatprep.subr.bf16.mxu0 0
        %4627 = vmatpush2.bf16.msra.mxu0 0
        %4628 = vmatprep.subr.bf16.mxu0 0
        %4629 = vmatpush2.bf16.msra.mxu0 0
        %4630 = vmatprep.subr.bf16.mxu0 0
        %4631 = vmatpush2.bf16.msra.mxu0 0
        %4632 = vmatprep.subr.bf16.mxu0 0
        %4633 = vmatpush2.bf16.msra.mxu0 0
        %4634 = vmatprep.subr.bf16.mxu0 0
        %4635 = vmatpush2.bf16.msra.mxu0 0
        %4636 = vmatprep.subr.bf16.mxu0 0
        %4637 = vmatpush2.bf16.msra.mxu0 0
        %4638 = vmatprep.mubr.bf16.mxu0 0
        %4639 = vmatmul.mubr.bf16.gmra.mxu0 %v4542
        %v4640 = vpop.f32.mrf.mxu0
        %v4641 = vadd.f32 %v4556, %v4640
        %v4642 = vpop.f32.mrf.mxu0
        %v4643 = vpop.f32.mrf.mxu0
        %v4644 = vadd.f32 %v4556, %v4643
        %v4645 = vpop.f32.mrf.mxu0
        %4646 = vmatprep.mubr.bf16.mxu0 0
        %4647 = vmatmul.mubr.bf16.gmra.mxu0 %v4543
        %v4648 = vpop.f32.mrf.mxu0
        %v4649 = vadd.f32 %v4556, %v4648
        %v4650 = vpop.f32.mrf.mxu0
        %v4651 = vpop.f32.mrf.mxu0
        %v4652 = vadd.f32 %v4556, %v4651
        %v4653 = vpop.f32.mrf.mxu0
        %4654 = vmatprep.mubr.bf16.mxu0 0
        %4655 = vmatmul.mubr.bf16.gmra.mxu0 %v4544
        %v4656 = vpop.f32.mrf.mxu0
        %v4657 = vadd.f32 %v4556, %v4656
        %v4658 = vpop.f32.mrf.mxu0
        %v4659 = vpop.f32.mrf.mxu0
        %v4660 = vadd.f32 %v4556, %v4659
        %v4661 = vpop.f32.mrf.mxu0
        %4662 = vmatprep.mubr.bf16.mxu0 0
        %4663 = vmatmul.mubr.bf16.gmra.mxu0 %v4545
        %v4664 = vpop.f32.mrf.mxu0
        %v4665 = vadd.f32 %v4556, %v4664
        %v4666 = vpop.f32.mrf.mxu0
        %v4667 = vpop.f32.mrf.mxu0
        %v4668 = vadd.f32 %v4556, %v4667
        %v4669 = vpop.f32.mrf.mxu0
        %4670 = vmatprep.mubr.bf16.mxu0 0
        %4671 = vmatmul.mubr.bf16.gmra.mxu0 %v4546
        %v4672 = vpop.f32.mrf.mxu0
        %v4673 = vadd.f32 %v4556, %v4672
        %v4674 = vpop.f32.mrf.mxu0
        %v4675 = vpop.f32.mrf.mxu0
        %v4676 = vadd.f32 %v4556, %v4675
        %v4677 = vpop.f32.mrf.mxu0
        %4678 = vmatprep.mubr.bf16.mxu0 0
        %4679 = vmatmul.mubr.bf16.gmra.mxu0 %v4547
        %v4680 = vpop.f32.mrf.mxu0
        %v4681 = vadd.f32 %v4556, %v4680
        %v4682 = vpop.f32.mrf.mxu0
        %v4683 = vpop.f32.mrf.mxu0
        %v4684 = vadd.f32 %v4556, %v4683
        %v4685 = vpop.f32.mrf.mxu0
        %4686 = vmatprep.mubr.bf16.mxu0 0
        %4687 = vmatmul.mubr.bf16.gmra.mxu0 %v4548
        %v4688 = vpop.f32.mrf.mxu0
        %v4689 = vadd.f32 %v4556, %v4688
        %v4690 = vpop.f32.mrf.mxu0
        %v4691 = vpop.f32.mrf.mxu0
        %v4692 = vadd.f32 %v4556, %v4691
        %v4693 = vpop.f32.mrf.mxu0
        %4694 = vmatprep.mubr.bf16.mxu0 0
        %4695 = vmatmul.mubr.bf16.gmra.mxu0 %v4549
        %v4696 = vpop.f32.mrf.mxu0
        %v4697 = vadd.f32 %v4556, %v4696
        %v4698 = vpop.f32.mrf.mxu0
        %v4699 = vpop.f32.mrf.mxu0
        %v4700 = vadd.f32 %v4556, %v4699
        %v4701 = vpop.f32.mrf.mxu0
        %4702 = vdwg.mxu0
        %s4703 = scalar_lea.vmem [#allocation21], 4
        %v4704 = vld [vmem:[%s4703] sm:$0xf]
        %v4705 = vadd.f32 %v3718, %v4641
        %v4706 = vadd.f32 %v3719, %v4644
        %v4707 = vadd.f32 %v3720, %v4649
        %v4708 = vadd.f32 %v3721, %v4652
        %v4709 = vadd.f32 %v3722, %v4657
        %v4710 = vadd.f32 %v3723, %v4660
        %v4711 = vadd.f32 %v3724, %v4665
        %v4712 = vadd.f32 %v3725, %v4668
        %v4713 = vadd.f32 %v3726, %v4673
        %v4714 = vadd.f32 %v3727, %v4676
        %v4715 = vadd.f32 %v3728, %v4681
        %v4716 = vadd.f32 %v3729, %v4684
        %v4717 = vadd.f32 %v3730, %v4689
        %v4718 = vadd.f32 %v3731, %v4692
        %v4719 = vadd.f32 %v3732, %v4697
        %v4720 = vadd.f32 %v3733, %v4700
        %4721 = vadd.xlane.f32.xlu0 %v4705
        %v4722 = vpop.xlane.xlu0 %4721
        %4723 = vadd.xlane.f32.xlu0 %v4706
        %v4724 = vpop.xlane.xlu0 %4723
        %4725 = vadd.xlane.f32.xlu0 %v4707
        %v4726 = vpop.xlane.xlu0 %4725
        %4727 = vadd.xlane.f32.xlu0 %v4708
        %v4728 = vpop.xlane.xlu0 %4727
        %4729 = vadd.xlane.f32.xlu0 %v4709
        %v4730 = vpop.xlane.xlu0 %4729
        %4731 = vadd.xlane.f32.xlu0 %v4710
        %v4732 = vpop.xlane.xlu0 %4731
        %4733 = vadd.xlane.f32.xlu0 %v4711
        %v4734 = vpop.xlane.xlu0 %4733
        %4735 = vadd.xlane.f32.xlu0 %v4712
        %v4736 = vpop.xlane.xlu0 %4735
        %4737 = vadd.xlane.f32.xlu0 %v4713
        %v4738 = vpop.xlane.xlu0 %4737
        %4739 = vadd.xlane.f32.xlu0 %v4714
        %v4740 = vpop.xlane.xlu0 %4739
        %4741 = vadd.xlane.f32.xlu0 %v4715
        %v4742 = vpop.xlane.xlu0 %4741
        %4743 = vadd.xlane.f32.xlu0 %v4716
        %v4744 = vpop.xlane.xlu0 %4743
        %4745 = vadd.xlane.f32.xlu0 %v4717
        %v4746 = vpop.xlane.xlu0 %4745
        %4747 = vadd.xlane.f32.xlu0 %v4718
        %v4748 = vpop.xlane.xlu0 %4747
        %4749 = vadd.xlane.f32.xlu0 %v4719
        %v4750 = vpop.xlane.xlu0 %4749
        %4751 = vadd.xlane.f32.xlu0 %v4720
        %v4752 = vpop.xlane.xlu0 %4751
        %v4753 = vmul.f32 %v4722, %v2808
        %v4754 = vmul.f32 %v4724, %v2808
        %v4755 = vmul.f32 %v4726, %v2808
        %v4756 = vmul.f32 %v4728, %v2808
        %v4757 = vmul.f32 %v4730, %v2808
        %v4758 = vmul.f32 %v4732, %v2808
        %v4759 = vmul.f32 %v4734, %v2808
        %v4760 = vmul.f32 %v4736, %v2808
        %v4761 = vmul.f32 %v4738, %v2808
        %v4762 = vmul.f32 %v4740, %v2808
        %v4763 = vmul.f32 %v4742, %v2808
        %v4764 = vmul.f32 %v4744, %v2808
        %v4765 = vmul.f32 %v4746, %v2808
        %v4766 = vmul.f32 %v4748, %v2808
        %v4767 = vmul.f32 %v4750, %v2808
        %v4768 = vmul.f32 %v4752, %v2808
        %v4769 = vsub.f32 %v4705, %v4753
        %v4770 = vsub.f32 %v4706, %v4754
        %v4771 = vsub.f32 %v4707, %v4755
        %v4772 = vsub.f32 %v4708, %v4756
        %v4773 = vsub.f32 %v4709, %v4757
        %v4774 = vsub.f32 %v4710, %v4758
        %v4775 = vsub.f32 %v4711, %v4759
        %v4776 = vsub.f32 %v4712, %v4760
        %v4777 = vsub.f32 %v4713, %v4761
        %v4778 = vsub.f32 %v4714, %v4762
        %v4779 = vsub.f32 %v4715, %v4763
        %v4780 = vsub.f32 %v4716, %v4764
        %v4781 = vsub.f32 %v4717, %v4765
        %v4782 = vsub.f32 %v4718, %v4766
        %v4783 = vsub.f32 %v4719, %v4767
        %v4784 = vsub.f32 %v4720, %v4768
        %v4785 = vmul.f32 %v4769, %v4769
        %v4786 = vmul.f32 %v4770, %v4770
        %v4787 = vmul.f32 %v4771, %v4771
        %v4788 = vmul.f32 %v4772, %v4772
        %v4789 = vmul.f32 %v4773, %v4773
        %v4790 = vmul.f32 %v4774, %v4774
        %v4791 = vmul.f32 %v4775, %v4775
        %v4792 = vmul.f32 %v4776, %v4776
        %v4793 = vmul.f32 %v4777, %v4777
        %v4794 = vmul.f32 %v4778, %v4778
        %v4795 = vmul.f32 %v4779, %v4779
        %v4796 = vmul.f32 %v4780, %v4780
        %v4797 = vmul.f32 %v4781, %v4781
        %v4798 = vmul.f32 %v4782, %v4782
        %v4799 = vmul.f32 %v4783, %v4783
        %v4800 = vmul.f32 %v4784, %v4784
        %4801 = vadd.xlane.f32.xlu0 %v4785
        %v4802 = vpop.xlane.xlu0 %4801
        %4803 = vadd.xlane.f32.xlu0 %v4786
        %v4804 = vpop.xlane.xlu0 %4803
        %4805 = vadd.xlane.f32.xlu0 %v4787
        %v4806 = vpop.xlane.xlu0 %4805
        %4807 = vadd.xlane.f32.xlu0 %v4788
        %v4808 = vpop.xlane.xlu0 %4807
        %4809 = vadd.xlane.f32.xlu0 %v4789
        %v4810 = vpop.xlane.xlu0 %4809
        %4811 = vadd.xlane.f32.xlu0 %v4790
        %v4812 = vpop.xlane.xlu0 %4811
        %4813 = vadd.xlane.f32.xlu0 %v4791
        %v4814 = vpop.xlane.xlu0 %4813
        %4815 = vadd.xlane.f32.xlu0 %v4792
        %v4816 = vpop.xlane.xlu0 %4815
        %4817 = vadd.xlane.f32.xlu0 %v4793
        %v4818 = vpop.xlane.xlu0 %4817
        %4819 = vadd.xlane.f32.xlu0 %v4794
        %v4820 = vpop.xlane.xlu0 %4819
        %4821 = vadd.xlane.f32.xlu0 %v4795
        %v4822 = vpop.xlane.xlu0 %4821
        %4823 = vadd.xlane.f32.xlu0 %v4796
        %v4824 = vpop.xlane.xlu0 %4823
        %4825 = vadd.xlane.f32.xlu0 %v4797
        %v4826 = vpop.xlane.xlu0 %4825
        %4827 = vadd.xlane.f32.xlu0 %v4798
        %v4828 = vpop.xlane.xlu0 %4827
        %4829 = vadd.xlane.f32.xlu0 %v4799
        %v4830 = vpop.xlane.xlu0 %4829
        %4831 = vadd.xlane.f32.xlu0 %v4800
        %v4832 = vpop.xlane.xlu0 %4831
        %v4833 = vmul.f32 %v4802, %v2808
        %v4834 = vmul.f32 %v4804, %v2808
        %v4835 = vmul.f32 %v4806, %v2808
        %v4836 = vmul.f32 %v4808, %v2808
        %v4837 = vmul.f32 %v4810, %v2808
        %v4838 = vmul.f32 %v4812, %v2808
        %v4839 = vmul.f32 %v4814, %v2808
        %v4840 = vmul.f32 %v4816, %v2808
        %v4841 = vmul.f32 %v4818, %v2808
        %v4842 = vmul.f32 %v4820, %v2808
        %v4843 = vmul.f32 %v4822, %v2808
        %v4844 = vmul.f32 %v4824, %v2808
        %v4845 = vmul.f32 %v4826, %v2808
        %v4846 = vmul.f32 %v4828, %v2808
        %v4847 = vmul.f32 %v4830, %v2808
        %v4848 = vmul.f32 %v4832, %v2808
        %v4849 = vadd.f32 %v4833, 1e-05
        %v4850 = vadd.f32 %v4834, 1e-05
        %v4851 = vadd.f32 %v4835, 1e-05
        %v4852 = vadd.f32 %v4836, 1e-05
        %v4853 = vadd.f32 %v4837, 1e-05
        %v4854 = vadd.f32 %v4838, 1e-05
        %v4855 = vadd.f32 %v4839, 1e-05
        %v4856 = vadd.f32 %v4840, 1e-05
        %v4857 = vadd.f32 %v4841, 1e-05
        %v4858 = vadd.f32 %v4842, 1e-05
        %v4859 = vadd.f32 %v4843, 1e-05
        %v4860 = vadd.f32 %v4844, 1e-05
        %v4861 = vadd.f32 %v4845, 1e-05
        %v4862 = vadd.f32 %v4846, 1e-05
        %v4863 = vadd.f32 %v4847, 1e-05
        %v4864 = vadd.f32 %v4848, 1e-05
        %v4865 = vrsqrt.pop %v4849
        %v4866 = vrsqrt.pop %v4850
        %v4867 = vrsqrt.pop %v4851
        %v4868 = vrsqrt.pop %v4852
        %v4869 = vrsqrt.pop %v4853
        %v4870 = vrsqrt.pop %v4854
        %v4871 = vrsqrt.pop %v4855
        %v4872 = vrsqrt.pop %v4856
        %v4873 = vrsqrt.pop %v4857
        %v4874 = vrsqrt.pop %v4858
        %v4875 = vrsqrt.pop %v4859
        %v4876 = vrsqrt.pop %v4860
        %v4877 = vrsqrt.pop %v4861
        %v4878 = vrsqrt.pop %v4862
        %v4879 = vrsqrt.pop %v4863
        %v4880 = vrsqrt.pop %v4864
        %v4881 = vmul.f32 %v4769, %v4865
        %v4882 = vmul.f32 %v4770, %v4866
        %v4883 = vmul.f32 %v4771, %v4867
        %v4884 = vmul.f32 %v4772, %v4868
        %v4885 = vmul.f32 %v4773, %v4869
        %v4886 = vmul.f32 %v4774, %v4870
        %v4887 = vmul.f32 %v4775, %v4871
        %v4888 = vmul.f32 %v4776, %v4872
        %v4889 = vmul.f32 %v4777, %v4873
        %v4890 = vmul.f32 %v4778, %v4874
        %v4891 = vmul.f32 %v4779, %v4875
        %v4892 = vmul.f32 %v4780, %v4876
        %v4893 = vmul.f32 %v4781, %v4877
        %v4894 = vmul.f32 %v4782, %v4878
        %v4895 = vmul.f32 %v4783, %v4879
        %v4896 = vmul.f32 %v4784, %v4880
        %v4897 = vlaneseq
        %v4898 = vshrl.u32 %v4897, 7
        %v4899 = vsub.s32 0, %v4898
        %v4900 = vrot.slane %v4704, %v4899
        %v4901 = vmul.f32 %v4881, %v4900
        %v4902 = vmul.f32 %v4882, %v4900
        %v4903 = vmul.f32 %v4883, %v4900
        %v4904 = vmul.f32 %v4884, %v4900
        %v4905 = vmul.f32 %v4885, %v4900
        %v4906 = vmul.f32 %v4886, %v4900
        %v4907 = vmul.f32 %v4887, %v4900
        %v4908 = vmul.f32 %v4888, %v4900
        %v4909 = vmul.f32 %v4889, %v4900
        %v4910 = vmul.f32 %v4890, %v4900
        %v4911 = vmul.f32 %v4891, %v4900
        %v4912 = vmul.f32 %v4892, %v4900
        %v4913 = vmul.f32 %v4893, %v4900
        %v4914 = vmul.f32 %v4894, %v4900
        %v4915 = vmul.f32 %v4895, %v4900
        %v4916 = vmul.f32 %v4896, %v4900
        %v4917 = vlaneseq
        %v4918 = vshrl.u32 %v4917, 7
        %v4919 = vsub.s32 1, %v4918
        %v4920 = vrot.slane %v4704, %v4919
        %v4921 = vadd.f32 %v4901, %v4920
        %v4922 = vadd.f32 %v4902, %v4920
        %v4923 = vadd.f32 %v4903, %v4920
        %v4924 = vadd.f32 %v4904, %v4920
        %v4925 = vadd.f32 %v4905, %v4920
        %v4926 = vadd.f32 %v4906, %v4920
        %v4927 = vadd.f32 %v4907, %v4920
        %v4928 = vadd.f32 %v4908, %v4920
        %v4929 = vadd.f32 %v4909, %v4920
        %v4930 = vadd.f32 %v4910, %v4920
        %v4931 = vadd.f32 %v4911, %v4920
        %v4932 = vadd.f32 %v4912, %v4920
        %v4933 = vadd.f32 %v4913, %v4920
        %v4934 = vadd.f32 %v4914, %v4920
        %v4935 = vadd.f32 %v4915, %v4920
        %v4936 = vadd.f32 %v4916, %v4920
        %s4937 = scalar_lea.vmem [#allocation15], 128
        %v4938 = vld [vmem:[%s4937] sm:$0xff]
        %v4939 = vld [vmem:[%s4937 + $0x8] sm:$0xff]
        %v4940 = vld [vmem:[%s4937 + $0x10] sm:$0xff]
        %v4941 = vld [vmem:[%s4937 + $0x18] sm:$0xff]
        %v4942 = vld [vmem:[%s4937 + $0x20] sm:$0xff]
        %v4943 = vld [vmem:[%s4937 + $0x28] sm:$0xff]
        %v4944 = vld [vmem:[%s4937 + $0x30] sm:$0xff]
        %v4945 = vld [vmem:[%s4937 + $0x38] sm:$0xff]
        %v4946 = vld [vmem:[%s4937 + $0x40] sm:$0xff]
        %v4947 = vld [vmem:[%s4937 + $0x48] sm:$0xff]
        %v4948 = vld [vmem:[%s4937 + $0x50] sm:$0xff]
        %v4949 = vld [vmem:[%s4937 + $0x58] sm:$0xff]
        %v4950 = vld [vmem:[%s4937 + $0x60] sm:$0xff]
        %v4951 = vld [vmem:[%s4937 + $0x68] sm:$0xff]
        %v4952 = vld [vmem:[%s4937 + $0x70] sm:$0xff]
        %v4953 = vld [vmem:[%s4937 + $0x78] sm:$0xff]
        %v4954 = vpack.c.bf16 %v4922, %v4921
        %v4955 = vpack.c.bf16 %v4924, %v4923
        %v4956 = vpack.c.bf16 %v4926, %v4925
        %v4957 = vpack.c.bf16 %v4928, %v4927
        %v4958 = vpack.c.bf16 %v4930, %v4929
        %v4959 = vpack.c.bf16 %v4932, %v4931
        %v4960 = vpack.c.bf16 %v4934, %v4933
        %v4961 = vpack.c.bf16 %v4936, %v4935
        %s4962 = scalar_lea.vmem [#allocation17], 2
        %v4963 = vld [vmem:[%s4962] sm:$0x3]
        %v4965 = vlaneseq
        %v4966 = vshrl.u32 %v4965, 7
        %v4967 = vsub.s32 0, %v4966
        %v4968 = vrot.slane %v4963, %v4967
        %v4969 = vlaneseq
        %v4970 = vshrl.u32 %v4969, 7
        %v4971 = vsub.s32 1, %v4970
        %v4972 = vrot.slane %v4963, %v4971
        %v4991 = vunpack.c.l.b16 %v4938
        %v4992 = vunpack.c.h.b16 %v4938
        %v4993 = vunpack.c.l.b16 %v4939
        %v4994 = vunpack.c.h.b16 %v4939
        %v4995 = vunpack.c.l.b16 %v4940
        %v4996 = vunpack.c.h.b16 %v4940
        %v4997 = vunpack.c.l.b16 %v4941
        %v4998 = vunpack.c.h.b16 %v4941
        %v4999 = vunpack.c.l.b16 %v4942
        %v5000 = vunpack.c.h.b16 %v4942
        %v5001 = vunpack.c.l.b16 %v4943
        %v5002 = vunpack.c.h.b16 %v4943
        %v5003 = vunpack.c.l.b16 %v4944
        %v5004 = vunpack.c.h.b16 %v4944
        %v5005 = vunpack.c.l.b16 %v4945
        %v5006 = vunpack.c.h.b16 %v4945
        %v5007 = vunpack.c.l.b16 %v4946
        %v5008 = vunpack.c.h.b16 %v4946
        %v5009 = vunpack.c.l.b16 %v4947
        %v5010 = vunpack.c.h.b16 %v4947
        %v5011 = vunpack.c.l.b16 %v4948
        %v5012 = vunpack.c.h.b16 %v4948
        %v5013 = vunpack.c.l.b16 %v4949
        %v5014 = vunpack.c.h.b16 %v4949
        %v5015 = vunpack.c.l.b16 %v4950
        %v5016 = vunpack.c.h.b16 %v4950
        %v5017 = vunpack.c.l.b16 %v4951
        %v5018 = vunpack.c.h.b16 %v4951
        %v5019 = vunpack.c.l.b16 %v4952
        %v5020 = vunpack.c.h.b16 %v4952
        %v5021 = vunpack.c.l.b16 %v4953
        %v5022 = vunpack.c.h.b16 %v4953
        %v5023 = vpack.c.b16 %v4993, %v4991
        %v5024 = vpack.c.b16 %v4994, %v4992
        %v5025 = vpack.c.b16 %v4997, %v4995
        %v5026 = vpack.c.b16 %v4998, %v4996
        %v5027 = vpack.c.b16 %v5001, %v4999
        %v5028 = vpack.c.b16 %v5002, %v5000
        %v5029 = vpack.c.b16 %v5005, %v5003
        %v5030 = vpack.c.b16 %v5006, %v5004
        %v5031 = vpack.c.b16 %v5009, %v5007
        %v5032 = vpack.c.b16 %v5010, %v5008
        %v5033 = vpack.c.b16 %v5013, %v5011
        %v5034 = vpack.c.b16 %v5014, %v5012
        %v5035 = vpack.c.b16 %v5017, %v5015
        %v5036 = vpack.c.b16 %v5018, %v5016
        %v5037 = vpack.c.b16 %v5021, %v5019
        %v5038 = vpack.c.b16 %v5022, %v5020
        %5055 = vmatprep.subr.bf16.mxu0 %v5038
        %5056 = vmatpush1.bf16.msra.mxu0 %v5037
        %5057 = vmatprep.subr.bf16.mxu0 %v5036
        %5058 = vmatpush1.bf16.msra.mxu0 %v5035
        %5059 = vmatprep.subr.bf16.mxu0 %v5034
        %5060 = vmatpush1.bf16.msra.mxu0 %v5033
        %5061 = vmatprep.subr.bf16.mxu0 %v5032
        %5062 = vmatpush1.bf16.msra.mxu0 %v5031
        %5063 = vmatprep.subr.bf16.mxu0 %v5030
        %5064 = vmatpush1.bf16.msra.mxu0 %v5029
        %5065 = vmatprep.subr.bf16.mxu0 %v5028
        %5066 = vmatpush1.bf16.msra.mxu0 %v5027
        %5067 = vmatprep.subr.bf16.mxu0 %v5026
        %5068 = vmatpush1.bf16.msra.mxu0 %v5025
        %5069 = vmatprep.subr.bf16.mxu0 %v5024
        %5070 = vmatpush1.bf16.msra.mxu0 %v5023
        %5071 = vmatprep.subr.bf16.mxu0 0
        %5072 = vmatpush2.bf16.msra.mxu0 0
        %5073 = vmatprep.subr.bf16.mxu0 0
        %5074 = vmatpush2.bf16.msra.mxu0 0
        %5075 = vmatprep.subr.bf16.mxu0 0
        %5076 = vmatpush2.bf16.msra.mxu0 0
        %5077 = vmatprep.subr.bf16.mxu0 0
        %5078 = vmatpush2.bf16.msra.mxu0 0
        %5079 = vmatprep.subr.bf16.mxu0 0
        %5080 = vmatpush2.bf16.msra.mxu0 0
        %5081 = vmatprep.subr.bf16.mxu0 0
        %5082 = vmatpush2.bf16.msra.mxu0 0
        %5083 = vmatprep.subr.bf16.mxu0 0
        %5084 = vmatpush2.bf16.msra.mxu0 0
        %5085 = vmatprep.subr.bf16.mxu0 0
        %5086 = vmatpush2.bf16.msra.mxu0 0
        %5087 = vmatprep.mubr.bf16.mxu0 0
        %5088 = vmatmul.mubr.bf16.gmra.mxu0 %v4954
        %v5089 = vpop.f32.mrf.mxu0
        %v5090 = vadd.f32 %v4968, %v5089
        %v5091 = vpop.f32.mrf.mxu0
        %v5092 = vadd.f32 %v4972, %v5091
        %v5093 = vpop.f32.mrf.mxu0
        %v5094 = vadd.f32 %v4968, %v5093
        %v5095 = vpop.f32.mrf.mxu0
        %v5096 = vadd.f32 %v4972, %v5095
        %5097 = vmatprep.mubr.bf16.mxu0 0
        %5098 = vmatmul.mubr.bf16.gmra.mxu0 %v4955
        %v5099 = vpop.f32.mrf.mxu0
        %v5100 = vadd.f32 %v4968, %v5099
        %v5101 = vpop.f32.mrf.mxu0
        %v5102 = vadd.f32 %v4972, %v5101
        %v5103 = vpop.f32.mrf.mxu0
        %v5104 = vadd.f32 %v4968, %v5103
        %v5105 = vpop.f32.mrf.mxu0
        %v5106 = vadd.f32 %v4972, %v5105
        %5107 = vmatprep.mubr.bf16.mxu0 0
        %5108 = vmatmul.mubr.bf16.gmra.mxu0 %v4956
        %v5109 = vpop.f32.mrf.mxu0
        %v5110 = vadd.f32 %v4968, %v5109
        %v5111 = vpop.f32.mrf.mxu0
        %v5112 = vadd.f32 %v4972, %v5111
        %v5113 = vpop.f32.mrf.mxu0
        %v5114 = vadd.f32 %v4968, %v5113
        %v5115 = vpop.f32.mrf.mxu0
        %v5116 = vadd.f32 %v4972, %v5115
        %5117 = vmatprep.mubr.bf16.mxu0 0
        %5118 = vmatmul.mubr.bf16.gmra.mxu0 %v4957
        %v5119 = vpop.f32.mrf.mxu0
        %v5120 = vadd.f32 %v4968, %v5119
        %v5121 = vpop.f32.mrf.mxu0
        %v5122 = vadd.f32 %v4972, %v5121
        %v5123 = vpop.f32.mrf.mxu0
        %v5124 = vadd.f32 %v4968, %v5123
        %v5125 = vpop.f32.mrf.mxu0
        %v5126 = vadd.f32 %v4972, %v5125
        %5127 = vmatprep.mubr.bf16.mxu0 0
        %5128 = vmatmul.mubr.bf16.gmra.mxu0 %v4958
        %v5129 = vpop.f32.mrf.mxu0
        %v5130 = vadd.f32 %v4968, %v5129
        %v5131 = vpop.f32.mrf.mxu0
        %v5132 = vadd.f32 %v4972, %v5131
        %v5133 = vpop.f32.mrf.mxu0
        %v5134 = vadd.f32 %v4968, %v5133
        %v5135 = vpop.f32.mrf.mxu0
        %v5136 = vadd.f32 %v4972, %v5135
        %5137 = vmatprep.mubr.bf16.mxu0 0
        %5138 = vmatmul.mubr.bf16.gmra.mxu0 %v4959
        %v5139 = vpop.f32.mrf.mxu0
        %v5140 = vadd.f32 %v4968, %v5139
        %v5141 = vpop.f32.mrf.mxu0
        %v5142 = vadd.f32 %v4972, %v5141
        %v5143 = vpop.f32.mrf.mxu0
        %v5144 = vadd.f32 %v4968, %v5143
        %v5145 = vpop.f32.mrf.mxu0
        %v5146 = vadd.f32 %v4972, %v5145
        %5147 = vmatprep.mubr.bf16.mxu0 0
        %5148 = vmatmul.mubr.bf16.gmra.mxu0 %v4960
        %v5149 = vpop.f32.mrf.mxu0
        %v5150 = vadd.f32 %v4968, %v5149
        %v5151 = vpop.f32.mrf.mxu0
        %v5152 = vadd.f32 %v4972, %v5151
        %v5153 = vpop.f32.mrf.mxu0
        %v5154 = vadd.f32 %v4968, %v5153
        %v5155 = vpop.f32.mrf.mxu0
        %v5156 = vadd.f32 %v4972, %v5155
        %5157 = vmatprep.mubr.bf16.mxu0 0
        %5158 = vmatmul.mubr.bf16.gmra.mxu0 %v4961
        %v5159 = vpop.f32.mrf.mxu0
        %v5160 = vadd.f32 %v4968, %v5159
        %v5161 = vpop.f32.mrf.mxu0
        %v5162 = vadd.f32 %v4972, %v5161
        %v5163 = vpop.f32.mrf.mxu0
        %v5164 = vadd.f32 %v4968, %v5163
        %v5165 = vpop.f32.mrf.mxu0
        %v5166 = vadd.f32 %v4972, %v5165
        %5167 = vdwg.mxu0
        %v5168 = vmax.f32 %v5090, 0.0
        %v5169 = vmax.f32 %v5092, 0.0
        %v5170 = vmax.f32 %v5094, 0.0
        %v5171 = vmax.f32 %v5096, 0.0
        %v5172 = vmax.f32 %v5100, 0.0
        %v5173 = vmax.f32 %v5102, 0.0
        %v5174 = vmax.f32 %v5104, 0.0
        %v5175 = vmax.f32 %v5106, 0.0
        %v5176 = vmax.f32 %v5110, 0.0
        %v5177 = vmax.f32 %v5112, 0.0
        %v5178 = vmax.f32 %v5114, 0.0
        %v5179 = vmax.f32 %v5116, 0.0
        %v5180 = vmax.f32 %v5120, 0.0
        %v5181 = vmax.f32 %v5122, 0.0
        %v5182 = vmax.f32 %v5124, 0.0
        %v5183 = vmax.f32 %v5126, 0.0
        %v5184 = vmax.f32 %v5130, 0.0
        %v5185 = vmax.f32 %v5132, 0.0
        %v5186 = vmax.f32 %v5134, 0.0
        %v5187 = vmax.f32 %v5136, 0.0
        %v5188 = vmax.f32 %v5140, 0.0
        %v5189 = vmax.f32 %v5142, 0.0
        %v5190 = vmax.f32 %v5144, 0.0
        %v5191 = vmax.f32 %v5146, 0.0
        %v5192 = vmax.f32 %v5150, 0.0
        %v5193 = vmax.f32 %v5152, 0.0
        %v5194 = vmax.f32 %v5154, 0.0
        %v5195 = vmax.f32 %v5156, 0.0
        %v5196 = vmax.f32 %v5160, 0.0
        %v5197 = vmax.f32 %v5162, 0.0
        %v5198 = vmax.f32 %v5164, 0.0
        %v5199 = vmax.f32 %v5166, 0.0
        %s5200 = scalar_lea.vmem [#allocation18], 128
        %v5201 = vld [vmem:[%s5200] sm:$0xf]
        %v5202 = vld [vmem:[%s5200 + $0x4] sm:$0xf]
        %v5203 = vld [vmem:[%s5200 + $0x8] sm:$0xf]
        %v5204 = vld [vmem:[%s5200 + $0xc] sm:$0xf]
        %v5205 = vld [vmem:[%s5200 + $0x10] sm:$0xf]
        %v5206 = vld [vmem:[%s5200 + $0x14] sm:$0xf]
        %v5207 = vld [vmem:[%s5200 + $0x18] sm:$0xf]
        %v5208 = vld [vmem:[%s5200 + $0x1c] sm:$0xf]
        %v5209 = vld [vmem:[%s5200 + $0x20] sm:$0xf]
        %v5210 = vld [vmem:[%s5200 + $0x24] sm:$0xf]
        %v5211 = vld [vmem:[%s5200 + $0x28] sm:$0xf]
        %v5212 = vld [vmem:[%s5200 + $0x2c] sm:$0xf]
        %v5213 = vld [vmem:[%s5200 + $0x30] sm:$0xf]
        %v5214 = vld [vmem:[%s5200 + $0x34] sm:$0xf]
        %v5215 = vld [vmem:[%s5200 + $0x38] sm:$0xf]
        %v5216 = vld [vmem:[%s5200 + $0x3c] sm:$0xf]
        %v5217 = vld [vmem:[%s5200 + $0x40] sm:$0xf]
        %v5218 = vld [vmem:[%s5200 + $0x44] sm:$0xf]
        %v5219 = vld [vmem:[%s5200 + $0x48] sm:$0xf]
        %v5220 = vld [vmem:[%s5200 + $0x4c] sm:$0xf]
        %v5221 = vld [vmem:[%s5200 + $0x50] sm:$0xf]
        %v5222 = vld [vmem:[%s5200 + $0x54] sm:$0xf]
        %v5223 = vld [vmem:[%s5200 + $0x58] sm:$0xf]
        %v5224 = vld [vmem:[%s5200 + $0x5c] sm:$0xf]
        %v5225 = vld [vmem:[%s5200 + $0x60] sm:$0xf]
        %v5226 = vld [vmem:[%s5200 + $0x64] sm:$0xf]
        %v5227 = vld [vmem:[%s5200 + $0x68] sm:$0xf]
        %v5228 = vld [vmem:[%s5200 + $0x6c] sm:$0xf]
        %v5229 = vld [vmem:[%s5200 + $0x70] sm:$0xf]
        %v5230 = vld [vmem:[%s5200 + $0x74] sm:$0xf]
        %v5231 = vld [vmem:[%s5200 + $0x78] sm:$0xf]
        %v5232 = vld [vmem:[%s5200 + $0x7c] sm:$0xf]
        %v5233 = vpack.c.bf16 %v5170, %v5168
        %v5234 = vpack.c.bf16 %v5171, %v5169
        %v5235 = vpack.c.bf16 %v5174, %v5172
        %v5236 = vpack.c.bf16 %v5175, %v5173
        %v5237 = vpack.c.bf16 %v5178, %v5176
        %v5238 = vpack.c.bf16 %v5179, %v5177
        %v5239 = vpack.c.bf16 %v5182, %v5180
        %v5240 = vpack.c.bf16 %v5183, %v5181
        %v5241 = vpack.c.bf16 %v5186, %v5184
        %v5242 = vpack.c.bf16 %v5187, %v5185
        %v5243 = vpack.c.bf16 %v5190, %v5188
        %v5244 = vpack.c.bf16 %v5191, %v5189
        %v5245 = vpack.c.bf16 %v5194, %v5192
        %v5246 = vpack.c.bf16 %v5195, %v5193
        %v5247 = vpack.c.bf16 %v5198, %v5196
        %v5248 = vpack.c.bf16 %v5199, %v5197
        %s5249 = scalar_lea.vmem [#allocation20], 1
        %v5250 = vld [vmem:[%s5249] sm:$0x1]
        %v5252 = vlaneseq
        %v5253 = vshrl.u32 %v5252, 7
        %v5254 = vsub.s32 0, %v5253
        %v5255 = vrot.slane %v5250, %v5254
        %v5289 = vunpack.c.l.b16 %v5201
        %v5290 = vunpack.c.l.b16 %v5202
        %v5291 = vunpack.c.l.b16 %v5203
        %v5292 = vunpack.c.l.b16 %v5204
        %v5293 = vunpack.c.l.b16 %v5205
        %v5294 = vunpack.c.l.b16 %v5206
        %v5295 = vunpack.c.l.b16 %v5207
        %v5296 = vunpack.c.l.b16 %v5208
        %v5297 = vunpack.c.l.b16 %v5209
        %v5298 = vunpack.c.l.b16 %v5210
        %v5299 = vunpack.c.l.b16 %v5211
        %v5300 = vunpack.c.l.b16 %v5212
        %v5301 = vunpack.c.l.b16 %v5213
        %v5302 = vunpack.c.l.b16 %v5214
        %v5303 = vunpack.c.l.b16 %v5215
        %v5304 = vunpack.c.l.b16 %v5216
        %v5305 = vunpack.c.l.b16 %v5217
        %v5306 = vunpack.c.l.b16 %v5218
        %v5307 = vunpack.c.l.b16 %v5219
        %v5308 = vunpack.c.l.b16 %v5220
        %v5309 = vunpack.c.l.b16 %v5221
        %v5310 = vunpack.c.l.b16 %v5222
        %v5311 = vunpack.c.l.b16 %v5223
        %v5312 = vunpack.c.l.b16 %v5224
        %v5313 = vunpack.c.l.b16 %v5225
        %v5314 = vunpack.c.l.b16 %v5226
        %v5315 = vunpack.c.l.b16 %v5227
        %v5316 = vunpack.c.l.b16 %v5228
        %v5317 = vunpack.c.l.b16 %v5229
        %v5318 = vunpack.c.l.b16 %v5230
        %v5319 = vunpack.c.l.b16 %v5231
        %v5320 = vunpack.c.l.b16 %v5232
        %v5321 = vpack.c.b16 %v5290, %v5289
        %v5322 = vpack.c.b16 %v5292, %v5291
        %v5323 = vpack.c.b16 %v5294, %v5293
        %v5324 = vpack.c.b16 %v5296, %v5295
        %v5325 = vpack.c.b16 %v5298, %v5297
        %v5326 = vpack.c.b16 %v5300, %v5299
        %v5327 = vpack.c.b16 %v5302, %v5301
        %v5328 = vpack.c.b16 %v5304, %v5303
        %v5329 = vpack.c.b16 %v5306, %v5305
        %v5330 = vpack.c.b16 %v5308, %v5307
        %v5331 = vpack.c.b16 %v5310, %v5309
        %v5332 = vpack.c.b16 %v5312, %v5311
        %v5333 = vpack.c.b16 %v5314, %v5313
        %v5334 = vpack.c.b16 %v5316, %v5315
        %v5335 = vpack.c.b16 %v5318, %v5317
        %v5336 = vpack.c.b16 %v5320, %v5319
        %5353 = vmatprep.subr.bf16.mxu0 0
        %5354 = vmatpush1.bf16.msra.mxu0 %v5328
        %5355 = vmatprep.subr.bf16.mxu0 0
        %5356 = vmatpush1.bf16.msra.mxu0 %v5327
        %5357 = vmatprep.subr.bf16.mxu0 0
        %5358 = vmatpush1.bf16.msra.mxu0 %v5326
        %5359 = vmatprep.subr.bf16.mxu0 0
        %5360 = vmatpush1.bf16.msra.mxu0 %v5325
        %5361 = vmatprep.subr.bf16.mxu0 0
        %5362 = vmatpush1.bf16.msra.mxu0 %v5324
        %5363 = vmatprep.subr.bf16.mxu0 0
        %5364 = vmatpush1.bf16.msra.mxu0 %v5323
        %5365 = vmatprep.subr.bf16.mxu0 0
        %5366 = vmatpush1.bf16.msra.mxu0 %v5322
        %5367 = vmatprep.subr.bf16.mxu0 0
        %5368 = vmatpush1.bf16.msra.mxu0 %v5321
        %5369 = vmatprep.subr.bf16.mxu0 0
        %5370 = vmatpush2.bf16.msra.mxu0 %v5336
        %5371 = vmatprep.subr.bf16.mxu0 0
        %5372 = vmatpush2.bf16.msra.mxu0 %v5335
        %5373 = vmatprep.subr.bf16.mxu0 0
        %5374 = vmatpush2.bf16.msra.mxu0 %v5334
        %5375 = vmatprep.subr.bf16.mxu0 0
        %5376 = vmatpush2.bf16.msra.mxu0 %v5333
        %5377 = vmatprep.subr.bf16.mxu0 0
        %5378 = vmatpush2.bf16.msra.mxu0 %v5332
        %5379 = vmatprep.subr.bf16.mxu0 0
        %5380 = vmatpush2.bf16.msra.mxu0 %v5331
        %5381 = vmatprep.subr.bf16.mxu0 0
        %5382 = vmatpush2.bf16.msra.mxu0 %v5330
        %5383 = vmatprep.subr.bf16.mxu0 0
        %5384 = vmatpush2.bf16.msra.mxu0 %v5329
        %5385 = vmatprep.mubr.bf16.mxu0 %v5234
        %5386 = vmatmul.mubr.bf16.gmra.mxu0 %v5233
        %v5387 = vpop.f32.mrf.mxu0
        %v5388 = vadd.f32 %v5255, %v5387
        %v5389 = vpop.f32.mrf.mxu0
        %v5390 = vpop.f32.mrf.mxu0
        %v5391 = vadd.f32 %v5255, %v5390
        %v5392 = vpop.f32.mrf.mxu0
        %5393 = vmatprep.mubr.bf16.mxu0 %v5236
        %5394 = vmatmul.mubr.bf16.gmra.mxu0 %v5235
        %v5395 = vpop.f32.mrf.mxu0
        %v5396 = vadd.f32 %v5255, %v5395
        %v5397 = vpop.f32.mrf.mxu0
        %v5398 = vpop.f32.mrf.mxu0
        %v5399 = vadd.f32 %v5255, %v5398
        %v5400 = vpop.f32.mrf.mxu0
        %5401 = vmatprep.mubr.bf16.mxu0 %v5238
        %5402 = vmatmul.mubr.bf16.gmra.mxu0 %v5237
        %v5403 = vpop.f32.mrf.mxu0
        %v5404 = vadd.f32 %v5255, %v5403
        %v5405 = vpop.f32.mrf.mxu0
        %v5406 = vpop.f32.mrf.mxu0
        %v5407 = vadd.f32 %v5255, %v5406
        %v5408 = vpop.f32.mrf.mxu0
        %5409 = vmatprep.mubr.bf16.mxu0 %v5240
        %5410 = vmatmul.mubr.bf16.gmra.mxu0 %v5239
        %v5411 = vpop.f32.mrf.mxu0
        %v5412 = vadd.f32 %v5255, %v5411
        %v5413 = vpop.f32.mrf.mxu0
        %v5414 = vpop.f32.mrf.mxu0
        %v5415 = vadd.f32 %v5255, %v5414
        %v5416 = vpop.f32.mrf.mxu0
        %5417 = vmatprep.mubr.bf16.mxu0 %v5242
        %5418 = vmatmul.mubr.bf16.gmra.mxu0 %v5241
        %v5419 = vpop.f32.mrf.mxu0
        %v5420 = vadd.f32 %v5255, %v5419
        %v5421 = vpop.f32.mrf.mxu0
        %v5422 = vpop.f32.mrf.mxu0
        %v5423 = vadd.f32 %v5255, %v5422
        %v5424 = vpop.f32.mrf.mxu0
        %5425 = vmatprep.mubr.bf16.mxu0 %v5244
        %5426 = vmatmul.mubr.bf16.gmra.mxu0 %v5243
        %v5427 = vpop.f32.mrf.mxu0
        %v5428 = vadd.f32 %v5255, %v5427
        %v5429 = vpop.f32.mrf.mxu0
        %v5430 = vpop.f32.mrf.mxu0
        %v5431 = vadd.f32 %v5255, %v5430
        %v5432 = vpop.f32.mrf.mxu0
        %5433 = vmatprep.mubr.bf16.mxu0 %v5246
        %5434 = vmatmul.mubr.bf16.gmra.mxu0 %v5245
        %v5435 = vpop.f32.mrf.mxu0
        %v5436 = vadd.f32 %v5255, %v5435
        %v5437 = vpop.f32.mrf.mxu0
        %v5438 = vpop.f32.mrf.mxu0
        %v5439 = vadd.f32 %v5255, %v5438
        %v5440 = vpop.f32.mrf.mxu0
        %5441 = vmatprep.mubr.bf16.mxu0 %v5248
        %5442 = vmatmul.mubr.bf16.gmra.mxu0 %v5247
        %v5443 = vpop.f32.mrf.mxu0
        %v5444 = vadd.f32 %v5255, %v5443
        %v5445 = vpop.f32.mrf.mxu0
        %v5446 = vpop.f32.mrf.mxu0
        %v5447 = vadd.f32 %v5255, %v5446
        %v5448 = vpop.f32.mrf.mxu0
        %5449 = vdwg.mxu0
        %v5450 = vadd.f32 %v4921, %v5388
        %v5451 = vadd.f32 %v4922, %v5391
        %v5452 = vadd.f32 %v4923, %v5396
        %v5453 = vadd.f32 %v4924, %v5399
        %v5454 = vadd.f32 %v4925, %v5404
        %v5455 = vadd.f32 %v4926, %v5407
        %v5456 = vadd.f32 %v4927, %v5412
        %v5457 = vadd.f32 %v4928, %v5415
        %v5458 = vadd.f32 %v4929, %v5420
        %v5459 = vadd.f32 %v4930, %v5423
        %v5460 = vadd.f32 %v4931, %v5428
        %v5461 = vadd.f32 %v4932, %v5431
        %v5462 = vadd.f32 %v4933, %v5436
        %v5463 = vadd.f32 %v4934, %v5439
        %v5464 = vadd.f32 %v4935, %v5444
        %v5465 = vadd.f32 %v4936, %v5447
        %5466 = vadd.xlane.f32.xlu0 %v5450
        %v5467 = vpop.xlane.xlu0 %5466
        %5468 = vadd.xlane.f32.xlu0 %v5451
        %v5469 = vpop.xlane.xlu0 %5468
        %5470 = vadd.xlane.f32.xlu0 %v5452
        %v5471 = vpop.xlane.xlu0 %5470
        %5472 = vadd.xlane.f32.xlu0 %v5453
        %v5473 = vpop.xlane.xlu0 %5472
        %5474 = vadd.xlane.f32.xlu0 %v5454
        %v5475 = vpop.xlane.xlu0 %5474
        %5476 = vadd.xlane.f32.xlu0 %v5455
        %v5477 = vpop.xlane.xlu0 %5476
        %5478 = vadd.xlane.f32.xlu0 %v5456
        %v5479 = vpop.xlane.xlu0 %5478
        %5480 = vadd.xlane.f32.xlu0 %v5457
        %v5481 = vpop.xlane.xlu0 %5480
        %5482 = vadd.xlane.f32.xlu0 %v5458
        %v5483 = vpop.xlane.xlu0 %5482
        %5484 = vadd.xlane.f32.xlu0 %v5459
        %v5485 = vpop.xlane.xlu0 %5484
        %5486 = vadd.xlane.f32.xlu0 %v5460
        %v5487 = vpop.xlane.xlu0 %5486
        %5488 = vadd.xlane.f32.xlu0 %v5461
        %v5489 = vpop.xlane.xlu0 %5488
        %5490 = vadd.xlane.f32.xlu0 %v5462
        %v5491 = vpop.xlane.xlu0 %5490
        %5492 = vadd.xlane.f32.xlu0 %v5463
        %v5493 = vpop.xlane.xlu0 %5492
        %5494 = vadd.xlane.f32.xlu0 %v5464
        %v5495 = vpop.xlane.xlu0 %5494
        %5496 = vadd.xlane.f32.xlu0 %v5465
        %v5497 = vpop.xlane.xlu0 %5496
        %v5498 = vmul.f32 %v5467, %v2808
        %v5499 = vmul.f32 %v5469, %v2808
        %v5500 = vmul.f32 %v5471, %v2808
        %v5501 = vmul.f32 %v5473, %v2808
        %v5502 = vmul.f32 %v5475, %v2808
        %v5503 = vmul.f32 %v5477, %v2808
        %v5504 = vmul.f32 %v5479, %v2808
        %v5505 = vmul.f32 %v5481, %v2808
        %v5506 = vmul.f32 %v5483, %v2808
        %v5507 = vmul.f32 %v5485, %v2808
        %v5508 = vmul.f32 %v5487, %v2808
        %v5509 = vmul.f32 %v5489, %v2808
        %v5510 = vmul.f32 %v5491, %v2808
        %v5511 = vmul.f32 %v5493, %v2808
        %v5512 = vmul.f32 %v5495, %v2808
        %v5513 = vmul.f32 %v5497, %v2808
        %v5514 = vsub.f32 %v5450, %v5498
        %v5515 = vsub.f32 %v5451, %v5499
        %v5516 = vsub.f32 %v5452, %v5500
        %v5517 = vsub.f32 %v5453, %v5501
        %v5518 = vsub.f32 %v5454, %v5502
        %v5519 = vsub.f32 %v5455, %v5503
        %v5520 = vsub.f32 %v5456, %v5504
        %v5521 = vsub.f32 %v5457, %v5505
        %v5522 = vsub.f32 %v5458, %v5506
        %v5523 = vsub.f32 %v5459, %v5507
        %v5524 = vsub.f32 %v5460, %v5508
        %v5525 = vsub.f32 %v5461, %v5509
        %v5526 = vsub.f32 %v5462, %v5510
        %v5527 = vsub.f32 %v5463, %v5511
        %v5528 = vsub.f32 %v5464, %v5512
        %v5529 = vsub.f32 %v5465, %v5513
        %v5530 = vmul.f32 %v5514, %v5514
        %v5531 = vmul.f32 %v5515, %v5515
        %v5532 = vmul.f32 %v5516, %v5516
        %v5533 = vmul.f32 %v5517, %v5517
        %v5534 = vmul.f32 %v5518, %v5518
        %v5535 = vmul.f32 %v5519, %v5519
        %v5536 = vmul.f32 %v5520, %v5520
        %v5537 = vmul.f32 %v5521, %v5521
        %v5538 = vmul.f32 %v5522, %v5522
        %v5539 = vmul.f32 %v5523, %v5523
        %v5540 = vmul.f32 %v5524, %v5524
        %v5541 = vmul.f32 %v5525, %v5525
        %v5542 = vmul.f32 %v5526, %v5526
        %v5543 = vmul.f32 %v5527, %v5527
        %v5544 = vmul.f32 %v5528, %v5528
        %v5545 = vmul.f32 %v5529, %v5529
        %5546 = vadd.xlane.f32.xlu0 %v5530
        %v5547 = vpop.xlane.xlu0 %5546
        %5548 = vadd.xlane.f32.xlu0 %v5531
        %v5549 = vpop.xlane.xlu0 %5548
        %5550 = vadd.xlane.f32.xlu0 %v5532
        %v5551 = vpop.xlane.xlu0 %5550
        %5552 = vadd.xlane.f32.xlu0 %v5533
        %v5553 = vpop.xlane.xlu0 %5552
        %5554 = vadd.xlane.f32.xlu0 %v5534
        %v5555 = vpop.xlane.xlu0 %5554
        %5556 = vadd.xlane.f32.xlu0 %v5535
        %v5557 = vpop.xlane.xlu0 %5556
        %5558 = vadd.xlane.f32.xlu0 %v5536
        %v5559 = vpop.xlane.xlu0 %5558
        %5560 = vadd.xlane.f32.xlu0 %v5537
        %v5561 = vpop.xlane.xlu0 %5560
        %5562 = vadd.xlane.f32.xlu0 %v5538
        %v5563 = vpop.xlane.xlu0 %5562
        %5564 = vadd.xlane.f32.xlu0 %v5539
        %v5565 = vpop.xlane.xlu0 %5564
        %5566 = vadd.xlane.f32.xlu0 %v5540
        %v5567 = vpop.xlane.xlu0 %5566
        %5568 = vadd.xlane.f32.xlu0 %v5541
        %v5569 = vpop.xlane.xlu0 %5568
        %5570 = vadd.xlane.f32.xlu0 %v5542
        %v5571 = vpop.xlane.xlu0 %5570
        %5572 = vadd.xlane.f32.xlu0 %v5543
        %v5573 = vpop.xlane.xlu0 %5572
        %5574 = vadd.xlane.f32.xlu0 %v5544
        %v5575 = vpop.xlane.xlu0 %5574
        %5576 = vadd.xlane.f32.xlu0 %v5545
        %v5577 = vpop.xlane.xlu0 %5576
        %v5578 = vmul.f32 %v5547, %v2808
        %v5579 = vmul.f32 %v5549, %v2808
        %v5580 = vmul.f32 %v5551, %v2808
        %v5581 = vmul.f32 %v5553, %v2808
        %v5582 = vmul.f32 %v5555, %v2808
        %v5583 = vmul.f32 %v5557, %v2808
        %v5584 = vmul.f32 %v5559, %v2808
        %v5585 = vmul.f32 %v5561, %v2808
        %v5586 = vmul.f32 %v5563, %v2808
        %v5587 = vmul.f32 %v5565, %v2808
        %v5588 = vmul.f32 %v5567, %v2808
        %v5589 = vmul.f32 %v5569, %v2808
        %v5590 = vmul.f32 %v5571, %v2808
        %v5591 = vmul.f32 %v5573, %v2808
        %v5592 = vmul.f32 %v5575, %v2808
        %v5593 = vmul.f32 %v5577, %v2808
        %v5594 = vadd.f32 %v5578, 1e-05
        %v5595 = vadd.f32 %v5579, 1e-05
        %v5596 = vadd.f32 %v5580, 1e-05
        %v5597 = vadd.f32 %v5581, 1e-05
        %v5598 = vadd.f32 %v5582, 1e-05
        %v5599 = vadd.f32 %v5583, 1e-05
        %v5600 = vadd.f32 %v5584, 1e-05
        %v5601 = vadd.f32 %v5585, 1e-05
        %v5602 = vadd.f32 %v5586, 1e-05
        %v5603 = vadd.f32 %v5587, 1e-05
        %v5604 = vadd.f32 %v5588, 1e-05
        %v5605 = vadd.f32 %v5589, 1e-05
        %v5606 = vadd.f32 %v5590, 1e-05
        %v5607 = vadd.f32 %v5591, 1e-05
        %v5608 = vadd.f32 %v5592, 1e-05
        %v5609 = vadd.f32 %v5593, 1e-05
        %v5610 = vrsqrt.pop %v5594
        %v5611 = vrsqrt.pop %v5595
        %v5612 = vrsqrt.pop %v5596
        %v5613 = vrsqrt.pop %v5597
        %v5614 = vrsqrt.pop %v5598
        %v5615 = vrsqrt.pop %v5599
        %v5616 = vrsqrt.pop %v5600
        %v5617 = vrsqrt.pop %v5601
        %v5618 = vrsqrt.pop %v5602
        %v5619 = vrsqrt.pop %v5603
        %v5620 = vrsqrt.pop %v5604
        %v5621 = vrsqrt.pop %v5605
        %v5622 = vrsqrt.pop %v5606
        %v5623 = vrsqrt.pop %v5607
        %v5624 = vrsqrt.pop %v5608
        %v5625 = vrsqrt.pop %v5609
        %v5626 = vmul.f32 %v5514, %v5610
        %v5627 = vmul.f32 %v5515, %v5611
        %v5628 = vmul.f32 %v5516, %v5612
        %v5629 = vmul.f32 %v5517, %v5613
        %v5630 = vmul.f32 %v5518, %v5614
        %v5631 = vmul.f32 %v5519, %v5615
        %v5632 = vmul.f32 %v5520, %v5616
        %v5633 = vmul.f32 %v5521, %v5617
        %v5634 = vmul.f32 %v5522, %v5618
        %v5635 = vmul.f32 %v5523, %v5619
        %v5636 = vmul.f32 %v5524, %v5620
        %v5637 = vmul.f32 %v5525, %v5621
        %v5638 = vmul.f32 %v5526, %v5622
        %v5639 = vmul.f32 %v5527, %v5623
        %v5640 = vmul.f32 %v5528, %v5624
        %v5641 = vmul.f32 %v5529, %v5625
        %v5642 = vlaneseq
        %v5643 = vshrl.u32 %v5642, 7
        %v5644 = vsub.s32 2, %v5643
        %v5645 = vrot.slane %v4704, %v5644
        %v5646 = vmul.f32 %v5626, %v5645
        %v5647 = vmul.f32 %v5627, %v5645
        %v5648 = vmul.f32 %v5628, %v5645
        %v5649 = vmul.f32 %v5629, %v5645
        %v5650 = vmul.f32 %v5630, %v5645
        %v5651 = vmul.f32 %v5631, %v5645
        %v5652 = vmul.f32 %v5632, %v5645
        %v5653 = vmul.f32 %v5633, %v5645
        %v5654 = vmul.f32 %v5634, %v5645
        %v5655 = vmul.f32 %v5635, %v5645
        %v5656 = vmul.f32 %v5636, %v5645
        %v5657 = vmul.f32 %v5637, %v5645
        %v5658 = vmul.f32 %v5638, %v5645
        %v5659 = vmul.f32 %v5639, %v5645
        %v5660 = vmul.f32 %v5640, %v5645
        %v5661 = vmul.f32 %v5641, %v5645
        %v5662 = vlaneseq
        %v5663 = vshrl.u32 %v5662, 7
        %v5664 = vsub.s32 3, %v5663
        %v5665 = vrot.slane %v4704, %v5664
        %v5666 = vadd.f32 %v5646, %v5665
        %v5667 = vadd.f32 %v5647, %v5665
        %v5668 = vadd.f32 %v5648, %v5665
        %v5669 = vadd.f32 %v5649, %v5665
        %v5670 = vadd.f32 %v5650, %v5665
        %v5671 = vadd.f32 %v5651, %v5665
        %v5672 = vadd.f32 %v5652, %v5665
        %v5673 = vadd.f32 %v5653, %v5665
        %v5674 = vadd.f32 %v5654, %v5665
        %v5675 = vadd.f32 %v5655, %v5665
        %v5676 = vadd.f32 %v5656, %v5665
        %v5677 = vadd.f32 %v5657, %v5665
        %v5678 = vadd.f32 %v5658, %v5665
        %v5679 = vadd.f32 %v5659, %v5665
        %v5680 = vadd.f32 %v5660, %v5665
        %v5681 = vadd.f32 %v5661, %v5665
        %v5682 = vld [vmem:[%s18] sm:$0xf]
        %v5683 = vld [vmem:[%s18 + $0x4] sm:$0xf]
        %v5684 = vld [vmem:[%s18 + $0x8] sm:$0xf]
        %v5685 = vld [vmem:[%s18 + $0xc] sm:$0xf]
        %v5686 = vld [vmem:[%s18 + $0x10] sm:$0xf]
        %v5687 = vld [vmem:[%s18 + $0x14] sm:$0xf]
        %v5688 = vld [vmem:[%s18 + $0x18] sm:$0xf]
        %v5689 = vld [vmem:[%s18 + $0x1c] sm:$0xf]
        %v5690 = vld [vmem:[%s18 + $0x20] sm:$0xf]
        %v5691 = vld [vmem:[%s18 + $0x24] sm:$0xf]
        %v5692 = vld [vmem:[%s18 + $0x28] sm:$0xf]
        %v5693 = vld [vmem:[%s18 + $0x2c] sm:$0xf]
        %v5694 = vld [vmem:[%s18 + $0x30] sm:$0xf]
        %v5695 = vld [vmem:[%s18 + $0x34] sm:$0xf]
        %v5696 = vld [vmem:[%s18 + $0x38] sm:$0xf]
        %v5697 = vld [vmem:[%s18 + $0x3c] sm:$0xf]
        %v5698 = vpack.c.bf16 %v5667, %v5666
        %v5699 = vpack.c.bf16 %v5669, %v5668
        %v5700 = vpack.c.bf16 %v5671, %v5670
        %v5701 = vpack.c.bf16 %v5673, %v5672
        %v5702 = vpack.c.bf16 %v5675, %v5674
        %v5703 = vpack.c.bf16 %v5677, %v5676
        %v5704 = vpack.c.bf16 %v5679, %v5678
        %v5705 = vpack.c.bf16 %v5681, %v5680
        %v5706 = vld [vmem:[#allocation2] sm:$0x1]
        %v5708 = vlaneseq
        %v5709 = vshrl.u32 %v5708, 7
        %v5710 = vsub.s32 0, %v5709
        %v5711 = vrot.slane %v5706, %v5710
        %v5729 = vunpack.c.l.b16 %v5682
        %v5730 = vunpack.c.l.b16 %v5683
        %v5731 = vunpack.c.l.b16 %v5684
        %v5732 = vunpack.c.l.b16 %v5685
        %v5733 = vunpack.c.l.b16 %v5686
        %v5734 = vunpack.c.l.b16 %v5687
        %v5735 = vunpack.c.l.b16 %v5688
        %v5736 = vunpack.c.l.b16 %v5689
        %v5737 = vunpack.c.l.b16 %v5690
        %v5738 = vunpack.c.l.b16 %v5691
        %v5739 = vunpack.c.l.b16 %v5692
        %v5740 = vunpack.c.l.b16 %v5693
        %v5741 = vunpack.c.l.b16 %v5694
        %v5742 = vunpack.c.l.b16 %v5695
        %v5743 = vunpack.c.l.b16 %v5696
        %v5744 = vunpack.c.l.b16 %v5697
        %v5745 = vpack.c.b16 %v5730, %v5729
        %v5746 = vpack.c.b16 %v5732, %v5731
        %v5747 = vpack.c.b16 %v5734, %v5733
        %v5748 = vpack.c.b16 %v5736, %v5735
        %v5749 = vpack.c.b16 %v5738, %v5737
        %v5750 = vpack.c.b16 %v5740, %v5739
        %v5751 = vpack.c.b16 %v5742, %v5741
        %v5752 = vpack.c.b16 %v5744, %v5743
        %5761 = vmatprep.subr.bf16.mxu0 0
        %5762 = vmatpush1.bf16.msra.mxu0 %v5752
        %5763 = vmatprep.subr.bf16.mxu0 0
        %5764 = vmatpush1.bf16.msra.mxu0 %v5751
        %5765 = vmatprep.subr.bf16.mxu0 0
        %5766 = vmatpush1.bf16.msra.mxu0 %v5750
        %5767 = vmatprep.subr.bf16.mxu0 0
        %5768 = vmatpush1.bf16.msra.mxu0 %v5749
        %5769 = vmatprep.subr.bf16.mxu0 0
        %5770 = vmatpush1.bf16.msra.mxu0 %v5748
        %5771 = vmatprep.subr.bf16.mxu0 0
        %5772 = vmatpush1.bf16.msra.mxu0 %v5747
        %5773 = vmatprep.subr.bf16.mxu0 0
        %5774 = vmatpush1.bf16.msra.mxu0 %v5746
        %5775 = vmatprep.subr.bf16.mxu0 0
        %5776 = vmatpush1.bf16.msra.mxu0 %v5745
        %5777 = vmatprep.subr.bf16.mxu0 0
        %5778 = vmatpush2.bf16.msra.mxu0 0
        %5779 = vmatprep.subr.bf16.mxu0 0
        %5780 = vmatpush2.bf16.msra.mxu0 0
        %5781 = vmatprep.subr.bf16.mxu0 0
        %5782 = vmatpush2.bf16.msra.mxu0 0
        %5783 = vmatprep.subr.bf16.mxu0 0
        %5784 = vmatpush2.bf16.msra.mxu0 0
        %5785 = vmatprep.subr.bf16.mxu0 0
        %5786 = vmatpush2.bf16.msra.mxu0 0
        %5787 = vmatprep.subr.bf16.mxu0 0
        %5788 = vmatpush2.bf16.msra.mxu0 0
        %5789 = vmatprep.subr.bf16.mxu0 0
        %5790 = vmatpush2.bf16.msra.mxu0 0
        %5791 = vmatprep.subr.bf16.mxu0 0
        %5792 = vmatpush2.bf16.msra.mxu0 0
        %5793 = vmatprep.mubr.bf16.mxu0 0
        %5794 = vmatmul.mubr.bf16.gmra.mxu0 %v5698
        %v5795 = vpop.f32.mrf.mxu0
        %v5796 = vadd.f32 %v5711, %v5795
        %v5797 = vpop.f32.mrf.mxu0
        %v5798 = vpop.f32.mrf.mxu0
        %v5799 = vadd.f32 %v5711, %v5798
        %v5800 = vpop.f32.mrf.mxu0
        %5801 = vmatprep.mubr.bf16.mxu0 0
        %5802 = vmatmul.mubr.bf16.gmra.mxu0 %v5699
        %v5803 = vpop.f32.mrf.mxu0
        %v5804 = vadd.f32 %v5711, %v5803
        %v5805 = vpop.f32.mrf.mxu0
        %v5806 = vpop.f32.mrf.mxu0
        %v5807 = vadd.f32 %v5711, %v5806
        %v5808 = vpop.f32.mrf.mxu0
        %5809 = vmatprep.mubr.bf16.mxu0 0
        %5810 = vmatmul.mubr.bf16.gmra.mxu0 %v5700
        %v5811 = vpop.f32.mrf.mxu0
        %v5812 = vadd.f32 %v5711, %v5811
        %v5813 = vpop.f32.mrf.mxu0
        %v5814 = vpop.f32.mrf.mxu0
        %v5815 = vadd.f32 %v5711, %v5814
        %v5816 = vpop.f32.mrf.mxu0
        %5817 = vmatprep.mubr.bf16.mxu0 0
        %5818 = vmatmul.mubr.bf16.gmra.mxu0 %v5701
        %v5819 = vpop.f32.mrf.mxu0
        %v5820 = vadd.f32 %v5711, %v5819
        %v5821 = vpop.f32.mrf.mxu0
        %v5822 = vpop.f32.mrf.mxu0
        %v5823 = vadd.f32 %v5711, %v5822
        %v5824 = vpop.f32.mrf.mxu0
        %5825 = vmatprep.mubr.bf16.mxu0 0
        %5826 = vmatmul.mubr.bf16.gmra.mxu0 %v5702
        %v5827 = vpop.f32.mrf.mxu0
        %v5828 = vadd.f32 %v5711, %v5827
        %v5829 = vpop.f32.mrf.mxu0
        %v5830 = vpop.f32.mrf.mxu0
        %v5831 = vadd.f32 %v5711, %v5830
        %v5832 = vpop.f32.mrf.mxu0
        %5833 = vmatprep.mubr.bf16.mxu0 0
        %5834 = vmatmul.mubr.bf16.gmra.mxu0 %v5703
        %v5835 = vpop.f32.mrf.mxu0
        %v5836 = vadd.f32 %v5711, %v5835
        %v5837 = vpop.f32.mrf.mxu0
        %v5838 = vpop.f32.mrf.mxu0
        %v5839 = vadd.f32 %v5711, %v5838
        %v5840 = vpop.f32.mrf.mxu0
        %5841 = vmatprep.mubr.bf16.mxu0 0
        %5842 = vmatmul.mubr.bf16.gmra.mxu0 %v5704
        %v5843 = vpop.f32.mrf.mxu0
        %v5844 = vadd.f32 %v5711, %v5843
        %v5845 = vpop.f32.mrf.mxu0
        %v5846 = vpop.f32.mrf.mxu0
        %v5847 = vadd.f32 %v5711, %v5846
        %v5848 = vpop.f32.mrf.mxu0
        %5849 = vmatprep.mubr.bf16.mxu0 0
        %5850 = vmatmul.mubr.bf16.gmra.mxu0 %v5705
        %v5851 = vpop.f32.mrf.mxu0
        %v5852 = vadd.f32 %v5711, %v5851
        %v5853 = vpop.f32.mrf.mxu0
        %v5854 = vpop.f32.mrf.mxu0
        %v5855 = vadd.f32 %v5711, %v5854
        %v5856 = vpop.f32.mrf.mxu0
        %5857 = vdwg.mxu0
        %v5858 = vsub.f32 %v5796, %v5828
        %v5859 = vsub.f32 %v5799, %v5831
        %v5860 = vsub.f32 %v5804, %v5836
        %v5861 = vsub.f32 %v5807, %v5839
        %v5862 = vsub.f32 %v5812, %v5844
        %v5863 = vsub.f32 %v5815, %v5847
        %v5864 = vsub.f32 %v5820, %v5852
        %v5865 = vsub.f32 %v5823, %v5855
        %v5866 = vsub.f32 0.0, %v5858
        %v5867 = vsub.f32 0.0, %v5859
        %v5868 = vsub.f32 0.0, %v5860
        %v5869 = vsub.f32 0.0, %v5861
        %v5870 = vsub.f32 0.0, %v5862
        %v5871 = vsub.f32 0.0, %v5863
        %v5872 = vsub.f32 0.0, %v5864
        %v5873 = vsub.f32 0.0, %v5865
        %v5874 = vmul.f32 %v5866, 1.442695
        %v5875 = vpow.pop %v5874
        %v5876 = vmul.f32 %v5867, 1.442695
        %v5877 = vpow.pop %v5876
        %v5878 = vmul.f32 %v5868, 1.442695
        %v5879 = vpow.pop %v5878
        %v5880 = vmul.f32 %v5869, 1.442695
        %v5881 = vpow.pop %v5880
        %v5882 = vmul.f32 %v5870, 1.442695
        %v5883 = vpow.pop %v5882
        %v5884 = vmul.f32 %v5871, 1.442695
        %v5885 = vpow.pop %v5884
        %v5886 = vmul.f32 %v5872, 1.442695
        %v5887 = vpow.pop %v5886
        %v5888 = vmul.f32 %v5873, 1.442695
        %v5889 = vpow.pop %v5888
        %v5890 = vadd.f32 %v5875, 1.0
        %v5891 = vadd.f32 %v5877, 1.0
        %v5892 = vadd.f32 %v5879, 1.0
        %v5893 = vadd.f32 %v5881, 1.0
        %v5894 = vadd.f32 %v5883, 1.0
        %v5895 = vadd.f32 %v5885, 1.0
        %v5896 = vadd.f32 %v5887, 1.0
        %v5897 = vadd.f32 %v5889, 1.0
        %v5898 = vrcp.pop %v5890
        %v5899 = vrcp.pop %v5891
        %v5900 = vrcp.pop %v5892
        %v5901 = vrcp.pop %v5893
        %v5902 = vrcp.pop %v5894
        %v5903 = vrcp.pop %v5895
        %v5904 = vrcp.pop %v5896
        %v5905 = vrcp.pop %v5897
        %v5906 = vsub.f32 %v5666, %v5674
        %v5907 = vsub.f32 %v5667, %v5675
        %v5908 = vsub.f32 %v5668, %v5676
        %v5909 = vsub.f32 %v5669, %v5677
        %v5910 = vsub.f32 %v5670, %v5678
        %v5911 = vsub.f32 %v5671, %v5679
        %v5912 = vsub.f32 %v5672, %v5680
        %v5913 = vsub.f32 %v5673, %v5681
        %5915 = vset.pattern.permute.xlu0 0
        %5916 = vperm.xlu0 %5915, %v5898
        %v5917 = vpop.permute.xlu0 %5916
        %5920 = vset.pattern.permute.xlu0 0
        %5921 = vperm.xlu0 %5920, %v5899
        %v5922 = vpop.permute.xlu0 %5921
        %5925 = vset.pattern.permute.xlu0 0
        %5926 = vperm.xlu0 %5925, %v5900
        %v5927 = vpop.permute.xlu0 %5926
        %5930 = vset.pattern.permute.xlu0 0
        %5931 = vperm.xlu0 %5930, %v5901
        %v5932 = vpop.permute.xlu0 %5931
        %5935 = vset.pattern.permute.xlu0 0
        %5936 = vperm.xlu0 %5935, %v5902
        %v5937 = vpop.permute.xlu0 %5936
        %5940 = vset.pattern.permute.xlu0 0
        %5941 = vperm.xlu0 %5940, %v5903
        %v5942 = vpop.permute.xlu0 %5941
        %5945 = vset.pattern.permute.xlu0 0
        %5946 = vperm.xlu0 %5945, %v5904
        %v5947 = vpop.permute.xlu0 %5946
        %5950 = vset.pattern.permute.xlu0 0
        %5951 = vperm.xlu0 %5950, %v5905
        %v5952 = vpop.permute.xlu0 %5951
        %v5954 = vmul.f32 %v5917, %v5906
        %v5955 = vmul.f32 %v5922, %v5907
        %v5956 = vmul.f32 %v5927, %v5908
        %v5957 = vmul.f32 %v5932, %v5909
        %v5958 = vmul.f32 %v5937, %v5910
        %v5959 = vmul.f32 %v5942, %v5911
        %v5960 = vmul.f32 %v5947, %v5912
        %v5961 = vmul.f32 %v5952, %v5913
        %v5962 = vadd.f32 %v5674, %v5954
        %v5963 = vadd.f32 %v5675, %v5955
        %v5964 = vadd.f32 %v5676, %v5956
        %v5965 = vadd.f32 %v5677, %v5957
        %v5966 = vadd.f32 %v5678, %v5958
        %v5967 = vadd.f32 %v5679, %v5959
        %v5968 = vadd.f32 %v5680, %v5960
        %v5969 = vadd.f32 %v5681, %v5961
        %v5970 = vld [vmem:[#allocation24] sm:$0xf]
        %v5971 = vld [vmem:[#allocation24 + $0x4] sm:$0xf]
        %v5972 = vld [vmem:[#allocation24 + $0x8] sm:$0xf]
        %v5973 = vld [vmem:[#allocation24 + $0xc] sm:$0xf]
        %v5974 = vld [vmem:[#allocation24 + $0x10] sm:$0xf]
        %v5975 = vld [vmem:[#allocation24 + $0x14] sm:$0xf]
        %v5976 = vld [vmem:[#allocation24 + $0x18] sm:$0xf]
        %v5977 = vld [vmem:[#allocation24 + $0x1c] sm:$0xf]
        %v5978 = vld [vmem:[#allocation24 + $0x20] sm:$0xf]
        %v5979 = vld [vmem:[#allocation24 + $0x24] sm:$0xf]
        %v5980 = vld [vmem:[#allocation24 + $0x28] sm:$0xf]
        %v5981 = vld [vmem:[#allocation24 + $0x2c] sm:$0xf]
        %v5982 = vld [vmem:[#allocation24 + $0x30] sm:$0xf]
        %v5983 = vld [vmem:[#allocation24 + $0x34] sm:$0xf]
        %v5984 = vld [vmem:[#allocation24 + $0x38] sm:$0xf]
        %v5985 = vld [vmem:[#allocation24 + $0x3c] sm:$0xf]
        %v5986 = vld [vmem:[#allocation24 + $0x40] sm:$0xf]
        %v5987 = vld [vmem:[#allocation24 + $0x44] sm:$0xf]
        %v5988 = vld [vmem:[#allocation24 + $0x48] sm:$0xf]
        %v5989 = vld [vmem:[#allocation24 + $0x4c] sm:$0xf]
        %v5990 = vld [vmem:[#allocation24 + $0x50] sm:$0xf]
        %v5991 = vld [vmem:[#allocation24 + $0x54] sm:$0xf]
        %v5992 = vld [vmem:[#allocation24 + $0x58] sm:$0xf]
        %v5993 = vld [vmem:[#allocation24 + $0x5c] sm:$0xf]
        %v5994 = vld [vmem:[#allocation24 + $0x60] sm:$0xf]
        %v5995 = vld [vmem:[#allocation24 + $0x64] sm:$0xf]
        %v5996 = vld [vmem:[#allocation24 + $0x68] sm:$0xf]
        %v5997 = vld [vmem:[#allocation24 + $0x6c] sm:$0xf]
        %v5998 = vld [vmem:[#allocation24 + $0x70] sm:$0xf]
        %v5999 = vld [vmem:[#allocation24 + $0x74] sm:$0xf]
        %v6000 = vld [vmem:[#allocation24 + $0x78] sm:$0xf]
        %v6001 = vld [vmem:[#allocation24 + $0x7c] sm:$0xf]
        %v6002 = vld [vmem:[#allocation24 + $0x80] sm:$0xf]
        %v6003 = vld [vmem:[#allocation24 + $0x84] sm:$0xf]
        %v6004 = vld [vmem:[#allocation24 + $0x88] sm:$0xf]
        %v6005 = vld [vmem:[#allocation24 + $0x8c] sm:$0xf]
        %v6006 = vpack.c.bf16 %v1270, %v1269
        %v6007 = vpack.c.bf16 %v1272, %v1271
        %v6008 = vpack.c.bf16 %v1274, %v1273
        %v6009 = vpack.c.bf16 %v1276, %v1275
        %v6010 = vpack.c.bf16 %v1442, %v1441
        %v6011 = vpack.c.bf16 %v1444, %v1443
        %v6012 = vpack.c.bf16 %v1446, %v1445
        %v6013 = vpack.c.bf16 %v1448, %v1447
        %v6018 = vunpack.c.l.b16 %v5986
        %v6019 = vunpack.c.l.b16 %v5987
        %v6020 = vunpack.c.l.b16 %v5988
        %v6021 = vunpack.c.l.b16 %v5989
        %v6022 = vpack.c.b16 %v6019, %v6018
        %v6023 = vpack.c.b16 %v6021, %v6020
        %vm6026 = vcmask 261120
        %v6028 = vsel %vm6026, %v6010, 0
        %v6031 = vsel %vm6026, %v6011, 0
        %v6034 = vsel %vm6026, %v6012, 0
        %v6037 = vsel %vm6026, %v6013, 0
        %6039 = vmatprep.subr.bf16.mxu0 0
        %6040 = vmatpush1.bf16.msra.mxu0 0
        %6041 = vmatprep.subr.bf16.mxu0 0
        %6042 = vmatpush1.bf16.msra.mxu0 0
        %6043 = vmatprep.subr.bf16.mxu0 0
        %6044 = vmatpush1.bf16.msra.mxu0 0
        %6045 = vmatprep.subr.bf16.mxu0 0
        %6046 = vmatpush1.bf16.msra.mxu0 0
        %6047 = vmatprep.subr.bf16.mxu0 0
        %6048 = vmatpush1.bf16.msra.mxu0 0
        %6049 = vmatprep.subr.bf16.mxu0 0
        %6050 = vmatpush1.bf16.msra.mxu0 0
        %6051 = vmatprep.subr.bf16.mxu0 0
        %6052 = vmatpush1.bf16.msra.mxu0 %v6023
        %6053 = vmatprep.subr.bf16.mxu0 0
        %6054 = vmatpush1.bf16.msra.mxu0 %v6022
        %6055 = vmatprep.subr.bf16.mxu0 0
        %6056 = vmatpush2.bf16.msra.mxu0 0
        %6057 = vmatprep.subr.bf16.mxu0 0
        %6058 = vmatpush2.bf16.msra.mxu0 0
        %6059 = vmatprep.subr.bf16.mxu0 0
        %6060 = vmatpush2.bf16.msra.mxu0 0
        %6061 = vmatprep.subr.bf16.mxu0 0
        %6062 = vmatpush2.bf16.msra.mxu0 0
        %6063 = vmatprep.subr.bf16.mxu0 0
        %6064 = vmatpush2.bf16.msra.mxu0 0
        %6065 = vmatprep.subr.bf16.mxu0 0
        %6066 = vmatpush2.bf16.msra.mxu0 0
        %6067 = vmatprep.subr.bf16.mxu0 0
        %6068 = vmatpush2.bf16.msra.mxu0 0
        %6069 = vmatprep.subr.bf16.mxu0 0
        %6070 = vmatpush2.bf16.msra.mxu0 0
        %6071 = vmatprep.mubr.bf16.mxu0 0
        %6072 = vmatmul.mubr.bf16.gmra.mxu0 %v6028
        %v6073 = vpop.f32.mrf.mxu0
        %v6074 = vadd.f32 0.0, %v6073
        %v6075 = vpop.f32.mrf.mxu0
        %v6076 = vpop.f32.mrf.mxu0
        %v6077 = vadd.f32 0.0, %v6076
        %v6078 = vpop.f32.mrf.mxu0
        %6079 = vmatprep.mubr.bf16.mxu0 0
        %6080 = vmatmul.mubr.bf16.gmra.mxu0 %v6031
        %v6081 = vpop.f32.mrf.mxu0
        %v6082 = vadd.f32 0.0, %v6081
        %v6083 = vpop.f32.mrf.mxu0
        %v6084 = vpop.f32.mrf.mxu0
        %v6085 = vadd.f32 0.0, %v6084
        %v6086 = vpop.f32.mrf.mxu0
        %6087 = vmatprep.mubr.bf16.mxu0 0
        %6088 = vmatmul.mubr.bf16.gmra.mxu0 %v6034
        %v6089 = vpop.f32.mrf.mxu0
        %v6090 = vadd.f32 0.0, %v6089
        %v6091 = vpop.f32.mrf.mxu0
        %v6092 = vpop.f32.mrf.mxu0
        %v6093 = vadd.f32 0.0, %v6092
        %v6094 = vpop.f32.mrf.mxu0
        %6095 = vmatprep.mubr.bf16.mxu0 0
        %6096 = vmatmul.mubr.bf16.gmra.mxu0 %v6037
        %v6097 = vpop.f32.mrf.mxu0
        %v6098 = vadd.f32 0.0, %v6097
        %v6099 = vpop.f32.mrf.mxu0
        %v6100 = vpop.f32.mrf.mxu0
        %v6101 = vadd.f32 0.0, %v6100
        %v6102 = vpop.f32.mrf.mxu0
        %6103 = vdwg.mxu0
        %v6120 = vunpack.c.l.b16 %v5970
        %v6121 = vunpack.c.l.b16 %v5971
        %v6122 = vunpack.c.l.b16 %v5972
        %v6123 = vunpack.c.l.b16 %v5973
        %v6124 = vunpack.c.l.b16 %v5974
        %v6125 = vunpack.c.l.b16 %v5975
        %v6126 = vunpack.c.l.b16 %v5976
        %v6127 = vunpack.c.l.b16 %v5977
        %v6128 = vunpack.c.l.b16 %v5978
        %v6129 = vunpack.c.l.b16 %v5979
        %v6130 = vunpack.c.l.b16 %v5980
        %v6131 = vunpack.c.l.b16 %v5981
        %v6132 = vunpack.c.l.b16 %v5982
        %v6133 = vunpack.c.l.b16 %v5983
        %v6134 = vunpack.c.l.b16 %v5984
        %v6135 = vunpack.c.l.b16 %v5985
        %v6136 = vpack.c.b16 %v6121, %v6120
        %v6137 = vpack.c.b16 %v6123, %v6122
        %v6138 = vpack.c.b16 %v6125, %v6124
        %v6139 = vpack.c.b16 %v6127, %v6126
        %v6140 = vpack.c.b16 %v6129, %v6128
        %v6141 = vpack.c.b16 %v6131, %v6130
        %v6142 = vpack.c.b16 %v6133, %v6132
        %v6143 = vpack.c.b16 %v6135, %v6134
        %6152 = vmatprep.subr.bf16.mxu0 0
        %6153 = vmatpush1.bf16.msra.mxu0 %v6143
        %6154 = vmatprep.subr.bf16.mxu0 0
        %6155 = vmatpush1.bf16.msra.mxu0 %v6142
        %6156 = vmatprep.subr.bf16.mxu0 0
        %6157 = vmatpush1.bf16.msra.mxu0 %v6141
        %6158 = vmatprep.subr.bf16.mxu0 0
        %6159 = vmatpush1.bf16.msra.mxu0 %v6140
        %6160 = vmatprep.subr.bf16.mxu0 0
        %6161 = vmatpush1.bf16.msra.mxu0 %v6139
        %6162 = vmatprep.subr.bf16.mxu0 0
        %6163 = vmatpush1.bf16.msra.mxu0 %v6138
        %6164 = vmatprep.subr.bf16.mxu0 0
        %6165 = vmatpush1.bf16.msra.mxu0 %v6137
        %6166 = vmatprep.subr.bf16.mxu0 0
        %6167 = vmatpush1.bf16.msra.mxu0 %v6136
        %6168 = vmatprep.subr.bf16.mxu0 0
        %6169 = vmatpush2.bf16.msra.mxu0 0
        %6170 = vmatprep.subr.bf16.mxu0 0
        %6171 = vmatpush2.bf16.msra.mxu0 0
        %6172 = vmatprep.subr.bf16.mxu0 0
        %6173 = vmatpush2.bf16.msra.mxu0 0
        %6174 = vmatprep.subr.bf16.mxu0 0
        %6175 = vmatpush2.bf16.msra.mxu0 0
        %6176 = vmatprep.subr.bf16.mxu0 0
        %6177 = vmatpush2.bf16.msra.mxu0 0
        %6178 = vmatprep.subr.bf16.mxu0 0
        %6179 = vmatpush2.bf16.msra.mxu0 0
        %6180 = vmatprep.subr.bf16.mxu0 0
        %6181 = vmatpush2.bf16.msra.mxu0 0
        %6182 = vmatprep.subr.bf16.mxu0 0
        %6183 = vmatpush2.bf16.msra.mxu0 0
        %6184 = vmatprep.mubr.bf16.mxu0 0
        %6185 = vmatmul.mubr.bf16.gmra.mxu0 %v6006
        %v6186 = vpop.f32.mrf.mxu0
        %v6187 = vadd.f32 %v6074, %v6186
        %v6188 = vpop.f32.mrf.mxu0
        %v6189 = vpop.f32.mrf.mxu0
        %v6190 = vadd.f32 %v6077, %v6189
        %v6191 = vpop.f32.mrf.mxu0
        %6192 = vmatprep.mubr.bf16.mxu0 0
        %6193 = vmatmul.mubr.bf16.gmra.mxu0 %v6007
        %v6194 = vpop.f32.mrf.mxu0
        %v6195 = vadd.f32 %v6082, %v6194
        %v6196 = vpop.f32.mrf.mxu0
        %v6197 = vpop.f32.mrf.mxu0
        %v6198 = vadd.f32 %v6085, %v6197
        %v6199 = vpop.f32.mrf.mxu0
        %6200 = vmatprep.mubr.bf16.mxu0 0
        %6201 = vmatmul.mubr.bf16.gmra.mxu0 %v6008
        %v6202 = vpop.f32.mrf.mxu0
        %v6203 = vadd.f32 %v6090, %v6202
        %v6204 = vpop.f32.mrf.mxu0
        %v6205 = vpop.f32.mrf.mxu0
        %v6206 = vadd.f32 %v6093, %v6205
        %v6207 = vpop.f32.mrf.mxu0
        %6208 = vmatprep.mubr.bf16.mxu0 0
        %6209 = vmatmul.mubr.bf16.gmra.mxu0 %v6009
        %v6210 = vpop.f32.mrf.mxu0
        %v6211 = vadd.f32 %v6098, %v6210
        %v6212 = vpop.f32.mrf.mxu0
        %v6213 = vpop.f32.mrf.mxu0
        %v6214 = vadd.f32 %v6101, %v6213
        %v6215 = vpop.f32.mrf.mxu0
        %6216 = vdwg.mxu0
        %v6217 = vpack.c.bf16 %v5963, %v5962
        %v6218 = vpack.c.bf16 %v5965, %v5964
        %v6219 = vpack.c.bf16 %v5967, %v5966
        %v6220 = vpack.c.bf16 %v5969, %v5968
        %v6237 = vunpack.c.l.b16 %v5990
        %v6238 = vunpack.c.l.b16 %v5991
        %v6239 = vunpack.c.l.b16 %v5992
        %v6240 = vunpack.c.l.b16 %v5993
        %v6241 = vunpack.c.l.b16 %v5994
        %v6242 = vunpack.c.l.b16 %v5995
        %v6243 = vunpack.c.l.b16 %v5996
        %v6244 = vunpack.c.l.b16 %v5997
        %v6245 = vunpack.c.l.b16 %v5998
        %v6246 = vunpack.c.l.b16 %v5999
        %v6247 = vunpack.c.l.b16 %v6000
        %v6248 = vunpack.c.l.b16 %v6001
        %v6249 = vunpack.c.l.b16 %v6002
        %v6250 = vunpack.c.l.b16 %v6003
        %v6251 = vunpack.c.l.b16 %v6004
        %v6252 = vunpack.c.l.b16 %v6005
        %v6253 = vpack.c.b16 %v6238, %v6237
        %v6254 = vpack.c.b16 %v6240, %v6239
        %v6255 = vpack.c.b16 %v6242, %v6241
        %v6256 = vpack.c.b16 %v6244, %v6243
        %v6257 = vpack.c.b16 %v6246, %v6245
        %v6258 = vpack.c.b16 %v6248, %v6247
        %v6259 = vpack.c.b16 %v6250, %v6249
        %v6260 = vpack.c.b16 %v6252, %v6251
        %6269 = vmatprep.subr.bf16.mxu0 0
        %6270 = vmatpush1.bf16.msra.mxu0 %v6260
        %6271 = vmatprep.subr.bf16.mxu0 0
        %6272 = vmatpush1.bf16.msra.mxu0 %v6259
        %6273 = vmatprep.subr.bf16.mxu0 0
        %6274 = vmatpush1.bf16.msra.mxu0 %v6258
        %6275 = vmatprep.subr.bf16.mxu0 0
        %6276 = vmatpush1.bf16.msra.mxu0 %v6257
        %6277 = vmatprep.subr.bf16.mxu0 0
        %6278 = vmatpush1.bf16.msra.mxu0 %v6256
        %6279 = vmatprep.subr.bf16.mxu0 0
        %6280 = vmatpush1.bf16.msra.mxu0 %v6255
        %6281 = vmatprep.subr.bf16.mxu0 0
        %6282 = vmatpush1.bf16.msra.mxu0 %v6254
        %6283 = vmatprep.subr.bf16.mxu0 0
        %6284 = vmatpush1.bf16.msra.mxu0 %v6253
        %6285 = vmatprep.subr.bf16.mxu0 0
        %6286 = vmatpush2.bf16.msra.mxu0 0
        %6287 = vmatprep.subr.bf16.mxu0 0
        %6288 = vmatpush2.bf16.msra.mxu0 0
        %6289 = vmatprep.subr.bf16.mxu0 0
        %6290 = vmatpush2.bf16.msra.mxu0 0
        %6291 = vmatprep.subr.bf16.mxu0 0
        %6292 = vmatpush2.bf16.msra.mxu0 0
        %6293 = vmatprep.subr.bf16.mxu0 0
        %6294 = vmatpush2.bf16.msra.mxu0 0
        %6295 = vmatprep.subr.bf16.mxu0 0
        %6296 = vmatpush2.bf16.msra.mxu0 0
        %6297 = vmatprep.subr.bf16.mxu0 0
        %6298 = vmatpush2.bf16.msra.mxu0 0
        %6299 = vmatprep.subr.bf16.mxu0 0
        %6300 = vmatpush2.bf16.msra.mxu0 0
        %6301 = vmatprep.mubr.bf16.mxu0 0
        %6302 = vmatmul.mubr.bf16.gmra.mxu0 %v6217
        %v6303 = vpop.f32.mrf.mxu0
        %v6304 = vadd.f32 0.0, %v6303
        %v6305 = vpop.f32.mrf.mxu0
        %v6306 = vpop.f32.mrf.mxu0
        %v6307 = vadd.f32 0.0, %v6306
        %v6308 = vpop.f32.mrf.mxu0
        %6309 = vmatprep.mubr.bf16.mxu0 0
        %6310 = vmatmul.mubr.bf16.gmra.mxu0 %v6218
        %v6311 = vpop.f32.mrf.mxu0
        %v6312 = vadd.f32 0.0, %v6311
        %v6313 = vpop.f32.mrf.mxu0
        %v6314 = vpop.f32.mrf.mxu0
        %v6315 = vadd.f32 0.0, %v6314
        %v6316 = vpop.f32.mrf.mxu0
        %6317 = vmatprep.mubr.bf16.mxu0 0
        %6318 = vmatmul.mubr.bf16.gmra.mxu0 %v6219
        %v6319 = vpop.f32.mrf.mxu0
        %v6320 = vadd.f32 0.0, %v6319
        %v6321 = vpop.f32.mrf.mxu0
        %v6322 = vpop.f32.mrf.mxu0
        %v6323 = vadd.f32 0.0, %v6322
        %v6324 = vpop.f32.mrf.mxu0
        %6325 = vmatprep.mubr.bf16.mxu0 0
        %6326 = vmatmul.mubr.bf16.gmra.mxu0 %v6220
        %v6327 = vpop.f32.mrf.mxu0
        %v6328 = vadd.f32 0.0, %v6327
        %v6329 = vpop.f32.mrf.mxu0
        %v6330 = vpop.f32.mrf.mxu0
        %v6331 = vadd.f32 0.0, %v6330
        %v6332 = vpop.f32.mrf.mxu0
        %6333 = vdwg.mxu0
        %v6334 = vadd.f32 %v6187, %v6304
        %v6335 = vadd.f32 %v6190, %v6307
        %v6336 = vadd.f32 %v6195, %v6312
        %v6337 = vadd.f32 %v6198, %v6315
        %v6338 = vadd.f32 %v6203, %v6320
        %v6339 = vadd.f32 %v6206, %v6323
        %v6340 = vadd.f32 %v6211, %v6328
        %v6341 = vadd.f32 %v6214, %v6331
        %v6342 = vld [vmem:[%s21] sm:$0x1]
        %v6344 = vlaneseq
        %v6345 = vshrl.u32 %v6344, 7
        %v6346 = vsub.s32 0, %v6345
        %v6347 = vrot.slane %v6342, %v6346
        %v6349 = vadd.f32 %v6334, %v6347
        %v6350 = vadd.f32 %v6335, %v6347
        %v6351 = vadd.f32 %v6336, %v6347
        %v6352 = vadd.f32 %v6337, %v6347
        %v6353 = vadd.f32 %v6338, %v6347
        %v6354 = vadd.f32 %v6339, %v6347
        %v6355 = vadd.f32 %v6340, %v6347
        %v6356 = vadd.f32 %v6341, %v6347
        %v6357 = vmax.f32 %v6349, 0.0
        %v6358 = vmax.f32 %v6350, 0.0
        %v6359 = vmax.f32 %v6351, 0.0
        %v6360 = vmax.f32 %v6352, 0.0
        %v6361 = vmax.f32 %v6353, 0.0
        %v6362 = vmax.f32 %v6354, 0.0
        %v6363 = vmax.f32 %v6355, 0.0
        %v6364 = vmax.f32 %v6356, 0.0
        %v6365 = vld [vmem:[%s22] sm:$0xf]
        %v6366 = vld [vmem:[%s22 + $0x4] sm:$0xf]
        %v6367 = vld [vmem:[%s22 + $0x8] sm:$0xf]
        %v6368 = vld [vmem:[%s22 + $0xc] sm:$0xf]
        %v6369 = vld [vmem:[%s22 + $0x10] sm:$0xf]
        %v6370 = vld [vmem:[%s22 + $0x14] sm:$0xf]
        %v6371 = vld [vmem:[%s22 + $0x18] sm:$0xf]
        %v6372 = vld [vmem:[%s22 + $0x1c] sm:$0xf]
        %v6373 = vld [vmem:[%s22 + $0x20] sm:$0xf]
        %v6374 = vld [vmem:[%s22 + $0x24] sm:$0xf]
        %v6375 = vld [vmem:[%s22 + $0x28] sm:$0xf]
        %v6376 = vld [vmem:[%s22 + $0x2c] sm:$0xf]
        %v6377 = vld [vmem:[%s22 + $0x30] sm:$0xf]
        %v6378 = vld [vmem:[%s22 + $0x34] sm:$0xf]
        %v6379 = vld [vmem:[%s22 + $0x38] sm:$0xf]
        %v6380 = vld [vmem:[%s22 + $0x3c] sm:$0xf]
        %v6381 = vpack.c.bf16 %v6358, %v6357
        %v6382 = vpack.c.bf16 %v6360, %v6359
        %v6383 = vpack.c.bf16 %v6362, %v6361
        %v6384 = vpack.c.bf16 %v6364, %v6363
        %v6385 = vld [vmem:[%s23] sm:$0x1]
        %v6387 = vlaneseq
        %v6388 = vshrl.u32 %v6387, 7
        %v6389 = vsub.s32 0, %v6388
        %v6390 = vrot.slane %v6385, %v6389
        %v6408 = vunpack.c.l.b16 %v6365
        %v6409 = vunpack.c.l.b16 %v6366
        %v6410 = vunpack.c.l.b16 %v6367
        %v6411 = vunpack.c.l.b16 %v6368
        %v6412 = vunpack.c.l.b16 %v6369
        %v6413 = vunpack.c.l.b16 %v6370
        %v6414 = vunpack.c.l.b16 %v6371
        %v6415 = vunpack.c.l.b16 %v6372
        %v6416 = vunpack.c.l.b16 %v6373
        %v6417 = vunpack.c.l.b16 %v6374
        %v6418 = vunpack.c.l.b16 %v6375
        %v6419 = vunpack.c.l.b16 %v6376
        %v6420 = vunpack.c.l.b16 %v6377
        %v6421 = vunpack.c.l.b16 %v6378
        %v6422 = vunpack.c.l.b16 %v6379
        %v6423 = vunpack.c.l.b16 %v6380
        %v6424 = vpack.c.b16 %v6409, %v6408
        %v6425 = vpack.c.b16 %v6411, %v6410
        %v6426 = vpack.c.b16 %v6413, %v6412
        %v6427 = vpack.c.b16 %v6415, %v6414
        %v6428 = vpack.c.b16 %v6417, %v6416
        %v6429 = vpack.c.b16 %v6419, %v6418
        %v6430 = vpack.c.b16 %v6421, %v6420
        %v6431 = vpack.c.b16 %v6423, %v6422
        %6440 = vmatprep.subr.bf16.mxu0 0
        %6441 = vmatpush1.bf16.msra.mxu0 %v6431
        %6442 = vmatprep.subr.bf16.mxu0 0
        %6443 = vmatpush1.bf16.msra.mxu0 %v6430
        %6444 = vmatprep.subr.bf16.mxu0 0
        %6445 = vmatpush1.bf16.msra.mxu0 %v6429
        %6446 = vmatprep.subr.bf16.mxu0 0
        %6447 = vmatpush1.bf16.msra.mxu0 %v6428
        %6448 = vmatprep.subr.bf16.mxu0 0
        %6449 = vmatpush1.bf16.msra.mxu0 %v6427
        %6450 = vmatprep.subr.bf16.mxu0 0
        %6451 = vmatpush1.bf16.msra.mxu0 %v6426
        %6452 = vmatprep.subr.bf16.mxu0 0
        %6453 = vmatpush1.bf16.msra.mxu0 %v6425
        %6454 = vmatprep.subr.bf16.mxu0 0
        %6455 = vmatpush1.bf16.msra.mxu0 %v6424
        %6456 = vmatprep.subr.bf16.mxu0 0
        %6457 = vmatpush2.bf16.msra.mxu0 0
        %6458 = vmatprep.subr.bf16.mxu0 0
        %6459 = vmatpush2.bf16.msra.mxu0 0
        %6460 = vmatprep.subr.bf16.mxu0 0
        %6461 = vmatpush2.bf16.msra.mxu0 0
        %6462 = vmatprep.subr.bf16.mxu0 0
        %6463 = vmatpush2.bf16.msra.mxu0 0
        %6464 = vmatprep.subr.bf16.mxu0 0
        %6465 = vmatpush2.bf16.msra.mxu0 0
        %6466 = vmatprep.subr.bf16.mxu0 0
        %6467 = vmatpush2.bf16.msra.mxu0 0
        %6468 = vmatprep.subr.bf16.mxu0 0
        %6469 = vmatpush2.bf16.msra.mxu0 0
        %6470 = vmatprep.subr.bf16.mxu0 0
        %6471 = vmatpush2.bf16.msra.mxu0 0
        %6472 = vmatprep.mubr.bf16.mxu0 0
        %6473 = vmatmul.mubr.bf16.gmra.mxu0 %v6381
        %v6474 = vpop.f32.mrf.mxu0
        %v6475 = vadd.f32 %v6390, %v6474
        %v6476 = vpop.f32.mrf.mxu0
        %v6477 = vpop.f32.mrf.mxu0
        %v6478 = vadd.f32 %v6390, %v6477
        %v6479 = vpop.f32.mrf.mxu0
        %6480 = vmatprep.mubr.bf16.mxu0 0
        %6481 = vmatmul.mubr.bf16.gmra.mxu0 %v6382
        %v6482 = vpop.f32.mrf.mxu0
        %v6483 = vadd.f32 %v6390, %v6482
        %v6484 = vpop.f32.mrf.mxu0
        %v6485 = vpop.f32.mrf.mxu0
        %v6486 = vadd.f32 %v6390, %v6485
        %v6487 = vpop.f32.mrf.mxu0
        %6488 = vmatprep.mubr.bf16.mxu0 0
        %6489 = vmatmul.mubr.bf16.gmra.mxu0 %v6383
        %v6490 = vpop.f32.mrf.mxu0
        %v6491 = vadd.f32 %v6390, %v6490
        %v6492 = vpop.f32.mrf.mxu0
        %v6493 = vpop.f32.mrf.mxu0
        %v6494 = vadd.f32 %v6390, %v6493
        %v6495 = vpop.f32.mrf.mxu0
        %6496 = vmatprep.mubr.bf16.mxu0 0
        %6497 = vmatmul.mubr.bf16.gmra.mxu0 %v6384
        %v6498 = vpop.f32.mrf.mxu0
        %v6499 = vadd.f32 %v6390, %v6498
        %v6500 = vpop.f32.mrf.mxu0
        %v6501 = vpop.f32.mrf.mxu0
        %v6502 = vadd.f32 %v6390, %v6501
        %v6503 = vpop.f32.mrf.mxu0
        %6504 = vdwg.mxu0
        %6505 = vst [vmem:[%s931] sm:$0xff] %v6475
        %6506 = vst [vmem:[%s931 + $0x8] sm:$0xff] %v6478
        %6507 = vst [vmem:[%s931 + $0x10] sm:$0xff] %v6483
        %6508 = vst [vmem:[%s931 + $0x18] sm:$0xff] %v6486
        %6509 = vst [vmem:[%s931 + $0x20] sm:$0xff] %v6491
        %6510 = vst [vmem:[%s931 + $0x28] sm:$0xff] %v6494
        %6511 = vst [vmem:[%s931 + $0x30] sm:$0xff] %v6499
        %6512 = vst [vmem:[%s931 + $0x38] sm:$0xff] %v6502
        %s6513 = sand.u32 %s565, 1
        %s6514 = scalar_lea.sflag [#allocation5], %s6513
        %s6515 = sand.u32 %s565, 1
        %s6516 = smul.addr %s6515, 64
        %s6517 = scalar_lea.vmem [#allocation26], %s6516
        // Predicated region
        $region173: #{tpu_custom_call.1} parent=115 // pred_check
          %p6518 = pneg %p575
        $region174: #{tpu_custom_call.1} parent=115 // pred_check_branch
          %6520 = sbr.rel (%p6518) target = $region176
        $region175: #{tpu_custom_call.1} parent=115 // pred_region
          %s6521 = smul.u32 8, %s48
          %s6523 = ssub.s32 1024, 1024
          %6524 = vsyncadd %s6514, %s6523
          %s6525 = smul.addr %s6521, 128
          %s6526 = scalar_lea.hbm %s24, %s6525
          %s6527 = sshll.u32 %s6517, 4
          %s6528 = int_to_ptr.vmem [resolvable:$true] %s6527
          %6533 = dma.vmem_to_hbm [thread:$0]  %s6528, 1024, %s6526, %s6514, 128, 128, 8
        $region176: #{tpu_custom_call.1} parent=115 // pred_fallthru
          _
      $region116: #{tpu_custom_call.1} parent=5 // pred_fallthru
        _
      %p6534 = scmp.le.s32.totalorder 2, %s43
      // Predicated region
      $region177: #{tpu_custom_call.1} parent=5 // pred_check
        %p6535 = pneg %p6534
      $region178: #{tpu_custom_call.1} parent=5 // pred_check_branch
        %6537 = sbr.rel (%p6535) target = $region180
      $region179: #{tpu_custom_call.1} parent=5 // pred_region
        %s6538 = ssub.s32 %s43, 2
        // Predicated region
        $region181: #{tpu_custom_call.1} parent=179 // pred_check
          %p6539 = pneg %p581
        $region182: #{tpu_custom_call.1} parent=179 // pred_check_branch
          %6541 = sbr.rel (%p6539) target = $region184
        $region183: #{tpu_custom_call.1} parent=179 // pred_region
          %s6542 = sand.u32 %s566, 1
          %s6543 = scalar_lea.sflag [#allocation5], %s6542
          %s6544 = sand.u32 %s566, 1
          %s6545 = smul.addr %s6544, 64
          %s6546 = scalar_lea.vmem [#allocation26], %s6545
          %6547 = dma.done %s6543, 1024
        $region184: #{tpu_custom_call.1} parent=179 // pred_fallthru
          _
      $region180: #{tpu_custom_call.1} parent=5 // pred_fallthru
        _
    $region6: #{tpu_custom_call.1} parent=1 // loop_footer
      %s47 = sadd.s32 1, %s43
    $region7: #{tpu_custom_call.1} parent=1 // loop_footer_branch
      %42 = sbr.rel target = $region3
    $region8: #{tpu_custom_call.1} parent=1 // loop_exit
      _
    %6548 = vsyncpa [#allocation4], 1
    %s6549 = scalar_lea.sflag [#allocation4], 1
    %6550 = vsyncpa %s6549, 1
    %6551 = vsyncpa [#allocation7], 1
    %6552 = vsyncpa [#allocation10], 1
    %6553 = vsyncpa [#allocation13], 1
    %6554 = vsyncpa [#allocation16], 1
    %6555 = vsyncpa [#allocation19], 1
    %6556 = vsyncpa [#allocation22], 1
    %6557 = vsyncpa [#allocation25], 1
    %6558 = vsyncpa [#allocation5], 1
    %s6559 = scalar_lea.sflag [#allocation5], 1
    %6560 = vsyncpa %s6559, 1

</llo_original>
